<compile_context>
chip_gen: v7x
topology: tpu7x:2x2x1
jax: 0.10.0
libtpu: 0.0.40
codegen_flags: <defaults>
</compile_context>

<pallas_src>
import functools

import numpy as np
import jax
import jax.numpy as jnp
from jax.experimental import pallas as pl
from jax.experimental.pallas import tpu as pltpu

N_QUBITS = 4
N_LAYERS = 1
KERNEL_SIZE = N_QUBITS      # 4
STRIDE = 4
LRELU_SLOPE = 0.01          # F.leaky_relu default
BN_EPS = 1e-5               # nn.BatchNorm1d default

# Shapes fixed by the module itself (.view(-1, 4, 16) and fc = Linear(64*14*60, 1)):
SEG = 16                                   # positions per sample after quanv reshape
L1 = SEG - 2                               # 14 : length after Conv1d(4, 64, 3)
L2 = L1 - 2                                # 12 : length after Conv1d(64, 128, 3)
N_SAMPLES = (64 * 14 * 60) // (128 * L2)   # 35 : leading dim of the NCL tensor
ROWS = N_SAMPLES * SEG                     # 560 (multiple of 8 -> aligned sublanes)
NWIN_PAD = 1024                            # windows padded to 8 * 128 lanes


# --------------------------------------------------------------------------
# Pallas kernels
# --------------------------------------------------------------------------

def quanv_kernel(xw_ref, ar_ref, ai_ref, o_ref):
    """4-qubit quantum convolution; windows live on the lane axis.

    xw_ref : (4, 8, 128) f32 VMEM  -- row j = j-th value of every window
    ar_ref : (4, 16)     f32 SMEM  -- Re(Sel @ U_var^T)  (variational layer folded)
    ai_ref : (4, 16)     f32 SMEM  -- Im(Sel @ U_var^T)
    o_ref  : (4, 8, 128) f32 VMEM  -- row q = <Z_q> for every window

    Circuit per window: q0 <- H, RZ(x0), RY(x1); q1 <- H, RZ(x2), RY(x3);
    q2,q3 <- H only; then CRZ ring + RY layer (precomposed into A); <Z_q> readout.
    """
    inv_sqrt2 = 0.7071067811865476

    a0 = xw_ref[0] * 0.5          # RZ(x0) half-angle, qubit 0
    b0 = xw_ref[1] * 0.5          # RY(x1) half-angle, qubit 0
    a1 = xw_ref[2] * 0.5          # RZ(x2) half-angle, qubit 1
    b1 = xw_ref[3] * 0.5          # RY(x3) half-angle, qubit 1

    ca0, sa0 = jnp.cos(a0), jnp.sin(a0)
    cb0, sb0 = jnp.cos(b0), jnp.sin(b0)
    ca1, sa1 = jnp.cos(a1), jnp.sin(a1)
    cb1, sb1 = jnp.cos(b1), jnp.sin(b1)

    # single-qubit amplitudes after RY(b) RZ(a) H |0>
    u0r = ca0 * (cb0 - sb0) * inv_sqrt2
    u0i = -sa0 * (cb0 + sb0) * inv_sqrt2
    u1r = ca0 * (cb0 + sb0) * inv_sqrt2
    u1i = sa0 * (cb0 - sb0) * inv_sqrt2
    v0r = ca1 * (cb1 - sb1) * inv_sqrt2
    v0i = -sa1 * (cb1 + sb1) * inv_sqrt2
    v1r = ca1 * (cb1 + sb1) * inv_sqrt2
    v1i = sa1 * (cb1 - sb1) * inv_sqrt2

    # p_k = amp_q0[k>>1] * amp_q1[k&1]  (qubits 2,3 stay in |+>, folded into A)
    prs, pis = [], []
    for (r0, i0) in ((u0r, u0i), (u1r, u1i)):
        for (r1, i1) in ((v0r, v0i), (v1r, v1i)):
            prs.append(r0 * r1 - i0 * i1)
            pis.append(r0 * i1 + i0 * r1)

    # state[s] = sum_k p_k * A[k, s]; probs = |state|^2; e_q = sum_s Z(q,s) probs.
    # Fully unrolled as VPU FMAs with coefficients broadcast from SMEM (no MXU).
    e = [None] * 4
    for s in range(16):
        sr = None
        si = None
        for k in range(4):
            ar = ar_ref[k, s]
            ai = ai_ref[k, s]
            tr = prs[k] * ar - pis[k] * ai
            ti = prs[k] * ai + pis[k] * ar
            sr = tr if sr is None else sr + tr
            si = ti if si is None else si + ti
        prob = sr * sr + si * si
        for q in range(4):
            if (s >> (3 - q)) & 1:          # PauliZ sign, wire 0 = MSB (PennyLane)
                e[q] = -prob if e[q] is None else e[q] - prob
            else:
                e[q] = prob if e[q] is None else e[q] + prob

    for q in range(4):
        o_ref[q] = e[q]


def disc_kernel(x0_ref, g1_ref, be1_ref, w1_ref, b1_ref, g2_ref, be2_ref,
                w2_ref, b2_ref, g3_ref, be3_ref, wfc_ref, bfc_ref,
                o_ref, s0, s1, *, rows, l1, l2, n2, n3):
    """Fused bn1 -> lrelu -> conv1 -> bn2 -> lrelu -> conv2 -> bn3 -> fc -> sigmoid.

    All activations are kept in a uniform channels-last (rows, C) layout with
    rows = n*16 + l (rows is a multiple of 8).  The convolutions are computed as
    3 sublane-shifted matmuls against a VMEM scratch with a zeroed tail; rows
    whose position l exceeds the valid conv output length carry garbage and are
    masked out of the batch statistics and of the final fc (pre-zeroed weights).
    """
    f32 = jnp.float32

    # ---- bn1 (training-mode batch statistics) + leaky_relu ----------------
    x = x0_ref[...]                                          # (rows, 4)
    inv_n1 = 1.0 / rows
    mean1 = jnp.sum(x, axis=0, keepdims=True) * inv_n1
    var1 = jnp.maximum(jnp.sum(x * x, axis=0, keepdims=True) * inv_n1
                       - mean1 * mean1, 0.0)
    h = g1_ref[...] * (x - mean1) * jax.lax.rsqrt(var1 + BN_EPS) + be1_ref[...]
    h = jnp.where(h >= 0.0, h, LRELU_SLOPE * h)
    # TODO(synk): F.dropout1d defaults to training=True (stochastic, p=0.5);
    # it is applied as identity here.
    s0[pl.ds(0, rows), :] = h
    s0[pl.ds(rows, 8), :] = jnp.zeros((8, h.shape[1]), f32)

    # per-row validity masks for the batch statistics
    rid = jax.lax.broadcasted_iota(jnp.int32, (rows, 1), 0)
    pos = jnp.bitwise_and(rid, SEG - 1)                      # l = row % 16
    m1 = (pos < l1).astype(f32)                              # valid after conv1
    m2 = (pos < l2).astype(f32)                              # valid after conv2

    # ---- c1: Conv1d(4 -> 64, k=3) as 3 shifted MXU matmuls + bn2 + lrelu ---
    y = b1_ref[...]
    for k in range(3):
        y = y + jnp.dot(s0[pl.ds(k, rows), :], w1_ref[k], preferred_element_type=f32)
    ym = y * m1
    inv_n2 = 1.0 / n2
    mean2 = jnp.sum(ym, axis=0, keepdims=True) * inv_n2
    var2 = jnp.maximum(jnp.sum(ym * y, axis=0, keepdims=True) * inv_n2
                       - mean2 * mean2, 0.0)
    h1 = g2_ref[...] * (y - mean2) * jax.lax.rsqrt(var2 + BN_EPS) + be2_ref[...]
    h1 = jnp.where(h1 >= 0.0, h1, LRELU_SLOPE * h1)
    s1[pl.ds(0, rows), :] = h1
    s1[pl.ds(rows, 8), :] = jnp.zeros((8, h1.shape[1]), f32)

    # ---- c2: Conv1d(64 -> 128, k=3) as 3 shifted MXU matmuls + bn3 ---------
    z = b2_ref[...]
    for k in range(3):
        z = z + jnp.dot(s1[pl.ds(k, rows), :], w2_ref[k], preferred_element_type=f32)
    zm = z * m2
    inv_n3 = 1.0 / n3
    mean3 = jnp.sum(zm, axis=0, keepdims=True) * inv_n3
    var3 = jnp.maximum(jnp.sum(zm * z, axis=0, keepdims=True) * inv_n3
                       - mean3 * mean3, 0.0)
    zn = g3_ref[...] * (z - mean3) * jax.lax.rsqrt(var3 + BN_EPS) + be3_ref[...]

    # ---- flatten + fc + sigmoid (fc weights pre-permuted, invalid rows = 0) -
    prod = zn * wfc_ref[...]                                 # (rows, 128)
    logit = jnp.sum(jnp.sum(prod, axis=1, keepdims=True), axis=0, keepdims=True)
    logit = logit + bfc_ref[...]
    o_ref[...] = 1.0 / (1.0 + jnp.exp(-logit))


_VMEM = pl.BlockSpec(memory_space=pltpu.MemorySpace.VMEM)
_SMEM = pl.BlockSpec(memory_space=pltpu.MemorySpace.SMEM)


# --------------------------------------------------------------------------
# Parameter setup (deterministic, in-script)
# --------------------------------------------------------------------------

def _quantum_layer_mats(qweights):
    """Fold the weight-dependent part of the circuit into a constant 4x16 matrix.

    state_row = p_row @ (Ar + i*Ai), where p_row are the 4 complex products of
    the encoded qubit-0/qubit-1 amplitudes (qubits 2,3 stay in |+>, folded in).
    """
    w = np.asarray(qweights, dtype=np.float64)[0]            # (2*n_qubits,) = (8,)

    def ry(t):
        c, s = np.cos(t / 2.0), np.sin(t / 2.0)
        return np.array([[c, -s], [s, c]], dtype=np.float64)

    # RY layer: RY(w[4+j]) on wire j, kron ordered wire0 (x) ... (x) wire3
    R = ry(w[4])
    for j in (5, 6, 7):
        R = np.kron(R, ry(w[j]))

    # CRZ ring: CRZ(w[i], wires=[i, (i+1)%4]) -> diagonal phases
    phases = np.zeros(16)
    for s in range(16):
        bits = [(s >> (3 - q)) & 1 for q in range(4)]
        ph = 0.0
        for i in range(4):
            ctrl, tgt = i, (i + 1) % 4
            if bits[ctrl]:
                ph += (w[i] / 2.0) if bits[tgt] else (-w[i] / 2.0)
        phases[s] = ph
    U = R * np.exp(1j * phases)[None, :]                     # RY_layer @ diag(CRZ)

    # selection: psi_enc[s] = p[s // 4] * 0.5 (qubits 2,3 in |+>)
    Sel = np.zeros((4, 16))
    for k in range(4):
        Sel[k, 4 * k:4 * k + 4] = 0.5
    A = Sel @ U.T                                            # (4, 16) complex
    return jnp.asarray(A.real, jnp.float32), jnp.asarray(A.imag, jnp.float32)


def init_params(key):
    ks = jax.random.split(key, 7)
    qw = jax.random.uniform(ks[0], (N_LAYERS, 2 * N_QUBITS), jnp.float32,
                            0.0, 2.0 * np.pi)
    q_ar, q_ai = _quantum_layer_mats(np.asarray(qw))

    c1_w = jax.random.normal(ks[1], (64, 4, 3), jnp.float32) * 0.2     # Conv1d(4,64,3)
    c1_b = jax.random.normal(ks[2], (64,), jnp.float32) * 0.1
    c2_w = jax.random.normal(ks[3], (128, 64, 3), jnp.float32) * 0.05  # Conv1d(64,128,3)
    c2_b = jax.random.normal(ks[4], (128,), jnp.float32) * 0.1
    fc_w = jax.random.normal(ks[5], (1, 64 * 14 * 60), jnp.float32) * 0.01
    fc_b = jax.random.normal(ks[6], (1,), jnp.float32) * 0.1

    # fc weight: torch flattens (N, 128, 12) in NCL order; re-layout to rows =
    # n*16 + l (l padded 12 -> 16 with zeros), lanes = output channel.
    wfc = jnp.transpose(fc_w.reshape(N_SAMPLES, 128, L2), (0, 2, 1))   # (N, 12, 128)
    wfc = jnp.pad(wfc, ((0, 0), (0, SEG - L2), (0, 0))).reshape(ROWS, 128)

    return dict(
        q_Ar=q_ar, q_Ai=q_ai,
        w1=jnp.transpose(c1_w, (2, 1, 0)),        # (3, 4, 64):  w1[k, ci, co]
        b1=c1_b.reshape(1, 64),
        w2=jnp.transpose(c2_w, (2, 1, 0)),        # (3, 64, 128)
        b2=c2_b.reshape(1, 128),
        wfc=wfc, bfc=fc_b.reshape(1, 1),
        bn1_g=jnp.ones((1, 4), jnp.float32), bn1_b=jnp.zeros((1, 4), jnp.float32),
        bn2_g=jnp.ones((1, 64), jnp.float32), bn2_b=jnp.zeros((1, 64), jnp.float32),
        bn3_g=jnp.ones((1, 128), jnp.float32), bn3_b=jnp.zeros((1, 128), jnp.float32),
    )


# --------------------------------------------------------------------------
# Forward pass (thin glue + two kernel calls)
# --------------------------------------------------------------------------

def discriminator_forward(x, params):
    assert x.ndim == 2
    bs, L = x.shape
    nwin = len(range(0, L - 4, STRIDE))
    assert nwin == SEG, "Quanv1d + .view(-1, 4, 16) requires 16 windows per sample"
    nw = bs * nwin
    assert nw * 4 == N_SAMPLES * 64, "fc(64*14*60) requires bs * nwin == 560"
    assert STRIDE == KERNEL_SIZE

    # ---- Quanv1d: stride == kernel_size -> windows are a plain reshape ----
    xw = x[:, :nwin * KERNEL_SIZE].reshape(nw, KERNEL_SIZE).astype(jnp.float32)
    xw = jnp.pad(xw.T, ((0, 0), (0, NWIN_PAD - nw)))          # (4, 1024): lanes=windows
    xw = xw.reshape(4, NWIN_PAD // 128, 128)

    q_out = pl.pallas_call(
        quanv_kernel,
        out_shape=jax.ShapeDtypeStruct((4, NWIN_PAD // 128, 128), jnp.float32),
        in_specs=[_VMEM, _SMEM, _SMEM],
        out_specs=_VMEM,
    )(xw, params["q_Ar"], params["q_Ai"])

    # (qubit, window) -> rows (n*16 + l, channel), matching torch's
    # cat(XL, 1).view(-1, 4, 16) followed by a channels-last transpose.
    e = q_out.reshape(4, NWIN_PAD)[:, :nw].reshape(4, N_SAMPLES, 4, 4)  # (q, n, c, wlo)
    x0 = jnp.transpose(e, (1, 3, 0, 2)).reshape(ROWS, 4)                # l = 4*wlo + q

    # ---- fused bn1 -> c1 -> bn2 -> c2 -> bn3 -> fc -> sigmoid -------------
    kernel = functools.partial(disc_kernel, rows=ROWS, l1=L1, l2=L2,
                               n2=float(N_SAMPLES * L1), n3=float(N_SAMPLES * L2))
    out = pl.pallas_call(
        kernel,
        out_shape=jax.ShapeDtypeStruct((1, 1), jnp.float32),
        in_specs=[_VMEM] * 13,
        out_specs=_VMEM,
        scratch_shapes=[pltpu.VMEM((ROWS + 8, 4), jnp.float32),
                        pltpu.VMEM((ROWS + 8, 64), jnp.float32)],
    )(x0, params["bn1_g"], params["bn1_b"], params["w1"], params["b1"],
      params["bn2_g"], params["bn2_b"], params["w2"], params["b2"],
      params["bn3_g"], params["bn3_b"], params["wfc"], params["bfc"])
    return out


# --------------------------------------------------------------------------

if __name__ == "__main__":
    key = jax.random.PRNGKey(0)
    pkey, xkey = jax.random.split(key)
    params = init_params(pkey)

    # Quanv1d needs (bs, L) with 16 windows/sample; .view(-1, 4, 16) plus
    # fc(64*14*60) then require bs * nwin == 560  ->  bs = 35, L = 68.
    x = jax.random.normal(xkey, (35, 68), jnp.float32)

    fwd = jax.jit(discriminator_forward)
    out = jax.block_until_ready(fwd(x, params))
    assert out.shape == (1, 1)
    assert bool(jnp.all(jnp.isfinite(out)))
    print("KERNEL_OK")
</pallas_src>

<mosaic_0001>
module attributes {stable_mosaic.version = 11 : i64} {
  func.func @quanv_kernel(%arg0: memref<4x8x128xf32, #tpu.memory_space<vmem>>, %arg1: memref<4x16xf32, #tpu.memory_space<smem>>, %arg2: memref<4x16xf32, #tpu.memory_space<smem>>, %arg3: memref<4x8x128xf32, #tpu.memory_space<vmem>>) attributes {dimension_semantics = [], scalar_prefetch = 0 : i64, scratch_operands = 0 : i64, tpu.core_type = #tpu.core_type<tc>} {
    %c0 = arith.constant 0 : index
    %c0_0 = arith.constant 0 : index
    %c0_1 = arith.constant 0 : index
    %0 = vector.load %arg0[%c0, %c0_0, %c0_1] : memref<4x8x128xf32, #tpu.memory_space<vmem>>, vector<1x8x128xf32>
    %1 = vector.shape_cast %0 : vector<1x8x128xf32> to vector<8x128xf32>
    %cst = arith.constant 5.000000e-01 : f32
    %2 = vector.broadcast %cst : f32 to vector<8x128xf32>
    %3 = arith.mulf %1, %2 : vector<8x128xf32>
    %c1 = arith.constant 1 : index
    %c0_2 = arith.constant 0 : index
    %c0_3 = arith.constant 0 : index
    %4 = vector.load %arg0[%c1, %c0_2, %c0_3] : memref<4x8x128xf32, #tpu.memory_space<vmem>>, vector<1x8x128xf32>
    %5 = vector.shape_cast %4 : vector<1x8x128xf32> to vector<8x128xf32>
    %cst_4 = arith.constant 5.000000e-01 : f32
    %6 = vector.broadcast %cst_4 : f32 to vector<8x128xf32>
    %7 = arith.mulf %5, %6 : vector<8x128xf32>
    %c2 = arith.constant 2 : index
    %c0_5 = arith.constant 0 : index
    %c0_6 = arith.constant 0 : index
    %8 = vector.load %arg0[%c2, %c0_5, %c0_6] : memref<4x8x128xf32, #tpu.memory_space<vmem>>, vector<1x8x128xf32>
    %9 = vector.shape_cast %8 : vector<1x8x128xf32> to vector<8x128xf32>
    %cst_7 = arith.constant 5.000000e-01 : f32
    %10 = vector.broadcast %cst_7 : f32 to vector<8x128xf32>
    %11 = arith.mulf %9, %10 : vector<8x128xf32>
    %c3 = arith.constant 3 : index
    %c0_8 = arith.constant 0 : index
    %c0_9 = arith.constant 0 : index
    %12 = vector.load %arg0[%c3, %c0_8, %c0_9] : memref<4x8x128xf32, #tpu.memory_space<vmem>>, vector<1x8x128xf32>
    %13 = vector.shape_cast %12 : vector<1x8x128xf32> to vector<8x128xf32>
    %cst_10 = arith.constant 5.000000e-01 : f32
    %14 = vector.broadcast %cst_10 : f32 to vector<8x128xf32>
    %15 = arith.mulf %13, %14 : vector<8x128xf32>
    %16 = math.cos %3 : vector<8x128xf32>
    %17 = math.sin %3 : vector<8x128xf32>
    %18 = math.cos %7 : vector<8x128xf32>
    %19 = math.sin %7 : vector<8x128xf32>
    %20 = math.cos %11 : vector<8x128xf32>
    %21 = math.sin %11 : vector<8x128xf32>
    %22 = math.cos %15 : vector<8x128xf32>
    %23 = math.sin %15 : vector<8x128xf32>
    %24 = arith.subf %18, %19 : vector<8x128xf32>
    %25 = arith.mulf %16, %24 : vector<8x128xf32>
    %cst_11 = arith.constant 0.707106769 : f32
    %26 = vector.broadcast %cst_11 : f32 to vector<8x128xf32>
    %27 = arith.mulf %25, %26 : vector<8x128xf32>
    %cst_12 = arith.constant 0.000000e+00 : f32
    %28 = vector.broadcast %cst_12 : f32 to vector<8x128xf32>
    %29 = arith.subf %28, %17 : vector<8x128xf32>
    %30 = arith.addf %18, %19 : vector<8x128xf32>
    %31 = arith.mulf %29, %30 : vector<8x128xf32>
    %cst_13 = arith.constant 0.707106769 : f32
    %32 = vector.broadcast %cst_13 : f32 to vector<8x128xf32>
    %33 = arith.mulf %31, %32 : vector<8x128xf32>
    %34 = arith.addf %18, %19 : vector<8x128xf32>
    %35 = arith.mulf %16, %34 : vector<8x128xf32>
    %cst_14 = arith.constant 0.707106769 : f32
    %36 = vector.broadcast %cst_14 : f32 to vector<8x128xf32>
    %37 = arith.mulf %35, %36 : vector<8x128xf32>
    %38 = arith.subf %18, %19 : vector<8x128xf32>
    %39 = arith.mulf %17, %38 : vector<8x128xf32>
    %cst_15 = arith.constant 0.707106769 : f32
    %40 = vector.broadcast %cst_15 : f32 to vector<8x128xf32>
    %41 = arith.mulf %39, %40 : vector<8x128xf32>
    %42 = arith.subf %22, %23 : vector<8x128xf32>
    %43 = arith.mulf %20, %42 : vector<8x128xf32>
    %cst_16 = arith.constant 0.707106769 : f32
    %44 = vector.broadcast %cst_16 : f32 to vector<8x128xf32>
    %45 = arith.mulf %43, %44 : vector<8x128xf32>
    %cst_17 = arith.constant 0.000000e+00 : f32
    %46 = vector.broadcast %cst_17 : f32 to vector<8x128xf32>
    %47 = arith.subf %46, %21 : vector<8x128xf32>
    %48 = arith.addf %22, %23 : vector<8x128xf32>
    %49 = arith.mulf %47, %48 : vector<8x128xf32>
    %cst_18 = arith.constant 0.707106769 : f32
    %50 = vector.broadcast %cst_18 : f32 to vector<8x128xf32>
    %51 = arith.mulf %49, %50 : vector<8x128xf32>
    %52 = arith.addf %22, %23 : vector<8x128xf32>
    %53 = arith.mulf %20, %52 : vector<8x128xf32>
    %cst_19 = arith.constant 0.707106769 : f32
    %54 = vector.broadcast %cst_19 : f32 to vector<8x128xf32>
    %55 = arith.mulf %53, %54 : vector<8x128xf32>
    %56 = arith.subf %22, %23 : vector<8x128xf32>
    %57 = arith.mulf %21, %56 : vector<8x128xf32>
    %cst_20 = arith.constant 0.707106769 : f32
    %58 = vector.broadcast %cst_20 : f32 to vector<8x128xf32>
    %59 = arith.mulf %57, %58 : vector<8x128xf32>
    %60 = arith.mulf %27, %45 : vector<8x128xf32>
    %61 = arith.mulf %33, %51 : vector<8x128xf32>
    %62 = arith.subf %60, %61 : vector<8x128xf32>
    %63 = arith.mulf %27, %51 : vector<8x128xf32>
    %64 = arith.mulf %33, %45 : vector<8x128xf32>
    %65 = arith.addf %63, %64 : vector<8x128xf32>
    %66 = arith.mulf %27, %55 : vector<8x128xf32>
    %67 = arith.mulf %33, %59 : vector<8x128xf32>
    %68 = arith.subf %66, %67 : vector<8x128xf32>
    %69 = arith.mulf %27, %59 : vector<8x128xf32>
    %70 = arith.mulf %33, %55 : vector<8x128xf32>
    %71 = arith.addf %69, %70 : vector<8x128xf32>
    %72 = arith.mulf %37, %45 : vector<8x128xf32>
    %73 = arith.mulf %41, %51 : vector<8x128xf32>
    %74 = arith.subf %72, %73 : vector<8x128xf32>
    %75 = arith.mulf %37, %51 : vector<8x128xf32>
    %76 = arith.mulf %41, %45 : vector<8x128xf32>
    %77 = arith.addf %75, %76 : vector<8x128xf32>
    %78 = arith.mulf %37, %55 : vector<8x128xf32>
    %79 = arith.mulf %41, %59 : vector<8x128xf32>
    %80 = arith.subf %78, %79 : vector<8x128xf32>
    %81 = arith.mulf %37, %59 : vector<8x128xf32>
    %82 = arith.mulf %41, %55 : vector<8x128xf32>
    %83 = arith.addf %81, %82 : vector<8x128xf32>
    %c0_21 = arith.constant 0 : index
    %c0_22 = arith.constant 0 : index
    %84 = memref.load %arg1[%c0_21, %c0_22] : memref<4x16xf32, #tpu.memory_space<smem>>
    %c0_23 = arith.constant 0 : index
    %c0_24 = arith.constant 0 : index
    %85 = memref.load %arg2[%c0_23, %c0_24] : memref<4x16xf32, #tpu.memory_space<smem>>
    %86 = vector.broadcast %84 : f32 to vector<8x128xf32>
    %87 = arith.mulf %62, %86 : vector<8x128xf32>
    %88 = vector.broadcast %85 : f32 to vector<8x128xf32>
    %89 = arith.mulf %65, %88 : vector<8x128xf32>
    %90 = arith.subf %87, %89 : vector<8x128xf32>
    %91 = vector.broadcast %85 : f32 to vector<8x128xf32>
    %92 = arith.mulf %62, %91 : vector<8x128xf32>
    %93 = vector.broadcast %84 : f32 to vector<8x128xf32>
    %94 = arith.mulf %65, %93 : vector<8x128xf32>
    %95 = arith.addf %92, %94 : vector<8x128xf32>
    %c1_25 = arith.constant 1 : index
    %c0_26 = arith.constant 0 : index
    %96 = memref.load %arg1[%c1_25, %c0_26] : memref<4x16xf32, #tpu.memory_space<smem>>
    %c1_27 = arith.constant 1 : index
    %c0_28 = arith.constant 0 : index
    %97 = memref.load %arg2[%c1_27, %c0_28] : memref<4x16xf32, #tpu.memory_space<smem>>
    %98 = vector.broadcast %96 : f32 to vector<8x128xf32>
    %99 = arith.mulf %68, %98 : vector<8x128xf32>
    %100 = vector.broadcast %97 : f32 to vector<8x128xf32>
    %101 = arith.mulf %71, %100 : vector<8x128xf32>
    %102 = arith.subf %99, %101 : vector<8x128xf32>
    %103 = vector.broadcast %97 : f32 to vector<8x128xf32>
    %104 = arith.mulf %68, %103 : vector<8x128xf32>
    %105 = vector.broadcast %96 : f32 to vector<8x128xf32>
    %106 = arith.mulf %71, %105 : vector<8x128xf32>
    %107 = arith.addf %104, %106 : vector<8x128xf32>
    %108 = arith.addf %90, %102 : vector<8x128xf32>
    %109 = arith.addf %95, %107 : vector<8x128xf32>
    %c2_29 = arith.constant 2 : index
    %c0_30 = arith.constant 0 : index
    %110 = memref.load %arg1[%c2_29, %c0_30] : memref<4x16xf32, #tpu.memory_space<smem>>
    %c2_31 = arith.constant 2 : index
    %c0_32 = arith.constant 0 : index
    %111 = memref.load %arg2[%c2_31, %c0_32] : memref<4x16xf32, #tpu.memory_space<smem>>
    %112 = vector.broadcast %110 : f32 to vector<8x128xf32>
    %113 = arith.mulf %74, %112 : vector<8x128xf32>
    %114 = vector.broadcast %111 : f32 to vector<8x128xf32>
    %115 = arith.mulf %77, %114 : vector<8x128xf32>
    %116 = arith.subf %113, %115 : vector<8x128xf32>
    %117 = vector.broadcast %111 : f32 to vector<8x128xf32>
    %118 = arith.mulf %74, %117 : vector<8x128xf32>
    %119 = vector.broadcast %110 : f32 to vector<8x128xf32>
    %120 = arith.mulf %77, %119 : vector<8x128xf32>
    %121 = arith.addf %118, %120 : vector<8x128xf32>
    %122 = arith.addf %108, %116 : vector<8x128xf32>
    %123 = arith.addf %109, %121 : vector<8x128xf32>
    %c3_33 = arith.constant 3 : index
    %c0_34 = arith.constant 0 : index
    %124 = memref.load %arg1[%c3_33, %c0_34] : memref<4x16xf32, #tpu.memory_space<smem>>
    %c3_35 = arith.constant 3 : index
    %c0_36 = arith.constant 0 : index
    %125 = memref.load %arg2[%c3_35, %c0_36] : memref<4x16xf32, #tpu.memory_space<smem>>
    %126 = vector.broadcast %124 : f32 to vector<8x128xf32>
    %127 = arith.mulf %80, %126 : vector<8x128xf32>
    %128 = vector.broadcast %125 : f32 to vector<8x128xf32>
    %129 = arith.mulf %83, %128 : vector<8x128xf32>
    %130 = arith.subf %127, %129 : vector<8x128xf32>
    %131 = vector.broadcast %125 : f32 to vector<8x128xf32>
    %132 = arith.mulf %80, %131 : vector<8x128xf32>
    %133 = vector.broadcast %124 : f32 to vector<8x128xf32>
    %134 = arith.mulf %83, %133 : vector<8x128xf32>
    %135 = arith.addf %132, %134 : vector<8x128xf32>
    %136 = arith.addf %122, %130 : vector<8x128xf32>
    %137 = arith.addf %123, %135 : vector<8x128xf32>
    %138 = arith.mulf %136, %136 : vector<8x128xf32>
    %139 = arith.mulf %137, %137 : vector<8x128xf32>
    %140 = arith.addf %138, %139 : vector<8x128xf32>
    %c0_37 = arith.constant 0 : index
    %c1_38 = arith.constant 1 : index
    %141 = memref.load %arg1[%c0_37, %c1_38] : memref<4x16xf32, #tpu.memory_space<smem>>
    %c0_39 = arith.constant 0 : index
    %c1_40 = arith.constant 1 : index
    %142 = memref.load %arg2[%c0_39, %c1_40] : memref<4x16xf32, #tpu.memory_space<smem>>
    %143 = vector.broadcast %141 : f32 to vector<8x128xf32>
    %144 = arith.mulf %62, %143 : vector<8x128xf32>
    %145 = vector.broadcast %142 : f32 to vector<8x128xf32>
    %146 = arith.mulf %65, %145 : vector<8x128xf32>
    %147 = arith.subf %144, %146 : vector<8x128xf32>
    %148 = vector.broadcast %142 : f32 to vector<8x128xf32>
    %149 = arith.mulf %62, %148 : vector<8x128xf32>
    %150 = vector.broadcast %141 : f32 to vector<8x128xf32>
    %151 = arith.mulf %65, %150 : vector<8x128xf32>
    %152 = arith.addf %149, %151 : vector<8x128xf32>
    %c1_41 = arith.constant 1 : index
    %c1_42 = arith.constant 1 : index
    %153 = memref.load %arg1[%c1_41, %c1_42] : memref<4x16xf32, #tpu.memory_space<smem>>
    %c1_43 = arith.constant 1 : index
    %c1_44 = arith.constant 1 : index
    %154 = memref.load %arg2[%c1_43, %c1_44] : memref<4x16xf32, #tpu.memory_space<smem>>
    %155 = vector.broadcast %153 : f32 to vector<8x128xf32>
    %156 = arith.mulf %68, %155 : vector<8x128xf32>
    %157 = vector.broadcast %154 : f32 to vector<8x128xf32>
    %158 = arith.mulf %71, %157 : vector<8x128xf32>
    %159 = arith.subf %156, %158 : vector<8x128xf32>
    %160 = vector.broadcast %154 : f32 to vector<8x128xf32>
    %161 = arith.mulf %68, %160 : vector<8x128xf32>
    %162 = vector.broadcast %153 : f32 to vector<8x128xf32>
    %163 = arith.mulf %71, %162 : vector<8x128xf32>
    %164 = arith.addf %161, %163 : vector<8x128xf32>
    %165 = arith.addf %147, %159 : vector<8x128xf32>
    %166 = arith.addf %152, %164 : vector<8x128xf32>
    %c2_45 = arith.constant 2 : index
    %c1_46 = arith.constant 1 : index
    %167 = memref.load %arg1[%c2_45, %c1_46] : memref<4x16xf32, #tpu.memory_space<smem>>
    %c2_47 = arith.constant 2 : index
    %c1_48 = arith.constant 1 : index
    %168 = memref.load %arg2[%c2_47, %c1_48] : memref<4x16xf32, #tpu.memory_space<smem>>
    %169 = vector.broadcast %167 : f32 to vector<8x128xf32>
    %170 = arith.mulf %74, %169 : vector<8x128xf32>
    %171 = vector.broadcast %168 : f32 to vector<8x128xf32>
    %172 = arith.mulf %77, %171 : vector<8x128xf32>
    %173 = arith.subf %170, %172 : vector<8x128xf32>
    %174 = vector.broadcast %168 : f32 to vector<8x128xf32>
    %175 = arith.mulf %74, %174 : vector<8x128xf32>
    %176 = vector.broadcast %167 : f32 to vector<8x128xf32>
    %177 = arith.mulf %77, %176 : vector<8x128xf32>
    %178 = arith.addf %175, %177 : vector<8x128xf32>
    %179 = arith.addf %165, %173 : vector<8x128xf32>
    %180 = arith.addf %166, %178 : vector<8x128xf32>
    %c3_49 = arith.constant 3 : index
    %c1_50 = arith.constant 1 : index
    %181 = memref.load %arg1[%c3_49, %c1_50] : memref<4x16xf32, #tpu.memory_space<smem>>
    %c3_51 = arith.constant 3 : index
    %c1_52 = arith.constant 1 : index
    %182 = memref.load %arg2[%c3_51, %c1_52] : memref<4x16xf32, #tpu.memory_space<smem>>
    %183 = vector.broadcast %181 : f32 to vector<8x128xf32>
    %184 = arith.mulf %80, %183 : vector<8x128xf32>
    %185 = vector.broadcast %182 : f32 to vector<8x128xf32>
    %186 = arith.mulf %83, %185 : vector<8x128xf32>
    %187 = arith.subf %184, %186 : vector<8x128xf32>
    %188 = vector.broadcast %182 : f32 to vector<8x128xf32>
    %189 = arith.mulf %80, %188 : vector<8x128xf32>
    %190 = vector.broadcast %181 : f32 to vector<8x128xf32>
    %191 = arith.mulf %83, %190 : vector<8x128xf32>
    %192 = arith.addf %189, %191 : vector<8x128xf32>
    %193 = arith.addf %179, %187 : vector<8x128xf32>
    %194 = arith.addf %180, %192 : vector<8x128xf32>
    %195 = arith.mulf %193, %193 : vector<8x128xf32>
    %196 = arith.mulf %194, %194 : vector<8x128xf32>
    %197 = arith.addf %195, %196 : vector<8x128xf32>
    %198 = arith.addf %140, %197 : vector<8x128xf32>
    %199 = arith.addf %140, %197 : vector<8x128xf32>
    %200 = arith.addf %140, %197 : vector<8x128xf32>
    %201 = arith.subf %140, %197 : vector<8x128xf32>
    %c0_53 = arith.constant 0 : index
    %c2_54 = arith.constant 2 : index
    %202 = memref.load %arg1[%c0_53, %c2_54] : memref<4x16xf32, #tpu.memory_space<smem>>
    %c0_55 = arith.constant 0 : index
    %c2_56 = arith.constant 2 : index
    %203 = memref.load %arg2[%c0_55, %c2_56] : memref<4x16xf32, #tpu.memory_space<smem>>
    %204 = vector.broadcast %202 : f32 to vector<8x128xf32>
    %205 = arith.mulf %62, %204 : vector<8x128xf32>
    %206 = vector.broadcast %203 : f32 to vector<8x128xf32>
    %207 = arith.mulf %65, %206 : vector<8x128xf32>
    %208 = arith.subf %205, %207 : vector<8x128xf32>
    %209 = vector.broadcast %203 : f32 to vector<8x128xf32>
    %210 = arith.mulf %62, %209 : vector<8x128xf32>
    %211 = vector.broadcast %202 : f32 to vector<8x128xf32>
    %212 = arith.mulf %65, %211 : vector<8x128xf32>
    %213 = arith.addf %210, %212 : vector<8x128xf32>
    %c1_57 = arith.constant 1 : index
    %c2_58 = arith.constant 2 : index
    %214 = memref.load %arg1[%c1_57, %c2_58] : memref<4x16xf32, #tpu.memory_space<smem>>
    %c1_59 = arith.constant 1 : index
    %c2_60 = arith.constant 2 : index
    %215 = memref.load %arg2[%c1_59, %c2_60] : memref<4x16xf32, #tpu.memory_space<smem>>
    %216 = vector.broadcast %214 : f32 to vector<8x128xf32>
    %217 = arith.mulf %68, %216 : vector<8x128xf32>
    %218 = vector.broadcast %215 : f32 to vector<8x128xf32>
    %219 = arith.mulf %71, %218 : vector<8x128xf32>
    %220 = arith.subf %217, %219 : vector<8x128xf32>
    %221 = vector.broadcast %215 : f32 to vector<8x128xf32>
    %222 = arith.mulf %68, %221 : vector<8x128xf32>
    %223 = vector.broadcast %214 : f32 to vector<8x128xf32>
    %224 = arith.mulf %71, %223 : vector<8x128xf32>
    %225 = arith.addf %222, %224 : vector<8x128xf32>
    %226 = arith.addf %208, %220 : vector<8x128xf32>
    %227 = arith.addf %213, %225 : vector<8x128xf32>
    %c2_61 = arith.constant 2 : index
    %c2_62 = arith.constant 2 : index
    %228 = memref.load %arg1[%c2_61, %c2_62] : memref<4x16xf32, #tpu.memory_space<smem>>
    %c2_63 = arith.constant 2 : index
    %c2_64 = arith.constant 2 : index
    %229 = memref.load %arg2[%c2_63, %c2_64] : memref<4x16xf32, #tpu.memory_space<smem>>
    %230 = vector.broadcast %228 : f32 to vector<8x128xf32>
    %231 = arith.mulf %74, %230 : vector<8x128xf32>
    %232 = vector.broadcast %229 : f32 to vector<8x128xf32>
    %233 = arith.mulf %77, %232 : vector<8x128xf32>
    %234 = arith.subf %231, %233 : vector<8x128xf32>
    %235 = vector.broadcast %229 : f32 to vector<8x128xf32>
    %236 = arith.mulf %74, %235 : vector<8x128xf32>
    %237 = vector.broadcast %228 : f32 to vector<8x128xf32>
    %238 = arith.mulf %77, %237 : vector<8x128xf32>
    %239 = arith.addf %236, %238 : vector<8x128xf32>
    %240 = arith.addf %226, %234 : vector<8x128xf32>
    %241 = arith.addf %227, %239 : vector<8x128xf32>
    %c3_65 = arith.constant 3 : index
    %c2_66 = arith.constant 2 : index
    %242 = memref.load %arg1[%c3_65, %c2_66] : memref<4x16xf32, #tpu.memory_space<smem>>
    %c3_67 = arith.constant 3 : index
    %c2_68 = arith.constant 2 : index
    %243 = memref.load %arg2[%c3_67, %c2_68] : memref<4x16xf32, #tpu.memory_space<smem>>
    %244 = vector.broadcast %242 : f32 to vector<8x128xf32>
    %245 = arith.mulf %80, %244 : vector<8x128xf32>
    %246 = vector.broadcast %243 : f32 to vector<8x128xf32>
    %247 = arith.mulf %83, %246 : vector<8x128xf32>
    %248 = arith.subf %245, %247 : vector<8x128xf32>
    %249 = vector.broadcast %243 : f32 to vector<8x128xf32>
    %250 = arith.mulf %80, %249 : vector<8x128xf32>
    %251 = vector.broadcast %242 : f32 to vector<8x128xf32>
    %252 = arith.mulf %83, %251 : vector<8x128xf32>
    %253 = arith.addf %250, %252 : vector<8x128xf32>
    %254 = arith.addf %240, %248 : vector<8x128xf32>
    %255 = arith.addf %241, %253 : vector<8x128xf32>
    %256 = arith.mulf %254, %254 : vector<8x128xf32>
    %257 = arith.mulf %255, %255 : vector<8x128xf32>
    %258 = arith.addf %256, %257 : vector<8x128xf32>
    %259 = arith.addf %198, %258 : vector<8x128xf32>
    %260 = arith.addf %199, %258 : vector<8x128xf32>
    %261 = arith.subf %200, %258 : vector<8x128xf32>
    %262 = arith.addf %201, %258 : vector<8x128xf32>
    %c0_69 = arith.constant 0 : index
    %c3_70 = arith.constant 3 : index
    %263 = memref.load %arg1[%c0_69, %c3_70] : memref<4x16xf32, #tpu.memory_space<smem>>
    %c0_71 = arith.constant 0 : index
    %c3_72 = arith.constant 3 : index
    %264 = memref.load %arg2[%c0_71, %c3_72] : memref<4x16xf32, #tpu.memory_space<smem>>
    %265 = vector.broadcast %263 : f32 to vector<8x128xf32>
    %266 = arith.mulf %62, %265 : vector<8x128xf32>
    %267 = vector.broadcast %264 : f32 to vector<8x128xf32>
    %268 = arith.mulf %65, %267 : vector<8x128xf32>
    %269 = arith.subf %266, %268 : vector<8x128xf32>
    %270 = vector.broadcast %264 : f32 to vector<8x128xf32>
    %271 = arith.mulf %62, %270 : vector<8x128xf32>
    %272 = vector.broadcast %263 : f32 to vector<8x128xf32>
    %273 = arith.mulf %65, %272 : vector<8x128xf32>
    %274 = arith.addf %271, %273 : vector<8x128xf32>
    %c1_73 = arith.constant 1 : index
    %c3_74 = arith.constant 3 : index
    %275 = memref.load %arg1[%c1_73, %c3_74] : memref<4x16xf32, #tpu.memory_space<smem>>
    %c1_75 = arith.constant 1 : index
    %c3_76 = arith.constant 3 : index
    %276 = memref.load %arg2[%c1_75, %c3_76] : memref<4x16xf32, #tpu.memory_space<smem>>
    %277 = vector.broadcast %275 : f32 to vector<8x128xf32>
    %278 = arith.mulf %68, %277 : vector<8x128xf32>
    %279 = vector.broadcast %276 : f32 to vector<8x128xf32>
    %280 = arith.mulf %71, %279 : vector<8x128xf32>
    %281 = arith.subf %278, %280 : vector<8x128xf32>
    %282 = vector.broadcast %276 : f32 to vector<8x128xf32>
    %283 = arith.mulf %68, %282 : vector<8x128xf32>
    %284 = vector.broadcast %275 : f32 to vector<8x128xf32>
    %285 = arith.mulf %71, %284 : vector<8x128xf32>
    %286 = arith.addf %283, %285 : vector<8x128xf32>
    %287 = arith.addf %269, %281 : vector<8x128xf32>
    %288 = arith.addf %274, %286 : vector<8x128xf32>
    %c2_77 = arith.constant 2 : index
    %c3_78 = arith.constant 3 : index
    %289 = memref.load %arg1[%c2_77, %c3_78] : memref<4x16xf32, #tpu.memory_space<smem>>
    %c2_79 = arith.constant 2 : index
    %c3_80 = arith.constant 3 : index
    %290 = memref.load %arg2[%c2_79, %c3_80] : memref<4x16xf32, #tpu.memory_space<smem>>
    %291 = vector.broadcast %289 : f32 to vector<8x128xf32>
    %292 = arith.mulf %74, %291 : vector<8x128xf32>
    %293 = vector.broadcast %290 : f32 to vector<8x128xf32>
    %294 = arith.mulf %77, %293 : vector<8x128xf32>
    %295 = arith.subf %292, %294 : vector<8x128xf32>
    %296 = vector.broadcast %290 : f32 to vector<8x128xf32>
    %297 = arith.mulf %74, %296 : vector<8x128xf32>
    %298 = vector.broadcast %289 : f32 to vector<8x128xf32>
    %299 = arith.mulf %77, %298 : vector<8x128xf32>
    %300 = arith.addf %297, %299 : vector<8x128xf32>
    %301 = arith.addf %287, %295 : vector<8x128xf32>
    %302 = arith.addf %288, %300 : vector<8x128xf32>
    %c3_81 = arith.constant 3 : index
    %c3_82 = arith.constant 3 : index
    %303 = memref.load %arg1[%c3_81, %c3_82] : memref<4x16xf32, #tpu.memory_space<smem>>
    %c3_83 = arith.constant 3 : index
    %c3_84 = arith.constant 3 : index
    %304 = memref.load %arg2[%c3_83, %c3_84] : memref<4x16xf32, #tpu.memory_space<smem>>
    %305 = vector.broadcast %303 : f32 to vector<8x128xf32>
    %306 = arith.mulf %80, %305 : vector<8x128xf32>
    %307 = vector.broadcast %304 : f32 to vector<8x128xf32>
    %308 = arith.mulf %83, %307 : vector<8x128xf32>
    %309 = arith.subf %306, %308 : vector<8x128xf32>
    %310 = vector.broadcast %304 : f32 to vector<8x128xf32>
    %311 = arith.mulf %80, %310 : vector<8x128xf32>
    %312 = vector.broadcast %303 : f32 to vector<8x128xf32>
    %313 = arith.mulf %83, %312 : vector<8x128xf32>
    %314 = arith.addf %311, %313 : vector<8x128xf32>
    %315 = arith.addf %301, %309 : vector<8x128xf32>
    %316 = arith.addf %302, %314 : vector<8x128xf32>
    %317 = arith.mulf %315, %315 : vector<8x128xf32>
    %318 = arith.mulf %316, %316 : vector<8x128xf32>
    %319 = arith.addf %317, %318 : vector<8x128xf32>
    %320 = arith.addf %259, %319 : vector<8x128xf32>
    %321 = arith.addf %260, %319 : vector<8x128xf32>
    %322 = arith.subf %261, %319 : vector<8x128xf32>
    %323 = arith.subf %262, %319 : vector<8x128xf32>
    %c0_85 = arith.constant 0 : index
    %c4 = arith.constant 4 : index
    %324 = memref.load %arg1[%c0_85, %c4] : memref<4x16xf32, #tpu.memory_space<smem>>
    %c0_86 = arith.constant 0 : index
    %c4_87 = arith.constant 4 : index
    %325 = memref.load %arg2[%c0_86, %c4_87] : memref<4x16xf32, #tpu.memory_space<smem>>
    %326 = vector.broadcast %324 : f32 to vector<8x128xf32>
    %327 = arith.mulf %62, %326 : vector<8x128xf32>
    %328 = vector.broadcast %325 : f32 to vector<8x128xf32>
    %329 = arith.mulf %65, %328 : vector<8x128xf32>
    %330 = arith.subf %327, %329 : vector<8x128xf32>
    %331 = vector.broadcast %325 : f32 to vector<8x128xf32>
    %332 = arith.mulf %62, %331 : vector<8x128xf32>
    %333 = vector.broadcast %324 : f32 to vector<8x128xf32>
    %334 = arith.mulf %65, %333 : vector<8x128xf32>
    %335 = arith.addf %332, %334 : vector<8x128xf32>
    %c1_88 = arith.constant 1 : index
    %c4_89 = arith.constant 4 : index
    %336 = memref.load %arg1[%c1_88, %c4_89] : memref<4x16xf32, #tpu.memory_space<smem>>
    %c1_90 = arith.constant 1 : index
    %c4_91 = arith.constant 4 : index
    %337 = memref.load %arg2[%c1_90, %c4_91] : memref<4x16xf32, #tpu.memory_space<smem>>
    %338 = vector.broadcast %336 : f32 to vector<8x128xf32>
    %339 = arith.mulf %68, %338 : vector<8x128xf32>
    %340 = vector.broadcast %337 : f32 to vector<8x128xf32>
    %341 = arith.mulf %71, %340 : vector<8x128xf32>
    %342 = arith.subf %339, %341 : vector<8x128xf32>
    %343 = vector.broadcast %337 : f32 to vector<8x128xf32>
    %344 = arith.mulf %68, %343 : vector<8x128xf32>
    %345 = vector.broadcast %336 : f32 to vector<8x128xf32>
    %346 = arith.mulf %71, %345 : vector<8x128xf32>
    %347 = arith.addf %344, %346 : vector<8x128xf32>
    %348 = arith.addf %330, %342 : vector<8x128xf32>
    %349 = arith.addf %335, %347 : vector<8x128xf32>
    %c2_92 = arith.constant 2 : index
    %c4_93 = arith.constant 4 : index
    %350 = memref.load %arg1[%c2_92, %c4_93] : memref<4x16xf32, #tpu.memory_space<smem>>
    %c2_94 = arith.constant 2 : index
    %c4_95 = arith.constant 4 : index
    %351 = memref.load %arg2[%c2_94, %c4_95] : memref<4x16xf32, #tpu.memory_space<smem>>
    %352 = vector.broadcast %350 : f32 to vector<8x128xf32>
    %353 = arith.mulf %74, %352 : vector<8x128xf32>
    %354 = vector.broadcast %351 : f32 to vector<8x128xf32>
    %355 = arith.mulf %77, %354 : vector<8x128xf32>
    %356 = arith.subf %353, %355 : vector<8x128xf32>
    %357 = vector.broadcast %351 : f32 to vector<8x128xf32>
    %358 = arith.mulf %74, %357 : vector<8x128xf32>
    %359 = vector.broadcast %350 : f32 to vector<8x128xf32>
    %360 = arith.mulf %77, %359 : vector<8x128xf32>
    %361 = arith.addf %358, %360 : vector<8x128xf32>
    %362 = arith.addf %348, %356 : vector<8x128xf32>
    %363 = arith.addf %349, %361 : vector<8x128xf32>
    %c3_96 = arith.constant 3 : index
    %c4_97 = arith.constant 4 : index
    %364 = memref.load %arg1[%c3_96, %c4_97] : memref<4x16xf32, #tpu.memory_space<smem>>
    %c3_98 = arith.constant 3 : index
    %c4_99 = arith.constant 4 : index
    %365 = memref.load %arg2[%c3_98, %c4_99] : memref<4x16xf32, #tpu.memory_space<smem>>
    %366 = vector.broadcast %364 : f32 to vector<8x128xf32>
    %367 = arith.mulf %80, %366 : vector<8x128xf32>
    %368 = vector.broadcast %365 : f32 to vector<8x128xf32>
    %369 = arith.mulf %83, %368 : vector<8x128xf32>
    %370 = arith.subf %367, %369 : vector<8x128xf32>
    %371 = vector.broadcast %365 : f32 to vector<8x128xf32>
    %372 = arith.mulf %80, %371 : vector<8x128xf32>
    %373 = vector.broadcast %364 : f32 to vector<8x128xf32>
    %374 = arith.mulf %83, %373 : vector<8x128xf32>
    %375 = arith.addf %372, %374 : vector<8x128xf32>
    %376 = arith.addf %362, %370 : vector<8x128xf32>
    %377 = arith.addf %363, %375 : vector<8x128xf32>
    %378 = arith.mulf %376, %376 : vector<8x128xf32>
    %379 = arith.mulf %377, %377 : vector<8x128xf32>
    %380 = arith.addf %378, %379 : vector<8x128xf32>
    %381 = arith.addf %320, %380 : vector<8x128xf32>
    %382 = arith.subf %321, %380 : vector<8x128xf32>
    %383 = arith.addf %322, %380 : vector<8x128xf32>
    %384 = arith.addf %323, %380 : vector<8x128xf32>
    %c0_100 = arith.constant 0 : index
    %c5 = arith.constant 5 : index
    %385 = memref.load %arg1[%c0_100, %c5] : memref<4x16xf32, #tpu.memory_space<smem>>
    %c0_101 = arith.constant 0 : index
    %c5_102 = arith.constant 5 : index
    %386 = memref.load %arg2[%c0_101, %c5_102] : memref<4x16xf32, #tpu.memory_space<smem>>
    %387 = vector.broadcast %385 : f32 to vector<8x128xf32>
    %388 = arith.mulf %62, %387 : vector<8x128xf32>
    %389 = vector.broadcast %386 : f32 to vector<8x128xf32>
    %390 = arith.mulf %65, %389 : vector<8x128xf32>
    %391 = arith.subf %388, %390 : vector<8x128xf32>
    %392 = vector.broadcast %386 : f32 to vector<8x128xf32>
    %393 = arith.mulf %62, %392 : vector<8x128xf32>
    %394 = vector.broadcast %385 : f32 to vector<8x128xf32>
    %395 = arith.mulf %65, %394 : vector<8x128xf32>
    %396 = arith.addf %393, %395 : vector<8x128xf32>
    %c1_103 = arith.constant 1 : index
    %c5_104 = arith.constant 5 : index
    %397 = memref.load %arg1[%c1_103, %c5_104] : memref<4x16xf32, #tpu.memory_space<smem>>
    %c1_105 = arith.constant 1 : index
    %c5_106 = arith.constant 5 : index
    %398 = memref.load %arg2[%c1_105, %c5_106] : memref<4x16xf32, #tpu.memory_space<smem>>
    %399 = vector.broadcast %397 : f32 to vector<8x128xf32>
    %400 = arith.mulf %68, %399 : vector<8x128xf32>
    %401 = vector.broadcast %398 : f32 to vector<8x128xf32>
    %402 = arith.mulf %71, %401 : vector<8x128xf32>
    %403 = arith.subf %400, %402 : vector<8x128xf32>
    %404 = vector.broadcast %398 : f32 to vector<8x128xf32>
    %405 = arith.mulf %68, %404 : vector<8x128xf32>
    %406 = vector.broadcast %397 : f32 to vector<8x128xf32>
    %407 = arith.mulf %71, %406 : vector<8x128xf32>
    %408 = arith.addf %405, %407 : vector<8x128xf32>
    %409 = arith.addf %391, %403 : vector<8x128xf32>
    %410 = arith.addf %396, %408 : vector<8x128xf32>
    %c2_107 = arith.constant 2 : index
    %c5_108 = arith.constant 5 : index
    %411 = memref.load %arg1[%c2_107, %c5_108] : memref<4x16xf32, #tpu.memory_space<smem>>
    %c2_109 = arith.constant 2 : index
    %c5_110 = arith.constant 5 : index
    %412 = memref.load %arg2[%c2_109, %c5_110] : memref<4x16xf32, #tpu.memory_space<smem>>
    %413 = vector.broadcast %411 : f32 to vector<8x128xf32>
    %414 = arith.mulf %74, %413 : vector<8x128xf32>
    %415 = vector.broadcast %412 : f32 to vector<8x128xf32>
    %416 = arith.mulf %77, %415 : vector<8x128xf32>
    %417 = arith.subf %414, %416 : vector<8x128xf32>
    %418 = vector.broadcast %412 : f32 to vector<8x128xf32>
    %419 = arith.mulf %74, %418 : vector<8x128xf32>
    %420 = vector.broadcast %411 : f32 to vector<8x128xf32>
    %421 = arith.mulf %77, %420 : vector<8x128xf32>
    %422 = arith.addf %419, %421 : vector<8x128xf32>
    %423 = arith.addf %409, %417 : vector<8x128xf32>
    %424 = arith.addf %410, %422 : vector<8x128xf32>
    %c3_111 = arith.constant 3 : index
    %c5_112 = arith.constant 5 : index
    %425 = memref.load %arg1[%c3_111, %c5_112] : memref<4x16xf32, #tpu.memory_space<smem>>
    %c3_113 = arith.constant 3 : index
    %c5_114 = arith.constant 5 : index
    %426 = memref.load %arg2[%c3_113, %c5_114] : memref<4x16xf32, #tpu.memory_space<smem>>
    %427 = vector.broadcast %425 : f32 to vector<8x128xf32>
    %428 = arith.mulf %80, %427 : vector<8x128xf32>
    %429 = vector.broadcast %426 : f32 to vector<8x128xf32>
    %430 = arith.mulf %83, %429 : vector<8x128xf32>
    %431 = arith.subf %428, %430 : vector<8x128xf32>
    %432 = vector.broadcast %426 : f32 to vector<8x128xf32>
    %433 = arith.mulf %80, %432 : vector<8x128xf32>
    %434 = vector.broadcast %425 : f32 to vector<8x128xf32>
    %435 = arith.mulf %83, %434 : vector<8x128xf32>
    %436 = arith.addf %433, %435 : vector<8x128xf32>
    %437 = arith.addf %423, %431 : vector<8x128xf32>
    %438 = arith.addf %424, %436 : vector<8x128xf32>
    %439 = arith.mulf %437, %437 : vector<8x128xf32>
    %440 = arith.mulf %438, %438 : vector<8x128xf32>
    %441 = arith.addf %439, %440 : vector<8x128xf32>
    %442 = arith.addf %381, %441 : vector<8x128xf32>
    %443 = arith.subf %382, %441 : vector<8x128xf32>
    %444 = arith.addf %383, %441 : vector<8x128xf32>
    %445 = arith.subf %384, %441 : vector<8x128xf32>
    %c0_115 = arith.constant 0 : index
    %c6 = arith.constant 6 : index
    %446 = memref.load %arg1[%c0_115, %c6] : memref<4x16xf32, #tpu.memory_space<smem>>
    %c0_116 = arith.constant 0 : index
    %c6_117 = arith.constant 6 : index
    %447 = memref.load %arg2[%c0_116, %c6_117] : memref<4x16xf32, #tpu.memory_space<smem>>
    %448 = vector.broadcast %446 : f32 to vector<8x128xf32>
    %449 = arith.mulf %62, %448 : vector<8x128xf32>
    %450 = vector.broadcast %447 : f32 to vector<8x128xf32>
    %451 = arith.mulf %65, %450 : vector<8x128xf32>
    %452 = arith.subf %449, %451 : vector<8x128xf32>
    %453 = vector.broadcast %447 : f32 to vector<8x128xf32>
    %454 = arith.mulf %62, %453 : vector<8x128xf32>
    %455 = vector.broadcast %446 : f32 to vector<8x128xf32>
    %456 = arith.mulf %65, %455 : vector<8x128xf32>
    %457 = arith.addf %454, %456 : vector<8x128xf32>
    %c1_118 = arith.constant 1 : index
    %c6_119 = arith.constant 6 : index
    %458 = memref.load %arg1[%c1_118, %c6_119] : memref<4x16xf32, #tpu.memory_space<smem>>
    %c1_120 = arith.constant 1 : index
    %c6_121 = arith.constant 6 : index
    %459 = memref.load %arg2[%c1_120, %c6_121] : memref<4x16xf32, #tpu.memory_space<smem>>
    %460 = vector.broadcast %458 : f32 to vector<8x128xf32>
    %461 = arith.mulf %68, %460 : vector<8x128xf32>
    %462 = vector.broadcast %459 : f32 to vector<8x128xf32>
    %463 = arith.mulf %71, %462 : vector<8x128xf32>
    %464 = arith.subf %461, %463 : vector<8x128xf32>
    %465 = vector.broadcast %459 : f32 to vector<8x128xf32>
    %466 = arith.mulf %68, %465 : vector<8x128xf32>
    %467 = vector.broadcast %458 : f32 to vector<8x128xf32>
    %468 = arith.mulf %71, %467 : vector<8x128xf32>
    %469 = arith.addf %466, %468 : vector<8x128xf32>
    %470 = arith.addf %452, %464 : vector<8x128xf32>
    %471 = arith.addf %457, %469 : vector<8x128xf32>
    %c2_122 = arith.constant 2 : index
    %c6_123 = arith.constant 6 : index
    %472 = memref.load %arg1[%c2_122, %c6_123] : memref<4x16xf32, #tpu.memory_space<smem>>
    %c2_124 = arith.constant 2 : index
    %c6_125 = arith.constant 6 : index
    %473 = memref.load %arg2[%c2_124, %c6_125] : memref<4x16xf32, #tpu.memory_space<smem>>
    %474 = vector.broadcast %472 : f32 to vector<8x128xf32>
    %475 = arith.mulf %74, %474 : vector<8x128xf32>
    %476 = vector.broadcast %473 : f32 to vector<8x128xf32>
    %477 = arith.mulf %77, %476 : vector<8x128xf32>
    %478 = arith.subf %475, %477 : vector<8x128xf32>
    %479 = vector.broadcast %473 : f32 to vector<8x128xf32>
    %480 = arith.mulf %74, %479 : vector<8x128xf32>
    %481 = vector.broadcast %472 : f32 to vector<8x128xf32>
    %482 = arith.mulf %77, %481 : vector<8x128xf32>
    %483 = arith.addf %480, %482 : vector<8x128xf32>
    %484 = arith.addf %470, %478 : vector<8x128xf32>
    %485 = arith.addf %471, %483 : vector<8x128xf32>
    %c3_126 = arith.constant 3 : index
    %c6_127 = arith.constant 6 : index
    %486 = memref.load %arg1[%c3_126, %c6_127] : memref<4x16xf32, #tpu.memory_space<smem>>
    %c3_128 = arith.constant 3 : index
    %c6_129 = arith.constant 6 : index
    %487 = memref.load %arg2[%c3_128, %c6_129] : memref<4x16xf32, #tpu.memory_space<smem>>
    %488 = vector.broadcast %486 : f32 to vector<8x128xf32>
    %489 = arith.mulf %80, %488 : vector<8x128xf32>
    %490 = vector.broadcast %487 : f32 to vector<8x128xf32>
    %491 = arith.mulf %83, %490 : vector<8x128xf32>
    %492 = arith.subf %489, %491 : vector<8x128xf32>
    %493 = vector.broadcast %487 : f32 to vector<8x128xf32>
    %494 = arith.mulf %80, %493 : vector<8x128xf32>
    %495 = vector.broadcast %486 : f32 to vector<8x128xf32>
    %496 = arith.mulf %83, %495 : vector<8x128xf32>
    %497 = arith.addf %494, %496 : vector<8x128xf32>
    %498 = arith.addf %484, %492 : vector<8x128xf32>
    %499 = arith.addf %485, %497 : vector<8x128xf32>
    %500 = arith.mulf %498, %498 : vector<8x128xf32>
    %501 = arith.mulf %499, %499 : vector<8x128xf32>
    %502 = arith.addf %500, %501 : vector<8x128xf32>
    %503 = arith.addf %442, %502 : vector<8x128xf32>
    %504 = arith.subf %443, %502 : vector<8x128xf32>
    %505 = arith.subf %444, %502 : vector<8x128xf32>
    %506 = arith.addf %445, %502 : vector<8x128xf32>
    %c0_130 = arith.constant 0 : index
    %c7 = arith.constant 7 : index
    %507 = memref.load %arg1[%c0_130, %c7] : memref<4x16xf32, #tpu.memory_space<smem>>
    %c0_131 = arith.constant 0 : index
    %c7_132 = arith.constant 7 : index
    %508 = memref.load %arg2[%c0_131, %c7_132] : memref<4x16xf32, #tpu.memory_space<smem>>
    %509 = vector.broadcast %507 : f32 to vector<8x128xf32>
    %510 = arith.mulf %62, %509 : vector<8x128xf32>
    %511 = vector.broadcast %508 : f32 to vector<8x128xf32>
    %512 = arith.mulf %65, %511 : vector<8x128xf32>
    %513 = arith.subf %510, %512 : vector<8x128xf32>
    %514 = vector.broadcast %508 : f32 to vector<8x128xf32>
    %515 = arith.mulf %62, %514 : vector<8x128xf32>
    %516 = vector.broadcast %507 : f32 to vector<8x128xf32>
    %517 = arith.mulf %65, %516 : vector<8x128xf32>
    %518 = arith.addf %515, %517 : vector<8x128xf32>
    %c1_133 = arith.constant 1 : index
    %c7_134 = arith.constant 7 : index
    %519 = memref.load %arg1[%c1_133, %c7_134] : memref<4x16xf32, #tpu.memory_space<smem>>
    %c1_135 = arith.constant 1 : index
    %c7_136 = arith.constant 7 : index
    %520 = memref.load %arg2[%c1_135, %c7_136] : memref<4x16xf32, #tpu.memory_space<smem>>
    %521 = vector.broadcast %519 : f32 to vector<8x128xf32>
    %522 = arith.mulf %68, %521 : vector<8x128xf32>
    %523 = vector.broadcast %520 : f32 to vector<8x128xf32>
    %524 = arith.mulf %71, %523 : vector<8x128xf32>
    %525 = arith.subf %522, %524 : vector<8x128xf32>
    %526 = vector.broadcast %520 : f32 to vector<8x128xf32>
    %527 = arith.mulf %68, %526 : vector<8x128xf32>
    %528 = vector.broadcast %519 : f32 to vector<8x128xf32>
    %529 = arith.mulf %71, %528 : vector<8x128xf32>
    %530 = arith.addf %527, %529 : vector<8x128xf32>
    %531 = arith.addf %513, %525 : vector<8x128xf32>
    %532 = arith.addf %518, %530 : vector<8x128xf32>
    %c2_137 = arith.constant 2 : index
    %c7_138 = arith.constant 7 : index
    %533 = memref.load %arg1[%c2_137, %c7_138] : memref<4x16xf32, #tpu.memory_space<smem>>
    %c2_139 = arith.constant 2 : index
    %c7_140 = arith.constant 7 : index
    %534 = memref.load %arg2[%c2_139, %c7_140] : memref<4x16xf32, #tpu.memory_space<smem>>
    %535 = vector.broadcast %533 : f32 to vector<8x128xf32>
    %536 = arith.mulf %74, %535 : vector<8x128xf32>
    %537 = vector.broadcast %534 : f32 to vector<8x128xf32>
    %538 = arith.mulf %77, %537 : vector<8x128xf32>
    %539 = arith.subf %536, %538 : vector<8x128xf32>
    %540 = vector.broadcast %534 : f32 to vector<8x128xf32>
    %541 = arith.mulf %74, %540 : vector<8x128xf32>
    %542 = vector.broadcast %533 : f32 to vector<8x128xf32>
    %543 = arith.mulf %77, %542 : vector<8x128xf32>
    %544 = arith.addf %541, %543 : vector<8x128xf32>
    %545 = arith.addf %531, %539 : vector<8x128xf32>
    %546 = arith.addf %532, %544 : vector<8x128xf32>
    %c3_141 = arith.constant 3 : index
    %c7_142 = arith.constant 7 : index
    %547 = memref.load %arg1[%c3_141, %c7_142] : memref<4x16xf32, #tpu.memory_space<smem>>
    %c3_143 = arith.constant 3 : index
    %c7_144 = arith.constant 7 : index
    %548 = memref.load %arg2[%c3_143, %c7_144] : memref<4x16xf32, #tpu.memory_space<smem>>
    %549 = vector.broadcast %547 : f32 to vector<8x128xf32>
    %550 = arith.mulf %80, %549 : vector<8x128xf32>
    %551 = vector.broadcast %548 : f32 to vector<8x128xf32>
    %552 = arith.mulf %83, %551 : vector<8x128xf32>
    %553 = arith.subf %550, %552 : vector<8x128xf32>
    %554 = vector.broadcast %548 : f32 to vector<8x128xf32>
    %555 = arith.mulf %80, %554 : vector<8x128xf32>
    %556 = vector.broadcast %547 : f32 to vector<8x128xf32>
    %557 = arith.mulf %83, %556 : vector<8x128xf32>
    %558 = arith.addf %555, %557 : vector<8x128xf32>
    %559 = arith.addf %545, %553 : vector<8x128xf32>
    %560 = arith.addf %546, %558 : vector<8x128xf32>
    %561 = arith.mulf %559, %559 : vector<8x128xf32>
    %562 = arith.mulf %560, %560 : vector<8x128xf32>
    %563 = arith.addf %561, %562 : vector<8x128xf32>
    %564 = arith.addf %503, %563 : vector<8x128xf32>
    %565 = arith.subf %504, %563 : vector<8x128xf32>
    %566 = arith.subf %505, %563 : vector<8x128xf32>
    %567 = arith.subf %506, %563 : vector<8x128xf32>
    %c0_145 = arith.constant 0 : index
    %c8 = arith.constant 8 : index
    %568 = memref.load %arg1[%c0_145, %c8] : memref<4x16xf32, #tpu.memory_space<smem>>
    %c0_146 = arith.constant 0 : index
    %c8_147 = arith.constant 8 : index
    %569 = memref.load %arg2[%c0_146, %c8_147] : memref<4x16xf32, #tpu.memory_space<smem>>
    %570 = vector.broadcast %568 : f32 to vector<8x128xf32>
    %571 = arith.mulf %62, %570 : vector<8x128xf32>
    %572 = vector.broadcast %569 : f32 to vector<8x128xf32>
    %573 = arith.mulf %65, %572 : vector<8x128xf32>
    %574 = arith.subf %571, %573 : vector<8x128xf32>
    %575 = vector.broadcast %569 : f32 to vector<8x128xf32>
    %576 = arith.mulf %62, %575 : vector<8x128xf32>
    %577 = vector.broadcast %568 : f32 to vector<8x128xf32>
    %578 = arith.mulf %65, %577 : vector<8x128xf32>
    %579 = arith.addf %576, %578 : vector<8x128xf32>
    %c1_148 = arith.constant 1 : index
    %c8_149 = arith.constant 8 : index
    %580 = memref.load %arg1[%c1_148, %c8_149] : memref<4x16xf32, #tpu.memory_space<smem>>
    %c1_150 = arith.constant 1 : index
    %c8_151 = arith.constant 8 : index
    %581 = memref.load %arg2[%c1_150, %c8_151] : memref<4x16xf32, #tpu.memory_space<smem>>
    %582 = vector.broadcast %580 : f32 to vector<8x128xf32>
    %583 = arith.mulf %68, %582 : vector<8x128xf32>
    %584 = vector.broadcast %581 : f32 to vector<8x128xf32>
    %585 = arith.mulf %71, %584 : vector<8x128xf32>
    %586 = arith.subf %583, %585 : vector<8x128xf32>
    %587 = vector.broadcast %581 : f32 to vector<8x128xf32>
    %588 = arith.mulf %68, %587 : vector<8x128xf32>
    %589 = vector.broadcast %580 : f32 to vector<8x128xf32>
    %590 = arith.mulf %71, %589 : vector<8x128xf32>
    %591 = arith.addf %588, %590 : vector<8x128xf32>
    %592 = arith.addf %574, %586 : vector<8x128xf32>
    %593 = arith.addf %579, %591 : vector<8x128xf32>
    %c2_152 = arith.constant 2 : index
    %c8_153 = arith.constant 8 : index
    %594 = memref.load %arg1[%c2_152, %c8_153] : memref<4x16xf32, #tpu.memory_space<smem>>
    %c2_154 = arith.constant 2 : index
    %c8_155 = arith.constant 8 : index
    %595 = memref.load %arg2[%c2_154, %c8_155] : memref<4x16xf32, #tpu.memory_space<smem>>
    %596 = vector.broadcast %594 : f32 to vector<8x128xf32>
    %597 = arith.mulf %74, %596 : vector<8x128xf32>
    %598 = vector.broadcast %595 : f32 to vector<8x128xf32>
    %599 = arith.mulf %77, %598 : vector<8x128xf32>
    %600 = arith.subf %597, %599 : vector<8x128xf32>
    %601 = vector.broadcast %595 : f32 to vector<8x128xf32>
    %602 = arith.mulf %74, %601 : vector<8x128xf32>
    %603 = vector.broadcast %594 : f32 to vector<8x128xf32>
    %604 = arith.mulf %77, %603 : vector<8x128xf32>
    %605 = arith.addf %602, %604 : vector<8x128xf32>
    %606 = arith.addf %592, %600 : vector<8x128xf32>
    %607 = arith.addf %593, %605 : vector<8x128xf32>
    %c3_156 = arith.constant 3 : index
    %c8_157 = arith.constant 8 : index
    %608 = memref.load %arg1[%c3_156, %c8_157] : memref<4x16xf32, #tpu.memory_space<smem>>
    %c3_158 = arith.constant 3 : index
    %c8_159 = arith.constant 8 : index
    %609 = memref.load %arg2[%c3_158, %c8_159] : memref<4x16xf32, #tpu.memory_space<smem>>
    %610 = vector.broadcast %608 : f32 to vector<8x128xf32>
    %611 = arith.mulf %80, %610 : vector<8x128xf32>
    %612 = vector.broadcast %609 : f32 to vector<8x128xf32>
    %613 = arith.mulf %83, %612 : vector<8x128xf32>
    %614 = arith.subf %611, %613 : vector<8x128xf32>
    %615 = vector.broadcast %609 : f32 to vector<8x128xf32>
    %616 = arith.mulf %80, %615 : vector<8x128xf32>
    %617 = vector.broadcast %608 : f32 to vector<8x128xf32>
    %618 = arith.mulf %83, %617 : vector<8x128xf32>
    %619 = arith.addf %616, %618 : vector<8x128xf32>
    %620 = arith.addf %606, %614 : vector<8x128xf32>
    %621 = arith.addf %607, %619 : vector<8x128xf32>
    %622 = arith.mulf %620, %620 : vector<8x128xf32>
    %623 = arith.mulf %621, %621 : vector<8x128xf32>
    %624 = arith.addf %622, %623 : vector<8x128xf32>
    %625 = arith.subf %564, %624 : vector<8x128xf32>
    %626 = arith.addf %565, %624 : vector<8x128xf32>
    %627 = arith.addf %566, %624 : vector<8x128xf32>
    %628 = arith.addf %567, %624 : vector<8x128xf32>
    %c0_160 = arith.constant 0 : index
    %c9 = arith.constant 9 : index
    %629 = memref.load %arg1[%c0_160, %c9] : memref<4x16xf32, #tpu.memory_space<smem>>
    %c0_161 = arith.constant 0 : index
    %c9_162 = arith.constant 9 : index
    %630 = memref.load %arg2[%c0_161, %c9_162] : memref<4x16xf32, #tpu.memory_space<smem>>
    %631 = vector.broadcast %629 : f32 to vector<8x128xf32>
    %632 = arith.mulf %62, %631 : vector<8x128xf32>
    %633 = vector.broadcast %630 : f32 to vector<8x128xf32>
    %634 = arith.mulf %65, %633 : vector<8x128xf32>
    %635 = arith.subf %632, %634 : vector<8x128xf32>
    %636 = vector.broadcast %630 : f32 to vector<8x128xf32>
    %637 = arith.mulf %62, %636 : vector<8x128xf32>
    %638 = vector.broadcast %629 : f32 to vector<8x128xf32>
    %639 = arith.mulf %65, %638 : vector<8x128xf32>
    %640 = arith.addf %637, %639 : vector<8x128xf32>
    %c1_163 = arith.constant 1 : index
    %c9_164 = arith.constant 9 : index
    %641 = memref.load %arg1[%c1_163, %c9_164] : memref<4x16xf32, #tpu.memory_space<smem>>
    %c1_165 = arith.constant 1 : index
    %c9_166 = arith.constant 9 : index
    %642 = memref.load %arg2[%c1_165, %c9_166] : memref<4x16xf32, #tpu.memory_space<smem>>
    %643 = vector.broadcast %641 : f32 to vector<8x128xf32>
    %644 = arith.mulf %68, %643 : vector<8x128xf32>
    %645 = vector.broadcast %642 : f32 to vector<8x128xf32>
    %646 = arith.mulf %71, %645 : vector<8x128xf32>
    %647 = arith.subf %644, %646 : vector<8x128xf32>
    %648 = vector.broadcast %642 : f32 to vector<8x128xf32>
    %649 = arith.mulf %68, %648 : vector<8x128xf32>
    %650 = vector.broadcast %641 : f32 to vector<8x128xf32>
    %651 = arith.mulf %71, %650 : vector<8x128xf32>
    %652 = arith.addf %649, %651 : vector<8x128xf32>
    %653 = arith.addf %635, %647 : vector<8x128xf32>
    %654 = arith.addf %640, %652 : vector<8x128xf32>
    %c2_167 = arith.constant 2 : index
    %c9_168 = arith.constant 9 : index
    %655 = memref.load %arg1[%c2_167, %c9_168] : memref<4x16xf32, #tpu.memory_space<smem>>
    %c2_169 = arith.constant 2 : index
    %c9_170 = arith.constant 9 : index
    %656 = memref.load %arg2[%c2_169, %c9_170] : memref<4x16xf32, #tpu.memory_space<smem>>
    %657 = vector.broadcast %655 : f32 to vector<8x128xf32>
    %658 = arith.mulf %74, %657 : vector<8x128xf32>
    %659 = vector.broadcast %656 : f32 to vector<8x128xf32>
    %660 = arith.mulf %77, %659 : vector<8x128xf32>
    %661 = arith.subf %658, %660 : vector<8x128xf32>
    %662 = vector.broadcast %656 : f32 to vector<8x128xf32>
    %663 = arith.mulf %74, %662 : vector<8x128xf32>
    %664 = vector.broadcast %655 : f32 to vector<8x128xf32>
    %665 = arith.mulf %77, %664 : vector<8x128xf32>
    %666 = arith.addf %663, %665 : vector<8x128xf32>
    %667 = arith.addf %653, %661 : vector<8x128xf32>
    %668 = arith.addf %654, %666 : vector<8x128xf32>
    %c3_171 = arith.constant 3 : index
    %c9_172 = arith.constant 9 : index
    %669 = memref.load %arg1[%c3_171, %c9_172] : memref<4x16xf32, #tpu.memory_space<smem>>
    %c3_173 = arith.constant 3 : index
    %c9_174 = arith.constant 9 : index
    %670 = memref.load %arg2[%c3_173, %c9_174] : memref<4x16xf32, #tpu.memory_space<smem>>
    %671 = vector.broadcast %669 : f32 to vector<8x128xf32>
    %672 = arith.mulf %80, %671 : vector<8x128xf32>
    %673 = vector.broadcast %670 : f32 to vector<8x128xf32>
    %674 = arith.mulf %83, %673 : vector<8x128xf32>
    %675 = arith.subf %672, %674 : vector<8x128xf32>
    %676 = vector.broadcast %670 : f32 to vector<8x128xf32>
    %677 = arith.mulf %80, %676 : vector<8x128xf32>
    %678 = vector.broadcast %669 : f32 to vector<8x128xf32>
    %679 = arith.mulf %83, %678 : vector<8x128xf32>
    %680 = arith.addf %677, %679 : vector<8x128xf32>
    %681 = arith.addf %667, %675 : vector<8x128xf32>
    %682 = arith.addf %668, %680 : vector<8x128xf32>
    %683 = arith.mulf %681, %681 : vector<8x128xf32>
    %684 = arith.mulf %682, %682 : vector<8x128xf32>
    %685 = arith.addf %683, %684 : vector<8x128xf32>
    %686 = arith.subf %625, %685 : vector<8x128xf32>
    %687 = arith.addf %626, %685 : vector<8x128xf32>
    %688 = arith.addf %627, %685 : vector<8x128xf32>
    %689 = arith.subf %628, %685 : vector<8x128xf32>
    %c0_175 = arith.constant 0 : index
    %c10 = arith.constant 10 : index
    %690 = memref.load %arg1[%c0_175, %c10] : memref<4x16xf32, #tpu.memory_space<smem>>
    %c0_176 = arith.constant 0 : index
    %c10_177 = arith.constant 10 : index
    %691 = memref.load %arg2[%c0_176, %c10_177] : memref<4x16xf32, #tpu.memory_space<smem>>
    %692 = vector.broadcast %690 : f32 to vector<8x128xf32>
    %693 = arith.mulf %62, %692 : vector<8x128xf32>
    %694 = vector.broadcast %691 : f32 to vector<8x128xf32>
    %695 = arith.mulf %65, %694 : vector<8x128xf32>
    %696 = arith.subf %693, %695 : vector<8x128xf32>
    %697 = vector.broadcast %691 : f32 to vector<8x128xf32>
    %698 = arith.mulf %62, %697 : vector<8x128xf32>
    %699 = vector.broadcast %690 : f32 to vector<8x128xf32>
    %700 = arith.mulf %65, %699 : vector<8x128xf32>
    %701 = arith.addf %698, %700 : vector<8x128xf32>
    %c1_178 = arith.constant 1 : index
    %c10_179 = arith.constant 10 : index
    %702 = memref.load %arg1[%c1_178, %c10_179] : memref<4x16xf32, #tpu.memory_space<smem>>
    %c1_180 = arith.constant 1 : index
    %c10_181 = arith.constant 10 : index
    %703 = memref.load %arg2[%c1_180, %c10_181] : memref<4x16xf32, #tpu.memory_space<smem>>
    %704 = vector.broadcast %702 : f32 to vector<8x128xf32>
    %705 = arith.mulf %68, %704 : vector<8x128xf32>
    %706 = vector.broadcast %703 : f32 to vector<8x128xf32>
    %707 = arith.mulf %71, %706 : vector<8x128xf32>
    %708 = arith.subf %705, %707 : vector<8x128xf32>
    %709 = vector.broadcast %703 : f32 to vector<8x128xf32>
    %710 = arith.mulf %68, %709 : vector<8x128xf32>
    %711 = vector.broadcast %702 : f32 to vector<8x128xf32>
    %712 = arith.mulf %71, %711 : vector<8x128xf32>
    %713 = arith.addf %710, %712 : vector<8x128xf32>
    %714 = arith.addf %696, %708 : vector<8x128xf32>
    %715 = arith.addf %701, %713 : vector<8x128xf32>
    %c2_182 = arith.constant 2 : index
    %c10_183 = arith.constant 10 : index
    %716 = memref.load %arg1[%c2_182, %c10_183] : memref<4x16xf32, #tpu.memory_space<smem>>
    %c2_184 = arith.constant 2 : index
    %c10_185 = arith.constant 10 : index
    %717 = memref.load %arg2[%c2_184, %c10_185] : memref<4x16xf32, #tpu.memory_space<smem>>
    %718 = vector.broadcast %716 : f32 to vector<8x128xf32>
    %719 = arith.mulf %74, %718 : vector<8x128xf32>
    %720 = vector.broadcast %717 : f32 to vector<8x128xf32>
    %721 = arith.mulf %77, %720 : vector<8x128xf32>
    %722 = arith.subf %719, %721 : vector<8x128xf32>
    %723 = vector.broadcast %717 : f32 to vector<8x128xf32>
    %724 = arith.mulf %74, %723 : vector<8x128xf32>
    %725 = vector.broadcast %716 : f32 to vector<8x128xf32>
    %726 = arith.mulf %77, %725 : vector<8x128xf32>
    %727 = arith.addf %724, %726 : vector<8x128xf32>
    %728 = arith.addf %714, %722 : vector<8x128xf32>
    %729 = arith.addf %715, %727 : vector<8x128xf32>
    %c3_186 = arith.constant 3 : index
    %c10_187 = arith.constant 10 : index
    %730 = memref.load %arg1[%c3_186, %c10_187] : memref<4x16xf32, #tpu.memory_space<smem>>
    %c3_188 = arith.constant 3 : index
    %c10_189 = arith.constant 10 : index
    %731 = memref.load %arg2[%c3_188, %c10_189] : memref<4x16xf32, #tpu.memory_space<smem>>
    %732 = vector.broadcast %730 : f32 to vector<8x128xf32>
    %733 = arith.mulf %80, %732 : vector<8x128xf32>
    %734 = vector.broadcast %731 : f32 to vector<8x128xf32>
    %735 = arith.mulf %83, %734 : vector<8x128xf32>
    %736 = arith.subf %733, %735 : vector<8x128xf32>
    %737 = vector.broadcast %731 : f32 to vector<8x128xf32>
    %738 = arith.mulf %80, %737 : vector<8x128xf32>
    %739 = vector.broadcast %730 : f32 to vector<8x128xf32>
    %740 = arith.mulf %83, %739 : vector<8x128xf32>
    %741 = arith.addf %738, %740 : vector<8x128xf32>
    %742 = arith.addf %728, %736 : vector<8x128xf32>
    %743 = arith.addf %729, %741 : vector<8x128xf32>
    %744 = arith.mulf %742, %742 : vector<8x128xf32>
    %745 = arith.mulf %743, %743 : vector<8x128xf32>
    %746 = arith.addf %744, %745 : vector<8x128xf32>
    %747 = arith.subf %686, %746 : vector<8x128xf32>
    %748 = arith.addf %687, %746 : vector<8x128xf32>
    %749 = arith.subf %688, %746 : vector<8x128xf32>
    %750 = arith.addf %689, %746 : vector<8x128xf32>
    %c0_190 = arith.constant 0 : index
    %c11 = arith.constant 11 : index
    %751 = memref.load %arg1[%c0_190, %c11] : memref<4x16xf32, #tpu.memory_space<smem>>
    %c0_191 = arith.constant 0 : index
    %c11_192 = arith.constant 11 : index
    %752 = memref.load %arg2[%c0_191, %c11_192] : memref<4x16xf32, #tpu.memory_space<smem>>
    %753 = vector.broadcast %751 : f32 to vector<8x128xf32>
    %754 = arith.mulf %62, %753 : vector<8x128xf32>
    %755 = vector.broadcast %752 : f32 to vector<8x128xf32>
    %756 = arith.mulf %65, %755 : vector<8x128xf32>
    %757 = arith.subf %754, %756 : vector<8x128xf32>
    %758 = vector.broadcast %752 : f32 to vector<8x128xf32>
    %759 = arith.mulf %62, %758 : vector<8x128xf32>
    %760 = vector.broadcast %751 : f32 to vector<8x128xf32>
    %761 = arith.mulf %65, %760 : vector<8x128xf32>
    %762 = arith.addf %759, %761 : vector<8x128xf32>
    %c1_193 = arith.constant 1 : index
    %c11_194 = arith.constant 11 : index
    %763 = memref.load %arg1[%c1_193, %c11_194] : memref<4x16xf32, #tpu.memory_space<smem>>
    %c1_195 = arith.constant 1 : index
    %c11_196 = arith.constant 11 : index
    %764 = memref.load %arg2[%c1_195, %c11_196] : memref<4x16xf32, #tpu.memory_space<smem>>
    %765 = vector.broadcast %763 : f32 to vector<8x128xf32>
    %766 = arith.mulf %68, %765 : vector<8x128xf32>
    %767 = vector.broadcast %764 : f32 to vector<8x128xf32>
    %768 = arith.mulf %71, %767 : vector<8x128xf32>
    %769 = arith.subf %766, %768 : vector<8x128xf32>
    %770 = vector.broadcast %764 : f32 to vector<8x128xf32>
    %771 = arith.mulf %68, %770 : vector<8x128xf32>
    %772 = vector.broadcast %763 : f32 to vector<8x128xf32>
    %773 = arith.mulf %71, %772 : vector<8x128xf32>
    %774 = arith.addf %771, %773 : vector<8x128xf32>
    %775 = arith.addf %757, %769 : vector<8x128xf32>
    %776 = arith.addf %762, %774 : vector<8x128xf32>
    %c2_197 = arith.constant 2 : index
    %c11_198 = arith.constant 11 : index
    %777 = memref.load %arg1[%c2_197, %c11_198] : memref<4x16xf32, #tpu.memory_space<smem>>
    %c2_199 = arith.constant 2 : index
    %c11_200 = arith.constant 11 : index
    %778 = memref.load %arg2[%c2_199, %c11_200] : memref<4x16xf32, #tpu.memory_space<smem>>
    %779 = vector.broadcast %777 : f32 to vector<8x128xf32>
    %780 = arith.mulf %74, %779 : vector<8x128xf32>
    %781 = vector.broadcast %778 : f32 to vector<8x128xf32>
    %782 = arith.mulf %77, %781 : vector<8x128xf32>
    %783 = arith.subf %780, %782 : vector<8x128xf32>
    %784 = vector.broadcast %778 : f32 to vector<8x128xf32>
    %785 = arith.mulf %74, %784 : vector<8x128xf32>
    %786 = vector.broadcast %777 : f32 to vector<8x128xf32>
    %787 = arith.mulf %77, %786 : vector<8x128xf32>
    %788 = arith.addf %785, %787 : vector<8x128xf32>
    %789 = arith.addf %775, %783 : vector<8x128xf32>
    %790 = arith.addf %776, %788 : vector<8x128xf32>
    %c3_201 = arith.constant 3 : index
    %c11_202 = arith.constant 11 : index
    %791 = memref.load %arg1[%c3_201, %c11_202] : memref<4x16xf32, #tpu.memory_space<smem>>
    %c3_203 = arith.constant 3 : index
    %c11_204 = arith.constant 11 : index
    %792 = memref.load %arg2[%c3_203, %c11_204] : memref<4x16xf32, #tpu.memory_space<smem>>
    %793 = vector.broadcast %791 : f32 to vector<8x128xf32>
    %794 = arith.mulf %80, %793 : vector<8x128xf32>
    %795 = vector.broadcast %792 : f32 to vector<8x128xf32>
    %796 = arith.mulf %83, %795 : vector<8x128xf32>
    %797 = arith.subf %794, %796 : vector<8x128xf32>
    %798 = vector.broadcast %792 : f32 to vector<8x128xf32>
    %799 = arith.mulf %80, %798 : vector<8x128xf32>
    %800 = vector.broadcast %791 : f32 to vector<8x128xf32>
    %801 = arith.mulf %83, %800 : vector<8x128xf32>
    %802 = arith.addf %799, %801 : vector<8x128xf32>
    %803 = arith.addf %789, %797 : vector<8x128xf32>
    %804 = arith.addf %790, %802 : vector<8x128xf32>
    %805 = arith.mulf %803, %803 : vector<8x128xf32>
    %806 = arith.mulf %804, %804 : vector<8x128xf32>
    %807 = arith.addf %805, %806 : vector<8x128xf32>
    %808 = arith.subf %747, %807 : vector<8x128xf32>
    %809 = arith.addf %748, %807 : vector<8x128xf32>
    %810 = arith.subf %749, %807 : vector<8x128xf32>
    %811 = arith.subf %750, %807 : vector<8x128xf32>
    %c0_205 = arith.constant 0 : index
    %c12 = arith.constant 12 : index
    %812 = memref.load %arg1[%c0_205, %c12] : memref<4x16xf32, #tpu.memory_space<smem>>
    %c0_206 = arith.constant 0 : index
    %c12_207 = arith.constant 12 : index
    %813 = memref.load %arg2[%c0_206, %c12_207] : memref<4x16xf32, #tpu.memory_space<smem>>
    %814 = vector.broadcast %812 : f32 to vector<8x128xf32>
    %815 = arith.mulf %62, %814 : vector<8x128xf32>
    %816 = vector.broadcast %813 : f32 to vector<8x128xf32>
    %817 = arith.mulf %65, %816 : vector<8x128xf32>
    %818 = arith.subf %815, %817 : vector<8x128xf32>
    %819 = vector.broadcast %813 : f32 to vector<8x128xf32>
    %820 = arith.mulf %62, %819 : vector<8x128xf32>
    %821 = vector.broadcast %812 : f32 to vector<8x128xf32>
    %822 = arith.mulf %65, %821 : vector<8x128xf32>
    %823 = arith.addf %820, %822 : vector<8x128xf32>
    %c1_208 = arith.constant 1 : index
    %c12_209 = arith.constant 12 : index
    %824 = memref.load %arg1[%c1_208, %c12_209] : memref<4x16xf32, #tpu.memory_space<smem>>
    %c1_210 = arith.constant 1 : index
    %c12_211 = arith.constant 12 : index
    %825 = memref.load %arg2[%c1_210, %c12_211] : memref<4x16xf32, #tpu.memory_space<smem>>
    %826 = vector.broadcast %824 : f32 to vector<8x128xf32>
    %827 = arith.mulf %68, %826 : vector<8x128xf32>
    %828 = vector.broadcast %825 : f32 to vector<8x128xf32>
    %829 = arith.mulf %71, %828 : vector<8x128xf32>
    %830 = arith.subf %827, %829 : vector<8x128xf32>
    %831 = vector.broadcast %825 : f32 to vector<8x128xf32>
    %832 = arith.mulf %68, %831 : vector<8x128xf32>
    %833 = vector.broadcast %824 : f32 to vector<8x128xf32>
    %834 = arith.mulf %71, %833 : vector<8x128xf32>
    %835 = arith.addf %832, %834 : vector<8x128xf32>
    %836 = arith.addf %818, %830 : vector<8x128xf32>
    %837 = arith.addf %823, %835 : vector<8x128xf32>
    %c2_212 = arith.constant 2 : index
    %c12_213 = arith.constant 12 : index
    %838 = memref.load %arg1[%c2_212, %c12_213] : memref<4x16xf32, #tpu.memory_space<smem>>
    %c2_214 = arith.constant 2 : index
    %c12_215 = arith.constant 12 : index
    %839 = memref.load %arg2[%c2_214, %c12_215] : memref<4x16xf32, #tpu.memory_space<smem>>
    %840 = vector.broadcast %838 : f32 to vector<8x128xf32>
    %841 = arith.mulf %74, %840 : vector<8x128xf32>
    %842 = vector.broadcast %839 : f32 to vector<8x128xf32>
    %843 = arith.mulf %77, %842 : vector<8x128xf32>
    %844 = arith.subf %841, %843 : vector<8x128xf32>
    %845 = vector.broadcast %839 : f32 to vector<8x128xf32>
    %846 = arith.mulf %74, %845 : vector<8x128xf32>
    %847 = vector.broadcast %838 : f32 to vector<8x128xf32>
    %848 = arith.mulf %77, %847 : vector<8x128xf32>
    %849 = arith.addf %846, %848 : vector<8x128xf32>
    %850 = arith.addf %836, %844 : vector<8x128xf32>
    %851 = arith.addf %837, %849 : vector<8x128xf32>
    %c3_216 = arith.constant 3 : index
    %c12_217 = arith.constant 12 : index
    %852 = memref.load %arg1[%c3_216, %c12_217] : memref<4x16xf32, #tpu.memory_space<smem>>
    %c3_218 = arith.constant 3 : index
    %c12_219 = arith.constant 12 : index
    %853 = memref.load %arg2[%c3_218, %c12_219] : memref<4x16xf32, #tpu.memory_space<smem>>
    %854 = vector.broadcast %852 : f32 to vector<8x128xf32>
    %855 = arith.mulf %80, %854 : vector<8x128xf32>
    %856 = vector.broadcast %853 : f32 to vector<8x128xf32>
    %857 = arith.mulf %83, %856 : vector<8x128xf32>
    %858 = arith.subf %855, %857 : vector<8x128xf32>
    %859 = vector.broadcast %853 : f32 to vector<8x128xf32>
    %860 = arith.mulf %80, %859 : vector<8x128xf32>
    %861 = vector.broadcast %852 : f32 to vector<8x128xf32>
    %862 = arith.mulf %83, %861 : vector<8x128xf32>
    %863 = arith.addf %860, %862 : vector<8x128xf32>
    %864 = arith.addf %850, %858 : vector<8x128xf32>
    %865 = arith.addf %851, %863 : vector<8x128xf32>
    %866 = arith.mulf %864, %864 : vector<8x128xf32>
    %867 = arith.mulf %865, %865 : vector<8x128xf32>
    %868 = arith.addf %866, %867 : vector<8x128xf32>
    %869 = arith.subf %808, %868 : vector<8x128xf32>
    %870 = arith.subf %809, %868 : vector<8x128xf32>
    %871 = arith.addf %810, %868 : vector<8x128xf32>
    %872 = arith.addf %811, %868 : vector<8x128xf32>
    %c0_220 = arith.constant 0 : index
    %c13 = arith.constant 13 : index
    %873 = memref.load %arg1[%c0_220, %c13] : memref<4x16xf32, #tpu.memory_space<smem>>
    %c0_221 = arith.constant 0 : index
    %c13_222 = arith.constant 13 : index
    %874 = memref.load %arg2[%c0_221, %c13_222] : memref<4x16xf32, #tpu.memory_space<smem>>
    %875 = vector.broadcast %873 : f32 to vector<8x128xf32>
    %876 = arith.mulf %62, %875 : vector<8x128xf32>
    %877 = vector.broadcast %874 : f32 to vector<8x128xf32>
    %878 = arith.mulf %65, %877 : vector<8x128xf32>
    %879 = arith.subf %876, %878 : vector<8x128xf32>
    %880 = vector.broadcast %874 : f32 to vector<8x128xf32>
    %881 = arith.mulf %62, %880 : vector<8x128xf32>
    %882 = vector.broadcast %873 : f32 to vector<8x128xf32>
    %883 = arith.mulf %65, %882 : vector<8x128xf32>
    %884 = arith.addf %881, %883 : vector<8x128xf32>
    %c1_223 = arith.constant 1 : index
    %c13_224 = arith.constant 13 : index
    %885 = memref.load %arg1[%c1_223, %c13_224] : memref<4x16xf32, #tpu.memory_space<smem>>
    %c1_225 = arith.constant 1 : index
    %c13_226 = arith.constant 13 : index
    %886 = memref.load %arg2[%c1_225, %c13_226] : memref<4x16xf32, #tpu.memory_space<smem>>
    %887 = vector.broadcast %885 : f32 to vector<8x128xf32>
    %888 = arith.mulf %68, %887 : vector<8x128xf32>
    %889 = vector.broadcast %886 : f32 to vector<8x128xf32>
    %890 = arith.mulf %71, %889 : vector<8x128xf32>
    %891 = arith.subf %888, %890 : vector<8x128xf32>
    %892 = vector.broadcast %886 : f32 to vector<8x128xf32>
    %893 = arith.mulf %68, %892 : vector<8x128xf32>
    %894 = vector.broadcast %885 : f32 to vector<8x128xf32>
    %895 = arith.mulf %71, %894 : vector<8x128xf32>
    %896 = arith.addf %893, %895 : vector<8x128xf32>
    %897 = arith.addf %879, %891 : vector<8x128xf32>
    %898 = arith.addf %884, %896 : vector<8x128xf32>
    %c2_227 = arith.constant 2 : index
    %c13_228 = arith.constant 13 : index
    %899 = memref.load %arg1[%c2_227, %c13_228] : memref<4x16xf32, #tpu.memory_space<smem>>
    %c2_229 = arith.constant 2 : index
    %c13_230 = arith.constant 13 : index
    %900 = memref.load %arg2[%c2_229, %c13_230] : memref<4x16xf32, #tpu.memory_space<smem>>
    %901 = vector.broadcast %899 : f32 to vector<8x128xf32>
    %902 = arith.mulf %74, %901 : vector<8x128xf32>
    %903 = vector.broadcast %900 : f32 to vector<8x128xf32>
    %904 = arith.mulf %77, %903 : vector<8x128xf32>
    %905 = arith.subf %902, %904 : vector<8x128xf32>
    %906 = vector.broadcast %900 : f32 to vector<8x128xf32>
    %907 = arith.mulf %74, %906 : vector<8x128xf32>
    %908 = vector.broadcast %899 : f32 to vector<8x128xf32>
    %909 = arith.mulf %77, %908 : vector<8x128xf32>
    %910 = arith.addf %907, %909 : vector<8x128xf32>
    %911 = arith.addf %897, %905 : vector<8x128xf32>
    %912 = arith.addf %898, %910 : vector<8x128xf32>
    %c3_231 = arith.constant 3 : index
    %c13_232 = arith.constant 13 : index
    %913 = memref.load %arg1[%c3_231, %c13_232] : memref<4x16xf32, #tpu.memory_space<smem>>
    %c3_233 = arith.constant 3 : index
    %c13_234 = arith.constant 13 : index
    %914 = memref.load %arg2[%c3_233, %c13_234] : memref<4x16xf32, #tpu.memory_space<smem>>
    %915 = vector.broadcast %913 : f32 to vector<8x128xf32>
    %916 = arith.mulf %80, %915 : vector<8x128xf32>
    %917 = vector.broadcast %914 : f32 to vector<8x128xf32>
    %918 = arith.mulf %83, %917 : vector<8x128xf32>
    %919 = arith.subf %916, %918 : vector<8x128xf32>
    %920 = vector.broadcast %914 : f32 to vector<8x128xf32>
    %921 = arith.mulf %80, %920 : vector<8x128xf32>
    %922 = vector.broadcast %913 : f32 to vector<8x128xf32>
    %923 = arith.mulf %83, %922 : vector<8x128xf32>
    %924 = arith.addf %921, %923 : vector<8x128xf32>
    %925 = arith.addf %911, %919 : vector<8x128xf32>
    %926 = arith.addf %912, %924 : vector<8x128xf32>
    %927 = arith.mulf %925, %925 : vector<8x128xf32>
    %928 = arith.mulf %926, %926 : vector<8x128xf32>
    %929 = arith.addf %927, %928 : vector<8x128xf32>
    %930 = arith.subf %869, %929 : vector<8x128xf32>
    %931 = arith.subf %870, %929 : vector<8x128xf32>
    %932 = arith.addf %871, %929 : vector<8x128xf32>
    %933 = arith.subf %872, %929 : vector<8x128xf32>
    %c0_235 = arith.constant 0 : index
    %c14 = arith.constant 14 : index
    %934 = memref.load %arg1[%c0_235, %c14] : memref<4x16xf32, #tpu.memory_space<smem>>
    %c0_236 = arith.constant 0 : index
    %c14_237 = arith.constant 14 : index
    %935 = memref.load %arg2[%c0_236, %c14_237] : memref<4x16xf32, #tpu.memory_space<smem>>
    %936 = vector.broadcast %934 : f32 to vector<8x128xf32>
    %937 = arith.mulf %62, %936 : vector<8x128xf32>
    %938 = vector.broadcast %935 : f32 to vector<8x128xf32>
    %939 = arith.mulf %65, %938 : vector<8x128xf32>
    %940 = arith.subf %937, %939 : vector<8x128xf32>
    %941 = vector.broadcast %935 : f32 to vector<8x128xf32>
    %942 = arith.mulf %62, %941 : vector<8x128xf32>
    %943 = vector.broadcast %934 : f32 to vector<8x128xf32>
    %944 = arith.mulf %65, %943 : vector<8x128xf32>
    %945 = arith.addf %942, %944 : vector<8x128xf32>
    %c1_238 = arith.constant 1 : index
    %c14_239 = arith.constant 14 : index
    %946 = memref.load %arg1[%c1_238, %c14_239] : memref<4x16xf32, #tpu.memory_space<smem>>
    %c1_240 = arith.constant 1 : index
    %c14_241 = arith.constant 14 : index
    %947 = memref.load %arg2[%c1_240, %c14_241] : memref<4x16xf32, #tpu.memory_space<smem>>
    %948 = vector.broadcast %946 : f32 to vector<8x128xf32>
    %949 = arith.mulf %68, %948 : vector<8x128xf32>
    %950 = vector.broadcast %947 : f32 to vector<8x128xf32>
    %951 = arith.mulf %71, %950 : vector<8x128xf32>
    %952 = arith.subf %949, %951 : vector<8x128xf32>
    %953 = vector.broadcast %947 : f32 to vector<8x128xf32>
    %954 = arith.mulf %68, %953 : vector<8x128xf32>
    %955 = vector.broadcast %946 : f32 to vector<8x128xf32>
    %956 = arith.mulf %71, %955 : vector<8x128xf32>
    %957 = arith.addf %954, %956 : vector<8x128xf32>
    %958 = arith.addf %940, %952 : vector<8x128xf32>
    %959 = arith.addf %945, %957 : vector<8x128xf32>
    %c2_242 = arith.constant 2 : index
    %c14_243 = arith.constant 14 : index
    %960 = memref.load %arg1[%c2_242, %c14_243] : memref<4x16xf32, #tpu.memory_space<smem>>
    %c2_244 = arith.constant 2 : index
    %c14_245 = arith.constant 14 : index
    %961 = memref.load %arg2[%c2_244, %c14_245] : memref<4x16xf32, #tpu.memory_space<smem>>
    %962 = vector.broadcast %960 : f32 to vector<8x128xf32>
    %963 = arith.mulf %74, %962 : vector<8x128xf32>
    %964 = vector.broadcast %961 : f32 to vector<8x128xf32>
    %965 = arith.mulf %77, %964 : vector<8x128xf32>
    %966 = arith.subf %963, %965 : vector<8x128xf32>
    %967 = vector.broadcast %961 : f32 to vector<8x128xf32>
    %968 = arith.mulf %74, %967 : vector<8x128xf32>
    %969 = vector.broadcast %960 : f32 to vector<8x128xf32>
    %970 = arith.mulf %77, %969 : vector<8x128xf32>
    %971 = arith.addf %968, %970 : vector<8x128xf32>
    %972 = arith.addf %958, %966 : vector<8x128xf32>
    %973 = arith.addf %959, %971 : vector<8x128xf32>
    %c3_246 = arith.constant 3 : index
    %c14_247 = arith.constant 14 : index
    %974 = memref.load %arg1[%c3_246, %c14_247] : memref<4x16xf32, #tpu.memory_space<smem>>
    %c3_248 = arith.constant 3 : index
    %c14_249 = arith.constant 14 : index
    %975 = memref.load %arg2[%c3_248, %c14_249] : memref<4x16xf32, #tpu.memory_space<smem>>
    %976 = vector.broadcast %974 : f32 to vector<8x128xf32>
    %977 = arith.mulf %80, %976 : vector<8x128xf32>
    %978 = vector.broadcast %975 : f32 to vector<8x128xf32>
    %979 = arith.mulf %83, %978 : vector<8x128xf32>
    %980 = arith.subf %977, %979 : vector<8x128xf32>
    %981 = vector.broadcast %975 : f32 to vector<8x128xf32>
    %982 = arith.mulf %80, %981 : vector<8x128xf32>
    %983 = vector.broadcast %974 : f32 to vector<8x128xf32>
    %984 = arith.mulf %83, %983 : vector<8x128xf32>
    %985 = arith.addf %982, %984 : vector<8x128xf32>
    %986 = arith.addf %972, %980 : vector<8x128xf32>
    %987 = arith.addf %973, %985 : vector<8x128xf32>
    %988 = arith.mulf %986, %986 : vector<8x128xf32>
    %989 = arith.mulf %987, %987 : vector<8x128xf32>
    %990 = arith.addf %988, %989 : vector<8x128xf32>
    %991 = arith.subf %930, %990 : vector<8x128xf32>
    %992 = arith.subf %931, %990 : vector<8x128xf32>
    %993 = arith.subf %932, %990 : vector<8x128xf32>
    %994 = arith.addf %933, %990 : vector<8x128xf32>
    %c0_250 = arith.constant 0 : index
    %c15 = arith.constant 15 : index
    %995 = memref.load %arg1[%c0_250, %c15] : memref<4x16xf32, #tpu.memory_space<smem>>
    %c0_251 = arith.constant 0 : index
    %c15_252 = arith.constant 15 : index
    %996 = memref.load %arg2[%c0_251, %c15_252] : memref<4x16xf32, #tpu.memory_space<smem>>
    %997 = vector.broadcast %995 : f32 to vector<8x128xf32>
    %998 = arith.mulf %62, %997 : vector<8x128xf32>
    %999 = vector.broadcast %996 : f32 to vector<8x128xf32>
    %1000 = arith.mulf %65, %999 : vector<8x128xf32>
    %1001 = arith.subf %998, %1000 : vector<8x128xf32>
    %1002 = vector.broadcast %996 : f32 to vector<8x128xf32>
    %1003 = arith.mulf %62, %1002 : vector<8x128xf32>
    %1004 = vector.broadcast %995 : f32 to vector<8x128xf32>
    %1005 = arith.mulf %65, %1004 : vector<8x128xf32>
    %1006 = arith.addf %1003, %1005 : vector<8x128xf32>
    %c1_253 = arith.constant 1 : index
    %c15_254 = arith.constant 15 : index
    %1007 = memref.load %arg1[%c1_253, %c15_254] : memref<4x16xf32, #tpu.memory_space<smem>>
    %c1_255 = arith.constant 1 : index
    %c15_256 = arith.constant 15 : index
    %1008 = memref.load %arg2[%c1_255, %c15_256] : memref<4x16xf32, #tpu.memory_space<smem>>
    %1009 = vector.broadcast %1007 : f32 to vector<8x128xf32>
    %1010 = arith.mulf %68, %1009 : vector<8x128xf32>
    %1011 = vector.broadcast %1008 : f32 to vector<8x128xf32>
    %1012 = arith.mulf %71, %1011 : vector<8x128xf32>
    %1013 = arith.subf %1010, %1012 : vector<8x128xf32>
    %1014 = vector.broadcast %1008 : f32 to vector<8x128xf32>
    %1015 = arith.mulf %68, %1014 : vector<8x128xf32>
    %1016 = vector.broadcast %1007 : f32 to vector<8x128xf32>
    %1017 = arith.mulf %71, %1016 : vector<8x128xf32>
    %1018 = arith.addf %1015, %1017 : vector<8x128xf32>
    %1019 = arith.addf %1001, %1013 : vector<8x128xf32>
    %1020 = arith.addf %1006, %1018 : vector<8x128xf32>
    %c2_257 = arith.constant 2 : index
    %c15_258 = arith.constant 15 : index
    %1021 = memref.load %arg1[%c2_257, %c15_258] : memref<4x16xf32, #tpu.memory_space<smem>>
    %c2_259 = arith.constant 2 : index
    %c15_260 = arith.constant 15 : index
    %1022 = memref.load %arg2[%c2_259, %c15_260] : memref<4x16xf32, #tpu.memory_space<smem>>
    %1023 = vector.broadcast %1021 : f32 to vector<8x128xf32>
    %1024 = arith.mulf %74, %1023 : vector<8x128xf32>
    %1025 = vector.broadcast %1022 : f32 to vector<8x128xf32>
    %1026 = arith.mulf %77, %1025 : vector<8x128xf32>
    %1027 = arith.subf %1024, %1026 : vector<8x128xf32>
    %1028 = vector.broadcast %1022 : f32 to vector<8x128xf32>
    %1029 = arith.mulf %74, %1028 : vector<8x128xf32>
    %1030 = vector.broadcast %1021 : f32 to vector<8x128xf32>
    %1031 = arith.mulf %77, %1030 : vector<8x128xf32>
    %1032 = arith.addf %1029, %1031 : vector<8x128xf32>
    %1033 = arith.addf %1019, %1027 : vector<8x128xf32>
    %1034 = arith.addf %1020, %1032 : vector<8x128xf32>
    %c3_261 = arith.constant 3 : index
    %c15_262 = arith.constant 15 : index
    %1035 = memref.load %arg1[%c3_261, %c15_262] : memref<4x16xf32, #tpu.memory_space<smem>>
    %c3_263 = arith.constant 3 : index
    %c15_264 = arith.constant 15 : index
    %1036 = memref.load %arg2[%c3_263, %c15_264] : memref<4x16xf32, #tpu.memory_space<smem>>
    %1037 = vector.broadcast %1035 : f32 to vector<8x128xf32>
    %1038 = arith.mulf %80, %1037 : vector<8x128xf32>
    %1039 = vector.broadcast %1036 : f32 to vector<8x128xf32>
    %1040 = arith.mulf %83, %1039 : vector<8x128xf32>
    %1041 = arith.subf %1038, %1040 : vector<8x128xf32>
    %1042 = vector.broadcast %1036 : f32 to vector<8x128xf32>
    %1043 = arith.mulf %80, %1042 : vector<8x128xf32>
    %1044 = vector.broadcast %1035 : f32 to vector<8x128xf32>
    %1045 = arith.mulf %83, %1044 : vector<8x128xf32>
    %1046 = arith.addf %1043, %1045 : vector<8x128xf32>
    %1047 = arith.addf %1033, %1041 : vector<8x128xf32>
    %1048 = arith.addf %1034, %1046 : vector<8x128xf32>
    %1049 = arith.mulf %1047, %1047 : vector<8x128xf32>
    %1050 = arith.mulf %1048, %1048 : vector<8x128xf32>
    %1051 = arith.addf %1049, %1050 : vector<8x128xf32>
    %1052 = arith.subf %991, %1051 : vector<8x128xf32>
    %1053 = arith.subf %992, %1051 : vector<8x128xf32>
    %1054 = arith.subf %993, %1051 : vector<8x128xf32>
    %1055 = arith.subf %994, %1051 : vector<8x128xf32>
    %c0_265 = arith.constant 0 : index
    %c0_266 = arith.constant 0 : index
    %c0_267 = arith.constant 0 : index
    %1056 = vector.load %arg3[%c0_265, %c0_266, %c0_267] : memref<4x8x128xf32, #tpu.memory_space<vmem>>, vector<1x8x128xf32>
    %1057 = vector.shape_cast %1056 : vector<1x8x128xf32> to vector<8x128xf32>
    %1058 = vector.shape_cast %1052 : vector<8x128xf32> to vector<1x8x128xf32>
    tpu.vector_store %arg3[%c0_265, %c0_266, %c0_267], %1058 {strides = array<i32>} : memref<4x8x128xf32, #tpu.memory_space<vmem>>, vector<1x8x128xf32>,
    %c1_268 = arith.constant 1 : index
    %c0_269 = arith.constant 0 : index
    %c0_270 = arith.constant 0 : index
    %1059 = vector.load %arg3[%c1_268, %c0_269, %c0_270] : memref<4x8x128xf32, #tpu.memory_space<vmem>>, vector<1x8x128xf32>
    %1060 = vector.shape_cast %1059 : vector<1x8x128xf32> to vector<8x128xf32>
    %1061 = vector.shape_cast %1053 : vector<8x128xf32> to vector<1x8x128xf32>
    tpu.vector_store %arg3[%c1_268, %c0_269, %c0_270], %1061 {strides = array<i32>} : memref<4x8x128xf32, #tpu.memory_space<vmem>>, vector<1x8x128xf32>,
    %c2_271 = arith.constant 2 : index
    %c0_272 = arith.constant 0 : index
    %c0_273 = arith.constant 0 : index
    %1062 = vector.load %arg3[%c2_271, %c0_272, %c0_273] : memref<4x8x128xf32, #tpu.memory_space<vmem>>, vector<1x8x128xf32>
    %1063 = vector.shape_cast %1062 : vector<1x8x128xf32> to vector<8x128xf32>
    %1064 = vector.shape_cast %1054 : vector<8x128xf32> to vector<1x8x128xf32>
    tpu.vector_store %arg3[%c2_271, %c0_272, %c0_273], %1064 {strides = array<i32>} : memref<4x8x128xf32, #tpu.memory_space<vmem>>, vector<1x8x128xf32>,
    %c3_274 = arith.constant 3 : index
    %c0_275 = arith.constant 0 : index
    %c0_276 = arith.constant 0 : index
    %1065 = vector.load %arg3[%c3_274, %c0_275, %c0_276] : memref<4x8x128xf32, #tpu.memory_space<vmem>>, vector<1x8x128xf32>
    %1066 = vector.shape_cast %1065 : vector<1x8x128xf32> to vector<8x128xf32>
    %1067 = vector.shape_cast %1055 : vector<8x128xf32> to vector<1x8x128xf32>
    tpu.vector_store %arg3[%c3_274, %c0_275, %c0_276], %1067 {strides = array<i32>} : memref<4x8x128xf32, #tpu.memory_space<vmem>>, vector<1x8x128xf32>,
    return
  }
}

module attributes {stable_mosaic.version = 11 : i64} {
  func.func @disc_kernel(%arg0: memref<560x4xf32, #tpu.memory_space<vmem>>, %arg1: memref<1x4xf32, #tpu.memory_space<vmem>>, %arg2: memref<1x4xf32, #tpu.memory_space<vmem>>, %arg3: memref<3x4x64xf32, #tpu.memory_space<vmem>>, %arg4: memref<1x64xf32, #tpu.memory_space<vmem>>, %arg5: memref<1x64xf32, #tpu.memory_space<vmem>>, %arg6: memref<1x64xf32, #tpu.memory_space<vmem>>, %arg7: memref<3x64x128xf32, #tpu.memory_space<vmem>>, %arg8: memref<1x128xf32, #tpu.memory_space<vmem>>, %arg9: memref<1x128xf32, #tpu.memory_space<vmem>>, %arg10: memref<1x128xf32, #tpu.memory_space<vmem>>, %arg11: memref<560x128xf32, #tpu.memory_space<vmem>>, %arg12: memref<1x1xf32, #tpu.memory_space<vmem>>, %arg13: memref<1x1xf32, #tpu.memory_space<vmem>>, %arg14: memref<568x4xf32, #tpu.memory_space<vmem>>, %arg15: memref<568x64xf32, #tpu.memory_space<vmem>>) attributes {dimension_semantics = [], scalar_prefetch = 0 : i64, scratch_operands = 2 : i64, tpu.core_type = #tpu.core_type<tc>} {
    %c0 = arith.constant 0 : index
    %c0_0 = arith.constant 0 : index
    %0 = vector.load %arg0[%c0, %c0_0] : memref<560x4xf32, #tpu.memory_space<vmem>>, vector<560x4xf32>
    %cst = arith.constant dense<0.000000e+00> : vector<4xf32>
    %1 = vector.multi_reduction <add>, %0, %cst [0] : vector<560x4xf32> to vector<4xf32>
    %2 = vector.shape_cast %1 : vector<4xf32> to vector<1x4xf32>
    %cst_1 = arith.constant 0.0017857143 : f32
    %3 = vector.broadcast %cst_1 : f32 to vector<1x4xf32>
    %4 = arith.mulf %2, %3 : vector<1x4xf32>
    %5 = arith.mulf %0, %0 : vector<560x4xf32>
    %cst_2 = arith.constant dense<0.000000e+00> : vector<4xf32>
    %6 = vector.multi_reduction <add>, %5, %cst_2 [0] : vector<560x4xf32> to vector<4xf32>
    %7 = vector.shape_cast %6 : vector<4xf32> to vector<1x4xf32>
    %cst_3 = arith.constant 0.0017857143 : f32
    %8 = vector.broadcast %cst_3 : f32 to vector<1x4xf32>
    %9 = arith.mulf %7, %8 : vector<1x4xf32>
    %10 = arith.mulf %4, %4 : vector<1x4xf32>
    %11 = arith.subf %9, %10 : vector<1x4xf32>
    %cst_4 = arith.constant 0.000000e+00 : f32
    %12 = vector.broadcast %cst_4 : f32 to vector<1x4xf32>
    %13 = arith.maximumf %11, %12 : vector<1x4xf32>
    %c0_5 = arith.constant 0 : index
    %c0_6 = arith.constant 0 : index
    %14 = vector.load %arg1[%c0_5, %c0_6] : memref<1x4xf32, #tpu.memory_space<vmem>>, vector<1x4xf32>
    %15 = vector.broadcast %4 : vector<1x4xf32> to vector<560x4xf32>
    %16 = arith.subf %0, %15 : vector<560x4xf32>
    %17 = vector.broadcast %14 : vector<1x4xf32> to vector<560x4xf32>
    %18 = arith.mulf %17, %16 : vector<560x4xf32>
    %cst_7 = arith.constant 9.99999974E-6 : f32
    %19 = vector.broadcast %cst_7 : f32 to vector<1x4xf32>
    %20 = arith.addf %13, %19 : vector<1x4xf32>
    %21 = math.rsqrt %20 : vector<1x4xf32>
    %22 = vector.broadcast %21 : vector<1x4xf32> to vector<560x4xf32>
    %23 = arith.mulf %18, %22 : vector<560x4xf32>
    %c0_8 = arith.constant 0 : index
    %c0_9 = arith.constant 0 : index
    %24 = vector.load %arg2[%c0_8, %c0_9] : memref<1x4xf32, #tpu.memory_space<vmem>>, vector<1x4xf32>
    %25 = vector.broadcast %24 : vector<1x4xf32> to vector<560x4xf32>
    %26 = arith.addf %23, %25 : vector<560x4xf32>
    %cst_10 = arith.constant 0.000000e+00 : f32
    %27 = vector.broadcast %cst_10 : f32 to vector<560x4xf32>
    %28 = arith.cmpf oge, %26, %27 : vector<560x4xf32>
    %cst_11 = arith.constant 0.00999999977 : f32
    %29 = vector.broadcast %cst_11 : f32 to vector<560x4xf32>
    %30 = arith.mulf %29, %26 : vector<560x4xf32>
    %31 = arith.select %28, %26, %30 : vector<560x4xi1>, vector<560x4xf32>
    %c0_12 = arith.constant 0 : index
    %c0_13 = arith.constant 0 : index
    %32 = vector.load %arg14[%c0_12, %c0_13] : memref<568x4xf32, #tpu.memory_space<vmem>>, vector<560x4xf32>
    tpu.vector_store %arg14[%c0_12, %c0_13], %31 {strides = array<i32>} : memref<568x4xf32, #tpu.memory_space<vmem>>, vector<560x4xf32>,
    %cst_14 = arith.constant 0.000000e+00 : f32
    %33 = vector.broadcast %cst_14 : f32 to vector<8x4xf32>
    %c560 = arith.constant 560 : index
    %c0_15 = arith.constant 0 : index
    %34 = vector.load %arg14[%c560, %c0_15] : memref<568x4xf32, #tpu.memory_space<vmem>>, vector<8x4xf32>
    tpu.vector_store %arg14[%c560, %c0_15], %33 {strides = array<i32>} : memref<568x4xf32, #tpu.memory_space<vmem>>, vector<8x4xf32>,
    %35 = tpu.iota {dimensions = array<i32: 0>} : vector<560x1xi32>
    %c15_i32 = arith.constant 15 : i32
    %36 = vector.broadcast %c15_i32 : i32 to vector<560x1xi32>
    %37 = arith.andi %35, %36 : vector<560x1xi32>
    %c14_i32 = arith.constant 14 : i32
    %38 = vector.broadcast %c14_i32 : i32 to vector<560x1xi32>
    %39 = arith.cmpi slt, %37, %38 : vector<560x1xi32>
    %40 = arith.extui %39 : vector<560x1xi1> to vector<560x1xi32>
    %41 = arith.sitofp %40 : vector<560x1xi32> to vector<560x1xf32>
    %c12_i32 = arith.constant 12 : i32
    %42 = vector.broadcast %c12_i32 : i32 to vector<560x1xi32>
    %43 = arith.cmpi slt, %37, %42 : vector<560x1xi32>
    %44 = arith.extui %43 : vector<560x1xi1> to vector<560x1xi32>
    %45 = arith.sitofp %44 : vector<560x1xi32> to vector<560x1xf32>
    %c0_16 = arith.constant 0 : index
    %c0_17 = arith.constant 0 : index
    %46 = vector.load %arg4[%c0_16, %c0_17] : memref<1x64xf32, #tpu.memory_space<vmem>>, vector<1x64xf32>
    %c0_18 = arith.constant 0 : index
    %c0_19 = arith.constant 0 : index
    %47 = vector.load %arg14[%c0_18, %c0_19] : memref<568x4xf32, #tpu.memory_space<vmem>>, vector<560x4xf32>
    %c0_20 = arith.constant 0 : index
    %c0_21 = arith.constant 0 : index
    %c0_22 = arith.constant 0 : index
    %48 = vector.load %arg3[%c0_20, %c0_21, %c0_22] : memref<3x4x64xf32, #tpu.memory_space<vmem>>, vector<1x4x64xf32>
    %49 = vector.shape_cast %48 : vector<1x4x64xf32> to vector<4x64xf32>
    %cst_23 = arith.constant dense<0.000000e+00> : vector<560x64xf32>
    %50 = tpu.matmul %47, %49, %cst_23 {dimension_numbers = #tpu.dot_dimension_numbers<[1], [0], [0], [1], [0, 0, 1, 1], [], []>} : vector<560x4xf32>, vector<4x64xf32>, vector<560x64xf32> -> vector<560x64xf32>
    %51 = vector.broadcast %46 : vector<1x64xf32> to vector<560x64xf32>
    %52 = arith.addf %51, %50 : vector<560x64xf32>
    %c1 = arith.constant 1 : index
    %c0_24 = arith.constant 0 : index
    %53 = vector.load %arg14[%c1, %c0_24] : memref<568x4xf32, #tpu.memory_space<vmem>>, vector<560x4xf32>
    %c1_25 = arith.constant 1 : index
    %c0_26 = arith.constant 0 : index
    %c0_27 = arith.constant 0 : index
    %54 = vector.load %arg3[%c1_25, %c0_26, %c0_27] : memref<3x4x64xf32, #tpu.memory_space<vmem>>, vector<1x4x64xf32>
    %55 = vector.shape_cast %54 : vector<1x4x64xf32> to vector<4x64xf32>
    %cst_28 = arith.constant dense<0.000000e+00> : vector<560x64xf32>
    %56 = tpu.matmul %53, %55, %cst_28 {dimension_numbers = #tpu.dot_dimension_numbers<[1], [0], [0], [1], [0, 0, 1, 1], [], []>} : vector<560x4xf32>, vector<4x64xf32>, vector<560x64xf32> -> vector<560x64xf32>
    %57 = arith.addf %52, %56 : vector<560x64xf32>
    %c2 = arith.constant 2 : index
    %c0_29 = arith.constant 0 : index
    %58 = vector.load %arg14[%c2, %c0_29] : memref<568x4xf32, #tpu.memory_space<vmem>>, vector<560x4xf32>
    %c2_30 = arith.constant 2 : index
    %c0_31 = arith.constant 0 : index
    %c0_32 = arith.constant 0 : index
    %59 = vector.load %arg3[%c2_30, %c0_31, %c0_32] : memref<3x4x64xf32, #tpu.memory_space<vmem>>, vector<1x4x64xf32>
    %60 = vector.shape_cast %59 : vector<1x4x64xf32> to vector<4x64xf32>
    %cst_33 = arith.constant dense<0.000000e+00> : vector<560x64xf32>
    %61 = tpu.matmul %58, %60, %cst_33 {dimension_numbers = #tpu.dot_dimension_numbers<[1], [0], [0], [1], [0, 0, 1, 1], [], []>} : vector<560x4xf32>, vector<4x64xf32>, vector<560x64xf32> -> vector<560x64xf32>
    %62 = arith.addf %57, %61 : vector<560x64xf32>
    %63 = vector.broadcast %41 : vector<560x1xf32> to vector<560x64xf32>
    %64 = arith.mulf %62, %63 : vector<560x64xf32>
    %cst_34 = arith.constant dense<0.000000e+00> : vector<64xf32>
    %65 = vector.multi_reduction <add>, %64, %cst_34 [0] : vector<560x64xf32> to vector<64xf32>
    %66 = vector.shape_cast %65 : vector<64xf32> to vector<1x64xf32>
    %cst_35 = arith.constant 0.00204081624 : f32
    %67 = vector.broadcast %cst_35 : f32 to vector<1x64xf32>
    %68 = arith.mulf %66, %67 : vector<1x64xf32>
    %69 = arith.mulf %64, %62 : vector<560x64xf32>
    %cst_36 = arith.constant dense<0.000000e+00> : vector<64xf32>
    %70 = vector.multi_reduction <add>, %69, %cst_36 [0] : vector<560x64xf32> to vector<64xf32>
    %71 = vector.shape_cast %70 : vector<64xf32> to vector<1x64xf32>
    %cst_37 = arith.constant 0.00204081624 : f32
    %72 = vector.broadcast %cst_37 : f32 to vector<1x64xf32>
    %73 = arith.mulf %71, %72 : vector<1x64xf32>
    %74 = arith.mulf %68, %68 : vector<1x64xf32>
    %75 = arith.subf %73, %74 : vector<1x64xf32>
    %cst_38 = arith.constant 0.000000e+00 : f32
    %76 = vector.broadcast %cst_38 : f32 to vector<1x64xf32>
    %77 = arith.maximumf %75, %76 : vector<1x64xf32>
    %c0_39 = arith.constant 0 : index
    %c0_40 = arith.constant 0 : index
    %78 = vector.load %arg5[%c0_39, %c0_40] : memref<1x64xf32, #tpu.memory_space<vmem>>, vector<1x64xf32>
    %79 = vector.broadcast %68 : vector<1x64xf32> to vector<560x64xf32>
    %80 = arith.subf %62, %79 : vector<560x64xf32>
    %81 = vector.broadcast %78 : vector<1x64xf32> to vector<560x64xf32>
    %82 = arith.mulf %81, %80 : vector<560x64xf32>
    %cst_41 = arith.constant 9.99999974E-6 : f32
    %83 = vector.broadcast %cst_41 : f32 to vector<1x64xf32>
    %84 = arith.addf %77, %83 : vector<1x64xf32>
    %85 = math.rsqrt %84 : vector<1x64xf32>
    %86 = vector.broadcast %85 : vector<1x64xf32> to vector<560x64xf32>
    %87 = arith.mulf %82, %86 : vector<560x64xf32>
    %c0_42 = arith.constant 0 : index
    %c0_43 = arith.constant 0 : index
    %88 = vector.load %arg6[%c0_42, %c0_43] : memref<1x64xf32, #tpu.memory_space<vmem>>, vector<1x64xf32>
    %89 = vector.broadcast %88 : vector<1x64xf32> to vector<560x64xf32>
    %90 = arith.addf %87, %89 : vector<560x64xf32>
    %cst_44 = arith.constant 0.000000e+00 : f32
    %91 = vector.broadcast %cst_44 : f32 to vector<560x64xf32>
    %92 = arith.cmpf oge, %90, %91 : vector<560x64xf32>
    %cst_45 = arith.constant 0.00999999977 : f32
    %93 = vector.broadcast %cst_45 : f32 to vector<560x64xf32>
    %94 = arith.mulf %93, %90 : vector<560x64xf32>
    %95 = arith.select %92, %90, %94 : vector<560x64xi1>, vector<560x64xf32>
    %c0_46 = arith.constant 0 : index
    %c0_47 = arith.constant 0 : index
    %96 = vector.load %arg15[%c0_46, %c0_47] : memref<568x64xf32, #tpu.memory_space<vmem>>, vector<560x64xf32>
    tpu.vector_store %arg15[%c0_46, %c0_47], %95 {strides = array<i32>} : memref<568x64xf32, #tpu.memory_space<vmem>>, vector<560x64xf32>,
    %cst_48 = arith.constant 0.000000e+00 : f32
    %97 = vector.broadcast %cst_48 : f32 to vector<8x64xf32>
    %c560_49 = arith.constant 560 : index
    %c0_50 = arith.constant 0 : index
    %98 = vector.load %arg15[%c560_49, %c0_50] : memref<568x64xf32, #tpu.memory_space<vmem>>, vector<8x64xf32>
    tpu.vector_store %arg15[%c560_49, %c0_50], %97 {strides = array<i32>} : memref<568x64xf32, #tpu.memory_space<vmem>>, vector<8x64xf32>,
    %c0_51 = arith.constant 0 : index
    %c0_52 = arith.constant 0 : index
    %99 = vector.load %arg8[%c0_51, %c0_52] : memref<1x128xf32, #tpu.memory_space<vmem>>, vector<1x128xf32>
    %c0_53 = arith.constant 0 : index
    %c0_54 = arith.constant 0 : index
    %100 = vector.load %arg15[%c0_53, %c0_54] : memref<568x64xf32, #tpu.memory_space<vmem>>, vector<560x64xf32>
    %c0_55 = arith.constant 0 : index
    %c0_56 = arith.constant 0 : index
    %c0_57 = arith.constant 0 : index
    %101 = vector.load %arg7[%c0_55, %c0_56, %c0_57] : memref<3x64x128xf32, #tpu.memory_space<vmem>>, vector<1x64x128xf32>
    %102 = vector.shape_cast %101 : vector<1x64x128xf32> to vector<64x128xf32>
    %cst_58 = arith.constant dense<0.000000e+00> : vector<560x128xf32>
    %103 = tpu.matmul %100, %102, %cst_58 {dimension_numbers = #tpu.dot_dimension_numbers<[1], [0], [0], [1], [0, 0, 1, 1], [], []>} : vector<560x64xf32>, vector<64x128xf32>, vector<560x128xf32> -> vector<560x128xf32>
    %104 = vector.broadcast %99 : vector<1x128xf32> to vector<560x128xf32>
    %105 = arith.addf %104, %103 : vector<560x128xf32>
    %c1_59 = arith.constant 1 : index
    %c0_60 = arith.constant 0 : index
    %106 = vector.load %arg15[%c1_59, %c0_60] : memref<568x64xf32, #tpu.memory_space<vmem>>, vector<560x64xf32>
    %c1_61 = arith.constant 1 : index
    %c0_62 = arith.constant 0 : index
    %c0_63 = arith.constant 0 : index
    %107 = vector.load %arg7[%c1_61, %c0_62, %c0_63] : memref<3x64x128xf32, #tpu.memory_space<vmem>>, vector<1x64x128xf32>
    %108 = vector.shape_cast %107 : vector<1x64x128xf32> to vector<64x128xf32>
    %cst_64 = arith.constant dense<0.000000e+00> : vector<560x128xf32>
    %109 = tpu.matmul %106, %108, %cst_64 {dimension_numbers = #tpu.dot_dimension_numbers<[1], [0], [0], [1], [0, 0, 1, 1], [], []>} : vector<560x64xf32>, vector<64x128xf32>, vector<560x128xf32> -> vector<560x128xf32>
    %110 = arith.addf %105, %109 : vector<560x128xf32>
    %c2_65 = arith.constant 2 : index
    %c0_66 = arith.constant 0 : index
    %111 = vector.load %arg15[%c2_65, %c0_66] : memref<568x64xf32, #tpu.memory_space<vmem>>, vector<560x64xf32>
    %c2_67 = arith.constant 2 : index
    %c0_68 = arith.constant 0 : index
    %c0_69 = arith.constant 0 : index
    %112 = vector.load %arg7[%c2_67, %c0_68, %c0_69] : memref<3x64x128xf32, #tpu.memory_space<vmem>>, vector<1x64x128xf32>
    %113 = vector.shape_cast %112 : vector<1x64x128xf32> to vector<64x128xf32>
    %cst_70 = arith.constant dense<0.000000e+00> : vector<560x128xf32>
    %114 = tpu.matmul %111, %113, %cst_70 {dimension_numbers = #tpu.dot_dimension_numbers<[1], [0], [0], [1], [0, 0, 1, 1], [], []>} : vector<560x64xf32>, vector<64x128xf32>, vector<560x128xf32> -> vector<560x128xf32>
    %115 = arith.addf %110, %114 : vector<560x128xf32>
    %116 = vector.broadcast %45 : vector<560x1xf32> to vector<560x128xf32>
    %117 = arith.mulf %115, %116 : vector<560x128xf32>
    %cst_71 = arith.constant dense<0.000000e+00> : vector<128xf32>
    %118 = vector.multi_reduction <add>, %117, %cst_71 [0] : vector<560x128xf32> to vector<128xf32>
    %119 = vector.shape_cast %118 : vector<128xf32> to vector<1x128xf32>
    %cst_72 = arith.constant 0.00238095247 : f32
    %120 = vector.broadcast %cst_72 : f32 to vector<1x128xf32>
    %121 = arith.mulf %119, %120 : vector<1x128xf32>
    %122 = arith.mulf %117, %115 : vector<560x128xf32>
    %cst_73 = arith.constant dense<0.000000e+00> : vector<128xf32>
    %123 = vector.multi_reduction <add>, %122, %cst_73 [0] : vector<560x128xf32> to vector<128xf32>
    %124 = vector.shape_cast %123 : vector<128xf32> to vector<1x128xf32>
    %cst_74 = arith.constant 0.00238095247 : f32
    %125 = vector.broadcast %cst_74 : f32 to vector<1x128xf32>
    %126 = arith.mulf %124, %125 : vector<1x128xf32>
    %127 = arith.mulf %121, %121 : vector<1x128xf32>
    %128 = arith.subf %126, %127 : vector<1x128xf32>
    %cst_75 = arith.constant 0.000000e+00 : f32
    %129 = vector.broadcast %cst_75 : f32 to vector<1x128xf32>
    %130 = arith.maximumf %128, %129 : vector<1x128xf32>
    %c0_76 = arith.constant 0 : index
    %c0_77 = arith.constant 0 : index
    %131 = vector.load %arg9[%c0_76, %c0_77] : memref<1x128xf32, #tpu.memory_space<vmem>>, vector<1x128xf32>
    %132 = vector.broadcast %121 : vector<1x128xf32> to vector<560x128xf32>
    %133 = arith.subf %115, %132 : vector<560x128xf32>
    %134 = vector.broadcast %131 : vector<1x128xf32> to vector<560x128xf32>
    %135 = arith.mulf %134, %133 : vector<560x128xf32>
    %cst_78 = arith.constant 9.99999974E-6 : f32
    %136 = vector.broadcast %cst_78 : f32 to vector<1x128xf32>
    %137 = arith.addf %130, %136 : vector<1x128xf32>
    %138 = math.rsqrt %137 : vector<1x128xf32>
    %139 = vector.broadcast %138 : vector<1x128xf32> to vector<560x128xf32>
    %140 = arith.mulf %135, %139 : vector<560x128xf32>
    %c0_79 = arith.constant 0 : index
    %c0_80 = arith.constant 0 : index
    %141 = vector.load %arg10[%c0_79, %c0_80] : memref<1x128xf32, #tpu.memory_space<vmem>>, vector<1x128xf32>
    %142 = vector.broadcast %141 : vector<1x128xf32> to vector<560x128xf32>
    %143 = arith.addf %140, %142 : vector<560x128xf32>
    %c0_81 = arith.constant 0 : index
    %c0_82 = arith.constant 0 : index
    %144 = vector.load %arg11[%c0_81, %c0_82] : memref<560x128xf32, #tpu.memory_space<vmem>>, vector<560x128xf32>
    %145 = arith.mulf %143, %144 : vector<560x128xf32>
    %cst_83 = arith.constant dense<0.000000e+00> : vector<560xf32>
    %146 = vector.multi_reduction <add>, %145, %cst_83 [1] : vector<560x128xf32> to vector<560xf32>
    %147 = vector.shape_cast %146 : vector<560xf32> to vector<560x1xf32>
    %cst_84 = arith.constant dense<0.000000e+00> : vector<1xf32>
    %148 = vector.multi_reduction <add>, %147, %cst_84 [0] : vector<560x1xf32> to vector<1xf32>
    %149 = vector.shape_cast %148 : vector<1xf32> to vector<1x1xf32>
    %c0_85 = arith.constant 0 : index
    %c0_86 = arith.constant 0 : index
    %150 = vector.load %arg12[%c0_85, %c0_86] : memref<1x1xf32, #tpu.memory_space<vmem>>, vector<1x1xf32>
    %151 = arith.addf %149, %150 : vector<1x1xf32>
    %cst_87 = arith.constant 0.000000e+00 : f32
    %152 = vector.broadcast %cst_87 : f32 to vector<1x1xf32>
    %153 = arith.subf %152, %151 : vector<1x1xf32>
    %154 = math.exp %153 : vector<1x1xf32>
    %cst_88 = arith.constant 1.000000e+00 : f32
    %155 = vector.broadcast %cst_88 : f32 to vector<1x1xf32>
    %156 = arith.addf %155, %154 : vector<1x1xf32>
    %cst_89 = arith.constant 1.000000e+00 : f32
    %157 = vector.broadcast %cst_89 : f32 to vector<1x1xf32>
    %158 = arith.divf %157, %156 : vector<1x1xf32>
    %c0_90 = arith.constant 0 : index
    %c0_91 = arith.constant 0 : index
    %159 = vector.load %arg13[%c0_90, %c0_91] : memref<1x1xf32, #tpu.memory_space<vmem>>, vector<1x1xf32>
    tpu.vector_store %arg13[%c0_90, %c0_91], %158 {strides = array<i32>} : memref<1x1xf32, #tpu.memory_space<vmem>>, vector<1x1xf32>,
    return
  }
}

</mosaic_0001>

<llo_original>
// kernel: discriminator_forward.2
$region0: #{discriminator_forward.2}
  #allocation0 [shape = 'u32[]', space=smem, size = 0x4, offset = 0x4, fixed_abs, tag = 'smem constant byte address 0x4 - core index']
  #allocation1 [shape = 'u32[144,128]{1,0:T(1,128)}', space=vmem, size = 0x12000, scoped, tag = 'internal scratch']
  %s0 = inlined_call_operand.vmem [shape: f32[4,8,128], index: 0, kind: input, shape index: {}]
  %s1 = inlined_call_operand.vmem [shape: f32[4,16], index: 1, kind: input, shape index: {}]
  %s2 = inlined_call_operand.vmem [shape: f32[4,16], index: 2, kind: input, shape index: {}]
  %s3 = inlined_call_operand.vmem [shape: f32[4,8,128], index: 3, kind: output, shape index: {}]
  %s4 = sld [smem:[#allocation0]]
  $region30: #{discriminator_forward.2} parent=0
    _
  %s6 = ssub.s32 1, %s4
  %s7 = scalar_select 0, %s6, %s4
  $region1: #{discriminator_forward.2} parent=0
    #allocation2 [shape = 'u8[2048]{0}', space=smem, size = 0x800, scoped, tag = 'input window, operand 1, single buffered']
    #allocation3 [shape = 's32[1]{0}', space=sflag, size = 0x4, scoped, tag = 'scoped memory for discriminator_forward.2']
    #allocation4 [shape = 'u8[2048]{0}', space=smem, size = 0x800, scoped, tag = 'input window, operand 2, single buffered']
    #allocation5 [shape = 's32[1]{0}', space=sflag, size = 0x4, scoped, tag = 'scoped memory for discriminator_forward.2']
    %8 = vsyncpa [#allocation3], 0
    %9 = vsyncpa [#allocation5], 0
    // Predicated region
    $region2: #{discriminator_forward.2} parent=1 // pred_check
      _
    $region3: #{discriminator_forward.2} parent=1 // pred_check_branch
      %11 = sbr.rel (0) target = $region5
    $region4: #{discriminator_forward.2} parent=1 // pred_region
      _
    $region5: #{discriminator_forward.2} parent=1 // pred_fallthru
      _
    // Predicated region
    $region6: #{discriminator_forward.2} parent=1 // pred_check
      _
    $region7: #{discriminator_forward.2} parent=1 // pred_check_branch
      %13 = sbr.rel (0) target = $region9
    $region8: #{discriminator_forward.2} parent=1 // pred_region
      %s15 = ssub.s32 64, 64
      %16 = vsyncadd [#allocation3], %s15
      %s18 = sshll.u32 %s1, 4
      %s19 = int_to_ptr.vmem [resolvable:$true] %s18
      %21 = dma.vmem_to_smem %s19, 64, [#allocation2], [#allocation3]
    $region9: #{discriminator_forward.2} parent=1 // pred_fallthru
      _
    // Predicated region
    $region10: #{discriminator_forward.2} parent=1 // pred_check
      _
    $region11: #{discriminator_forward.2} parent=1 // pred_check_branch
      %23 = sbr.rel (0) target = $region13
    $region12: #{discriminator_forward.2} parent=1 // pred_region
      %s25 = ssub.s32 64, 64
      %26 = vsyncadd [#allocation5], %s25
      %s28 = sshll.u32 %s2, 4
      %s29 = int_to_ptr.vmem [resolvable:$true] %s28
      %31 = dma.vmem_to_smem %s29, 64, [#allocation4], [#allocation5]
    $region13: #{discriminator_forward.2} parent=1 // pred_fallthru
      _
    // Predicated region
    $region14: #{discriminator_forward.2} parent=1 // pred_check
      _
    $region15: #{discriminator_forward.2} parent=1 // pred_check_branch
      %33 = sbr.rel (0) target = $region17
    $region16: #{discriminator_forward.2} parent=1 // pred_region
      %34 = dma.done [#allocation3], 64
    $region17: #{discriminator_forward.2} parent=1 // pred_fallthru
      _
    // Predicated region
    $region18: #{discriminator_forward.2} parent=1 // pred_check
      _
    $region19: #{discriminator_forward.2} parent=1 // pred_check_branch
      %36 = sbr.rel (0) target = $region21
    $region20: #{discriminator_forward.2} parent=1 // pred_region
      %37 = dma.done [#allocation5], 64
    $region21: #{discriminator_forward.2} parent=1 // pred_fallthru
      _
    %38 = sfence
    %v39 = vld [vmem:[%s0] sm:$0xff]
    %v40 = vmul.f32 %v39, 0.5
    %s41 = scalar_lea.vmem %s0, 8
    %v42 = vld [vmem:[%s41] sm:$0xff]
    %v43 = vmul.f32 %v42, 0.5
    %s44 = scalar_lea.vmem %s0, 16
    %v45 = vld [vmem:[%s44] sm:$0xff]
    %v46 = vmul.f32 %v45, 0.5
    %s47 = scalar_lea.vmem %s0, 24
    %v48 = vld [vmem:[%s47] sm:$0xff]
    %v49 = vmul.f32 %v48, 0.5
    %v50 = vand.u32 2147483647, %v40
    %vm51 = vcmp.le.f32.partialorder %v50, 0.7853982
    %vm52 = vcmp.lt.s32.totalorder %v40, 0
    %v53 = vand.u32 %v40, 2139095040
    %v54 = vshrl.u32 %v53, 23
    %v55 = vsub.s32 %v54, 127
    %v56 = vand.u32 2147483647, %v40
    %v57 = vand.u32 %v56, 8388607
    %v58 = vor.u32 %v57, 8388608
    %v59 = vsub.s32 0, %v58
    %v60 = vadd.s32 %v55, 1
    %vm61 = vcmp.gt.s32.totalorder %v60, 0
    %v62 = vsel %vm61, %v60, 0
    %v63 = vshrl.u32 %v62, 5
    %v64 = vand.u32 %v62, 31
    %v65 = vsub.s32 32, %v64
    %v66 = vshrl.u32 683565275, %v65
    %v67 = vshll.u32 683565275, %v64
    %v68 = vshrl.u32 2475754826, %v65
    %v69 = vor.u32 %v67, %v68
    %v70 = vshll.u32 2475754826, %v64
    %v71 = vshrl.u32 2131351028, %v65
    %v72 = vor.u32 %v70, %v71
    %v73 = vshll.u32 2131351028, %v64
    %v74 = vshrl.u32 2102212464, %v65
    %v75 = vor.u32 %v73, %v74
    %v76 = vshll.u32 2102212464, %v64
    %v77 = vshrl.u32 920167782, %v65
    %v78 = vor.u32 %v76, %v77
    %v79 = vshll.u32 920167782, %v64
    %v80 = vshrl.u32 1326507024, %v65
    %v81 = vor.u32 %v79, %v80
    %vm82 = vcmp.lt.s32.totalorder %v63, 1
    %vm83 = vcmp.lt.s32.totalorder %v63, 2
    %vm84 = vcmp.lt.s32.totalorder %v63, 3
    %vm85 = vcmp.lt.s32.totalorder %v63, 4
    %v86 = vsel %vm82, %v66, %v69
    %v87 = vsel %vm85, %v75, 2102212464
    %v88 = vsel %vm84, %v72, %v87
    %v89 = vsel %vm83, %v86, %v88
    %v90 = vsel %vm82, %v69, %v72
    %v91 = vsel %vm85, %v78, 920167782
    %v92 = vsel %vm84, %v75, %v91
    %v93 = vsel %vm83, %v90, %v92
    %v94 = vsel %vm82, %v72, %v75
    %v95 = vsel %vm85, %v81, 1326507024
    %v96 = vsel %vm84, %v78, %v95
    %v97 = vsel %vm83, %v94, %v96
    %v98 = vshll.u32 %v58, 8
    %v99 = vmul.u32.u64.compose %v98, %v97
    %v100 = vextract.low.u32 %v99
    %v101 = vextract.high.u32 %v99
    %v102 = vmul.u32.u64.compose %v98, %v93
    %v103 = vextract.low.u32 %v102
    %v104 = vextract.high.u32 %v102
    %v105 = vmul.u32 %v98, %v89
    %v106 = vadd.s32 %v101, %v103
    %vm107 = vc.u32 %v101, %v103
    %v108 = vadd.s32 %v104, 1
    %v109 = vsel %vm107, %v108, %v104
    %v110 = vadd.s32 %v105, %v109
    %v111 = vadd.s32 %v110, 536870912
    %v112 = vshrl.u32 %v111, 30
    %v113 = vshll.u32 %v112, 30
    %v114 = vsub.s32 %v110, %v113
    %vm115 = vcmp.lt.s32.totalorder %v114, 0
    %v116 = vsub.s32 0, %v114
    %v117 = vsel %vm115, %v116, %v114
    %v118 = vclz %v117
    %v119 = vsub.s32 %v118, 2
    %vm120 = vcmp.gt.s32.totalorder 0, %v119
    %v121 = vsel %vm120, 0, %v119
    %v122 = vsub.s32 32, %v121
    %v123 = vshll.u32 %v114, %v121
    %v124 = vshrl.u32 %v106, %v122
    %v125 = vor.u32 %v123, %v124
    %v126 = vsub.s32 4294967266, %v121
    %v127 = vadd.s32 %v126, 127
    %v128 = vshll.u32 %v127, 23
    %v129 = vor.u32 4788187, %v128
    %v130 = vand.u32 2147483647, %v129
    %v132 = vcvt.s32.f32 %v125
    %v133 = vmul.f32 %v132, %v130
    %v134 = vxor.u32 %v133, 2147483648
    %v135 = vsel %vm52, %v134, %v133
    %v136 = vsub.s32 4, %v112
    %v137 = vsel %vm52, %v136, %v112
    %v138 = vsel %vm51, %v40, %v135
    %v139 = vsel %vm51, 0, %v137
    %v140 = vcosq.f32.pop %v138
    %v141 = vsinq.f32.pop %v138
    %vm142 = vweird.f32 %v40
    %v143 = vand.u32 %v139, 3
    %vm144 = vcmp.lt.s32.totalorder %v143, 2
    %vm145 = vcmp.eq.s32.totalorder %v143, 0
    %v146 = vxor.u32 %v141, 2147483648
    %v147 = vsel %vm145, %v140, %v146
    %vm148 = vcmp.eq.s32.totalorder %v143, 2
    %v149 = vxor.u32 %v140, 2147483648
    %v150 = vsel %vm148, %v149, %v141
    %v151 = vsel %vm144, %v147, %v150
    %v152 = vsel %vm142, nan, %v151
    %v153 = vand.u32 2147483647, %v40
    %vm154 = vcmp.le.f32.partialorder %v153, 0.7853982
    %vm155 = vcmp.lt.s32.totalorder %v40, 0
    %v156 = vand.u32 %v40, 2139095040
    %v157 = vshrl.u32 %v156, 23
    %v158 = vsub.s32 %v157, 127
    %v159 = vand.u32 2147483647, %v40
    %v160 = vand.u32 %v159, 8388607
    %v161 = vor.u32 %v160, 8388608
    %v162 = vsub.s32 0, %v161
    %v163 = vadd.s32 %v158, 1
    %vm164 = vcmp.gt.s32.totalorder %v163, 0
    %v165 = vsel %vm164, %v163, 0
    %v166 = vshrl.u32 %v165, 5
    %v167 = vand.u32 %v165, 31
    %v168 = vsub.s32 32, %v167
    %v169 = vshrl.u32 683565275, %v168
    %v170 = vshll.u32 683565275, %v167
    %v171 = vshrl.u32 2475754826, %v168
    %v172 = vor.u32 %v170, %v171
    %v173 = vshll.u32 2475754826, %v167
    %v174 = vshrl.u32 2131351028, %v168
    %v175 = vor.u32 %v173, %v174
    %v176 = vshll.u32 2131351028, %v167
    %v177 = vshrl.u32 2102212464, %v168
    %v178 = vor.u32 %v176, %v177
    %v179 = vshll.u32 2102212464, %v167
    %v180 = vshrl.u32 920167782, %v168
    %v181 = vor.u32 %v179, %v180
    %v182 = vshll.u32 920167782, %v167
    %v183 = vshrl.u32 1326507024, %v168
    %v184 = vor.u32 %v182, %v183
    %vm185 = vcmp.lt.s32.totalorder %v166, 1
    %vm186 = vcmp.lt.s32.totalorder %v166, 2
    %vm187 = vcmp.lt.s32.totalorder %v166, 3
    %vm188 = vcmp.lt.s32.totalorder %v166, 4
    %v189 = vsel %vm185, %v169, %v172
    %v190 = vsel %vm188, %v178, 2102212464
    %v191 = vsel %vm187, %v175, %v190
    %v192 = vsel %vm186, %v189, %v191
    %v193 = vsel %vm185, %v172, %v175
    %v194 = vsel %vm188, %v181, 920167782
    %v195 = vsel %vm187, %v178, %v194
    %v196 = vsel %vm186, %v193, %v195
    %v197 = vsel %vm185, %v175, %v178
    %v198 = vsel %vm188, %v184, 1326507024
    %v199 = vsel %vm187, %v181, %v198
    %v200 = vsel %vm186, %v197, %v199
    %v201 = vshll.u32 %v161, 8
    %v202 = vmul.u32.u64.compose %v201, %v200
    %v203 = vextract.low.u32 %v202
    %v204 = vextract.high.u32 %v202
    %v205 = vmul.u32.u64.compose %v201, %v196
    %v206 = vextract.low.u32 %v205
    %v207 = vextract.high.u32 %v205
    %v208 = vmul.u32 %v201, %v192
    %v209 = vadd.s32 %v204, %v206
    %vm210 = vc.u32 %v204, %v206
    %v211 = vadd.s32 %v207, 1
    %v212 = vsel %vm210, %v211, %v207
    %v213 = vadd.s32 %v208, %v212
    %v214 = vadd.s32 %v213, 536870912
    %v215 = vshrl.u32 %v214, 30
    %v216 = vshll.u32 %v215, 30
    %v217 = vsub.s32 %v213, %v216
    %vm218 = vcmp.lt.s32.totalorder %v217, 0
    %v219 = vsub.s32 0, %v217
    %v220 = vsel %vm218, %v219, %v217
    %v221 = vclz %v220
    %v222 = vsub.s32 %v221, 2
    %vm223 = vcmp.gt.s32.totalorder 0, %v222
    %v224 = vsel %vm223, 0, %v222
    %v225 = vsub.s32 32, %v224
    %v226 = vshll.u32 %v217, %v224
    %v227 = vshrl.u32 %v209, %v225
    %v228 = vor.u32 %v226, %v227
    %v229 = vsub.s32 4294967266, %v224
    %v230 = vadd.s32 %v229, 127
    %v231 = vshll.u32 %v230, 23
    %v232 = vor.u32 4788187, %v231
    %v233 = vand.u32 2147483647, %v232
    %v235 = vcvt.s32.f32 %v228
    %v236 = vmul.f32 %v235, %v233
    %v237 = vxor.u32 %v236, 2147483648
    %v238 = vsel %vm155, %v237, %v236
    %v239 = vsub.s32 4, %v215
    %v240 = vsel %vm155, %v239, %v215
    %v241 = vsel %vm154, %v40, %v238
    %v242 = vsel %vm154, 0, %v240
    %v243 = vcosq.f32.pop %v241
    %v244 = vsinq.f32.pop %v241
    %vm245 = vweird.f32 %v40
    %v246 = vadd.s32 %v242, 3
    %v247 = vand.u32 %v246, 3
    %vm248 = vcmp.lt.s32.totalorder %v247, 2
    %vm249 = vcmp.eq.s32.totalorder %v247, 0
    %v250 = vxor.u32 %v244, 2147483648
    %v251 = vsel %vm249, %v243, %v250
    %vm252 = vcmp.eq.s32.totalorder %v247, 2
    %v253 = vxor.u32 %v243, 2147483648
    %v254 = vsel %vm252, %v253, %v244
    %v255 = vsel %vm248, %v251, %v254
    %v256 = vsel %vm245, nan, %v255
    %v257 = vand.u32 2147483647, %v43
    %vm258 = vcmp.le.f32.partialorder %v257, 0.7853982
    %vm259 = vcmp.lt.s32.totalorder %v43, 0
    %v260 = vand.u32 %v43, 2139095040
    %v261 = vshrl.u32 %v260, 23
    %v262 = vsub.s32 %v261, 127
    %v263 = vand.u32 2147483647, %v43
    %v264 = vand.u32 %v263, 8388607
    %v265 = vor.u32 %v264, 8388608
    %v266 = vsub.s32 0, %v265
    %v267 = vadd.s32 %v262, 1
    %vm268 = vcmp.gt.s32.totalorder %v267, 0
    %v269 = vsel %vm268, %v267, 0
    %v270 = vshrl.u32 %v269, 5
    %v271 = vand.u32 %v269, 31
    %v272 = vsub.s32 32, %v271
    %v273 = vshrl.u32 683565275, %v272
    %v274 = vshll.u32 683565275, %v271
    %v275 = vshrl.u32 2475754826, %v272
    %v276 = vor.u32 %v274, %v275
    %v277 = vshll.u32 2475754826, %v271
    %v278 = vshrl.u32 2131351028, %v272
    %v279 = vor.u32 %v277, %v278
    %v280 = vshll.u32 2131351028, %v271
    %v281 = vshrl.u32 2102212464, %v272
    %v282 = vor.u32 %v280, %v281
    %v283 = vshll.u32 2102212464, %v271
    %v284 = vshrl.u32 920167782, %v272
    %v285 = vor.u32 %v283, %v284
    %v286 = vshll.u32 920167782, %v271
    %v287 = vshrl.u32 1326507024, %v272
    %v288 = vor.u32 %v286, %v287
    %vm289 = vcmp.lt.s32.totalorder %v270, 1
    %vm290 = vcmp.lt.s32.totalorder %v270, 2
    %vm291 = vcmp.lt.s32.totalorder %v270, 3
    %vm292 = vcmp.lt.s32.totalorder %v270, 4
    %v293 = vsel %vm289, %v273, %v276
    %v294 = vsel %vm292, %v282, 2102212464
    %v295 = vsel %vm291, %v279, %v294
    %v296 = vsel %vm290, %v293, %v295
    %v297 = vsel %vm289, %v276, %v279
    %v298 = vsel %vm292, %v285, 920167782
    %v299 = vsel %vm291, %v282, %v298
    %v300 = vsel %vm290, %v297, %v299
    %v301 = vsel %vm289, %v279, %v282
    %v302 = vsel %vm292, %v288, 1326507024
    %v303 = vsel %vm291, %v285, %v302
    %v304 = vsel %vm290, %v301, %v303
    %v305 = vshll.u32 %v265, 8
    %v306 = vmul.u32.u64.compose %v305, %v304
    %v307 = vextract.low.u32 %v306
    %v308 = vextract.high.u32 %v306
    %v309 = vmul.u32.u64.compose %v305, %v300
    %v310 = vextract.low.u32 %v309
    %v311 = vextract.high.u32 %v309
    %v312 = vmul.u32 %v305, %v296
    %v313 = vadd.s32 %v308, %v310
    %vm314 = vc.u32 %v308, %v310
    %v315 = vadd.s32 %v311, 1
    %v316 = vsel %vm314, %v315, %v311
    %v317 = vadd.s32 %v312, %v316
    %v318 = vadd.s32 %v317, 536870912
    %v319 = vshrl.u32 %v318, 30
    %v320 = vshll.u32 %v319, 30
    %v321 = vsub.s32 %v317, %v320
    %vm322 = vcmp.lt.s32.totalorder %v321, 0
    %v323 = vsub.s32 0, %v321
    %v324 = vsel %vm322, %v323, %v321
    %v325 = vclz %v324
    %v326 = vsub.s32 %v325, 2
    %vm327 = vcmp.gt.s32.totalorder 0, %v326
    %v328 = vsel %vm327, 0, %v326
    %v329 = vsub.s32 32, %v328
    %v330 = vshll.u32 %v321, %v328
    %v331 = vshrl.u32 %v313, %v329
    %v332 = vor.u32 %v330, %v331
    %v333 = vsub.s32 4294967266, %v328
    %v334 = vadd.s32 %v333, 127
    %v335 = vshll.u32 %v334, 23
    %v336 = vor.u32 4788187, %v335
    %v337 = vand.u32 2147483647, %v336
    %v339 = vcvt.s32.f32 %v332
    %v340 = vmul.f32 %v339, %v337
    %v341 = vxor.u32 %v340, 2147483648
    %v342 = vsel %vm259, %v341, %v340
    %v343 = vsub.s32 4, %v319
    %v344 = vsel %vm259, %v343, %v319
    %v345 = vsel %vm258, %v43, %v342
    %v346 = vsel %vm258, 0, %v344
    %v347 = vcosq.f32.pop %v345
    %v348 = vsinq.f32.pop %v345
    %vm349 = vweird.f32 %v43
    %v350 = vand.u32 %v346, 3
    %vm351 = vcmp.lt.s32.totalorder %v350, 2
    %vm352 = vcmp.eq.s32.totalorder %v350, 0
    %v353 = vxor.u32 %v348, 2147483648
    %v354 = vsel %vm352, %v347, %v353
    %vm355 = vcmp.eq.s32.totalorder %v350, 2
    %v356 = vxor.u32 %v347, 2147483648
    %v357 = vsel %vm355, %v356, %v348
    %v358 = vsel %vm351, %v354, %v357
    %v359 = vsel %vm349, nan, %v358
    %v360 = vand.u32 2147483647, %v43
    %vm361 = vcmp.le.f32.partialorder %v360, 0.7853982
    %vm362 = vcmp.lt.s32.totalorder %v43, 0
    %v363 = vand.u32 %v43, 2139095040
    %v364 = vshrl.u32 %v363, 23
    %v365 = vsub.s32 %v364, 127
    %v366 = vand.u32 2147483647, %v43
    %v367 = vand.u32 %v366, 8388607
    %v368 = vor.u32 %v367, 8388608
    %v369 = vsub.s32 0, %v368
    %v370 = vadd.s32 %v365, 1
    %vm371 = vcmp.gt.s32.totalorder %v370, 0
    %v372 = vsel %vm371, %v370, 0
    %v373 = vshrl.u32 %v372, 5
    %v374 = vand.u32 %v372, 31
    %v375 = vsub.s32 32, %v374
    %v376 = vshrl.u32 683565275, %v375
    %v377 = vshll.u32 683565275, %v374
    %v378 = vshrl.u32 2475754826, %v375
    %v379 = vor.u32 %v377, %v378
    %v380 = vshll.u32 2475754826, %v374
    %v381 = vshrl.u32 2131351028, %v375
    %v382 = vor.u32 %v380, %v381
    %v383 = vshll.u32 2131351028, %v374
    %v384 = vshrl.u32 2102212464, %v375
    %v385 = vor.u32 %v383, %v384
    %v386 = vshll.u32 2102212464, %v374
    %v387 = vshrl.u32 920167782, %v375
    %v388 = vor.u32 %v386, %v387
    %v389 = vshll.u32 920167782, %v374
    %v390 = vshrl.u32 1326507024, %v375
    %v391 = vor.u32 %v389, %v390
    %vm392 = vcmp.lt.s32.totalorder %v373, 1
    %vm393 = vcmp.lt.s32.totalorder %v373, 2
    %vm394 = vcmp.lt.s32.totalorder %v373, 3
    %vm395 = vcmp.lt.s32.totalorder %v373, 4
    %v396 = vsel %vm392, %v376, %v379
    %v397 = vsel %vm395, %v385, 2102212464
    %v398 = vsel %vm394, %v382, %v397
    %v399 = vsel %vm393, %v396, %v398
    %v400 = vsel %vm392, %v379, %v382
    %v401 = vsel %vm395, %v388, 920167782
    %v402 = vsel %vm394, %v385, %v401
    %v403 = vsel %vm393, %v400, %v402
    %v404 = vsel %vm392, %v382, %v385
    %v405 = vsel %vm395, %v391, 1326507024
    %v406 = vsel %vm394, %v388, %v405
    %v407 = vsel %vm393, %v404, %v406
    %v408 = vshll.u32 %v368, 8
    %v409 = vmul.u32.u64.compose %v408, %v407
    %v410 = vextract.low.u32 %v409
    %v411 = vextract.high.u32 %v409
    %v412 = vmul.u32.u64.compose %v408, %v403
    %v413 = vextract.low.u32 %v412
    %v414 = vextract.high.u32 %v412
    %v415 = vmul.u32 %v408, %v399
    %v416 = vadd.s32 %v411, %v413
    %vm417 = vc.u32 %v411, %v413
    %v418 = vadd.s32 %v414, 1
    %v419 = vsel %vm417, %v418, %v414
    %v420 = vadd.s32 %v415, %v419
    %v421 = vadd.s32 %v420, 536870912
    %v422 = vshrl.u32 %v421, 30
    %v423 = vshll.u32 %v422, 30
    %v424 = vsub.s32 %v420, %v423
    %vm425 = vcmp.lt.s32.totalorder %v424, 0
    %v426 = vsub.s32 0, %v424
    %v427 = vsel %vm425, %v426, %v424
    %v428 = vclz %v427
    %v429 = vsub.s32 %v428, 2
    %vm430 = vcmp.gt.s32.totalorder 0, %v429
    %v431 = vsel %vm430, 0, %v429
    %v432 = vsub.s32 32, %v431
    %v433 = vshll.u32 %v424, %v431
    %v434 = vshrl.u32 %v416, %v432
    %v435 = vor.u32 %v433, %v434
    %v436 = vsub.s32 4294967266, %v431
    %v437 = vadd.s32 %v436, 127
    %v438 = vshll.u32 %v437, 23
    %v439 = vor.u32 4788187, %v438
    %v440 = vand.u32 2147483647, %v439
    %v442 = vcvt.s32.f32 %v435
    %v443 = vmul.f32 %v442, %v440
    %v444 = vxor.u32 %v443, 2147483648
    %v445 = vsel %vm362, %v444, %v443
    %v446 = vsub.s32 4, %v422
    %v447 = vsel %vm362, %v446, %v422
    %v448 = vsel %vm361, %v43, %v445
    %v449 = vsel %vm361, 0, %v447
    %v450 = vcosq.f32.pop %v448
    %v451 = vsinq.f32.pop %v448
    %vm452 = vweird.f32 %v43
    %v453 = vadd.s32 %v449, 3
    %v454 = vand.u32 %v453, 3
    %vm455 = vcmp.lt.s32.totalorder %v454, 2
    %vm456 = vcmp.eq.s32.totalorder %v454, 0
    %v457 = vxor.u32 %v451, 2147483648
    %v458 = vsel %vm456, %v450, %v457
    %vm459 = vcmp.eq.s32.totalorder %v454, 2
    %v460 = vxor.u32 %v450, 2147483648
    %v461 = vsel %vm459, %v460, %v451
    %v462 = vsel %vm455, %v458, %v461
    %v463 = vsel %vm452, nan, %v462
    %v464 = vand.u32 2147483647, %v46
    %vm465 = vcmp.le.f32.partialorder %v464, 0.7853982
    %vm466 = vcmp.lt.s32.totalorder %v46, 0
    %v467 = vand.u32 %v46, 2139095040
    %v468 = vshrl.u32 %v467, 23
    %v469 = vsub.s32 %v468, 127
    %v470 = vand.u32 2147483647, %v46
    %v471 = vand.u32 %v470, 8388607
    %v472 = vor.u32 %v471, 8388608
    %v473 = vsub.s32 0, %v472
    %v474 = vadd.s32 %v469, 1
    %vm475 = vcmp.gt.s32.totalorder %v474, 0
    %v476 = vsel %vm475, %v474, 0
    %v477 = vshrl.u32 %v476, 5
    %v478 = vand.u32 %v476, 31
    %v479 = vsub.s32 32, %v478
    %v480 = vshrl.u32 683565275, %v479
    %v481 = vshll.u32 683565275, %v478
    %v482 = vshrl.u32 2475754826, %v479
    %v483 = vor.u32 %v481, %v482
    %v484 = vshll.u32 2475754826, %v478
    %v485 = vshrl.u32 2131351028, %v479
    %v486 = vor.u32 %v484, %v485
    %v487 = vshll.u32 2131351028, %v478
    %v488 = vshrl.u32 2102212464, %v479
    %v489 = vor.u32 %v487, %v488
    %v490 = vshll.u32 2102212464, %v478
    %v491 = vshrl.u32 920167782, %v479
    %v492 = vor.u32 %v490, %v491
    %v493 = vshll.u32 920167782, %v478
    %v494 = vshrl.u32 1326507024, %v479
    %v495 = vor.u32 %v493, %v494
    %vm496 = vcmp.lt.s32.totalorder %v477, 1
    %vm497 = vcmp.lt.s32.totalorder %v477, 2
    %vm498 = vcmp.lt.s32.totalorder %v477, 3
    %vm499 = vcmp.lt.s32.totalorder %v477, 4
    %v500 = vsel %vm496, %v480, %v483
    %v501 = vsel %vm499, %v489, 2102212464
    %v502 = vsel %vm498, %v486, %v501
    %v503 = vsel %vm497, %v500, %v502
    %v504 = vsel %vm496, %v483, %v486
    %v505 = vsel %vm499, %v492, 920167782
    %v506 = vsel %vm498, %v489, %v505
    %v507 = vsel %vm497, %v504, %v506
    %v508 = vsel %vm496, %v486, %v489
    %v509 = vsel %vm499, %v495, 1326507024
    %v510 = vsel %vm498, %v492, %v509
    %v511 = vsel %vm497, %v508, %v510
    %v512 = vshll.u32 %v472, 8
    %v513 = vmul.u32.u64.compose %v512, %v511
    %v514 = vextract.low.u32 %v513
    %v515 = vextract.high.u32 %v513
    %v516 = vmul.u32.u64.compose %v512, %v507
    %v517 = vextract.low.u32 %v516
    %v518 = vextract.high.u32 %v516
    %v519 = vmul.u32 %v512, %v503
    %v520 = vadd.s32 %v515, %v517
    %vm521 = vc.u32 %v515, %v517
    %v522 = vadd.s32 %v518, 1
    %v523 = vsel %vm521, %v522, %v518
    %v524 = vadd.s32 %v519, %v523
    %v525 = vadd.s32 %v524, 536870912
    %v526 = vshrl.u32 %v525, 30
    %v527 = vshll.u32 %v526, 30
    %v528 = vsub.s32 %v524, %v527
    %vm529 = vcmp.lt.s32.totalorder %v528, 0
    %v530 = vsub.s32 0, %v528
    %v531 = vsel %vm529, %v530, %v528
    %v532 = vclz %v531
    %v533 = vsub.s32 %v532, 2
    %vm534 = vcmp.gt.s32.totalorder 0, %v533
    %v535 = vsel %vm534, 0, %v533
    %v536 = vsub.s32 32, %v535
    %v537 = vshll.u32 %v528, %v535
    %v538 = vshrl.u32 %v520, %v536
    %v539 = vor.u32 %v537, %v538
    %v540 = vsub.s32 4294967266, %v535
    %v541 = vadd.s32 %v540, 127
    %v542 = vshll.u32 %v541, 23
    %v543 = vor.u32 4788187, %v542
    %v544 = vand.u32 2147483647, %v543
    %v546 = vcvt.s32.f32 %v539
    %v547 = vmul.f32 %v546, %v544
    %v548 = vxor.u32 %v547, 2147483648
    %v549 = vsel %vm466, %v548, %v547
    %v550 = vsub.s32 4, %v526
    %v551 = vsel %vm466, %v550, %v526
    %v552 = vsel %vm465, %v46, %v549
    %v553 = vsel %vm465, 0, %v551
    %v554 = vcosq.f32.pop %v552
    %v555 = vsinq.f32.pop %v552
    %vm556 = vweird.f32 %v46
    %v557 = vand.u32 %v553, 3
    %vm558 = vcmp.lt.s32.totalorder %v557, 2
    %vm559 = vcmp.eq.s32.totalorder %v557, 0
    %v560 = vxor.u32 %v555, 2147483648
    %v561 = vsel %vm559, %v554, %v560
    %vm562 = vcmp.eq.s32.totalorder %v557, 2
    %v563 = vxor.u32 %v554, 2147483648
    %v564 = vsel %vm562, %v563, %v555
    %v565 = vsel %vm558, %v561, %v564
    %v566 = vsel %vm556, nan, %v565
    %v567 = vand.u32 2147483647, %v46
    %vm568 = vcmp.le.f32.partialorder %v567, 0.7853982
    %vm569 = vcmp.lt.s32.totalorder %v46, 0
    %v570 = vand.u32 %v46, 2139095040
    %v571 = vshrl.u32 %v570, 23
    %v572 = vsub.s32 %v571, 127
    %v573 = vand.u32 2147483647, %v46
    %v574 = vand.u32 %v573, 8388607
    %v575 = vor.u32 %v574, 8388608
    %v576 = vsub.s32 0, %v575
    %v577 = vadd.s32 %v572, 1
    %vm578 = vcmp.gt.s32.totalorder %v577, 0
    %v579 = vsel %vm578, %v577, 0
    %v580 = vshrl.u32 %v579, 5
    %v581 = vand.u32 %v579, 31
    %v582 = vsub.s32 32, %v581
    %v583 = vshrl.u32 683565275, %v582
    %v584 = vshll.u32 683565275, %v581
    %v585 = vshrl.u32 2475754826, %v582
    %v586 = vor.u32 %v584, %v585
    %v587 = vshll.u32 2475754826, %v581
    %v588 = vshrl.u32 2131351028, %v582
    %v589 = vor.u32 %v587, %v588
    %v590 = vshll.u32 2131351028, %v581
    %v591 = vshrl.u32 2102212464, %v582
    %v592 = vor.u32 %v590, %v591
    %v593 = vshll.u32 2102212464, %v581
    %v594 = vshrl.u32 920167782, %v582
    %v595 = vor.u32 %v593, %v594
    %v596 = vshll.u32 920167782, %v581
    %v597 = vshrl.u32 1326507024, %v582
    %v598 = vor.u32 %v596, %v597
    %vm599 = vcmp.lt.s32.totalorder %v580, 1
    %vm600 = vcmp.lt.s32.totalorder %v580, 2
    %vm601 = vcmp.lt.s32.totalorder %v580, 3
    %vm602 = vcmp.lt.s32.totalorder %v580, 4
    %v603 = vsel %vm599, %v583, %v586
    %v604 = vsel %vm602, %v592, 2102212464
    %v605 = vsel %vm601, %v589, %v604
    %v606 = vsel %vm600, %v603, %v605
    %v607 = vsel %vm599, %v586, %v589
    %v608 = vsel %vm602, %v595, 920167782
    %v609 = vsel %vm601, %v592, %v608
    %v610 = vsel %vm600, %v607, %v609
    %v611 = vsel %vm599, %v589, %v592
    %v612 = vsel %vm602, %v598, 1326507024
    %v613 = vsel %vm601, %v595, %v612
    %v614 = vsel %vm600, %v611, %v613
    %v615 = vshll.u32 %v575, 8
    %v616 = vmul.u32.u64.compose %v615, %v614
    %v617 = vextract.low.u32 %v616
    %v618 = vextract.high.u32 %v616
    %v619 = vmul.u32.u64.compose %v615, %v610
    %v620 = vextract.low.u32 %v619
    %v621 = vextract.high.u32 %v619
    %v622 = vmul.u32 %v615, %v606
    %v623 = vadd.s32 %v618, %v620
    %vm624 = vc.u32 %v618, %v620
    %v625 = vadd.s32 %v621, 1
    %v626 = vsel %vm624, %v625, %v621
    %v627 = vadd.s32 %v622, %v626
    %v628 = vadd.s32 %v627, 536870912
    %v629 = vshrl.u32 %v628, 30
    %v630 = vshll.u32 %v629, 30
    %v631 = vsub.s32 %v627, %v630
    %vm632 = vcmp.lt.s32.totalorder %v631, 0
    %v633 = vsub.s32 0, %v631
    %v634 = vsel %vm632, %v633, %v631
    %v635 = vclz %v634
    %v636 = vsub.s32 %v635, 2
    %vm637 = vcmp.gt.s32.totalorder 0, %v636
    %v638 = vsel %vm637, 0, %v636
    %v639 = vsub.s32 32, %v638
    %v640 = vshll.u32 %v631, %v638
    %v641 = vshrl.u32 %v623, %v639
    %v642 = vor.u32 %v640, %v641
    %v643 = vsub.s32 4294967266, %v638
    %v644 = vadd.s32 %v643, 127
    %v645 = vshll.u32 %v644, 23
    %v646 = vor.u32 4788187, %v645
    %v647 = vand.u32 2147483647, %v646
    %v649 = vcvt.s32.f32 %v642
    %v650 = vmul.f32 %v649, %v647
    %v651 = vxor.u32 %v650, 2147483648
    %v652 = vsel %vm569, %v651, %v650
    %v653 = vsub.s32 4, %v629
    %v654 = vsel %vm569, %v653, %v629
    %v655 = vsel %vm568, %v46, %v652
    %v656 = vsel %vm568, 0, %v654
    %v657 = vcosq.f32.pop %v655
    %v658 = vsinq.f32.pop %v655
    %vm659 = vweird.f32 %v46
    %v660 = vadd.s32 %v656, 3
    %v661 = vand.u32 %v660, 3
    %vm662 = vcmp.lt.s32.totalorder %v661, 2
    %vm663 = vcmp.eq.s32.totalorder %v661, 0
    %v664 = vxor.u32 %v658, 2147483648
    %v665 = vsel %vm663, %v657, %v664
    %vm666 = vcmp.eq.s32.totalorder %v661, 2
    %v667 = vxor.u32 %v657, 2147483648
    %v668 = vsel %vm666, %v667, %v658
    %v669 = vsel %vm662, %v665, %v668
    %v670 = vsel %vm659, nan, %v669
    %v671 = vand.u32 2147483647, %v49
    %vm672 = vcmp.le.f32.partialorder %v671, 0.7853982
    %vm673 = vcmp.lt.s32.totalorder %v49, 0
    %v674 = vand.u32 %v49, 2139095040
    %v675 = vshrl.u32 %v674, 23
    %v676 = vsub.s32 %v675, 127
    %v677 = vand.u32 2147483647, %v49
    %v678 = vand.u32 %v677, 8388607
    %v679 = vor.u32 %v678, 8388608
    %v680 = vsub.s32 0, %v679
    %v681 = vadd.s32 %v676, 1
    %vm682 = vcmp.gt.s32.totalorder %v681, 0
    %v683 = vsel %vm682, %v681, 0
    %v684 = vshrl.u32 %v683, 5
    %v685 = vand.u32 %v683, 31
    %v686 = vsub.s32 32, %v685
    %v687 = vshrl.u32 683565275, %v686
    %v688 = vshll.u32 683565275, %v685
    %v689 = vshrl.u32 2475754826, %v686
    %v690 = vor.u32 %v688, %v689
    %v691 = vshll.u32 2475754826, %v685
    %v692 = vshrl.u32 2131351028, %v686
    %v693 = vor.u32 %v691, %v692
    %v694 = vshll.u32 2131351028, %v685
    %v695 = vshrl.u32 2102212464, %v686
    %v696 = vor.u32 %v694, %v695
    %v697 = vshll.u32 2102212464, %v685
    %v698 = vshrl.u32 920167782, %v686
    %v699 = vor.u32 %v697, %v698
    %v700 = vshll.u32 920167782, %v685
    %v701 = vshrl.u32 1326507024, %v686
    %v702 = vor.u32 %v700, %v701
    %vm703 = vcmp.lt.s32.totalorder %v684, 1
    %vm704 = vcmp.lt.s32.totalorder %v684, 2
    %vm705 = vcmp.lt.s32.totalorder %v684, 3
    %vm706 = vcmp.lt.s32.totalorder %v684, 4
    %v707 = vsel %vm703, %v687, %v690
    %v708 = vsel %vm706, %v696, 2102212464
    %v709 = vsel %vm705, %v693, %v708
    %v710 = vsel %vm704, %v707, %v709
    %v711 = vsel %vm703, %v690, %v693
    %v712 = vsel %vm706, %v699, 920167782
    %v713 = vsel %vm705, %v696, %v712
    %v714 = vsel %vm704, %v711, %v713
    %v715 = vsel %vm703, %v693, %v696
    %v716 = vsel %vm706, %v702, 1326507024
    %v717 = vsel %vm705, %v699, %v716
    %v718 = vsel %vm704, %v715, %v717
    %v719 = vshll.u32 %v679, 8
    %v720 = vmul.u32.u64.compose %v719, %v718
    %v721 = vextract.low.u32 %v720
    %v722 = vextract.high.u32 %v720
    %v723 = vmul.u32.u64.compose %v719, %v714
    %v724 = vextract.low.u32 %v723
    %v725 = vextract.high.u32 %v723
    %v726 = vmul.u32 %v719, %v710
    %v727 = vadd.s32 %v722, %v724
    %vm728 = vc.u32 %v722, %v724
    %v729 = vadd.s32 %v725, 1
    %v730 = vsel %vm728, %v729, %v725
    %v731 = vadd.s32 %v726, %v730
    %v732 = vadd.s32 %v731, 536870912
    %v733 = vshrl.u32 %v732, 30
    %v734 = vshll.u32 %v733, 30
    %v735 = vsub.s32 %v731, %v734
    %vm736 = vcmp.lt.s32.totalorder %v735, 0
    %v737 = vsub.s32 0, %v735
    %v738 = vsel %vm736, %v737, %v735
    %v739 = vclz %v738
    %v740 = vsub.s32 %v739, 2
    %vm741 = vcmp.gt.s32.totalorder 0, %v740
    %v742 = vsel %vm741, 0, %v740
    %v743 = vsub.s32 32, %v742
    %v744 = vshll.u32 %v735, %v742
    %v745 = vshrl.u32 %v727, %v743
    %v746 = vor.u32 %v744, %v745
    %v747 = vsub.s32 4294967266, %v742
    %v748 = vadd.s32 %v747, 127
    %v749 = vshll.u32 %v748, 23
    %v750 = vor.u32 4788187, %v749
    %v751 = vand.u32 2147483647, %v750
    %v753 = vcvt.s32.f32 %v746
    %v754 = vmul.f32 %v753, %v751
    %v755 = vxor.u32 %v754, 2147483648
    %v756 = vsel %vm673, %v755, %v754
    %v757 = vsub.s32 4, %v733
    %v758 = vsel %vm673, %v757, %v733
    %v759 = vsel %vm672, %v49, %v756
    %v760 = vsel %vm672, 0, %v758
    %v761 = vcosq.f32.pop %v759
    %v762 = vsinq.f32.pop %v759
    %vm763 = vweird.f32 %v49
    %v764 = vand.u32 %v760, 3
    %vm765 = vcmp.lt.s32.totalorder %v764, 2
    %vm766 = vcmp.eq.s32.totalorder %v764, 0
    %v767 = vxor.u32 %v762, 2147483648
    %v768 = vsel %vm766, %v761, %v767
    %vm769 = vcmp.eq.s32.totalorder %v764, 2
    %v770 = vxor.u32 %v761, 2147483648
    %v771 = vsel %vm769, %v770, %v762
    %v772 = vsel %vm765, %v768, %v771
    %v773 = vsel %vm763, nan, %v772
    %v774 = vand.u32 2147483647, %v49
    %vm775 = vcmp.le.f32.partialorder %v774, 0.7853982
    %vm776 = vcmp.lt.s32.totalorder %v49, 0
    %v777 = vand.u32 %v49, 2139095040
    %v778 = vshrl.u32 %v777, 23
    %v779 = vsub.s32 %v778, 127
    %v780 = vand.u32 2147483647, %v49
    %v781 = vand.u32 %v780, 8388607
    %v782 = vor.u32 %v781, 8388608
    %v783 = vsub.s32 0, %v782
    %v784 = vadd.s32 %v779, 1
    %vm785 = vcmp.gt.s32.totalorder %v784, 0
    %v786 = vsel %vm785, %v784, 0
    %v787 = vshrl.u32 %v786, 5
    %v788 = vand.u32 %v786, 31
    %v789 = vsub.s32 32, %v788
    %v790 = vshrl.u32 683565275, %v789
    %v791 = vshll.u32 683565275, %v788
    %v792 = vshrl.u32 2475754826, %v789
    %v793 = vor.u32 %v791, %v792
    %v794 = vshll.u32 2475754826, %v788
    %v795 = vshrl.u32 2131351028, %v789
    %v796 = vor.u32 %v794, %v795
    %v797 = vshll.u32 2131351028, %v788
    %v798 = vshrl.u32 2102212464, %v789
    %v799 = vor.u32 %v797, %v798
    %v800 = vshll.u32 2102212464, %v788
    %v801 = vshrl.u32 920167782, %v789
    %v802 = vor.u32 %v800, %v801
    %v803 = vshll.u32 920167782, %v788
    %v804 = vshrl.u32 1326507024, %v789
    %v805 = vor.u32 %v803, %v804
    %vm806 = vcmp.lt.s32.totalorder %v787, 1
    %vm807 = vcmp.lt.s32.totalorder %v787, 2
    %vm808 = vcmp.lt.s32.totalorder %v787, 3
    %vm809 = vcmp.lt.s32.totalorder %v787, 4
    %v810 = vsel %vm806, %v790, %v793
    %v811 = vsel %vm809, %v799, 2102212464
    %v812 = vsel %vm808, %v796, %v811
    %v813 = vsel %vm807, %v810, %v812
    %v814 = vsel %vm806, %v793, %v796
    %v815 = vsel %vm809, %v802, 920167782
    %v816 = vsel %vm808, %v799, %v815
    %v817 = vsel %vm807, %v814, %v816
    %v818 = vsel %vm806, %v796, %v799
    %v819 = vsel %vm809, %v805, 1326507024
    %v820 = vsel %vm808, %v802, %v819
    %v821 = vsel %vm807, %v818, %v820
    %v822 = vshll.u32 %v782, 8
    %v823 = vmul.u32.u64.compose %v822, %v821
    %v824 = vextract.low.u32 %v823
    %v825 = vextract.high.u32 %v823
    %v826 = vmul.u32.u64.compose %v822, %v817
    %v827 = vextract.low.u32 %v826
    %v828 = vextract.high.u32 %v826
    %v829 = vmul.u32 %v822, %v813
    %v830 = vadd.s32 %v825, %v827
    %vm831 = vc.u32 %v825, %v827
    %v832 = vadd.s32 %v828, 1
    %v833 = vsel %vm831, %v832, %v828
    %v834 = vadd.s32 %v829, %v833
    %v835 = vadd.s32 %v834, 536870912
    %v836 = vshrl.u32 %v835, 30
    %v837 = vshll.u32 %v836, 30
    %v838 = vsub.s32 %v834, %v837
    %vm839 = vcmp.lt.s32.totalorder %v838, 0
    %v840 = vsub.s32 0, %v838
    %v841 = vsel %vm839, %v840, %v838
    %v842 = vclz %v841
    %v843 = vsub.s32 %v842, 2
    %vm844 = vcmp.gt.s32.totalorder 0, %v843
    %v845 = vsel %vm844, 0, %v843
    %v846 = vsub.s32 32, %v845
    %v847 = vshll.u32 %v838, %v845
    %v848 = vshrl.u32 %v830, %v846
    %v849 = vor.u32 %v847, %v848
    %v850 = vsub.s32 4294967266, %v845
    %v851 = vadd.s32 %v850, 127
    %v852 = vshll.u32 %v851, 23
    %v853 = vor.u32 4788187, %v852
    %v854 = vand.u32 2147483647, %v853
    %v856 = vcvt.s32.f32 %v849
    %v857 = vmul.f32 %v856, %v854
    %v858 = vxor.u32 %v857, 2147483648
    %v859 = vsel %vm776, %v858, %v857
    %v860 = vsub.s32 4, %v836
    %v861 = vsel %vm776, %v860, %v836
    %v862 = vsel %vm775, %v49, %v859
    %v863 = vsel %vm775, 0, %v861
    %v864 = vcosq.f32.pop %v862
    %v865 = vsinq.f32.pop %v862
    %vm866 = vweird.f32 %v49
    %v867 = vadd.s32 %v863, 3
    %v868 = vand.u32 %v867, 3
    %vm869 = vcmp.lt.s32.totalorder %v868, 2
    %vm870 = vcmp.eq.s32.totalorder %v868, 0
    %v871 = vxor.u32 %v865, 2147483648
    %v872 = vsel %vm870, %v864, %v871
    %vm873 = vcmp.eq.s32.totalorder %v868, 2
    %v874 = vxor.u32 %v864, 2147483648
    %v875 = vsel %vm873, %v874, %v865
    %v876 = vsel %vm869, %v872, %v875
    %v877 = vsel %vm866, nan, %v876
    %v878 = vsub.f32 %v359, %v463
    %v879 = vmul.f32 %v152, %v878
    %v880 = vmul.f32 %v879, 0.70710677
    %v881 = vsub.f32 0.0, %v256
    %v882 = vadd.f32 %v359, %v463
    %v883 = vmul.f32 %v881, %v882
    %v884 = vmul.f32 %v883, 0.70710677
    %v885 = vmul.f32 %v152, %v882
    %v886 = vmul.f32 %v885, 0.70710677
    %v887 = vmul.f32 %v256, %v878
    %v888 = vmul.f32 %v887, 0.70710677
    %v889 = vsub.f32 %v773, %v877
    %v890 = vmul.f32 %v566, %v889
    %v891 = vmul.f32 %v890, 0.70710677
    %v892 = vsub.f32 0.0, %v670
    %v893 = vadd.f32 %v773, %v877
    %v894 = vmul.f32 %v892, %v893
    %v895 = vmul.f32 %v894, 0.70710677
    %v896 = vmul.f32 %v566, %v893
    %v897 = vmul.f32 %v896, 0.70710677
    %v898 = vmul.f32 %v670, %v889
    %v899 = vmul.f32 %v898, 0.70710677
    %v900 = vmul.f32 %v880, %v891
    %v901 = vmul.f32 %v884, %v895
    %v902 = vsub.f32 %v900, %v901
    %v903 = vmul.f32 %v880, %v895
    %v904 = vmul.f32 %v884, %v891
    %v905 = vadd.f32 %v903, %v904
    %v906 = vmul.f32 %v880, %v897
    %v907 = vmul.f32 %v884, %v899
    %v908 = vsub.f32 %v906, %v907
    %v909 = vmul.f32 %v880, %v899
    %v910 = vmul.f32 %v884, %v897
    %v911 = vadd.f32 %v909, %v910
    %v912 = vmul.f32 %v886, %v891
    %v913 = vmul.f32 %v888, %v895
    %v914 = vsub.f32 %v912, %v913
    %v915 = vmul.f32 %v886, %v895
    %v916 = vmul.f32 %v888, %v891
    %v917 = vadd.f32 %v915, %v916
    %v918 = vmul.f32 %v886, %v897
    %v919 = vmul.f32 %v888, %v899
    %v920 = vsub.f32 %v918, %v919
    %v921 = vmul.f32 %v886, %v899
    %v922 = vmul.f32 %v888, %v897
    %v923 = vadd.f32 %v921, %v922
    %s924 = sld [smem:[#allocation2]]
    %s925 = sld [smem:[#allocation4]]
    %v926 = vstv %s924
    %v927 = vmul.f32 %v902, %v926
    %v928 = vstv %s925
    %v929 = vmul.f32 %v905, %v928
    %v930 = vsub.f32 %v927, %v929
    %v931 = vmul.f32 %v902, %v928
    %v932 = vmul.f32 %v905, %v926
    %v933 = vadd.f32 %v931, %v932
    %s934 = sld [smem:[#allocation2 + $0x80]]
    %s935 = sld [smem:[#allocation4 + $0x80]]
    %v936 = vstv %s934
    %v937 = vmul.f32 %v908, %v936
    %v938 = vstv %s935
    %v939 = vmul.f32 %v911, %v938
    %v940 = vsub.f32 %v937, %v939
    %v941 = vmul.f32 %v908, %v938
    %v942 = vmul.f32 %v911, %v936
    %v943 = vadd.f32 %v941, %v942
    %v944 = vadd.f32 %v930, %v940
    %v945 = vadd.f32 %v933, %v943
    %s946 = sld [smem:[#allocation2 + $0x100]]
    %s947 = sld [smem:[#allocation4 + $0x100]]
    %v948 = vstv %s946
    %v949 = vmul.f32 %v914, %v948
    %v950 = vstv %s947
    %v951 = vmul.f32 %v917, %v950
    %v952 = vsub.f32 %v949, %v951
    %v953 = vmul.f32 %v914, %v950
    %v954 = vmul.f32 %v917, %v948
    %v955 = vadd.f32 %v953, %v954
    %v956 = vadd.f32 %v944, %v952
    %v957 = vadd.f32 %v945, %v955
    %s958 = sld [smem:[#allocation2 + $0x180]]
    %s959 = sld [smem:[#allocation4 + $0x180]]
    %v960 = vstv %s958
    %v961 = vmul.f32 %v920, %v960
    %v962 = vstv %s959
    %v963 = vmul.f32 %v923, %v962
    %v964 = vsub.f32 %v961, %v963
    %v965 = vmul.f32 %v920, %v962
    %v966 = vmul.f32 %v923, %v960
    %v967 = vadd.f32 %v965, %v966
    %v968 = vadd.f32 %v956, %v964
    %v969 = vadd.f32 %v957, %v967
    %v970 = vmul.f32 %v968, %v968
    %v971 = vmul.f32 %v969, %v969
    %v972 = vadd.f32 %v970, %v971
    %s973 = sld [smem:[#allocation2 + $0x1]]
    %s974 = sld [smem:[#allocation4 + $0x1]]
    %v975 = vstv %s973
    %v976 = vmul.f32 %v902, %v975
    %v977 = vstv %s974
    %v978 = vmul.f32 %v905, %v977
    %v979 = vsub.f32 %v976, %v978
    %v980 = vmul.f32 %v902, %v977
    %v981 = vmul.f32 %v905, %v975
    %v982 = vadd.f32 %v980, %v981
    %s983 = sld [smem:[#allocation2 + $0x81]]
    %s984 = sld [smem:[#allocation4 + $0x81]]
    %v985 = vstv %s983
    %v986 = vmul.f32 %v908, %v985
    %v987 = vstv %s984
    %v988 = vmul.f32 %v911, %v987
    %v989 = vsub.f32 %v986, %v988
    %v990 = vmul.f32 %v908, %v987
    %v991 = vmul.f32 %v911, %v985
    %v992 = vadd.f32 %v990, %v991
    %v993 = vadd.f32 %v979, %v989
    %v994 = vadd.f32 %v982, %v992
    %s995 = sld [smem:[#allocation2 + $0x101]]
    %s996 = sld [smem:[#allocation4 + $0x101]]
    %v997 = vstv %s995
    %v998 = vmul.f32 %v914, %v997
    %v999 = vstv %s996
    %v1000 = vmul.f32 %v917, %v999
    %v1001 = vsub.f32 %v998, %v1000
    %v1002 = vmul.f32 %v914, %v999
    %v1003 = vmul.f32 %v917, %v997
    %v1004 = vadd.f32 %v1002, %v1003
    %v1005 = vadd.f32 %v993, %v1001
    %v1006 = vadd.f32 %v994, %v1004
    %s1007 = sld [smem:[#allocation2 + $0x181]]
    %s1008 = sld [smem:[#allocation4 + $0x181]]
    %v1009 = vstv %s1007
    %v1010 = vmul.f32 %v920, %v1009
    %v1011 = vstv %s1008
    %v1012 = vmul.f32 %v923, %v1011
    %v1013 = vsub.f32 %v1010, %v1012
    %v1014 = vmul.f32 %v920, %v1011
    %v1015 = vmul.f32 %v923, %v1009
    %v1016 = vadd.f32 %v1014, %v1015
    %v1017 = vadd.f32 %v1005, %v1013
    %v1018 = vadd.f32 %v1006, %v1016
    %v1019 = vmul.f32 %v1017, %v1017
    %v1020 = vmul.f32 %v1018, %v1018
    %v1021 = vadd.f32 %v1019, %v1020
    %v1022 = vadd.f32 %v972, %v1021
    %v1023 = vsub.f32 %v972, %v1021
    %s1024 = sld [smem:[#allocation2 + $0x2]]
    %s1025 = sld [smem:[#allocation4 + $0x2]]
    %v1026 = vstv %s1024
    %v1027 = vmul.f32 %v902, %v1026
    %v1028 = vstv %s1025
    %v1029 = vmul.f32 %v905, %v1028
    %v1030 = vsub.f32 %v1027, %v1029
    %v1031 = vmul.f32 %v902, %v1028
    %v1032 = vmul.f32 %v905, %v1026
    %v1033 = vadd.f32 %v1031, %v1032
    %s1034 = sld [smem:[#allocation2 + $0x82]]
    %s1035 = sld [smem:[#allocation4 + $0x82]]
    %v1036 = vstv %s1034
    %v1037 = vmul.f32 %v908, %v1036
    %v1038 = vstv %s1035
    %v1039 = vmul.f32 %v911, %v1038
    %v1040 = vsub.f32 %v1037, %v1039
    %v1041 = vmul.f32 %v908, %v1038
    %v1042 = vmul.f32 %v911, %v1036
    %v1043 = vadd.f32 %v1041, %v1042
    %v1044 = vadd.f32 %v1030, %v1040
    %v1045 = vadd.f32 %v1033, %v1043
    %s1046 = sld [smem:[#allocation2 + $0x102]]
    %s1047 = sld [smem:[#allocation4 + $0x102]]
    %v1048 = vstv %s1046
    %v1049 = vmul.f32 %v914, %v1048
    %v1050 = vstv %s1047
    %v1051 = vmul.f32 %v917, %v1050
    %v1052 = vsub.f32 %v1049, %v1051
    %v1053 = vmul.f32 %v914, %v1050
    %v1054 = vmul.f32 %v917, %v1048
    %v1055 = vadd.f32 %v1053, %v1054
    %v1056 = vadd.f32 %v1044, %v1052
    %v1057 = vadd.f32 %v1045, %v1055
    %s1058 = sld [smem:[#allocation2 + $0x182]]
    %s1059 = sld [smem:[#allocation4 + $0x182]]
    %v1060 = vstv %s1058
    %v1061 = vmul.f32 %v920, %v1060
    %v1062 = vstv %s1059
    %v1063 = vmul.f32 %v923, %v1062
    %v1064 = vsub.f32 %v1061, %v1063
    %v1065 = vmul.f32 %v920, %v1062
    %v1066 = vmul.f32 %v923, %v1060
    %v1067 = vadd.f32 %v1065, %v1066
    %v1068 = vadd.f32 %v1056, %v1064
    %v1069 = vadd.f32 %v1057, %v1067
    %v1070 = vmul.f32 %v1068, %v1068
    %v1071 = vmul.f32 %v1069, %v1069
    %v1072 = vadd.f32 %v1070, %v1071
    %v1073 = vadd.f32 %v1022, %v1072
    %v1074 = vsub.f32 %v1022, %v1072
    %v1075 = vadd.f32 %v1023, %v1072
    %s1076 = sld [smem:[#allocation2 + $0x3]]
    %s1077 = sld [smem:[#allocation4 + $0x3]]
    %v1078 = vstv %s1076
    %v1079 = vmul.f32 %v902, %v1078
    %v1080 = vstv %s1077
    %v1081 = vmul.f32 %v905, %v1080
    %v1082 = vsub.f32 %v1079, %v1081
    %v1083 = vmul.f32 %v902, %v1080
    %v1084 = vmul.f32 %v905, %v1078
    %v1085 = vadd.f32 %v1083, %v1084
    %s1086 = sld [smem:[#allocation2 + $0x83]]
    %s1087 = sld [smem:[#allocation4 + $0x83]]
    %v1088 = vstv %s1086
    %v1089 = vmul.f32 %v908, %v1088
    %v1090 = vstv %s1087
    %v1091 = vmul.f32 %v911, %v1090
    %v1092 = vsub.f32 %v1089, %v1091
    %v1093 = vmul.f32 %v908, %v1090
    %v1094 = vmul.f32 %v911, %v1088
    %v1095 = vadd.f32 %v1093, %v1094
    %v1096 = vadd.f32 %v1082, %v1092
    %v1097 = vadd.f32 %v1085, %v1095
    %s1098 = sld [smem:[#allocation2 + $0x103]]
    %s1099 = sld [smem:[#allocation4 + $0x103]]
    %v1100 = vstv %s1098
    %v1101 = vmul.f32 %v914, %v1100
    %v1102 = vstv %s1099
    %v1103 = vmul.f32 %v917, %v1102
    %v1104 = vsub.f32 %v1101, %v1103
    %v1105 = vmul.f32 %v914, %v1102
    %v1106 = vmul.f32 %v917, %v1100
    %v1107 = vadd.f32 %v1105, %v1106
    %v1108 = vadd.f32 %v1096, %v1104
    %v1109 = vadd.f32 %v1097, %v1107
    %s1110 = sld [smem:[#allocation2 + $0x183]]
    %s1111 = sld [smem:[#allocation4 + $0x183]]
    %v1112 = vstv %s1110
    %v1113 = vmul.f32 %v920, %v1112
    %v1114 = vstv %s1111
    %v1115 = vmul.f32 %v923, %v1114
    %v1116 = vsub.f32 %v1113, %v1115
    %v1117 = vmul.f32 %v920, %v1114
    %v1118 = vmul.f32 %v923, %v1112
    %v1119 = vadd.f32 %v1117, %v1118
    %v1120 = vadd.f32 %v1108, %v1116
    %v1121 = vadd.f32 %v1109, %v1119
    %v1122 = vmul.f32 %v1120, %v1120
    %v1123 = vmul.f32 %v1121, %v1121
    %v1124 = vadd.f32 %v1122, %v1123
    %v1125 = vadd.f32 %v1073, %v1124
    %v1126 = vsub.f32 %v1074, %v1124
    %v1127 = vsub.f32 %v1075, %v1124
    %s1128 = sld [smem:[#allocation2 + $0x4]]
    %s1129 = sld [smem:[#allocation4 + $0x4]]
    %v1130 = vstv %s1128
    %v1131 = vmul.f32 %v902, %v1130
    %v1132 = vstv %s1129
    %v1133 = vmul.f32 %v905, %v1132
    %v1134 = vsub.f32 %v1131, %v1133
    %v1135 = vmul.f32 %v902, %v1132
    %v1136 = vmul.f32 %v905, %v1130
    %v1137 = vadd.f32 %v1135, %v1136
    %s1138 = sld [smem:[#allocation2 + $0x84]]
    %s1139 = sld [smem:[#allocation4 + $0x84]]
    %v1140 = vstv %s1138
    %v1141 = vmul.f32 %v908, %v1140
    %v1142 = vstv %s1139
    %v1143 = vmul.f32 %v911, %v1142
    %v1144 = vsub.f32 %v1141, %v1143
    %v1145 = vmul.f32 %v908, %v1142
    %v1146 = vmul.f32 %v911, %v1140
    %v1147 = vadd.f32 %v1145, %v1146
    %v1148 = vadd.f32 %v1134, %v1144
    %v1149 = vadd.f32 %v1137, %v1147
    %s1150 = sld [smem:[#allocation2 + $0x104]]
    %s1151 = sld [smem:[#allocation4 + $0x104]]
    %v1152 = vstv %s1150
    %v1153 = vmul.f32 %v914, %v1152
    %v1154 = vstv %s1151
    %v1155 = vmul.f32 %v917, %v1154
    %v1156 = vsub.f32 %v1153, %v1155
    %v1157 = vmul.f32 %v914, %v1154
    %v1158 = vmul.f32 %v917, %v1152
    %v1159 = vadd.f32 %v1157, %v1158
    %v1160 = vadd.f32 %v1148, %v1156
    %v1161 = vadd.f32 %v1149, %v1159
    %s1162 = sld [smem:[#allocation2 + $0x184]]
    %s1163 = sld [smem:[#allocation4 + $0x184]]
    %v1164 = vstv %s1162
    %v1165 = vmul.f32 %v920, %v1164
    %v1166 = vstv %s1163
    %v1167 = vmul.f32 %v923, %v1166
    %v1168 = vsub.f32 %v1165, %v1167
    %v1169 = vmul.f32 %v920, %v1166
    %v1170 = vmul.f32 %v923, %v1164
    %v1171 = vadd.f32 %v1169, %v1170
    %v1172 = vadd.f32 %v1160, %v1168
    %v1173 = vadd.f32 %v1161, %v1171
    %v1174 = vmul.f32 %v1172, %v1172
    %v1175 = vmul.f32 %v1173, %v1173
    %v1176 = vadd.f32 %v1174, %v1175
    %v1177 = vadd.f32 %v1125, %v1176
    %v1178 = vsub.f32 %v1125, %v1176
    %v1179 = vadd.f32 %v1126, %v1176
    %v1180 = vadd.f32 %v1127, %v1176
    %s1181 = sld [smem:[#allocation2 + $0x5]]
    %s1182 = sld [smem:[#allocation4 + $0x5]]
    %v1183 = vstv %s1181
    %v1184 = vmul.f32 %v902, %v1183
    %v1185 = vstv %s1182
    %v1186 = vmul.f32 %v905, %v1185
    %v1187 = vsub.f32 %v1184, %v1186
    %v1188 = vmul.f32 %v902, %v1185
    %v1189 = vmul.f32 %v905, %v1183
    %v1190 = vadd.f32 %v1188, %v1189
    %s1191 = sld [smem:[#allocation2 + $0x85]]
    %s1192 = sld [smem:[#allocation4 + $0x85]]
    %v1193 = vstv %s1191
    %v1194 = vmul.f32 %v908, %v1193
    %v1195 = vstv %s1192
    %v1196 = vmul.f32 %v911, %v1195
    %v1197 = vsub.f32 %v1194, %v1196
    %v1198 = vmul.f32 %v908, %v1195
    %v1199 = vmul.f32 %v911, %v1193
    %v1200 = vadd.f32 %v1198, %v1199
    %v1201 = vadd.f32 %v1187, %v1197
    %v1202 = vadd.f32 %v1190, %v1200
    %s1203 = sld [smem:[#allocation2 + $0x105]]
    %s1204 = sld [smem:[#allocation4 + $0x105]]
    %v1205 = vstv %s1203
    %v1206 = vmul.f32 %v914, %v1205
    %v1207 = vstv %s1204
    %v1208 = vmul.f32 %v917, %v1207
    %v1209 = vsub.f32 %v1206, %v1208
    %v1210 = vmul.f32 %v914, %v1207
    %v1211 = vmul.f32 %v917, %v1205
    %v1212 = vadd.f32 %v1210, %v1211
    %v1213 = vadd.f32 %v1201, %v1209
    %v1214 = vadd.f32 %v1202, %v1212
    %s1215 = sld [smem:[#allocation2 + $0x185]]
    %s1216 = sld [smem:[#allocation4 + $0x185]]
    %v1217 = vstv %s1215
    %v1218 = vmul.f32 %v920, %v1217
    %v1219 = vstv %s1216
    %v1220 = vmul.f32 %v923, %v1219
    %v1221 = vsub.f32 %v1218, %v1220
    %v1222 = vmul.f32 %v920, %v1219
    %v1223 = vmul.f32 %v923, %v1217
    %v1224 = vadd.f32 %v1222, %v1223
    %v1225 = vadd.f32 %v1213, %v1221
    %v1226 = vadd.f32 %v1214, %v1224
    %v1227 = vmul.f32 %v1225, %v1225
    %v1228 = vmul.f32 %v1226, %v1226
    %v1229 = vadd.f32 %v1227, %v1228
    %v1230 = vadd.f32 %v1177, %v1229
    %v1231 = vsub.f32 %v1178, %v1229
    %v1232 = vadd.f32 %v1179, %v1229
    %v1233 = vsub.f32 %v1180, %v1229
    %s1234 = sld [smem:[#allocation2 + $0x6]]
    %s1235 = sld [smem:[#allocation4 + $0x6]]
    %v1236 = vstv %s1234
    %v1237 = vmul.f32 %v902, %v1236
    %v1238 = vstv %s1235
    %v1239 = vmul.f32 %v905, %v1238
    %v1240 = vsub.f32 %v1237, %v1239
    %v1241 = vmul.f32 %v902, %v1238
    %v1242 = vmul.f32 %v905, %v1236
    %v1243 = vadd.f32 %v1241, %v1242
    %s1244 = sld [smem:[#allocation2 + $0x86]]
    %s1245 = sld [smem:[#allocation4 + $0x86]]
    %v1246 = vstv %s1244
    %v1247 = vmul.f32 %v908, %v1246
    %v1248 = vstv %s1245
    %v1249 = vmul.f32 %v911, %v1248
    %v1250 = vsub.f32 %v1247, %v1249
    %v1251 = vmul.f32 %v908, %v1248
    %v1252 = vmul.f32 %v911, %v1246
    %v1253 = vadd.f32 %v1251, %v1252
    %v1254 = vadd.f32 %v1240, %v1250
    %v1255 = vadd.f32 %v1243, %v1253
    %s1256 = sld [smem:[#allocation2 + $0x106]]
    %s1257 = sld [smem:[#allocation4 + $0x106]]
    %v1258 = vstv %s1256
    %v1259 = vmul.f32 %v914, %v1258
    %v1260 = vstv %s1257
    %v1261 = vmul.f32 %v917, %v1260
    %v1262 = vsub.f32 %v1259, %v1261
    %v1263 = vmul.f32 %v914, %v1260
    %v1264 = vmul.f32 %v917, %v1258
    %v1265 = vadd.f32 %v1263, %v1264
    %v1266 = vadd.f32 %v1254, %v1262
    %v1267 = vadd.f32 %v1255, %v1265
    %s1268 = sld [smem:[#allocation2 + $0x186]]
    %s1269 = sld [smem:[#allocation4 + $0x186]]
    %v1270 = vstv %s1268
    %v1271 = vmul.f32 %v920, %v1270
    %v1272 = vstv %s1269
    %v1273 = vmul.f32 %v923, %v1272
    %v1274 = vsub.f32 %v1271, %v1273
    %v1275 = vmul.f32 %v920, %v1272
    %v1276 = vmul.f32 %v923, %v1270
    %v1277 = vadd.f32 %v1275, %v1276
    %v1278 = vadd.f32 %v1266, %v1274
    %v1279 = vadd.f32 %v1267, %v1277
    %v1280 = vmul.f32 %v1278, %v1278
    %v1281 = vmul.f32 %v1279, %v1279
    %v1282 = vadd.f32 %v1280, %v1281
    %v1283 = vadd.f32 %v1230, %v1282
    %v1284 = vsub.f32 %v1231, %v1282
    %v1285 = vsub.f32 %v1232, %v1282
    %v1286 = vadd.f32 %v1233, %v1282
    %s1287 = sld [smem:[#allocation2 + $0x7]]
    %s1288 = sld [smem:[#allocation4 + $0x7]]
    %v1289 = vstv %s1287
    %v1290 = vmul.f32 %v902, %v1289
    %v1291 = vstv %s1288
    %v1292 = vmul.f32 %v905, %v1291
    %v1293 = vsub.f32 %v1290, %v1292
    %v1294 = vmul.f32 %v902, %v1291
    %v1295 = vmul.f32 %v905, %v1289
    %v1296 = vadd.f32 %v1294, %v1295
    %s1297 = sld [smem:[#allocation2 + $0x87]]
    %s1298 = sld [smem:[#allocation4 + $0x87]]
    %v1299 = vstv %s1297
    %v1300 = vmul.f32 %v908, %v1299
    %v1301 = vstv %s1298
    %v1302 = vmul.f32 %v911, %v1301
    %v1303 = vsub.f32 %v1300, %v1302
    %v1304 = vmul.f32 %v908, %v1301
    %v1305 = vmul.f32 %v911, %v1299
    %v1306 = vadd.f32 %v1304, %v1305
    %v1307 = vadd.f32 %v1293, %v1303
    %v1308 = vadd.f32 %v1296, %v1306
    %s1309 = sld [smem:[#allocation2 + $0x107]]
    %s1310 = sld [smem:[#allocation4 + $0x107]]
    %v1311 = vstv %s1309
    %v1312 = vmul.f32 %v914, %v1311
    %v1313 = vstv %s1310
    %v1314 = vmul.f32 %v917, %v1313
    %v1315 = vsub.f32 %v1312, %v1314
    %v1316 = vmul.f32 %v914, %v1313
    %v1317 = vmul.f32 %v917, %v1311
    %v1318 = vadd.f32 %v1316, %v1317
    %v1319 = vadd.f32 %v1307, %v1315
    %v1320 = vadd.f32 %v1308, %v1318
    %s1321 = sld [smem:[#allocation2 + $0x187]]
    %s1322 = sld [smem:[#allocation4 + $0x187]]
    %v1323 = vstv %s1321
    %v1324 = vmul.f32 %v920, %v1323
    %v1325 = vstv %s1322
    %v1326 = vmul.f32 %v923, %v1325
    %v1327 = vsub.f32 %v1324, %v1326
    %v1328 = vmul.f32 %v920, %v1325
    %v1329 = vmul.f32 %v923, %v1323
    %v1330 = vadd.f32 %v1328, %v1329
    %v1331 = vadd.f32 %v1319, %v1327
    %v1332 = vadd.f32 %v1320, %v1330
    %v1333 = vmul.f32 %v1331, %v1331
    %v1334 = vmul.f32 %v1332, %v1332
    %v1335 = vadd.f32 %v1333, %v1334
    %v1336 = vadd.f32 %v1283, %v1335
    %v1337 = vsub.f32 %v1284, %v1335
    %v1338 = vsub.f32 %v1285, %v1335
    %v1339 = vsub.f32 %v1286, %v1335
    %s1340 = sld [smem:[#allocation2 + $0x8]]
    %s1341 = sld [smem:[#allocation4 + $0x8]]
    %v1342 = vstv %s1340
    %v1343 = vmul.f32 %v902, %v1342
    %v1344 = vstv %s1341
    %v1345 = vmul.f32 %v905, %v1344
    %v1346 = vsub.f32 %v1343, %v1345
    %v1347 = vmul.f32 %v902, %v1344
    %v1348 = vmul.f32 %v905, %v1342
    %v1349 = vadd.f32 %v1347, %v1348
    %s1350 = sld [smem:[#allocation2 + $0x88]]
    %s1351 = sld [smem:[#allocation4 + $0x88]]
    %v1352 = vstv %s1350
    %v1353 = vmul.f32 %v908, %v1352
    %v1354 = vstv %s1351
    %v1355 = vmul.f32 %v911, %v1354
    %v1356 = vsub.f32 %v1353, %v1355
    %v1357 = vmul.f32 %v908, %v1354
    %v1358 = vmul.f32 %v911, %v1352
    %v1359 = vadd.f32 %v1357, %v1358
    %v1360 = vadd.f32 %v1346, %v1356
    %v1361 = vadd.f32 %v1349, %v1359
    %s1362 = sld [smem:[#allocation2 + $0x108]]
    %s1363 = sld [smem:[#allocation4 + $0x108]]
    %v1364 = vstv %s1362
    %v1365 = vmul.f32 %v914, %v1364
    %v1366 = vstv %s1363
    %v1367 = vmul.f32 %v917, %v1366
    %v1368 = vsub.f32 %v1365, %v1367
    %v1369 = vmul.f32 %v914, %v1366
    %v1370 = vmul.f32 %v917, %v1364
    %v1371 = vadd.f32 %v1369, %v1370
    %v1372 = vadd.f32 %v1360, %v1368
    %v1373 = vadd.f32 %v1361, %v1371
    %s1374 = sld [smem:[#allocation2 + $0x188]]
    %s1375 = sld [smem:[#allocation4 + $0x188]]
    %v1376 = vstv %s1374
    %v1377 = vmul.f32 %v920, %v1376
    %v1378 = vstv %s1375
    %v1379 = vmul.f32 %v923, %v1378
    %v1380 = vsub.f32 %v1377, %v1379
    %v1381 = vmul.f32 %v920, %v1378
    %v1382 = vmul.f32 %v923, %v1376
    %v1383 = vadd.f32 %v1381, %v1382
    %v1384 = vadd.f32 %v1372, %v1380
    %v1385 = vadd.f32 %v1373, %v1383
    %v1386 = vmul.f32 %v1384, %v1384
    %v1387 = vmul.f32 %v1385, %v1385
    %v1388 = vadd.f32 %v1386, %v1387
    %v1389 = vsub.f32 %v1336, %v1388
    %v1390 = vadd.f32 %v1337, %v1388
    %v1391 = vadd.f32 %v1338, %v1388
    %v1392 = vadd.f32 %v1339, %v1388
    %s1393 = sld [smem:[#allocation2 + $0x9]]
    %s1394 = sld [smem:[#allocation4 + $0x9]]
    %v1395 = vstv %s1393
    %v1396 = vmul.f32 %v902, %v1395
    %v1397 = vstv %s1394
    %v1398 = vmul.f32 %v905, %v1397
    %v1399 = vsub.f32 %v1396, %v1398
    %v1400 = vmul.f32 %v902, %v1397
    %v1401 = vmul.f32 %v905, %v1395
    %v1402 = vadd.f32 %v1400, %v1401
    %s1403 = sld [smem:[#allocation2 + $0x89]]
    %s1404 = sld [smem:[#allocation4 + $0x89]]
    %v1405 = vstv %s1403
    %v1406 = vmul.f32 %v908, %v1405
    %v1407 = vstv %s1404
    %v1408 = vmul.f32 %v911, %v1407
    %v1409 = vsub.f32 %v1406, %v1408
    %v1410 = vmul.f32 %v908, %v1407
    %v1411 = vmul.f32 %v911, %v1405
    %v1412 = vadd.f32 %v1410, %v1411
    %v1413 = vadd.f32 %v1399, %v1409
    %v1414 = vadd.f32 %v1402, %v1412
    %s1415 = sld [smem:[#allocation2 + $0x109]]
    %s1416 = sld [smem:[#allocation4 + $0x109]]
    %v1417 = vstv %s1415
    %v1418 = vmul.f32 %v914, %v1417
    %v1419 = vstv %s1416
    %v1420 = vmul.f32 %v917, %v1419
    %v1421 = vsub.f32 %v1418, %v1420
    %v1422 = vmul.f32 %v914, %v1419
    %v1423 = vmul.f32 %v917, %v1417
    %v1424 = vadd.f32 %v1422, %v1423
    %v1425 = vadd.f32 %v1413, %v1421
    %v1426 = vadd.f32 %v1414, %v1424
    %s1427 = sld [smem:[#allocation2 + $0x189]]
    %s1428 = sld [smem:[#allocation4 + $0x189]]
    %v1429 = vstv %s1427
    %v1430 = vmul.f32 %v920, %v1429
    %v1431 = vstv %s1428
    %v1432 = vmul.f32 %v923, %v1431
    %v1433 = vsub.f32 %v1430, %v1432
    %v1434 = vmul.f32 %v920, %v1431
    %v1435 = vmul.f32 %v923, %v1429
    %v1436 = vadd.f32 %v1434, %v1435
    %v1437 = vadd.f32 %v1425, %v1433
    %v1438 = vadd.f32 %v1426, %v1436
    %v1439 = vmul.f32 %v1437, %v1437
    %v1440 = vmul.f32 %v1438, %v1438
    %v1441 = vadd.f32 %v1439, %v1440
    %v1442 = vsub.f32 %v1389, %v1441
    %v1443 = vadd.f32 %v1390, %v1441
    %v1444 = vadd.f32 %v1391, %v1441
    %v1445 = vsub.f32 %v1392, %v1441
    %s1446 = sld [smem:[#allocation2 + $0xa]]
    %s1447 = sld [smem:[#allocation4 + $0xa]]
    %v1448 = vstv %s1446
    %v1449 = vmul.f32 %v902, %v1448
    %v1450 = vstv %s1447
    %v1451 = vmul.f32 %v905, %v1450
    %v1452 = vsub.f32 %v1449, %v1451
    %v1453 = vmul.f32 %v902, %v1450
    %v1454 = vmul.f32 %v905, %v1448
    %v1455 = vadd.f32 %v1453, %v1454
    %s1456 = sld [smem:[#allocation2 + $0x8a]]
    %s1457 = sld [smem:[#allocation4 + $0x8a]]
    %v1458 = vstv %s1456
    %v1459 = vmul.f32 %v908, %v1458
    %v1460 = vstv %s1457
    %v1461 = vmul.f32 %v911, %v1460
    %v1462 = vsub.f32 %v1459, %v1461
    %v1463 = vmul.f32 %v908, %v1460
    %v1464 = vmul.f32 %v911, %v1458
    %v1465 = vadd.f32 %v1463, %v1464
    %v1466 = vadd.f32 %v1452, %v1462
    %v1467 = vadd.f32 %v1455, %v1465
    %s1468 = sld [smem:[#allocation2 + $0x10a]]
    %s1469 = sld [smem:[#allocation4 + $0x10a]]
    %v1470 = vstv %s1468
    %v1471 = vmul.f32 %v914, %v1470
    %v1472 = vstv %s1469
    %v1473 = vmul.f32 %v917, %v1472
    %v1474 = vsub.f32 %v1471, %v1473
    %v1475 = vmul.f32 %v914, %v1472
    %v1476 = vmul.f32 %v917, %v1470
    %v1477 = vadd.f32 %v1475, %v1476
    %v1478 = vadd.f32 %v1466, %v1474
    %v1479 = vadd.f32 %v1467, %v1477
    %s1480 = sld [smem:[#allocation2 + $0x18a]]
    %s1481 = sld [smem:[#allocation4 + $0x18a]]
    %v1482 = vstv %s1480
    %v1483 = vmul.f32 %v920, %v1482
    %v1484 = vstv %s1481
    %v1485 = vmul.f32 %v923, %v1484
    %v1486 = vsub.f32 %v1483, %v1485
    %v1487 = vmul.f32 %v920, %v1484
    %v1488 = vmul.f32 %v923, %v1482
    %v1489 = vadd.f32 %v1487, %v1488
    %v1490 = vadd.f32 %v1478, %v1486
    %v1491 = vadd.f32 %v1479, %v1489
    %v1492 = vmul.f32 %v1490, %v1490
    %v1493 = vmul.f32 %v1491, %v1491
    %v1494 = vadd.f32 %v1492, %v1493
    %v1495 = vsub.f32 %v1442, %v1494
    %v1496 = vadd.f32 %v1443, %v1494
    %v1497 = vsub.f32 %v1444, %v1494
    %v1498 = vadd.f32 %v1445, %v1494
    %s1499 = sld [smem:[#allocation2 + $0xb]]
    %s1500 = sld [smem:[#allocation4 + $0xb]]
    %v1501 = vstv %s1499
    %v1502 = vmul.f32 %v902, %v1501
    %v1503 = vstv %s1500
    %v1504 = vmul.f32 %v905, %v1503
    %v1505 = vsub.f32 %v1502, %v1504
    %v1506 = vmul.f32 %v902, %v1503
    %v1507 = vmul.f32 %v905, %v1501
    %v1508 = vadd.f32 %v1506, %v1507
    %s1509 = sld [smem:[#allocation2 + $0x8b]]
    %s1510 = sld [smem:[#allocation4 + $0x8b]]
    %v1511 = vstv %s1509
    %v1512 = vmul.f32 %v908, %v1511
    %v1513 = vstv %s1510
    %v1514 = vmul.f32 %v911, %v1513
    %v1515 = vsub.f32 %v1512, %v1514
    %v1516 = vmul.f32 %v908, %v1513
    %v1517 = vmul.f32 %v911, %v1511
    %v1518 = vadd.f32 %v1516, %v1517
    %v1519 = vadd.f32 %v1505, %v1515
    %v1520 = vadd.f32 %v1508, %v1518
    %s1521 = sld [smem:[#allocation2 + $0x10b]]
    %s1522 = sld [smem:[#allocation4 + $0x10b]]
    %v1523 = vstv %s1521
    %v1524 = vmul.f32 %v914, %v1523
    %v1525 = vstv %s1522
    %v1526 = vmul.f32 %v917, %v1525
    %v1527 = vsub.f32 %v1524, %v1526
    %v1528 = vmul.f32 %v914, %v1525
    %v1529 = vmul.f32 %v917, %v1523
    %v1530 = vadd.f32 %v1528, %v1529
    %v1531 = vadd.f32 %v1519, %v1527
    %v1532 = vadd.f32 %v1520, %v1530
    %s1533 = sld [smem:[#allocation2 + $0x18b]]
    %s1534 = sld [smem:[#allocation4 + $0x18b]]
    %v1535 = vstv %s1533
    %v1536 = vmul.f32 %v920, %v1535
    %v1537 = vstv %s1534
    %v1538 = vmul.f32 %v923, %v1537
    %v1539 = vsub.f32 %v1536, %v1538
    %v1540 = vmul.f32 %v920, %v1537
    %v1541 = vmul.f32 %v923, %v1535
    %v1542 = vadd.f32 %v1540, %v1541
    %v1543 = vadd.f32 %v1531, %v1539
    %v1544 = vadd.f32 %v1532, %v1542
    %v1545 = vmul.f32 %v1543, %v1543
    %v1546 = vmul.f32 %v1544, %v1544
    %v1547 = vadd.f32 %v1545, %v1546
    %v1548 = vsub.f32 %v1495, %v1547
    %v1549 = vadd.f32 %v1496, %v1547
    %v1550 = vsub.f32 %v1497, %v1547
    %v1551 = vsub.f32 %v1498, %v1547
    %s1552 = sld [smem:[#allocation2 + $0xc]]
    %s1553 = sld [smem:[#allocation4 + $0xc]]
    %v1554 = vstv %s1552
    %v1555 = vmul.f32 %v902, %v1554
    %v1556 = vstv %s1553
    %v1557 = vmul.f32 %v905, %v1556
    %v1558 = vsub.f32 %v1555, %v1557
    %v1559 = vmul.f32 %v902, %v1556
    %v1560 = vmul.f32 %v905, %v1554
    %v1561 = vadd.f32 %v1559, %v1560
    %s1562 = sld [smem:[#allocation2 + $0x8c]]
    %s1563 = sld [smem:[#allocation4 + $0x8c]]
    %v1564 = vstv %s1562
    %v1565 = vmul.f32 %v908, %v1564
    %v1566 = vstv %s1563
    %v1567 = vmul.f32 %v911, %v1566
    %v1568 = vsub.f32 %v1565, %v1567
    %v1569 = vmul.f32 %v908, %v1566
    %v1570 = vmul.f32 %v911, %v1564
    %v1571 = vadd.f32 %v1569, %v1570
    %v1572 = vadd.f32 %v1558, %v1568
    %v1573 = vadd.f32 %v1561, %v1571
    %s1574 = sld [smem:[#allocation2 + $0x10c]]
    %s1575 = sld [smem:[#allocation4 + $0x10c]]
    %v1576 = vstv %s1574
    %v1577 = vmul.f32 %v914, %v1576
    %v1578 = vstv %s1575
    %v1579 = vmul.f32 %v917, %v1578
    %v1580 = vsub.f32 %v1577, %v1579
    %v1581 = vmul.f32 %v914, %v1578
    %v1582 = vmul.f32 %v917, %v1576
    %v1583 = vadd.f32 %v1581, %v1582
    %v1584 = vadd.f32 %v1572, %v1580
    %v1585 = vadd.f32 %v1573, %v1583
    %s1586 = sld [smem:[#allocation2 + $0x18c]]
    %s1587 = sld [smem:[#allocation4 + $0x18c]]
    %v1588 = vstv %s1586
    %v1589 = vmul.f32 %v920, %v1588
    %v1590 = vstv %s1587
    %v1591 = vmul.f32 %v923, %v1590
    %v1592 = vsub.f32 %v1589, %v1591
    %v1593 = vmul.f32 %v920, %v1590
    %v1594 = vmul.f32 %v923, %v1588
    %v1595 = vadd.f32 %v1593, %v1594
    %v1596 = vadd.f32 %v1584, %v1592
    %v1597 = vadd.f32 %v1585, %v1595
    %v1598 = vmul.f32 %v1596, %v1596
    %v1599 = vmul.f32 %v1597, %v1597
    %v1600 = vadd.f32 %v1598, %v1599
    %v1601 = vsub.f32 %v1548, %v1600
    %v1602 = vsub.f32 %v1549, %v1600
    %v1603 = vadd.f32 %v1550, %v1600
    %v1604 = vadd.f32 %v1551, %v1600
    %s1605 = sld [smem:[#allocation2 + $0xd]]
    %s1606 = sld [smem:[#allocation4 + $0xd]]
    %v1607 = vstv %s1605
    %v1608 = vmul.f32 %v902, %v1607
    %v1609 = vstv %s1606
    %v1610 = vmul.f32 %v905, %v1609
    %v1611 = vsub.f32 %v1608, %v1610
    %v1612 = vmul.f32 %v902, %v1609
    %v1613 = vmul.f32 %v905, %v1607
    %v1614 = vadd.f32 %v1612, %v1613
    %s1615 = sld [smem:[#allocation2 + $0x8d]]
    %s1616 = sld [smem:[#allocation4 + $0x8d]]
    %v1617 = vstv %s1615
    %v1618 = vmul.f32 %v908, %v1617
    %v1619 = vstv %s1616
    %v1620 = vmul.f32 %v911, %v1619
    %v1621 = vsub.f32 %v1618, %v1620
    %v1622 = vmul.f32 %v908, %v1619
    %v1623 = vmul.f32 %v911, %v1617
    %v1624 = vadd.f32 %v1622, %v1623
    %v1625 = vadd.f32 %v1611, %v1621
    %v1626 = vadd.f32 %v1614, %v1624
    %s1627 = sld [smem:[#allocation2 + $0x10d]]
    %s1628 = sld [smem:[#allocation4 + $0x10d]]
    %v1629 = vstv %s1627
    %v1630 = vmul.f32 %v914, %v1629
    %v1631 = vstv %s1628
    %v1632 = vmul.f32 %v917, %v1631
    %v1633 = vsub.f32 %v1630, %v1632
    %v1634 = vmul.f32 %v914, %v1631
    %v1635 = vmul.f32 %v917, %v1629
    %v1636 = vadd.f32 %v1634, %v1635
    %v1637 = vadd.f32 %v1625, %v1633
    %v1638 = vadd.f32 %v1626, %v1636
    %s1639 = sld [smem:[#allocation2 + $0x18d]]
    %s1640 = sld [smem:[#allocation4 + $0x18d]]
    %v1641 = vstv %s1639
    %v1642 = vmul.f32 %v920, %v1641
    %v1643 = vstv %s1640
    %v1644 = vmul.f32 %v923, %v1643
    %v1645 = vsub.f32 %v1642, %v1644
    %v1646 = vmul.f32 %v920, %v1643
    %v1647 = vmul.f32 %v923, %v1641
    %v1648 = vadd.f32 %v1646, %v1647
    %v1649 = vadd.f32 %v1637, %v1645
    %v1650 = vadd.f32 %v1638, %v1648
    %v1651 = vmul.f32 %v1649, %v1649
    %v1652 = vmul.f32 %v1650, %v1650
    %v1653 = vadd.f32 %v1651, %v1652
    %v1654 = vsub.f32 %v1601, %v1653
    %v1655 = vsub.f32 %v1602, %v1653
    %v1656 = vadd.f32 %v1603, %v1653
    %v1657 = vsub.f32 %v1604, %v1653
    %s1658 = sld [smem:[#allocation2 + $0xe]]
    %s1659 = sld [smem:[#allocation4 + $0xe]]
    %v1660 = vstv %s1658
    %v1661 = vmul.f32 %v902, %v1660
    %v1662 = vstv %s1659
    %v1663 = vmul.f32 %v905, %v1662
    %v1664 = vsub.f32 %v1661, %v1663
    %v1665 = vmul.f32 %v902, %v1662
    %v1666 = vmul.f32 %v905, %v1660
    %v1667 = vadd.f32 %v1665, %v1666
    %s1668 = sld [smem:[#allocation2 + $0x8e]]
    %s1669 = sld [smem:[#allocation4 + $0x8e]]
    %v1670 = vstv %s1668
    %v1671 = vmul.f32 %v908, %v1670
    %v1672 = vstv %s1669
    %v1673 = vmul.f32 %v911, %v1672
    %v1674 = vsub.f32 %v1671, %v1673
    %v1675 = vmul.f32 %v908, %v1672
    %v1676 = vmul.f32 %v911, %v1670
    %v1677 = vadd.f32 %v1675, %v1676
    %v1678 = vadd.f32 %v1664, %v1674
    %v1679 = vadd.f32 %v1667, %v1677
    %s1680 = sld [smem:[#allocation2 + $0x10e]]
    %s1681 = sld [smem:[#allocation4 + $0x10e]]
    %v1682 = vstv %s1680
    %v1683 = vmul.f32 %v914, %v1682
    %v1684 = vstv %s1681
    %v1685 = vmul.f32 %v917, %v1684
    %v1686 = vsub.f32 %v1683, %v1685
    %v1687 = vmul.f32 %v914, %v1684
    %v1688 = vmul.f32 %v917, %v1682
    %v1689 = vadd.f32 %v1687, %v1688
    %v1690 = vadd.f32 %v1678, %v1686
    %v1691 = vadd.f32 %v1679, %v1689
    %s1692 = sld [smem:[#allocation2 + $0x18e]]
    %s1693 = sld [smem:[#allocation4 + $0x18e]]
    %v1694 = vstv %s1692
    %v1695 = vmul.f32 %v920, %v1694
    %v1696 = vstv %s1693
    %v1697 = vmul.f32 %v923, %v1696
    %v1698 = vsub.f32 %v1695, %v1697
    %v1699 = vmul.f32 %v920, %v1696
    %v1700 = vmul.f32 %v923, %v1694
    %v1701 = vadd.f32 %v1699, %v1700
    %v1702 = vadd.f32 %v1690, %v1698
    %v1703 = vadd.f32 %v1691, %v1701
    %v1704 = vmul.f32 %v1702, %v1702
    %v1705 = vmul.f32 %v1703, %v1703
    %v1706 = vadd.f32 %v1704, %v1705
    %v1707 = vsub.f32 %v1654, %v1706
    %v1708 = vsub.f32 %v1655, %v1706
    %v1709 = vsub.f32 %v1656, %v1706
    %v1710 = vadd.f32 %v1657, %v1706
    %s1711 = sld [smem:[#allocation2 + $0xf]]
    %s1712 = sld [smem:[#allocation4 + $0xf]]
    %v1713 = vstv %s1711
    %v1714 = vmul.f32 %v902, %v1713
    %v1715 = vstv %s1712
    %v1716 = vmul.f32 %v905, %v1715
    %v1717 = vsub.f32 %v1714, %v1716
    %v1718 = vmul.f32 %v902, %v1715
    %v1719 = vmul.f32 %v905, %v1713
    %v1720 = vadd.f32 %v1718, %v1719
    %s1721 = sld [smem:[#allocation2 + $0x8f]]
    %s1722 = sld [smem:[#allocation4 + $0x8f]]
    %v1723 = vstv %s1721
    %v1724 = vmul.f32 %v908, %v1723
    %v1725 = vstv %s1722
    %v1726 = vmul.f32 %v911, %v1725
    %v1727 = vsub.f32 %v1724, %v1726
    %v1728 = vmul.f32 %v908, %v1725
    %v1729 = vmul.f32 %v911, %v1723
    %v1730 = vadd.f32 %v1728, %v1729
    %v1731 = vadd.f32 %v1717, %v1727
    %v1732 = vadd.f32 %v1720, %v1730
    %s1733 = sld [smem:[#allocation2 + $0x10f]]
    %s1734 = sld [smem:[#allocation4 + $0x10f]]
    %v1735 = vstv %s1733
    %v1736 = vmul.f32 %v914, %v1735
    %v1737 = vstv %s1734
    %v1738 = vmul.f32 %v917, %v1737
    %v1739 = vsub.f32 %v1736, %v1738
    %v1740 = vmul.f32 %v914, %v1737
    %v1741 = vmul.f32 %v917, %v1735
    %v1742 = vadd.f32 %v1740, %v1741
    %v1743 = vadd.f32 %v1731, %v1739
    %v1744 = vadd.f32 %v1732, %v1742
    %s1745 = sld [smem:[#allocation2 + $0x18f]]
    %s1746 = sld [smem:[#allocation4 + $0x18f]]
    %v1747 = vstv %s1745
    %v1748 = vmul.f32 %v920, %v1747
    %v1749 = vstv %s1746
    %v1750 = vmul.f32 %v923, %v1749
    %v1751 = vsub.f32 %v1748, %v1750
    %v1752 = vmul.f32 %v920, %v1749
    %v1753 = vmul.f32 %v923, %v1747
    %v1754 = vadd.f32 %v1752, %v1753
    %v1755 = vadd.f32 %v1743, %v1751
    %v1756 = vadd.f32 %v1744, %v1754
    %v1757 = vmul.f32 %v1755, %v1755
    %v1758 = vmul.f32 %v1756, %v1756
    %v1759 = vadd.f32 %v1757, %v1758
    %v1760 = vsub.f32 %v1707, %v1759
    %v1761 = vsub.f32 %v1708, %v1759
    %v1762 = vsub.f32 %v1709, %v1759
    %v1763 = vsub.f32 %v1710, %v1759
    %1764 = vst [vmem:[%s3] sm:$0xff] %v1760
    %s1765 = scalar_lea.vmem %s3, 8
    %1766 = vst [vmem:[%s1765] sm:$0xff] %v1761
    %s1767 = scalar_lea.vmem %s3, 16
    %1768 = vst [vmem:[%s1767] sm:$0xff] %v1762
    %s1769 = scalar_lea.vmem %s3, 24
    %1770 = vst [vmem:[%s1769] sm:$0xff] %v1763
    // Predicated region
    $region22: #{discriminator_forward.2} parent=1 // pred_check
      _
    $region23: #{discriminator_forward.2} parent=1 // pred_check_branch
      %1772 = sbr.rel (0) target = $region25
    $region24: #{discriminator_forward.2} parent=1 // pred_region
      _
    $region25: #{discriminator_forward.2} parent=1 // pred_fallthru
      _
    // Predicated region
    $region26: #{discriminator_forward.2} parent=1 // pred_check
      _
    $region27: #{discriminator_forward.2} parent=1 // pred_check_branch
      %1774 = sbr.rel (0) target = $region29
    $region28: #{discriminator_forward.2} parent=1 // pred_region
      _
    $region29: #{discriminator_forward.2} parent=1 // pred_fallthru
      _
    %1775 = vsyncpa [#allocation3], 1
    %1776 = vsyncpa [#allocation5], 1

// kernel: discriminator_forward.3
$region0: #{discriminator_forward.3}
  #allocation0 [shape = 'u32[]', space=smem, size = 0x4, offset = 0x4, fixed_abs, tag = 'smem constant byte address 0x4 - core index']
  #allocation1 [shape = 'u32[144,128]{1,0:T(1,128)}', space=vmem, size = 0x12000, scoped, tag = 'internal scratch']
  #allocation2 [shape = 'f32[568,4]{1,0:T(8,128)}', space=vmem, size = 0x47000, scoped, tag = 'scratch operand']
  #allocation3 [shape = 'f32[568,64]{1,0:T(8,128)}', space=vmem, size = 0x47000, scoped, tag = 'scratch operand']
  #allocation4 [shape = 'f32[1,1]{1,0:T(1,128)S(1)}', space=vmem, size = 0x200, scoped, tag = 'scoped memory for discriminator_forward.3']
  %s0 = inlined_call_operand.vmem [shape: f32[560,4], index: 0, kind: input, shape index: {}]
  %s1 = inlined_call_operand.vmem [shape: f32[1,4], index: 1, kind: input, shape index: {}]
  %s2 = inlined_call_operand.vmem [shape: f32[1,4], index: 2, kind: input, shape index: {}]
  %s3 = inlined_call_operand.vmem [shape: f32[3,4,64], index: 3, kind: input, shape index: {}]
  %s4 = inlined_call_operand.vmem [shape: f32[1,64], index: 4, kind: input, shape index: {}]
  %s5 = inlined_call_operand.vmem [shape: f32[1,64], index: 5, kind: input, shape index: {}]
  %s6 = inlined_call_operand.vmem [shape: f32[1,64], index: 6, kind: input, shape index: {}]
  %s7 = inlined_call_operand.vmem [shape: f32[3,64,128], index: 7, kind: input, shape index: {}]
  %s8 = inlined_call_operand.vmem [shape: f32[1,128], index: 8, kind: input, shape index: {}]
  %s9 = inlined_call_operand.vmem [shape: f32[1,128], index: 9, kind: input, shape index: {}]
  %s10 = inlined_call_operand.vmem [shape: f32[1,128], index: 10, kind: input, shape index: {}]
  %s11 = inlined_call_operand.vmem [shape: f32[560,128], index: 11, kind: input, shape index: {}]
  %s12 = inlined_call_operand.<no memory space> [shape: f32[1,1], index: 12, kind: input, shape index: {}]
  %s13 = inlined_call_operand.hbm [shape: f32[1,1], index: 13, kind: output, shape index: {}]
  %s14 = sld [smem:[#allocation0]]
  $region62: #{discriminator_forward.3} parent=0
    _
  %s16 = ssub.s32 1, %s14
  %s17 = scalar_select 0, %s16, %s14
  %v18 = vstv %s12
  %19 = vst [vmem:[#allocation4] sm:$0x1] %v18
  $region1: #{discriminator_forward.3} parent=0
    #allocation5 [shape = 'u8[512]{0}', space=vmem, size = 0x400, scoped, tag = 'output window, operand 0, single buffered']
    #allocation6 [shape = 's32[1]{0}', space=sflag, size = 0x4, scoped, tag = 'scoped memory for discriminator_forward.3']
    %20 = vsyncpa [#allocation6], 0
    // Predicated region
    $region2: #{discriminator_forward.3} parent=1 // pred_check
      _
    $region3: #{discriminator_forward.3} parent=1 // pred_check_branch
      %22 = sbr.rel (0) target = $region5
    $region4: #{discriminator_forward.3} parent=1 // pred_region
      _
    $region5: #{discriminator_forward.3} parent=1 // pred_fallthru
      _
    // Predicated region
    $region6: #{discriminator_forward.3} parent=1 // pred_check
      _
    $region7: #{discriminator_forward.3} parent=1 // pred_check_branch
      %24 = sbr.rel (0) target = $region9
    $region8: #{discriminator_forward.3} parent=1 // pred_region
      _
    $region9: #{discriminator_forward.3} parent=1 // pred_fallthru
      _
    // Predicated region
    $region10: #{discriminator_forward.3} parent=1 // pred_check
      _
    $region11: #{discriminator_forward.3} parent=1 // pred_check_branch
      %26 = sbr.rel (0) target = $region13
    $region12: #{discriminator_forward.3} parent=1 // pred_region
      _
    $region13: #{discriminator_forward.3} parent=1 // pred_fallthru
      _
    // Predicated region
    $region14: #{discriminator_forward.3} parent=1 // pred_check
      _
    $region15: #{discriminator_forward.3} parent=1 // pred_check_branch
      %28 = sbr.rel (0) target = $region17
    $region16: #{discriminator_forward.3} parent=1 // pred_region
      _
    $region17: #{discriminator_forward.3} parent=1 // pred_fallthru
      _
    // Predicated region
    $region18: #{discriminator_forward.3} parent=1 // pred_check
      _
    $region19: #{discriminator_forward.3} parent=1 // pred_check_branch
      %30 = sbr.rel (0) target = $region21
    $region20: #{discriminator_forward.3} parent=1 // pred_region
      _
    $region21: #{discriminator_forward.3} parent=1 // pred_fallthru
      _
    // Predicated region
    $region22: #{discriminator_forward.3} parent=1 // pred_check
      _
    $region23: #{discriminator_forward.3} parent=1 // pred_check_branch
      %32 = sbr.rel (0) target = $region25
    $region24: #{discriminator_forward.3} parent=1 // pred_region
      _
    $region25: #{discriminator_forward.3} parent=1 // pred_fallthru
      _
    // Predicated region
    $region26: #{discriminator_forward.3} parent=1 // pred_check
      _
    $region27: #{discriminator_forward.3} parent=1 // pred_check_branch
      %34 = sbr.rel (0) target = $region29
    $region28: #{discriminator_forward.3} parent=1 // pred_region
      _
    $region29: #{discriminator_forward.3} parent=1 // pred_fallthru
      _
    // Predicated region
    $region30: #{discriminator_forward.3} parent=1 // pred_check
      _
    $region31: #{discriminator_forward.3} parent=1 // pred_check_branch
      %36 = sbr.rel (0) target = $region33
    $region32: #{discriminator_forward.3} parent=1 // pred_region
      _
    $region33: #{discriminator_forward.3} parent=1 // pred_fallthru
      _
    // Predicated region
    $region34: #{discriminator_forward.3} parent=1 // pred_check
      _
    $region35: #{discriminator_forward.3} parent=1 // pred_check_branch
      %38 = sbr.rel (0) target = $region37
    $region36: #{discriminator_forward.3} parent=1 // pred_region
      _
    $region37: #{discriminator_forward.3} parent=1 // pred_fallthru
      _
    // Predicated region
    $region38: #{discriminator_forward.3} parent=1 // pred_check
      _
    $region39: #{discriminator_forward.3} parent=1 // pred_check_branch
      %40 = sbr.rel (0) target = $region41
    $region40: #{discriminator_forward.3} parent=1 // pred_region
      _
    $region41: #{discriminator_forward.3} parent=1 // pred_fallthru
      _
    // Predicated region
    $region42: #{discriminator_forward.3} parent=1 // pred_check
      _
    $region43: #{discriminator_forward.3} parent=1 // pred_check_branch
      %42 = sbr.rel (0) target = $region45
    $region44: #{discriminator_forward.3} parent=1 // pred_region
      _
    $region45: #{discriminator_forward.3} parent=1 // pred_fallthru
      _
    // Predicated region
    $region46: #{discriminator_forward.3} parent=1 // pred_check
      _
    $region47: #{discriminator_forward.3} parent=1 // pred_check_branch
      %44 = sbr.rel (0) target = $region49
    $region48: #{discriminator_forward.3} parent=1 // pred_region
      _
    $region49: #{discriminator_forward.3} parent=1 // pred_fallthru
      _
    // Predicated region
    $region50: #{discriminator_forward.3} parent=1 // pred_check
      _
    $region51: #{discriminator_forward.3} parent=1 // pred_check_branch
      %46 = sbr.rel (0) target = $region53
    $region52: #{discriminator_forward.3} parent=1 // pred_region
      _
    $region53: #{discriminator_forward.3} parent=1 // pred_fallthru
      _
    %v47 = vld [vmem:[%s0] sm:$0xff]
    %v48 = vld [vmem:[%s0 + $0x8] sm:$0xff]
    %v49 = vld [vmem:[%s0 + $0x10] sm:$0xff]
    %v50 = vld [vmem:[%s0 + $0x18] sm:$0xff]
    %v51 = vld [vmem:[%s0 + $0x20] sm:$0xff]
    %v52 = vld [vmem:[%s0 + $0x28] sm:$0xff]
    %v53 = vld [vmem:[%s0 + $0x30] sm:$0xff]
    %v54 = vld [vmem:[%s0 + $0x38] sm:$0xff]
    %v55 = vld [vmem:[%s0 + $0x40] sm:$0xff]
    %v56 = vld [vmem:[%s0 + $0x48] sm:$0xff]
    %v57 = vld [vmem:[%s0 + $0x50] sm:$0xff]
    %v58 = vld [vmem:[%s0 + $0x58] sm:$0xff]
    %v59 = vld [vmem:[%s0 + $0x60] sm:$0xff]
    %v60 = vld [vmem:[%s0 + $0x68] sm:$0xff]
    %v61 = vld [vmem:[%s0 + $0x70] sm:$0xff]
    %v62 = vld [vmem:[%s0 + $0x78] sm:$0xff]
    %v63 = vld [vmem:[%s0 + $0x80] sm:$0xff]
    %v64 = vld [vmem:[%s0 + $0x88] sm:$0xff]
    %v65 = vld [vmem:[%s0 + $0x90] sm:$0xff]
    %v66 = vld [vmem:[%s0 + $0x98] sm:$0xff]
    %v67 = vld [vmem:[%s0 + $0xa0] sm:$0xff]
    %v68 = vld [vmem:[%s0 + $0xa8] sm:$0xff]
    %v69 = vld [vmem:[%s0 + $0xb0] sm:$0xff]
    %v70 = vld [vmem:[%s0 + $0xb8] sm:$0xff]
    %v71 = vld [vmem:[%s0 + $0xc0] sm:$0xff]
    %v72 = vld [vmem:[%s0 + $0xc8] sm:$0xff]
    %v73 = vld [vmem:[%s0 + $0xd0] sm:$0xff]
    %v74 = vld [vmem:[%s0 + $0xd8] sm:$0xff]
    %v75 = vld [vmem:[%s0 + $0xe0] sm:$0xff]
    %v76 = vld [vmem:[%s0 + $0xe8] sm:$0xff]
    %v77 = vld [vmem:[%s0 + $0xf0] sm:$0xff]
    %v78 = vld [vmem:[%s0 + $0xf8] sm:$0xff]
    %v79 = vld [vmem:[%s0 + $0x100] sm:$0xff]
    %v80 = vld [vmem:[%s0 + $0x108] sm:$0xff]
    %v81 = vld [vmem:[%s0 + $0x110] sm:$0xff]
    %v82 = vld [vmem:[%s0 + $0x118] sm:$0xff]
    %v83 = vld [vmem:[%s0 + $0x120] sm:$0xff]
    %v84 = vld [vmem:[%s0 + $0x128] sm:$0xff]
    %v85 = vld [vmem:[%s0 + $0x130] sm:$0xff]
    %v86 = vld [vmem:[%s0 + $0x138] sm:$0xff]
    %v87 = vld [vmem:[%s0 + $0x140] sm:$0xff]
    %v88 = vld [vmem:[%s0 + $0x148] sm:$0xff]
    %v89 = vld [vmem:[%s0 + $0x150] sm:$0xff]
    %v90 = vld [vmem:[%s0 + $0x158] sm:$0xff]
    %v91 = vld [vmem:[%s0 + $0x160] sm:$0xff]
    %v92 = vld [vmem:[%s0 + $0x168] sm:$0xff]
    %v93 = vld [vmem:[%s0 + $0x170] sm:$0xff]
    %v94 = vld [vmem:[%s0 + $0x178] sm:$0xff]
    %v95 = vld [vmem:[%s0 + $0x180] sm:$0xff]
    %v96 = vld [vmem:[%s0 + $0x188] sm:$0xff]
    %v97 = vld [vmem:[%s0 + $0x190] sm:$0xff]
    %v98 = vld [vmem:[%s0 + $0x198] sm:$0xff]
    %v99 = vld [vmem:[%s0 + $0x1a0] sm:$0xff]
    %v100 = vld [vmem:[%s0 + $0x1a8] sm:$0xff]
    %v101 = vld [vmem:[%s0 + $0x1b0] sm:$0xff]
    %v102 = vld [vmem:[%s0 + $0x1b8] sm:$0xff]
    %v103 = vld [vmem:[%s0 + $0x1c0] sm:$0xff]
    %v104 = vld [vmem:[%s0 + $0x1c8] sm:$0xff]
    %v105 = vld [vmem:[%s0 + $0x1d0] sm:$0xff]
    %v106 = vld [vmem:[%s0 + $0x1d8] sm:$0xff]
    %v107 = vld [vmem:[%s0 + $0x1e0] sm:$0xff]
    %v108 = vld [vmem:[%s0 + $0x1e8] sm:$0xff]
    %v109 = vld [vmem:[%s0 + $0x1f0] sm:$0xff]
    %v110 = vld [vmem:[%s0 + $0x1f8] sm:$0xff]
    %v111 = vld [vmem:[%s0 + $0x200] sm:$0xff]
    %v112 = vld [vmem:[%s0 + $0x208] sm:$0xff]
    %v113 = vld [vmem:[%s0 + $0x210] sm:$0xff]
    %v114 = vld [vmem:[%s0 + $0x218] sm:$0xff]
    %v115 = vld [vmem:[%s0 + $0x220] sm:$0xff]
    %v116 = vld [vmem:[%s0 + $0x228] sm:$0xff]
    %vm117 = vcmask 31744
    %v118 = vsel %vm117, %v47, 0.0
    %v119 = vsel %vm117, %v48, 0.0
    %v120 = vadd.f32 %v118, %v119
    %v121 = vsel %vm117, %v49, 0.0
    %v122 = vadd.f32 %v120, %v121
    %v123 = vsel %vm117, %v50, 0.0
    %v124 = vadd.f32 %v122, %v123
    %v125 = vsel %vm117, %v51, 0.0
    %v126 = vadd.f32 %v124, %v125
    %v127 = vsel %vm117, %v52, 0.0
    %v128 = vadd.f32 %v126, %v127
    %v129 = vsel %vm117, %v53, 0.0
    %v130 = vadd.f32 %v128, %v129
    %v131 = vsel %vm117, %v54, 0.0
    %v132 = vadd.f32 %v130, %v131
    %v133 = vsel %vm117, %v55, 0.0
    %v134 = vadd.f32 %v132, %v133
    %v135 = vsel %vm117, %v56, 0.0
    %v136 = vadd.f32 %v134, %v135
    %v137 = vsel %vm117, %v57, 0.0
    %v138 = vadd.f32 %v136, %v137
    %v139 = vsel %vm117, %v58, 0.0
    %v140 = vadd.f32 %v138, %v139
    %v141 = vsel %vm117, %v59, 0.0
    %v142 = vadd.f32 %v140, %v141
    %v143 = vsel %vm117, %v60, 0.0
    %v144 = vadd.f32 %v142, %v143
    %v145 = vsel %vm117, %v61, 0.0
    %v146 = vadd.f32 %v144, %v145
    %v147 = vsel %vm117, %v62, 0.0
    %v148 = vadd.f32 %v146, %v147
    %v149 = vsel %vm117, %v63, 0.0
    %v150 = vadd.f32 %v148, %v149
    %v151 = vsel %vm117, %v64, 0.0
    %v152 = vadd.f32 %v150, %v151
    %v153 = vsel %vm117, %v65, 0.0
    %v154 = vadd.f32 %v152, %v153
    %v155 = vsel %vm117, %v66, 0.0
    %v156 = vadd.f32 %v154, %v155
    %v157 = vsel %vm117, %v67, 0.0
    %v158 = vadd.f32 %v156, %v157
    %v159 = vsel %vm117, %v68, 0.0
    %v160 = vadd.f32 %v158, %v159
    %v161 = vsel %vm117, %v69, 0.0
    %v162 = vadd.f32 %v160, %v161
    %v163 = vsel %vm117, %v70, 0.0
    %v164 = vadd.f32 %v162, %v163
    %v165 = vsel %vm117, %v71, 0.0
    %v166 = vadd.f32 %v164, %v165
    %v167 = vsel %vm117, %v72, 0.0
    %v168 = vadd.f32 %v166, %v167
    %v169 = vsel %vm117, %v73, 0.0
    %v170 = vadd.f32 %v168, %v169
    %v171 = vsel %vm117, %v74, 0.0
    %v172 = vadd.f32 %v170, %v171
    %v173 = vsel %vm117, %v75, 0.0
    %v174 = vadd.f32 %v172, %v173
    %v175 = vsel %vm117, %v76, 0.0
    %v176 = vadd.f32 %v174, %v175
    %v177 = vsel %vm117, %v77, 0.0
    %v178 = vadd.f32 %v176, %v177
    %v179 = vsel %vm117, %v78, 0.0
    %v180 = vadd.f32 %v178, %v179
    %v181 = vsel %vm117, %v79, 0.0
    %v182 = vadd.f32 %v180, %v181
    %v183 = vsel %vm117, %v80, 0.0
    %v184 = vadd.f32 %v182, %v183
    %v185 = vsel %vm117, %v81, 0.0
    %v186 = vadd.f32 %v184, %v185
    %v187 = vsel %vm117, %v82, 0.0
    %v188 = vadd.f32 %v186, %v187
    %v189 = vsel %vm117, %v83, 0.0
    %v190 = vadd.f32 %v188, %v189
    %v191 = vsel %vm117, %v84, 0.0
    %v192 = vadd.f32 %v190, %v191
    %v193 = vsel %vm117, %v85, 0.0
    %v194 = vadd.f32 %v192, %v193
    %v195 = vsel %vm117, %v86, 0.0
    %v196 = vadd.f32 %v194, %v195
    %v197 = vsel %vm117, %v87, 0.0
    %v198 = vadd.f32 %v196, %v197
    %v199 = vsel %vm117, %v88, 0.0
    %v200 = vadd.f32 %v198, %v199
    %v201 = vsel %vm117, %v89, 0.0
    %v202 = vadd.f32 %v200, %v201
    %v203 = vsel %vm117, %v90, 0.0
    %v204 = vadd.f32 %v202, %v203
    %v205 = vsel %vm117, %v91, 0.0
    %v206 = vadd.f32 %v204, %v205
    %v207 = vsel %vm117, %v92, 0.0
    %v208 = vadd.f32 %v206, %v207
    %v209 = vsel %vm117, %v93, 0.0
    %v210 = vadd.f32 %v208, %v209
    %v211 = vsel %vm117, %v94, 0.0
    %v212 = vadd.f32 %v210, %v211
    %v213 = vsel %vm117, %v95, 0.0
    %v214 = vadd.f32 %v212, %v213
    %v215 = vsel %vm117, %v96, 0.0
    %v216 = vadd.f32 %v214, %v215
    %v217 = vsel %vm117, %v97, 0.0
    %v218 = vadd.f32 %v216, %v217
    %v219 = vsel %vm117, %v98, 0.0
    %v220 = vadd.f32 %v218, %v219
    %v221 = vsel %vm117, %v99, 0.0
    %v222 = vadd.f32 %v220, %v221
    %v223 = vsel %vm117, %v100, 0.0
    %v224 = vadd.f32 %v222, %v223
    %v225 = vsel %vm117, %v101, 0.0
    %v226 = vadd.f32 %v224, %v225
    %v227 = vsel %vm117, %v102, 0.0
    %v228 = vadd.f32 %v226, %v227
    %v229 = vsel %vm117, %v103, 0.0
    %v230 = vadd.f32 %v228, %v229
    %v231 = vsel %vm117, %v104, 0.0
    %v232 = vadd.f32 %v230, %v231
    %v233 = vsel %vm117, %v105, 0.0
    %v234 = vadd.f32 %v232, %v233
    %v235 = vsel %vm117, %v106, 0.0
    %v236 = vadd.f32 %v234, %v235
    %v237 = vsel %vm117, %v107, 0.0
    %v238 = vadd.f32 %v236, %v237
    %v239 = vsel %vm117, %v108, 0.0
    %v240 = vadd.f32 %v238, %v239
    %v241 = vsel %vm117, %v109, 0.0
    %v242 = vadd.f32 %v240, %v241
    %v243 = vsel %vm117, %v110, 0.0
    %v244 = vadd.f32 %v242, %v243
    %v245 = vsel %vm117, %v111, 0.0
    %v246 = vadd.f32 %v244, %v245
    %v247 = vsel %vm117, %v112, 0.0
    %v248 = vadd.f32 %v246, %v247
    %v249 = vsel %vm117, %v113, 0.0
    %v250 = vadd.f32 %v248, %v249
    %v251 = vsel %vm117, %v114, 0.0
    %v252 = vadd.f32 %v250, %v251
    %v253 = vsel %vm117, %v115, 0.0
    %v254 = vadd.f32 %v252, %v253
    %v255 = vsel %vm117, %v116, 0.0
    %v256 = vadd.f32 %v254, %v255
    %v257 = vrot.slane %v256, 4
    %v258 = vadd.f32 %v256, %v257
    %v259 = vrot.slane %v258, 2
    %v260 = vadd.f32 %v258, %v259
    %v261 = vrot.slane %v260, 1
    %v262 = vadd.f32 %v260, %v261
    %v263 = vmul.f32 %v262, 0.0017857143
    %v264 = vmul.f32 %v47, %v47
    %v265 = vmul.f32 %v48, %v48
    %v266 = vmul.f32 %v49, %v49
    %v267 = vmul.f32 %v50, %v50
    %v268 = vmul.f32 %v51, %v51
    %v269 = vmul.f32 %v52, %v52
    %v270 = vmul.f32 %v53, %v53
    %v271 = vmul.f32 %v54, %v54
    %v272 = vmul.f32 %v55, %v55
    %v273 = vmul.f32 %v56, %v56
    %v274 = vmul.f32 %v57, %v57
    %v275 = vmul.f32 %v58, %v58
    %v276 = vmul.f32 %v59, %v59
    %v277 = vmul.f32 %v60, %v60
    %v278 = vmul.f32 %v61, %v61
    %v279 = vmul.f32 %v62, %v62
    %v280 = vmul.f32 %v63, %v63
    %v281 = vmul.f32 %v64, %v64
    %v282 = vmul.f32 %v65, %v65
    %v283 = vmul.f32 %v66, %v66
    %v284 = vmul.f32 %v67, %v67
    %v285 = vmul.f32 %v68, %v68
    %v286 = vmul.f32 %v69, %v69
    %v287 = vmul.f32 %v70, %v70
    %v288 = vmul.f32 %v71, %v71
    %v289 = vmul.f32 %v72, %v72
    %v290 = vmul.f32 %v73, %v73
    %v291 = vmul.f32 %v74, %v74
    %v292 = vmul.f32 %v75, %v75
    %v293 = vmul.f32 %v76, %v76
    %v294 = vmul.f32 %v77, %v77
    %v295 = vmul.f32 %v78, %v78
    %v296 = vmul.f32 %v79, %v79
    %v297 = vmul.f32 %v80, %v80
    %v298 = vmul.f32 %v81, %v81
    %v299 = vmul.f32 %v82, %v82
    %v300 = vmul.f32 %v83, %v83
    %v301 = vmul.f32 %v84, %v84
    %v302 = vmul.f32 %v85, %v85
    %v303 = vmul.f32 %v86, %v86
    %v304 = vmul.f32 %v87, %v87
    %v305 = vmul.f32 %v88, %v88
    %v306 = vmul.f32 %v89, %v89
    %v307 = vmul.f32 %v90, %v90
    %v308 = vmul.f32 %v91, %v91
    %v309 = vmul.f32 %v92, %v92
    %v310 = vmul.f32 %v93, %v93
    %v311 = vmul.f32 %v94, %v94
    %v312 = vmul.f32 %v95, %v95
    %v313 = vmul.f32 %v96, %v96
    %v314 = vmul.f32 %v97, %v97
    %v315 = vmul.f32 %v98, %v98
    %v316 = vmul.f32 %v99, %v99
    %v317 = vmul.f32 %v100, %v100
    %v318 = vmul.f32 %v101, %v101
    %v319 = vmul.f32 %v102, %v102
    %v320 = vmul.f32 %v103, %v103
    %v321 = vmul.f32 %v104, %v104
    %v322 = vmul.f32 %v105, %v105
    %v323 = vmul.f32 %v106, %v106
    %v324 = vmul.f32 %v107, %v107
    %v325 = vmul.f32 %v108, %v108
    %v326 = vmul.f32 %v109, %v109
    %v327 = vmul.f32 %v110, %v110
    %v328 = vmul.f32 %v111, %v111
    %v329 = vmul.f32 %v112, %v112
    %v330 = vmul.f32 %v113, %v113
    %v331 = vmul.f32 %v114, %v114
    %v332 = vmul.f32 %v115, %v115
    %v333 = vmul.f32 %v116, %v116
    %v334 = vsel %vm117, %v264, 0.0
    %v335 = vsel %vm117, %v265, 0.0
    %v336 = vadd.f32 %v334, %v335
    %v337 = vsel %vm117, %v266, 0.0
    %v338 = vadd.f32 %v336, %v337
    %v339 = vsel %vm117, %v267, 0.0
    %v340 = vadd.f32 %v338, %v339
    %v341 = vsel %vm117, %v268, 0.0
    %v342 = vadd.f32 %v340, %v341
    %v343 = vsel %vm117, %v269, 0.0
    %v344 = vadd.f32 %v342, %v343
    %v345 = vsel %vm117, %v270, 0.0
    %v346 = vadd.f32 %v344, %v345
    %v347 = vsel %vm117, %v271, 0.0
    %v348 = vadd.f32 %v346, %v347
    %v349 = vsel %vm117, %v272, 0.0
    %v350 = vadd.f32 %v348, %v349
    %v351 = vsel %vm117, %v273, 0.0
    %v352 = vadd.f32 %v350, %v351
    %v353 = vsel %vm117, %v274, 0.0
    %v354 = vadd.f32 %v352, %v353
    %v355 = vsel %vm117, %v275, 0.0
    %v356 = vadd.f32 %v354, %v355
    %v357 = vsel %vm117, %v276, 0.0
    %v358 = vadd.f32 %v356, %v357
    %v359 = vsel %vm117, %v277, 0.0
    %v360 = vadd.f32 %v358, %v359
    %v361 = vsel %vm117, %v278, 0.0
    %v362 = vadd.f32 %v360, %v361
    %v363 = vsel %vm117, %v279, 0.0
    %v364 = vadd.f32 %v362, %v363
    %v365 = vsel %vm117, %v280, 0.0
    %v366 = vadd.f32 %v364, %v365
    %v367 = vsel %vm117, %v281, 0.0
    %v368 = vadd.f32 %v366, %v367
    %v369 = vsel %vm117, %v282, 0.0
    %v370 = vadd.f32 %v368, %v369
    %v371 = vsel %vm117, %v283, 0.0
    %v372 = vadd.f32 %v370, %v371
    %v373 = vsel %vm117, %v284, 0.0
    %v374 = vadd.f32 %v372, %v373
    %v375 = vsel %vm117, %v285, 0.0
    %v376 = vadd.f32 %v374, %v375
    %v377 = vsel %vm117, %v286, 0.0
    %v378 = vadd.f32 %v376, %v377
    %v379 = vsel %vm117, %v287, 0.0
    %v380 = vadd.f32 %v378, %v379
    %v381 = vsel %vm117, %v288, 0.0
    %v382 = vadd.f32 %v380, %v381
    %v383 = vsel %vm117, %v289, 0.0
    %v384 = vadd.f32 %v382, %v383
    %v385 = vsel %vm117, %v290, 0.0
    %v386 = vadd.f32 %v384, %v385
    %v387 = vsel %vm117, %v291, 0.0
    %v388 = vadd.f32 %v386, %v387
    %v389 = vsel %vm117, %v292, 0.0
    %v390 = vadd.f32 %v388, %v389
    %v391 = vsel %vm117, %v293, 0.0
    %v392 = vadd.f32 %v390, %v391
    %v393 = vsel %vm117, %v294, 0.0
    %v394 = vadd.f32 %v392, %v393
    %v395 = vsel %vm117, %v295, 0.0
    %v396 = vadd.f32 %v394, %v395
    %v397 = vsel %vm117, %v296, 0.0
    %v398 = vadd.f32 %v396, %v397
    %v399 = vsel %vm117, %v297, 0.0
    %v400 = vadd.f32 %v398, %v399
    %v401 = vsel %vm117, %v298, 0.0
    %v402 = vadd.f32 %v400, %v401
    %v403 = vsel %vm117, %v299, 0.0
    %v404 = vadd.f32 %v402, %v403
    %v405 = vsel %vm117, %v300, 0.0
    %v406 = vadd.f32 %v404, %v405
    %v407 = vsel %vm117, %v301, 0.0
    %v408 = vadd.f32 %v406, %v407
    %v409 = vsel %vm117, %v302, 0.0
    %v410 = vadd.f32 %v408, %v409
    %v411 = vsel %vm117, %v303, 0.0
    %v412 = vadd.f32 %v410, %v411
    %v413 = vsel %vm117, %v304, 0.0
    %v414 = vadd.f32 %v412, %v413
    %v415 = vsel %vm117, %v305, 0.0
    %v416 = vadd.f32 %v414, %v415
    %v417 = vsel %vm117, %v306, 0.0
    %v418 = vadd.f32 %v416, %v417
    %v419 = vsel %vm117, %v307, 0.0
    %v420 = vadd.f32 %v418, %v419
    %v421 = vsel %vm117, %v308, 0.0
    %v422 = vadd.f32 %v420, %v421
    %v423 = vsel %vm117, %v309, 0.0
    %v424 = vadd.f32 %v422, %v423
    %v425 = vsel %vm117, %v310, 0.0
    %v426 = vadd.f32 %v424, %v425
    %v427 = vsel %vm117, %v311, 0.0
    %v428 = vadd.f32 %v426, %v427
    %v429 = vsel %vm117, %v312, 0.0
    %v430 = vadd.f32 %v428, %v429
    %v431 = vsel %vm117, %v313, 0.0
    %v432 = vadd.f32 %v430, %v431
    %v433 = vsel %vm117, %v314, 0.0
    %v434 = vadd.f32 %v432, %v433
    %v435 = vsel %vm117, %v315, 0.0
    %v436 = vadd.f32 %v434, %v435
    %v437 = vsel %vm117, %v316, 0.0
    %v438 = vadd.f32 %v436, %v437
    %v439 = vsel %vm117, %v317, 0.0
    %v440 = vadd.f32 %v438, %v439
    %v441 = vsel %vm117, %v318, 0.0
    %v442 = vadd.f32 %v440, %v441
    %v443 = vsel %vm117, %v319, 0.0
    %v444 = vadd.f32 %v442, %v443
    %v445 = vsel %vm117, %v320, 0.0
    %v446 = vadd.f32 %v444, %v445
    %v447 = vsel %vm117, %v321, 0.0
    %v448 = vadd.f32 %v446, %v447
    %v449 = vsel %vm117, %v322, 0.0
    %v450 = vadd.f32 %v448, %v449
    %v451 = vsel %vm117, %v323, 0.0
    %v452 = vadd.f32 %v450, %v451
    %v453 = vsel %vm117, %v324, 0.0
    %v454 = vadd.f32 %v452, %v453
    %v455 = vsel %vm117, %v325, 0.0
    %v456 = vadd.f32 %v454, %v455
    %v457 = vsel %vm117, %v326, 0.0
    %v458 = vadd.f32 %v456, %v457
    %v459 = vsel %vm117, %v327, 0.0
    %v460 = vadd.f32 %v458, %v459
    %v461 = vsel %vm117, %v328, 0.0
    %v462 = vadd.f32 %v460, %v461
    %v463 = vsel %vm117, %v329, 0.0
    %v464 = vadd.f32 %v462, %v463
    %v465 = vsel %vm117, %v330, 0.0
    %v466 = vadd.f32 %v464, %v465
    %v467 = vsel %vm117, %v331, 0.0
    %v468 = vadd.f32 %v466, %v467
    %v469 = vsel %vm117, %v332, 0.0
    %v470 = vadd.f32 %v468, %v469
    %v471 = vsel %vm117, %v333, 0.0
    %v472 = vadd.f32 %v470, %v471
    %v473 = vrot.slane %v472, 4
    %v474 = vadd.f32 %v472, %v473
    %v475 = vrot.slane %v474, 2
    %v476 = vadd.f32 %v474, %v475
    %v477 = vrot.slane %v476, 1
    %v478 = vadd.f32 %v476, %v477
    %v479 = vmul.f32 %v478, 0.0017857143
    %v480 = vmul.f32 %v263, %v263
    %v481 = vsub.f32 %v479, %v480
    %v482 = vmax.f32 %v481, 0.0
    %v483 = vld [vmem:[%s1] sm:$0x1]
    %v484 = vsub.f32 %v47, %v263
    %v485 = vsub.f32 %v48, %v263
    %v486 = vsub.f32 %v49, %v263
    %v487 = vsub.f32 %v50, %v263
    %v488 = vsub.f32 %v51, %v263
    %v489 = vsub.f32 %v52, %v263
    %v490 = vsub.f32 %v53, %v263
    %v491 = vsub.f32 %v54, %v263
    %v492 = vsub.f32 %v55, %v263
    %v493 = vsub.f32 %v56, %v263
    %v494 = vsub.f32 %v57, %v263
    %v495 = vsub.f32 %v58, %v263
    %v496 = vsub.f32 %v59, %v263
    %v497 = vsub.f32 %v60, %v263
    %v498 = vsub.f32 %v61, %v263
    %v499 = vsub.f32 %v62, %v263
    %v500 = vsub.f32 %v63, %v263
    %v501 = vsub.f32 %v64, %v263
    %v502 = vsub.f32 %v65, %v263
    %v503 = vsub.f32 %v66, %v263
    %v504 = vsub.f32 %v67, %v263
    %v505 = vsub.f32 %v68, %v263
    %v506 = vsub.f32 %v69, %v263
    %v507 = vsub.f32 %v70, %v263
    %v508 = vsub.f32 %v71, %v263
    %v509 = vsub.f32 %v72, %v263
    %v510 = vsub.f32 %v73, %v263
    %v511 = vsub.f32 %v74, %v263
    %v512 = vsub.f32 %v75, %v263
    %v513 = vsub.f32 %v76, %v263
    %v514 = vsub.f32 %v77, %v263
    %v515 = vsub.f32 %v78, %v263
    %v516 = vsub.f32 %v79, %v263
    %v517 = vsub.f32 %v80, %v263
    %v518 = vsub.f32 %v81, %v263
    %v519 = vsub.f32 %v82, %v263
    %v520 = vsub.f32 %v83, %v263
    %v521 = vsub.f32 %v84, %v263
    %v522 = vsub.f32 %v85, %v263
    %v523 = vsub.f32 %v86, %v263
    %v524 = vsub.f32 %v87, %v263
    %v525 = vsub.f32 %v88, %v263
    %v526 = vsub.f32 %v89, %v263
    %v527 = vsub.f32 %v90, %v263
    %v528 = vsub.f32 %v91, %v263
    %v529 = vsub.f32 %v92, %v263
    %v530 = vsub.f32 %v93, %v263
    %v531 = vsub.f32 %v94, %v263
    %v532 = vsub.f32 %v95, %v263
    %v533 = vsub.f32 %v96, %v263
    %v534 = vsub.f32 %v97, %v263
    %v535 = vsub.f32 %v98, %v263
    %v536 = vsub.f32 %v99, %v263
    %v537 = vsub.f32 %v100, %v263
    %v538 = vsub.f32 %v101, %v263
    %v539 = vsub.f32 %v102, %v263
    %v540 = vsub.f32 %v103, %v263
    %v541 = vsub.f32 %v104, %v263
    %v542 = vsub.f32 %v105, %v263
    %v543 = vsub.f32 %v106, %v263
    %v544 = vsub.f32 %v107, %v263
    %v545 = vsub.f32 %v108, %v263
    %v546 = vsub.f32 %v109, %v263
    %v547 = vsub.f32 %v110, %v263
    %v548 = vsub.f32 %v111, %v263
    %v549 = vsub.f32 %v112, %v263
    %v550 = vsub.f32 %v113, %v263
    %v551 = vsub.f32 %v114, %v263
    %v552 = vsub.f32 %v115, %v263
    %v553 = vsub.f32 %v116, %v263
    %v555 = vlaneseq
    %v556 = vshrl.u32 %v555, 7
    %v557 = vsub.s32 0, %v556
    %v558 = vrot.slane %v483, %v557
    %v560 = vmul.f32 %v558, %v484
    %v561 = vmul.f32 %v558, %v485
    %v562 = vmul.f32 %v558, %v486
    %v563 = vmul.f32 %v558, %v487
    %v564 = vmul.f32 %v558, %v488
    %v565 = vmul.f32 %v558, %v489
    %v566 = vmul.f32 %v558, %v490
    %v567 = vmul.f32 %v558, %v491
    %v568 = vmul.f32 %v558, %v492
    %v569 = vmul.f32 %v558, %v493
    %v570 = vmul.f32 %v558, %v494
    %v571 = vmul.f32 %v558, %v495
    %v572 = vmul.f32 %v558, %v496
    %v573 = vmul.f32 %v558, %v497
    %v574 = vmul.f32 %v558, %v498
    %v575 = vmul.f32 %v558, %v499
    %v576 = vmul.f32 %v558, %v500
    %v577 = vmul.f32 %v558, %v501
    %v578 = vmul.f32 %v558, %v502
    %v579 = vmul.f32 %v558, %v503
    %v580 = vmul.f32 %v558, %v504
    %v581 = vmul.f32 %v558, %v505
    %v582 = vmul.f32 %v558, %v506
    %v583 = vmul.f32 %v558, %v507
    %v584 = vmul.f32 %v558, %v508
    %v585 = vmul.f32 %v558, %v509
    %v586 = vmul.f32 %v558, %v510
    %v587 = vmul.f32 %v558, %v511
    %v588 = vmul.f32 %v558, %v512
    %v589 = vmul.f32 %v558, %v513
    %v590 = vmul.f32 %v558, %v514
    %v591 = vmul.f32 %v558, %v515
    %v592 = vmul.f32 %v558, %v516
    %v593 = vmul.f32 %v558, %v517
    %v594 = vmul.f32 %v558, %v518
    %v595 = vmul.f32 %v558, %v519
    %v596 = vmul.f32 %v558, %v520
    %v597 = vmul.f32 %v558, %v521
    %v598 = vmul.f32 %v558, %v522
    %v599 = vmul.f32 %v558, %v523
    %v600 = vmul.f32 %v558, %v524
    %v601 = vmul.f32 %v558, %v525
    %v602 = vmul.f32 %v558, %v526
    %v603 = vmul.f32 %v558, %v527
    %v604 = vmul.f32 %v558, %v528
    %v605 = vmul.f32 %v558, %v529
    %v606 = vmul.f32 %v558, %v530
    %v607 = vmul.f32 %v558, %v531
    %v608 = vmul.f32 %v558, %v532
    %v609 = vmul.f32 %v558, %v533
    %v610 = vmul.f32 %v558, %v534
    %v611 = vmul.f32 %v558, %v535
    %v612 = vmul.f32 %v558, %v536
    %v613 = vmul.f32 %v558, %v537
    %v614 = vmul.f32 %v558, %v538
    %v615 = vmul.f32 %v558, %v539
    %v616 = vmul.f32 %v558, %v540
    %v617 = vmul.f32 %v558, %v541
    %v618 = vmul.f32 %v558, %v542
    %v619 = vmul.f32 %v558, %v543
    %v620 = vmul.f32 %v558, %v544
    %v621 = vmul.f32 %v558, %v545
    %v622 = vmul.f32 %v558, %v546
    %v623 = vmul.f32 %v558, %v547
    %v624 = vmul.f32 %v558, %v548
    %v625 = vmul.f32 %v558, %v549
    %v626 = vmul.f32 %v558, %v550
    %v627 = vmul.f32 %v558, %v551
    %v628 = vmul.f32 %v558, %v552
    %v629 = vmul.f32 %v558, %v553
    %v630 = vadd.f32 %v482, 1e-05
    %v631 = vrsqrt.pop %v630
    %v632 = vmul.f32 %v560, %v631
    %v633 = vmul.f32 %v561, %v631
    %v634 = vmul.f32 %v562, %v631
    %v635 = vmul.f32 %v563, %v631
    %v636 = vmul.f32 %v564, %v631
    %v637 = vmul.f32 %v565, %v631
    %v638 = vmul.f32 %v566, %v631
    %v639 = vmul.f32 %v567, %v631
    %v640 = vmul.f32 %v568, %v631
    %v641 = vmul.f32 %v569, %v631
    %v642 = vmul.f32 %v570, %v631
    %v643 = vmul.f32 %v571, %v631
    %v644 = vmul.f32 %v572, %v631
    %v645 = vmul.f32 %v573, %v631
    %v646 = vmul.f32 %v574, %v631
    %v647 = vmul.f32 %v575, %v631
    %v648 = vmul.f32 %v576, %v631
    %v649 = vmul.f32 %v577, %v631
    %v650 = vmul.f32 %v578, %v631
    %v651 = vmul.f32 %v579, %v631
    %v652 = vmul.f32 %v580, %v631
    %v653 = vmul.f32 %v581, %v631
    %v654 = vmul.f32 %v582, %v631
    %v655 = vmul.f32 %v583, %v631
    %v656 = vmul.f32 %v584, %v631
    %v657 = vmul.f32 %v585, %v631
    %v658 = vmul.f32 %v586, %v631
    %v659 = vmul.f32 %v587, %v631
    %v660 = vmul.f32 %v588, %v631
    %v661 = vmul.f32 %v589, %v631
    %v662 = vmul.f32 %v590, %v631
    %v663 = vmul.f32 %v591, %v631
    %v664 = vmul.f32 %v592, %v631
    %v665 = vmul.f32 %v593, %v631
    %v666 = vmul.f32 %v594, %v631
    %v667 = vmul.f32 %v595, %v631
    %v668 = vmul.f32 %v596, %v631
    %v669 = vmul.f32 %v597, %v631
    %v670 = vmul.f32 %v598, %v631
    %v671 = vmul.f32 %v599, %v631
    %v672 = vmul.f32 %v600, %v631
    %v673 = vmul.f32 %v601, %v631
    %v674 = vmul.f32 %v602, %v631
    %v675 = vmul.f32 %v603, %v631
    %v676 = vmul.f32 %v604, %v631
    %v677 = vmul.f32 %v605, %v631
    %v678 = vmul.f32 %v606, %v631
    %v679 = vmul.f32 %v607, %v631
    %v680 = vmul.f32 %v608, %v631
    %v681 = vmul.f32 %v609, %v631
    %v682 = vmul.f32 %v610, %v631
    %v683 = vmul.f32 %v611, %v631
    %v684 = vmul.f32 %v612, %v631
    %v685 = vmul.f32 %v613, %v631
    %v686 = vmul.f32 %v614, %v631
    %v687 = vmul.f32 %v615, %v631
    %v688 = vmul.f32 %v616, %v631
    %v689 = vmul.f32 %v617, %v631
    %v690 = vmul.f32 %v618, %v631
    %v691 = vmul.f32 %v619, %v631
    %v692 = vmul.f32 %v620, %v631
    %v693 = vmul.f32 %v621, %v631
    %v694 = vmul.f32 %v622, %v631
    %v695 = vmul.f32 %v623, %v631
    %v696 = vmul.f32 %v624, %v631
    %v697 = vmul.f32 %v625, %v631
    %v698 = vmul.f32 %v626, %v631
    %v699 = vmul.f32 %v627, %v631
    %v700 = vmul.f32 %v628, %v631
    %v701 = vmul.f32 %v629, %v631
    %v702 = vld [vmem:[%s2] sm:$0x1]
    %v704 = vlaneseq
    %v705 = vshrl.u32 %v704, 7
    %v706 = vsub.s32 0, %v705
    %v707 = vrot.slane %v702, %v706
    %v709 = vadd.f32 %v632, %v707
    %v710 = vadd.f32 %v633, %v707
    %v711 = vadd.f32 %v634, %v707
    %v712 = vadd.f32 %v635, %v707
    %v713 = vadd.f32 %v636, %v707
    %v714 = vadd.f32 %v637, %v707
    %v715 = vadd.f32 %v638, %v707
    %v716 = vadd.f32 %v639, %v707
    %v717 = vadd.f32 %v640, %v707
    %v718 = vadd.f32 %v641, %v707
    %v719 = vadd.f32 %v642, %v707
    %v720 = vadd.f32 %v643, %v707
    %v721 = vadd.f32 %v644, %v707
    %v722 = vadd.f32 %v645, %v707
    %v723 = vadd.f32 %v646, %v707
    %v724 = vadd.f32 %v647, %v707
    %v725 = vadd.f32 %v648, %v707
    %v726 = vadd.f32 %v649, %v707
    %v727 = vadd.f32 %v650, %v707
    %v728 = vadd.f32 %v651, %v707
    %v729 = vadd.f32 %v652, %v707
    %v730 = vadd.f32 %v653, %v707
    %v731 = vadd.f32 %v654, %v707
    %v732 = vadd.f32 %v655, %v707
    %v733 = vadd.f32 %v656, %v707
    %v734 = vadd.f32 %v657, %v707
    %v735 = vadd.f32 %v658, %v707
    %v736 = vadd.f32 %v659, %v707
    %v737 = vadd.f32 %v660, %v707
    %v738 = vadd.f32 %v661, %v707
    %v739 = vadd.f32 %v662, %v707
    %v740 = vadd.f32 %v663, %v707
    %v741 = vadd.f32 %v664, %v707
    %v742 = vadd.f32 %v665, %v707
    %v743 = vadd.f32 %v666, %v707
    %v744 = vadd.f32 %v667, %v707
    %v745 = vadd.f32 %v668, %v707
    %v746 = vadd.f32 %v669, %v707
    %v747 = vadd.f32 %v670, %v707
    %v748 = vadd.f32 %v671, %v707
    %v749 = vadd.f32 %v672, %v707
    %v750 = vadd.f32 %v673, %v707
    %v751 = vadd.f32 %v674, %v707
    %v752 = vadd.f32 %v675, %v707
    %v753 = vadd.f32 %v676, %v707
    %v754 = vadd.f32 %v677, %v707
    %v755 = vadd.f32 %v678, %v707
    %v756 = vadd.f32 %v679, %v707
    %v757 = vadd.f32 %v680, %v707
    %v758 = vadd.f32 %v681, %v707
    %v759 = vadd.f32 %v682, %v707
    %v760 = vadd.f32 %v683, %v707
    %v761 = vadd.f32 %v684, %v707
    %v762 = vadd.f32 %v685, %v707
    %v763 = vadd.f32 %v686, %v707
    %v764 = vadd.f32 %v687, %v707
    %v765 = vadd.f32 %v688, %v707
    %v766 = vadd.f32 %v689, %v707
    %v767 = vadd.f32 %v690, %v707
    %v768 = vadd.f32 %v691, %v707
    %v769 = vadd.f32 %v692, %v707
    %v770 = vadd.f32 %v693, %v707
    %v771 = vadd.f32 %v694, %v707
    %v772 = vadd.f32 %v695, %v707
    %v773 = vadd.f32 %v696, %v707
    %v774 = vadd.f32 %v697, %v707
    %v775 = vadd.f32 %v698, %v707
    %v776 = vadd.f32 %v699, %v707
    %v777 = vadd.f32 %v700, %v707
    %v778 = vadd.f32 %v701, %v707
    %vm779 = vcmp.ge.f32.partialorder %v709, 0.0
    %vm780 = vcmp.ge.f32.partialorder %v710, 0.0
    %vm781 = vcmp.ge.f32.partialorder %v711, 0.0
    %vm782 = vcmp.ge.f32.partialorder %v712, 0.0
    %vm783 = vcmp.ge.f32.partialorder %v713, 0.0
    %vm784 = vcmp.ge.f32.partialorder %v714, 0.0
    %vm785 = vcmp.ge.f32.partialorder %v715, 0.0
    %vm786 = vcmp.ge.f32.partialorder %v716, 0.0
    %vm787 = vcmp.ge.f32.partialorder %v717, 0.0
    %vm788 = vcmp.ge.f32.partialorder %v718, 0.0
    %vm789 = vcmp.ge.f32.partialorder %v719, 0.0
    %vm790 = vcmp.ge.f32.partialorder %v720, 0.0
    %vm791 = vcmp.ge.f32.partialorder %v721, 0.0
    %vm792 = vcmp.ge.f32.partialorder %v722, 0.0
    %vm793 = vcmp.ge.f32.partialorder %v723, 0.0
    %vm794 = vcmp.ge.f32.partialorder %v724, 0.0
    %vm795 = vcmp.ge.f32.partialorder %v725, 0.0
    %vm796 = vcmp.ge.f32.partialorder %v726, 0.0
    %vm797 = vcmp.ge.f32.partialorder %v727, 0.0
    %vm798 = vcmp.ge.f32.partialorder %v728, 0.0
    %vm799 = vcmp.ge.f32.partialorder %v729, 0.0
    %vm800 = vcmp.ge.f32.partialorder %v730, 0.0
    %vm801 = vcmp.ge.f32.partialorder %v731, 0.0
    %vm802 = vcmp.ge.f32.partialorder %v732, 0.0
    %vm803 = vcmp.ge.f32.partialorder %v733, 0.0
    %vm804 = vcmp.ge.f32.partialorder %v734, 0.0
    %vm805 = vcmp.ge.f32.partialorder %v735, 0.0
    %vm806 = vcmp.ge.f32.partialorder %v736, 0.0
    %vm807 = vcmp.ge.f32.partialorder %v737, 0.0
    %vm808 = vcmp.ge.f32.partialorder %v738, 0.0
    %vm809 = vcmp.ge.f32.partialorder %v739, 0.0
    %vm810 = vcmp.ge.f32.partialorder %v740, 0.0
    %vm811 = vcmp.ge.f32.partialorder %v741, 0.0
    %vm812 = vcmp.ge.f32.partialorder %v742, 0.0
    %vm813 = vcmp.ge.f32.partialorder %v743, 0.0
    %vm814 = vcmp.ge.f32.partialorder %v744, 0.0
    %vm815 = vcmp.ge.f32.partialorder %v745, 0.0
    %vm816 = vcmp.ge.f32.partialorder %v746, 0.0
    %vm817 = vcmp.ge.f32.partialorder %v747, 0.0
    %vm818 = vcmp.ge.f32.partialorder %v748, 0.0
    %vm819 = vcmp.ge.f32.partialorder %v749, 0.0
    %vm820 = vcmp.ge.f32.partialorder %v750, 0.0
    %vm821 = vcmp.ge.f32.partialorder %v751, 0.0
    %vm822 = vcmp.ge.f32.partialorder %v752, 0.0
    %vm823 = vcmp.ge.f32.partialorder %v753, 0.0
    %vm824 = vcmp.ge.f32.partialorder %v754, 0.0
    %vm825 = vcmp.ge.f32.partialorder %v755, 0.0
    %vm826 = vcmp.ge.f32.partialorder %v756, 0.0
    %vm827 = vcmp.ge.f32.partialorder %v757, 0.0
    %vm828 = vcmp.ge.f32.partialorder %v758, 0.0
    %vm829 = vcmp.ge.f32.partialorder %v759, 0.0
    %vm830 = vcmp.ge.f32.partialorder %v760, 0.0
    %vm831 = vcmp.ge.f32.partialorder %v761, 0.0
    %vm832 = vcmp.ge.f32.partialorder %v762, 0.0
    %vm833 = vcmp.ge.f32.partialorder %v763, 0.0
    %vm834 = vcmp.ge.f32.partialorder %v764, 0.0
    %vm835 = vcmp.ge.f32.partialorder %v765, 0.0
    %vm836 = vcmp.ge.f32.partialorder %v766, 0.0
    %vm837 = vcmp.ge.f32.partialorder %v767, 0.0
    %vm838 = vcmp.ge.f32.partialorder %v768, 0.0
    %vm839 = vcmp.ge.f32.partialorder %v769, 0.0
    %vm840 = vcmp.ge.f32.partialorder %v770, 0.0
    %vm841 = vcmp.ge.f32.partialorder %v771, 0.0
    %vm842 = vcmp.ge.f32.partialorder %v772, 0.0
    %vm843 = vcmp.ge.f32.partialorder %v773, 0.0
    %vm844 = vcmp.ge.f32.partialorder %v774, 0.0
    %vm845 = vcmp.ge.f32.partialorder %v775, 0.0
    %vm846 = vcmp.ge.f32.partialorder %v776, 0.0
    %vm847 = vcmp.ge.f32.partialorder %v777, 0.0
    %vm848 = vcmp.ge.f32.partialorder %v778, 0.0
    %v849 = vmul.f32 %v709, 0.01
    %v850 = vmul.f32 %v710, 0.01
    %v851 = vmul.f32 %v711, 0.01
    %v852 = vmul.f32 %v712, 0.01
    %v853 = vmul.f32 %v713, 0.01
    %v854 = vmul.f32 %v714, 0.01
    %v855 = vmul.f32 %v715, 0.01
    %v856 = vmul.f32 %v716, 0.01
    %v857 = vmul.f32 %v717, 0.01
    %v858 = vmul.f32 %v718, 0.01
    %v859 = vmul.f32 %v719, 0.01
    %v860 = vmul.f32 %v720, 0.01
    %v861 = vmul.f32 %v721, 0.01
    %v862 = vmul.f32 %v722, 0.01
    %v863 = vmul.f32 %v723, 0.01
    %v864 = vmul.f32 %v724, 0.01
    %v865 = vmul.f32 %v725, 0.01
    %v866 = vmul.f32 %v726, 0.01
    %v867 = vmul.f32 %v727, 0.01
    %v868 = vmul.f32 %v728, 0.01
    %v869 = vmul.f32 %v729, 0.01
    %v870 = vmul.f32 %v730, 0.01
    %v871 = vmul.f32 %v731, 0.01
    %v872 = vmul.f32 %v732, 0.01
    %v873 = vmul.f32 %v733, 0.01
    %v874 = vmul.f32 %v734, 0.01
    %v875 = vmul.f32 %v735, 0.01
    %v876 = vmul.f32 %v736, 0.01
    %v877 = vmul.f32 %v737, 0.01
    %v878 = vmul.f32 %v738, 0.01
    %v879 = vmul.f32 %v739, 0.01
    %v880 = vmul.f32 %v740, 0.01
    %v881 = vmul.f32 %v741, 0.01
    %v882 = vmul.f32 %v742, 0.01
    %v883 = vmul.f32 %v743, 0.01
    %v884 = vmul.f32 %v744, 0.01
    %v885 = vmul.f32 %v745, 0.01
    %v886 = vmul.f32 %v746, 0.01
    %v887 = vmul.f32 %v747, 0.01
    %v888 = vmul.f32 %v748, 0.01
    %v889 = vmul.f32 %v749, 0.01
    %v890 = vmul.f32 %v750, 0.01
    %v891 = vmul.f32 %v751, 0.01
    %v892 = vmul.f32 %v752, 0.01
    %v893 = vmul.f32 %v753, 0.01
    %v894 = vmul.f32 %v754, 0.01
    %v895 = vmul.f32 %v755, 0.01
    %v896 = vmul.f32 %v756, 0.01
    %v897 = vmul.f32 %v757, 0.01
    %v898 = vmul.f32 %v758, 0.01
    %v899 = vmul.f32 %v759, 0.01
    %v900 = vmul.f32 %v760, 0.01
    %v901 = vmul.f32 %v761, 0.01
    %v902 = vmul.f32 %v762, 0.01
    %v903 = vmul.f32 %v763, 0.01
    %v904 = vmul.f32 %v764, 0.01
    %v905 = vmul.f32 %v765, 0.01
    %v906 = vmul.f32 %v766, 0.01
    %v907 = vmul.f32 %v767, 0.01
    %v908 = vmul.f32 %v768, 0.01
    %v909 = vmul.f32 %v769, 0.01
    %v910 = vmul.f32 %v770, 0.01
    %v911 = vmul.f32 %v771, 0.01
    %v912 = vmul.f32 %v772, 0.01
    %v913 = vmul.f32 %v773, 0.01
    %v914 = vmul.f32 %v774, 0.01
    %v915 = vmul.f32 %v775, 0.01
    %v916 = vmul.f32 %v776, 0.01
    %v917 = vmul.f32 %v777, 0.01
    %v918 = vmul.f32 %v778, 0.01
    %v919 = vsel %vm779, %v709, %v849
    %v920 = vsel %vm780, %v710, %v850
    %v921 = vsel %vm781, %v711, %v851
    %v922 = vsel %vm782, %v712, %v852
    %v923 = vsel %vm783, %v713, %v853
    %v924 = vsel %vm784, %v714, %v854
    %v925 = vsel %vm785, %v715, %v855
    %v926 = vsel %vm786, %v716, %v856
    %v927 = vsel %vm787, %v717, %v857
    %v928 = vsel %vm788, %v718, %v858
    %v929 = vsel %vm789, %v719, %v859
    %v930 = vsel %vm790, %v720, %v860
    %v931 = vsel %vm791, %v721, %v861
    %v932 = vsel %vm792, %v722, %v862
    %v933 = vsel %vm793, %v723, %v863
    %v934 = vsel %vm794, %v724, %v864
    %v935 = vsel %vm795, %v725, %v865
    %v936 = vsel %vm796, %v726, %v866
    %v937 = vsel %vm797, %v727, %v867
    %v938 = vsel %vm798, %v728, %v868
    %v939 = vsel %vm799, %v729, %v869
    %v940 = vsel %vm800, %v730, %v870
    %v941 = vsel %vm801, %v731, %v871
    %v942 = vsel %vm802, %v732, %v872
    %v943 = vsel %vm803, %v733, %v873
    %v944 = vsel %vm804, %v734, %v874
    %v945 = vsel %vm805, %v735, %v875
    %v946 = vsel %vm806, %v736, %v876
    %v947 = vsel %vm807, %v737, %v877
    %v948 = vsel %vm808, %v738, %v878
    %v949 = vsel %vm809, %v739, %v879
    %v950 = vsel %vm810, %v740, %v880
    %v951 = vsel %vm811, %v741, %v881
    %v952 = vsel %vm812, %v742, %v882
    %v953 = vsel %vm813, %v743, %v883
    %v954 = vsel %vm814, %v744, %v884
    %v955 = vsel %vm815, %v745, %v885
    %v956 = vsel %vm816, %v746, %v886
    %v957 = vsel %vm817, %v747, %v887
    %v958 = vsel %vm818, %v748, %v888
    %v959 = vsel %vm819, %v749, %v889
    %v960 = vsel %vm820, %v750, %v890
    %v961 = vsel %vm821, %v751, %v891
    %v962 = vsel %vm822, %v752, %v892
    %v963 = vsel %vm823, %v753, %v893
    %v964 = vsel %vm824, %v754, %v894
    %v965 = vsel %vm825, %v755, %v895
    %v966 = vsel %vm826, %v756, %v896
    %v967 = vsel %vm827, %v757, %v897
    %v968 = vsel %vm828, %v758, %v898
    %v969 = vsel %vm829, %v759, %v899
    %v970 = vsel %vm830, %v760, %v900
    %v971 = vsel %vm831, %v761, %v901
    %v972 = vsel %vm832, %v762, %v902
    %v973 = vsel %vm833, %v763, %v903
    %v974 = vsel %vm834, %v764, %v904
    %v975 = vsel %vm835, %v765, %v905
    %v976 = vsel %vm836, %v766, %v906
    %v977 = vsel %vm837, %v767, %v907
    %v978 = vsel %vm838, %v768, %v908
    %v979 = vsel %vm839, %v769, %v909
    %v980 = vsel %vm840, %v770, %v910
    %v981 = vsel %vm841, %v771, %v911
    %v982 = vsel %vm842, %v772, %v912
    %v983 = vsel %vm843, %v773, %v913
    %v984 = vsel %vm844, %v774, %v914
    %v985 = vsel %vm845, %v775, %v915
    %v986 = vsel %vm846, %v776, %v916
    %v987 = vsel %vm847, %v777, %v917
    %v988 = vsel %vm848, %v778, %v918
    %989 = vst.msk [vmem:[#allocation2] sm:$0xff] %vm117, %v919
    %990 = vst.msk [vmem:[#allocation2 + $0x8] sm:$0xff] %vm117, %v920
    %991 = vst.msk [vmem:[#allocation2 + $0x10] sm:$0xff] %vm117, %v921
    %992 = vst.msk [vmem:[#allocation2 + $0x18] sm:$0xff] %vm117, %v922
    %993 = vst.msk [vmem:[#allocation2 + $0x20] sm:$0xff] %vm117, %v923
    %994 = vst.msk [vmem:[#allocation2 + $0x28] sm:$0xff] %vm117, %v924
    %995 = vst.msk [vmem:[#allocation2 + $0x30] sm:$0xff] %vm117, %v925
    %996 = vst.msk [vmem:[#allocation2 + $0x38] sm:$0xff] %vm117, %v926
    %997 = vst.msk [vmem:[#allocation2 + $0x40] sm:$0xff] %vm117, %v927
    %998 = vst.msk [vmem:[#allocation2 + $0x48] sm:$0xff] %vm117, %v928
    %999 = vst.msk [vmem:[#allocation2 + $0x50] sm:$0xff] %vm117, %v929
    %1000 = vst.msk [vmem:[#allocation2 + $0x58] sm:$0xff] %vm117, %v930
    %1001 = vst.msk [vmem:[#allocation2 + $0x60] sm:$0xff] %vm117, %v931
    %1002 = vst.msk [vmem:[#allocation2 + $0x68] sm:$0xff] %vm117, %v932
    %1003 = vst.msk [vmem:[#allocation2 + $0x70] sm:$0xff] %vm117, %v933
    %1004 = vst.msk [vmem:[#allocation2 + $0x78] sm:$0xff] %vm117, %v934
    %1005 = vst.msk [vmem:[#allocation2 + $0x80] sm:$0xff] %vm117, %v935
    %1006 = vst.msk [vmem:[#allocation2 + $0x88] sm:$0xff] %vm117, %v936
    %1007 = vst.msk [vmem:[#allocation2 + $0x90] sm:$0xff] %vm117, %v937
    %1008 = vst.msk [vmem:[#allocation2 + $0x98] sm:$0xff] %vm117, %v938
    %1009 = vst.msk [vmem:[#allocation2 + $0xa0] sm:$0xff] %vm117, %v939
    %1010 = vst.msk [vmem:[#allocation2 + $0xa8] sm:$0xff] %vm117, %v940
    %1011 = vst.msk [vmem:[#allocation2 + $0xb0] sm:$0xff] %vm117, %v941
    %1012 = vst.msk [vmem:[#allocation2 + $0xb8] sm:$0xff] %vm117, %v942
    %1013 = vst.msk [vmem:[#allocation2 + $0xc0] sm:$0xff] %vm117, %v943
    %1014 = vst.msk [vmem:[#allocation2 + $0xc8] sm:$0xff] %vm117, %v944
    %1015 = vst.msk [vmem:[#allocation2 + $0xd0] sm:$0xff] %vm117, %v945
    %1016 = vst.msk [vmem:[#allocation2 + $0xd8] sm:$0xff] %vm117, %v946
    %1017 = vst.msk [vmem:[#allocation2 + $0xe0] sm:$0xff] %vm117, %v947
    %1018 = vst.msk [vmem:[#allocation2 + $0xe8] sm:$0xff] %vm117, %v948
    %1019 = vst.msk [vmem:[#allocation2 + $0xf0] sm:$0xff] %vm117, %v949
    %1020 = vst.msk [vmem:[#allocation2 + $0xf8] sm:$0xff] %vm117, %v950
    %1021 = vst.msk [vmem:[#allocation2 + $0x100] sm:$0xff] %vm117, %v951
    %1022 = vst.msk [vmem:[#allocation2 + $0x108] sm:$0xff] %vm117, %v952
    %1023 = vst.msk [vmem:[#allocation2 + $0x110] sm:$0xff] %vm117, %v953
    %1024 = vst.msk [vmem:[#allocation2 + $0x118] sm:$0xff] %vm117, %v954
    %1025 = vst.msk [vmem:[#allocation2 + $0x120] sm:$0xff] %vm117, %v955
    %1026 = vst.msk [vmem:[#allocation2 + $0x128] sm:$0xff] %vm117, %v956
    %1027 = vst.msk [vmem:[#allocation2 + $0x130] sm:$0xff] %vm117, %v957
    %1028 = vst.msk [vmem:[#allocation2 + $0x138] sm:$0xff] %vm117, %v958
    %1029 = vst.msk [vmem:[#allocation2 + $0x140] sm:$0xff] %vm117, %v959
    %1030 = vst.msk [vmem:[#allocation2 + $0x148] sm:$0xff] %vm117, %v960
    %1031 = vst.msk [vmem:[#allocation2 + $0x150] sm:$0xff] %vm117, %v961
    %1032 = vst.msk [vmem:[#allocation2 + $0x158] sm:$0xff] %vm117, %v962
    %1033 = vst.msk [vmem:[#allocation2 + $0x160] sm:$0xff] %vm117, %v963
    %1034 = vst.msk [vmem:[#allocation2 + $0x168] sm:$0xff] %vm117, %v964
    %1035 = vst.msk [vmem:[#allocation2 + $0x170] sm:$0xff] %vm117, %v965
    %1036 = vst.msk [vmem:[#allocation2 + $0x178] sm:$0xff] %vm117, %v966
    %1037 = vst.msk [vmem:[#allocation2 + $0x180] sm:$0xff] %vm117, %v967
    %1038 = vst.msk [vmem:[#allocation2 + $0x188] sm:$0xff] %vm117, %v968
    %1039 = vst.msk [vmem:[#allocation2 + $0x190] sm:$0xff] %vm117, %v969
    %1040 = vst.msk [vmem:[#allocation2 + $0x198] sm:$0xff] %vm117, %v970
    %1041 = vst.msk [vmem:[#allocation2 + $0x1a0] sm:$0xff] %vm117, %v971
    %1042 = vst.msk [vmem:[#allocation2 + $0x1a8] sm:$0xff] %vm117, %v972
    %1043 = vst.msk [vmem:[#allocation2 + $0x1b0] sm:$0xff] %vm117, %v973
    %1044 = vst.msk [vmem:[#allocation2 + $0x1b8] sm:$0xff] %vm117, %v974
    %1045 = vst.msk [vmem:[#allocation2 + $0x1c0] sm:$0xff] %vm117, %v975
    %1046 = vst.msk [vmem:[#allocation2 + $0x1c8] sm:$0xff] %vm117, %v976
    %1047 = vst.msk [vmem:[#allocation2 + $0x1d0] sm:$0xff] %vm117, %v977
    %1048 = vst.msk [vmem:[#allocation2 + $0x1d8] sm:$0xff] %vm117, %v978
    %1049 = vst.msk [vmem:[#allocation2 + $0x1e0] sm:$0xff] %vm117, %v979
    %1050 = vst.msk [vmem:[#allocation2 + $0x1e8] sm:$0xff] %vm117, %v980
    %1051 = vst.msk [vmem:[#allocation2 + $0x1f0] sm:$0xff] %vm117, %v981
    %1052 = vst.msk [vmem:[#allocation2 + $0x1f8] sm:$0xff] %vm117, %v982
    %1053 = vst.msk [vmem:[#allocation2 + $0x200] sm:$0xff] %vm117, %v983
    %1054 = vst.msk [vmem:[#allocation2 + $0x208] sm:$0xff] %vm117, %v984
    %1055 = vst.msk [vmem:[#allocation2 + $0x210] sm:$0xff] %vm117, %v985
    %1056 = vst.msk [vmem:[#allocation2 + $0x218] sm:$0xff] %vm117, %v986
    %1057 = vst.msk [vmem:[#allocation2 + $0x220] sm:$0xff] %vm117, %v987
    %1058 = vst.msk [vmem:[#allocation2 + $0x228] sm:$0xff] %vm117, %v988
    %1059 = vst.msk [vmem:[#allocation2 + $0x230] sm:$0xff] %vm117, 0.0
    %v1060 = vlaneseq
    %v1061 = vshrl.u32 %v1060, 7
    %v1062 = vadd.s32 %v1061, 8
    %v1063 = vadd.s32 %v1061, 16
    %v1064 = vadd.s32 %v1061, 24
    %v1065 = vadd.s32 %v1061, 32
    %v1066 = vadd.s32 %v1061, 40
    %v1067 = vadd.s32 %v1061, 48
    %v1068 = vadd.s32 %v1061, 56
    %v1069 = vadd.s32 %v1061, 64
    %v1070 = vadd.s32 %v1061, 72
    %v1071 = vadd.s32 %v1061, 80
    %v1072 = vadd.s32 %v1061, 88
    %v1073 = vadd.s32 %v1061, 96
    %v1074 = vadd.s32 %v1061, 104
    %v1075 = vadd.s32 %v1061, 112
    %v1076 = vadd.s32 %v1061, 120
    %v1077 = vadd.s32 %v1061, 128
    %v1078 = vadd.s32 %v1061, 136
    %v1079 = vadd.s32 %v1061, 144
    %v1080 = vadd.s32 %v1061, 152
    %v1081 = vadd.s32 %v1061, 160
    %v1082 = vadd.s32 %v1061, 168
    %v1083 = vadd.s32 %v1061, 176
    %v1084 = vadd.s32 %v1061, 184
    %v1085 = vadd.s32 %v1061, 192
    %v1086 = vadd.s32 %v1061, 200
    %v1087 = vadd.s32 %v1061, 208
    %v1088 = vadd.s32 %v1061, 216
    %v1089 = vadd.s32 %v1061, 224
    %v1090 = vadd.s32 %v1061, 232
    %v1091 = vadd.s32 %v1061, 240
    %v1092 = vadd.s32 %v1061, 248
    %v1093 = vadd.s32 %v1061, 256
    %v1094 = vadd.s32 %v1061, 264
    %v1095 = vadd.s32 %v1061, 272
    %v1096 = vadd.s32 %v1061, 280
    %v1097 = vadd.s32 %v1061, 288
    %v1098 = vadd.s32 %v1061, 296
    %v1099 = vadd.s32 %v1061, 304
    %v1100 = vadd.s32 %v1061, 312
    %v1101 = vadd.s32 %v1061, 320
    %v1102 = vadd.s32 %v1061, 328
    %v1103 = vadd.s32 %v1061, 336
    %v1104 = vadd.s32 %v1061, 344
    %v1105 = vadd.s32 %v1061, 352
    %v1106 = vadd.s32 %v1061, 360
    %v1107 = vadd.s32 %v1061, 368
    %v1108 = vadd.s32 %v1061, 376
    %v1109 = vadd.s32 %v1061, 384
    %v1110 = vadd.s32 %v1061, 392
    %v1111 = vadd.s32 %v1061, 400
    %v1112 = vadd.s32 %v1061, 408
    %v1113 = vadd.s32 %v1061, 416
    %v1114 = vadd.s32 %v1061, 424
    %v1115 = vadd.s32 %v1061, 432
    %v1116 = vadd.s32 %v1061, 440
    %v1117 = vadd.s32 %v1061, 448
    %v1118 = vadd.s32 %v1061, 456
    %v1119 = vadd.s32 %v1061, 464
    %v1120 = vadd.s32 %v1061, 472
    %v1121 = vadd.s32 %v1061, 480
    %v1122 = vadd.s32 %v1061, 488
    %v1123 = vadd.s32 %v1061, 496
    %v1124 = vadd.s32 %v1061, 504
    %v1125 = vadd.s32 %v1061, 512
    %v1126 = vadd.s32 %v1061, 520
    %v1127 = vadd.s32 %v1061, 528
    %v1128 = vadd.s32 %v1061, 536
    %v1129 = vadd.s32 %v1061, 544
    %v1130 = vadd.s32 %v1061, 552
    %v1131 = vand.u32 %v1061, 15
    %v1132 = vand.u32 %v1062, 15
    %v1133 = vand.u32 %v1063, 15
    %v1134 = vand.u32 %v1064, 15
    %v1135 = vand.u32 %v1065, 15
    %v1136 = vand.u32 %v1066, 15
    %v1137 = vand.u32 %v1067, 15
    %v1138 = vand.u32 %v1068, 15
    %v1139 = vand.u32 %v1069, 15
    %v1140 = vand.u32 %v1070, 15
    %v1141 = vand.u32 %v1071, 15
    %v1142 = vand.u32 %v1072, 15
    %v1143 = vand.u32 %v1073, 15
    %v1144 = vand.u32 %v1074, 15
    %v1145 = vand.u32 %v1075, 15
    %v1146 = vand.u32 %v1076, 15
    %v1147 = vand.u32 %v1077, 15
    %v1148 = vand.u32 %v1078, 15
    %v1149 = vand.u32 %v1079, 15
    %v1150 = vand.u32 %v1080, 15
    %v1151 = vand.u32 %v1081, 15
    %v1152 = vand.u32 %v1082, 15
    %v1153 = vand.u32 %v1083, 15
    %v1154 = vand.u32 %v1084, 15
    %v1155 = vand.u32 %v1085, 15
    %v1156 = vand.u32 %v1086, 15
    %v1157 = vand.u32 %v1087, 15
    %v1158 = vand.u32 %v1088, 15
    %v1159 = vand.u32 %v1089, 15
    %v1160 = vand.u32 %v1090, 15
    %v1161 = vand.u32 %v1091, 15
    %v1162 = vand.u32 %v1092, 15
    %v1163 = vand.u32 %v1093, 15
    %v1164 = vand.u32 %v1094, 15
    %v1165 = vand.u32 %v1095, 15
    %v1166 = vand.u32 %v1096, 15
    %v1167 = vand.u32 %v1097, 15
    %v1168 = vand.u32 %v1098, 15
    %v1169 = vand.u32 %v1099, 15
    %v1170 = vand.u32 %v1100, 15
    %v1171 = vand.u32 %v1101, 15
    %v1172 = vand.u32 %v1102, 15
    %v1173 = vand.u32 %v1103, 15
    %v1174 = vand.u32 %v1104, 15
    %v1175 = vand.u32 %v1105, 15
    %v1176 = vand.u32 %v1106, 15
    %v1177 = vand.u32 %v1107, 15
    %v1178 = vand.u32 %v1108, 15
    %v1179 = vand.u32 %v1109, 15
    %v1180 = vand.u32 %v1110, 15
    %v1181 = vand.u32 %v1111, 15
    %v1182 = vand.u32 %v1112, 15
    %v1183 = vand.u32 %v1113, 15
    %v1184 = vand.u32 %v1114, 15
    %v1185 = vand.u32 %v1115, 15
    %v1186 = vand.u32 %v1116, 15
    %v1187 = vand.u32 %v1117, 15
    %v1188 = vand.u32 %v1118, 15
    %v1189 = vand.u32 %v1119, 15
    %v1190 = vand.u32 %v1120, 15
    %v1191 = vand.u32 %v1121, 15
    %v1192 = vand.u32 %v1122, 15
    %v1193 = vand.u32 %v1123, 15
    %v1194 = vand.u32 %v1124, 15
    %v1195 = vand.u32 %v1125, 15
    %v1196 = vand.u32 %v1126, 15
    %v1197 = vand.u32 %v1127, 15
    %v1198 = vand.u32 %v1128, 15
    %v1199 = vand.u32 %v1129, 15
    %v1200 = vand.u32 %v1130, 15
    %vm1201 = vcmp.lt.s32.totalorder %v1131, 14
    %vm1202 = vcmp.lt.s32.totalorder %v1132, 14
    %vm1203 = vcmp.lt.s32.totalorder %v1133, 14
    %vm1204 = vcmp.lt.s32.totalorder %v1134, 14
    %vm1205 = vcmp.lt.s32.totalorder %v1135, 14
    %vm1206 = vcmp.lt.s32.totalorder %v1136, 14
    %vm1207 = vcmp.lt.s32.totalorder %v1137, 14
    %vm1208 = vcmp.lt.s32.totalorder %v1138, 14
    %vm1209 = vcmp.lt.s32.totalorder %v1139, 14
    %vm1210 = vcmp.lt.s32.totalorder %v1140, 14
    %vm1211 = vcmp.lt.s32.totalorder %v1141, 14
    %vm1212 = vcmp.lt.s32.totalorder %v1142, 14
    %vm1213 = vcmp.lt.s32.totalorder %v1143, 14
    %vm1214 = vcmp.lt.s32.totalorder %v1144, 14
    %vm1215 = vcmp.lt.s32.totalorder %v1145, 14
    %vm1216 = vcmp.lt.s32.totalorder %v1146, 14
    %vm1217 = vcmp.lt.s32.totalorder %v1147, 14
    %vm1218 = vcmp.lt.s32.totalorder %v1148, 14
    %vm1219 = vcmp.lt.s32.totalorder %v1149, 14
    %vm1220 = vcmp.lt.s32.totalorder %v1150, 14
    %vm1221 = vcmp.lt.s32.totalorder %v1151, 14
    %vm1222 = vcmp.lt.s32.totalorder %v1152, 14
    %vm1223 = vcmp.lt.s32.totalorder %v1153, 14
    %vm1224 = vcmp.lt.s32.totalorder %v1154, 14
    %vm1225 = vcmp.lt.s32.totalorder %v1155, 14
    %vm1226 = vcmp.lt.s32.totalorder %v1156, 14
    %vm1227 = vcmp.lt.s32.totalorder %v1157, 14
    %vm1228 = vcmp.lt.s32.totalorder %v1158, 14
    %vm1229 = vcmp.lt.s32.totalorder %v1159, 14
    %vm1230 = vcmp.lt.s32.totalorder %v1160, 14
    %vm1231 = vcmp.lt.s32.totalorder %v1161, 14
    %vm1232 = vcmp.lt.s32.totalorder %v1162, 14
    %vm1233 = vcmp.lt.s32.totalorder %v1163, 14
    %vm1234 = vcmp.lt.s32.totalorder %v1164, 14
    %vm1235 = vcmp.lt.s32.totalorder %v1165, 14
    %vm1236 = vcmp.lt.s32.totalorder %v1166, 14
    %vm1237 = vcmp.lt.s32.totalorder %v1167, 14
    %vm1238 = vcmp.lt.s32.totalorder %v1168, 14
    %vm1239 = vcmp.lt.s32.totalorder %v1169, 14
    %vm1240 = vcmp.lt.s32.totalorder %v1170, 14
    %vm1241 = vcmp.lt.s32.totalorder %v1171, 14
    %vm1242 = vcmp.lt.s32.totalorder %v1172, 14
    %vm1243 = vcmp.lt.s32.totalorder %v1173, 14
    %vm1244 = vcmp.lt.s32.totalorder %v1174, 14
    %vm1245 = vcmp.lt.s32.totalorder %v1175, 14
    %vm1246 = vcmp.lt.s32.totalorder %v1176, 14
    %vm1247 = vcmp.lt.s32.totalorder %v1177, 14
    %vm1248 = vcmp.lt.s32.totalorder %v1178, 14
    %vm1249 = vcmp.lt.s32.totalorder %v1179, 14
    %vm1250 = vcmp.lt.s32.totalorder %v1180, 14
    %vm1251 = vcmp.lt.s32.totalorder %v1181, 14
    %vm1252 = vcmp.lt.s32.totalorder %v1182, 14
    %vm1253 = vcmp.lt.s32.totalorder %v1183, 14
    %vm1254 = vcmp.lt.s32.totalorder %v1184, 14
    %vm1255 = vcmp.lt.s32.totalorder %v1185, 14
    %vm1256 = vcmp.lt.s32.totalorder %v1186, 14
    %vm1257 = vcmp.lt.s32.totalorder %v1187, 14
    %vm1258 = vcmp.lt.s32.totalorder %v1188, 14
    %vm1259 = vcmp.lt.s32.totalorder %v1189, 14
    %vm1260 = vcmp.lt.s32.totalorder %v1190, 14
    %vm1261 = vcmp.lt.s32.totalorder %v1191, 14
    %vm1262 = vcmp.lt.s32.totalorder %v1192, 14
    %vm1263 = vcmp.lt.s32.totalorder %v1193, 14
    %vm1264 = vcmp.lt.s32.totalorder %v1194, 14
    %vm1265 = vcmp.lt.s32.totalorder %v1195, 14
    %vm1266 = vcmp.lt.s32.totalorder %v1196, 14
    %vm1267 = vcmp.lt.s32.totalorder %v1197, 14
    %vm1268 = vcmp.lt.s32.totalorder %v1198, 14
    %vm1269 = vcmp.lt.s32.totalorder %v1199, 14
    %vm1270 = vcmp.lt.s32.totalorder %v1200, 14
    %v1271 = vsel %vm1201, 1, 0
    %v1272 = vsel %vm1202, 1, 0
    %v1273 = vsel %vm1203, 1, 0
    %v1274 = vsel %vm1204, 1, 0
    %v1275 = vsel %vm1205, 1, 0
    %v1276 = vsel %vm1206, 1, 0
    %v1277 = vsel %vm1207, 1, 0
    %v1278 = vsel %vm1208, 1, 0
    %v1279 = vsel %vm1209, 1, 0
    %v1280 = vsel %vm1210, 1, 0
    %v1281 = vsel %vm1211, 1, 0
    %v1282 = vsel %vm1212, 1, 0
    %v1283 = vsel %vm1213, 1, 0
    %v1284 = vsel %vm1214, 1, 0
    %v1285 = vsel %vm1215, 1, 0
    %v1286 = vsel %vm1216, 1, 0
    %v1287 = vsel %vm1217, 1, 0
    %v1288 = vsel %vm1218, 1, 0
    %v1289 = vsel %vm1219, 1, 0
    %v1290 = vsel %vm1220, 1, 0
    %v1291 = vsel %vm1221, 1, 0
    %v1292 = vsel %vm1222, 1, 0
    %v1293 = vsel %vm1223, 1, 0
    %v1294 = vsel %vm1224, 1, 0
    %v1295 = vsel %vm1225, 1, 0
    %v1296 = vsel %vm1226, 1, 0
    %v1297 = vsel %vm1227, 1, 0
    %v1298 = vsel %vm1228, 1, 0
    %v1299 = vsel %vm1229, 1, 0
    %v1300 = vsel %vm1230, 1, 0
    %v1301 = vsel %vm1231, 1, 0
    %v1302 = vsel %vm1232, 1, 0
    %v1303 = vsel %vm1233, 1, 0
    %v1304 = vsel %vm1234, 1, 0
    %v1305 = vsel %vm1235, 1, 0
    %v1306 = vsel %vm1236, 1, 0
    %v1307 = vsel %vm1237, 1, 0
    %v1308 = vsel %vm1238, 1, 0
    %v1309 = vsel %vm1239, 1, 0
    %v1310 = vsel %vm1240, 1, 0
    %v1311 = vsel %vm1241, 1, 0
    %v1312 = vsel %vm1242, 1, 0
    %v1313 = vsel %vm1243, 1, 0
    %v1314 = vsel %vm1244, 1, 0
    %v1315 = vsel %vm1245, 1, 0
    %v1316 = vsel %vm1246, 1, 0
    %v1317 = vsel %vm1247, 1, 0
    %v1318 = vsel %vm1248, 1, 0
    %v1319 = vsel %vm1249, 1, 0
    %v1320 = vsel %vm1250, 1, 0
    %v1321 = vsel %vm1251, 1, 0
    %v1322 = vsel %vm1252, 1, 0
    %v1323 = vsel %vm1253, 1, 0
    %v1324 = vsel %vm1254, 1, 0
    %v1325 = vsel %vm1255, 1, 0
    %v1326 = vsel %vm1256, 1, 0
    %v1327 = vsel %vm1257, 1, 0
    %v1328 = vsel %vm1258, 1, 0
    %v1329 = vsel %vm1259, 1, 0
    %v1330 = vsel %vm1260, 1, 0
    %v1331 = vsel %vm1261, 1, 0
    %v1332 = vsel %vm1262, 1, 0
    %v1333 = vsel %vm1263, 1, 0
    %v1334 = vsel %vm1264, 1, 0
    %v1335 = vsel %vm1265, 1, 0
    %v1336 = vsel %vm1266, 1, 0
    %v1337 = vsel %vm1267, 1, 0
    %v1338 = vsel %vm1268, 1, 0
    %v1339 = vsel %vm1269, 1, 0
    %v1340 = vsel %vm1270, 1, 0
    %v1341 = vcvt.s32.f32 %v1271
    %v1342 = vcvt.s32.f32 %v1272
    %v1343 = vcvt.s32.f32 %v1273
    %v1344 = vcvt.s32.f32 %v1274
    %v1345 = vcvt.s32.f32 %v1275
    %v1346 = vcvt.s32.f32 %v1276
    %v1347 = vcvt.s32.f32 %v1277
    %v1348 = vcvt.s32.f32 %v1278
    %v1349 = vcvt.s32.f32 %v1279
    %v1350 = vcvt.s32.f32 %v1280
    %v1351 = vcvt.s32.f32 %v1281
    %v1352 = vcvt.s32.f32 %v1282
    %v1353 = vcvt.s32.f32 %v1283
    %v1354 = vcvt.s32.f32 %v1284
    %v1355 = vcvt.s32.f32 %v1285
    %v1356 = vcvt.s32.f32 %v1286
    %v1357 = vcvt.s32.f32 %v1287
    %v1358 = vcvt.s32.f32 %v1288
    %v1359 = vcvt.s32.f32 %v1289
    %v1360 = vcvt.s32.f32 %v1290
    %v1361 = vcvt.s32.f32 %v1291
    %v1362 = vcvt.s32.f32 %v1292
    %v1363 = vcvt.s32.f32 %v1293
    %v1364 = vcvt.s32.f32 %v1294
    %v1365 = vcvt.s32.f32 %v1295
    %v1366 = vcvt.s32.f32 %v1296
    %v1367 = vcvt.s32.f32 %v1297
    %v1368 = vcvt.s32.f32 %v1298
    %v1369 = vcvt.s32.f32 %v1299
    %v1370 = vcvt.s32.f32 %v1300
    %v1371 = vcvt.s32.f32 %v1301
    %v1372 = vcvt.s32.f32 %v1302
    %v1373 = vcvt.s32.f32 %v1303
    %v1374 = vcvt.s32.f32 %v1304
    %v1375 = vcvt.s32.f32 %v1305
    %v1376 = vcvt.s32.f32 %v1306
    %v1377 = vcvt.s32.f32 %v1307
    %v1378 = vcvt.s32.f32 %v1308
    %v1379 = vcvt.s32.f32 %v1309
    %v1380 = vcvt.s32.f32 %v1310
    %v1381 = vcvt.s32.f32 %v1311
    %v1382 = vcvt.s32.f32 %v1312
    %v1383 = vcvt.s32.f32 %v1313
    %v1384 = vcvt.s32.f32 %v1314
    %v1385 = vcvt.s32.f32 %v1315
    %v1386 = vcvt.s32.f32 %v1316
    %v1387 = vcvt.s32.f32 %v1317
    %v1388 = vcvt.s32.f32 %v1318
    %v1389 = vcvt.s32.f32 %v1319
    %v1390 = vcvt.s32.f32 %v1320
    %v1391 = vcvt.s32.f32 %v1321
    %v1392 = vcvt.s32.f32 %v1322
    %v1393 = vcvt.s32.f32 %v1323
    %v1394 = vcvt.s32.f32 %v1324
    %v1395 = vcvt.s32.f32 %v1325
    %v1396 = vcvt.s32.f32 %v1326
    %v1397 = vcvt.s32.f32 %v1327
    %v1398 = vcvt.s32.f32 %v1328
    %v1399 = vcvt.s32.f32 %v1329
    %v1400 = vcvt.s32.f32 %v1330
    %v1401 = vcvt.s32.f32 %v1331
    %v1402 = vcvt.s32.f32 %v1332
    %v1403 = vcvt.s32.f32 %v1333
    %v1404 = vcvt.s32.f32 %v1334
    %v1405 = vcvt.s32.f32 %v1335
    %v1406 = vcvt.s32.f32 %v1336
    %v1407 = vcvt.s32.f32 %v1337
    %v1408 = vcvt.s32.f32 %v1338
    %v1409 = vcvt.s32.f32 %v1339
    %v1410 = vcvt.s32.f32 %v1340
    %vm1411 = vcmp.lt.s32.totalorder %v1131, 12
    %vm1412 = vcmp.lt.s32.totalorder %v1132, 12
    %vm1413 = vcmp.lt.s32.totalorder %v1133, 12
    %vm1414 = vcmp.lt.s32.totalorder %v1134, 12
    %vm1415 = vcmp.lt.s32.totalorder %v1135, 12
    %vm1416 = vcmp.lt.s32.totalorder %v1136, 12
    %vm1417 = vcmp.lt.s32.totalorder %v1137, 12
    %vm1418 = vcmp.lt.s32.totalorder %v1138, 12
    %vm1419 = vcmp.lt.s32.totalorder %v1139, 12
    %vm1420 = vcmp.lt.s32.totalorder %v1140, 12
    %vm1421 = vcmp.lt.s32.totalorder %v1141, 12
    %vm1422 = vcmp.lt.s32.totalorder %v1142, 12
    %vm1423 = vcmp.lt.s32.totalorder %v1143, 12
    %vm1424 = vcmp.lt.s32.totalorder %v1144, 12
    %vm1425 = vcmp.lt.s32.totalorder %v1145, 12
    %vm1426 = vcmp.lt.s32.totalorder %v1146, 12
    %vm1427 = vcmp.lt.s32.totalorder %v1147, 12
    %vm1428 = vcmp.lt.s32.totalorder %v1148, 12
    %vm1429 = vcmp.lt.s32.totalorder %v1149, 12
    %vm1430 = vcmp.lt.s32.totalorder %v1150, 12
    %vm1431 = vcmp.lt.s32.totalorder %v1151, 12
    %vm1432 = vcmp.lt.s32.totalorder %v1152, 12
    %vm1433 = vcmp.lt.s32.totalorder %v1153, 12
    %vm1434 = vcmp.lt.s32.totalorder %v1154, 12
    %vm1435 = vcmp.lt.s32.totalorder %v1155, 12
    %vm1436 = vcmp.lt.s32.totalorder %v1156, 12
    %vm1437 = vcmp.lt.s32.totalorder %v1157, 12
    %vm1438 = vcmp.lt.s32.totalorder %v1158, 12
    %vm1439 = vcmp.lt.s32.totalorder %v1159, 12
    %vm1440 = vcmp.lt.s32.totalorder %v1160, 12
    %vm1441 = vcmp.lt.s32.totalorder %v1161, 12
    %vm1442 = vcmp.lt.s32.totalorder %v1162, 12
    %vm1443 = vcmp.lt.s32.totalorder %v1163, 12
    %vm1444 = vcmp.lt.s32.totalorder %v1164, 12
    %vm1445 = vcmp.lt.s32.totalorder %v1165, 12
    %vm1446 = vcmp.lt.s32.totalorder %v1166, 12
    %vm1447 = vcmp.lt.s32.totalorder %v1167, 12
    %vm1448 = vcmp.lt.s32.totalorder %v1168, 12
    %vm1449 = vcmp.lt.s32.totalorder %v1169, 12
    %vm1450 = vcmp.lt.s32.totalorder %v1170, 12
    %vm1451 = vcmp.lt.s32.totalorder %v1171, 12
    %vm1452 = vcmp.lt.s32.totalorder %v1172, 12
    %vm1453 = vcmp.lt.s32.totalorder %v1173, 12
    %vm1454 = vcmp.lt.s32.totalorder %v1174, 12
    %vm1455 = vcmp.lt.s32.totalorder %v1175, 12
    %vm1456 = vcmp.lt.s32.totalorder %v1176, 12
    %vm1457 = vcmp.lt.s32.totalorder %v1177, 12
    %vm1458 = vcmp.lt.s32.totalorder %v1178, 12
    %vm1459 = vcmp.lt.s32.totalorder %v1179, 12
    %vm1460 = vcmp.lt.s32.totalorder %v1180, 12
    %vm1461 = vcmp.lt.s32.totalorder %v1181, 12
    %vm1462 = vcmp.lt.s32.totalorder %v1182, 12
    %vm1463 = vcmp.lt.s32.totalorder %v1183, 12
    %vm1464 = vcmp.lt.s32.totalorder %v1184, 12
    %vm1465 = vcmp.lt.s32.totalorder %v1185, 12
    %vm1466 = vcmp.lt.s32.totalorder %v1186, 12
    %vm1467 = vcmp.lt.s32.totalorder %v1187, 12
    %vm1468 = vcmp.lt.s32.totalorder %v1188, 12
    %vm1469 = vcmp.lt.s32.totalorder %v1189, 12
    %vm1470 = vcmp.lt.s32.totalorder %v1190, 12
    %vm1471 = vcmp.lt.s32.totalorder %v1191, 12
    %vm1472 = vcmp.lt.s32.totalorder %v1192, 12
    %vm1473 = vcmp.lt.s32.totalorder %v1193, 12
    %vm1474 = vcmp.lt.s32.totalorder %v1194, 12
    %vm1475 = vcmp.lt.s32.totalorder %v1195, 12
    %vm1476 = vcmp.lt.s32.totalorder %v1196, 12
    %vm1477 = vcmp.lt.s32.totalorder %v1197, 12
    %vm1478 = vcmp.lt.s32.totalorder %v1198, 12
    %vm1479 = vcmp.lt.s32.totalorder %v1199, 12
    %vm1480 = vcmp.lt.s32.totalorder %v1200, 12
    %v1481 = vsel %vm1411, 1, 0
    %v1482 = vsel %vm1412, 1, 0
    %v1483 = vsel %vm1413, 1, 0
    %v1484 = vsel %vm1414, 1, 0
    %v1485 = vsel %vm1415, 1, 0
    %v1486 = vsel %vm1416, 1, 0
    %v1487 = vsel %vm1417, 1, 0
    %v1488 = vsel %vm1418, 1, 0
    %v1489 = vsel %vm1419, 1, 0
    %v1490 = vsel %vm1420, 1, 0
    %v1491 = vsel %vm1421, 1, 0
    %v1492 = vsel %vm1422, 1, 0
    %v1493 = vsel %vm1423, 1, 0
    %v1494 = vsel %vm1424, 1, 0
    %v1495 = vsel %vm1425, 1, 0
    %v1496 = vsel %vm1426, 1, 0
    %v1497 = vsel %vm1427, 1, 0
    %v1498 = vsel %vm1428, 1, 0
    %v1499 = vsel %vm1429, 1, 0
    %v1500 = vsel %vm1430, 1, 0
    %v1501 = vsel %vm1431, 1, 0
    %v1502 = vsel %vm1432, 1, 0
    %v1503 = vsel %vm1433, 1, 0
    %v1504 = vsel %vm1434, 1, 0
    %v1505 = vsel %vm1435, 1, 0
    %v1506 = vsel %vm1436, 1, 0
    %v1507 = vsel %vm1437, 1, 0
    %v1508 = vsel %vm1438, 1, 0
    %v1509 = vsel %vm1439, 1, 0
    %v1510 = vsel %vm1440, 1, 0
    %v1511 = vsel %vm1441, 1, 0
    %v1512 = vsel %vm1442, 1, 0
    %v1513 = vsel %vm1443, 1, 0
    %v1514 = vsel %vm1444, 1, 0
    %v1515 = vsel %vm1445, 1, 0
    %v1516 = vsel %vm1446, 1, 0
    %v1517 = vsel %vm1447, 1, 0
    %v1518 = vsel %vm1448, 1, 0
    %v1519 = vsel %vm1449, 1, 0
    %v1520 = vsel %vm1450, 1, 0
    %v1521 = vsel %vm1451, 1, 0
    %v1522 = vsel %vm1452, 1, 0
    %v1523 = vsel %vm1453, 1, 0
    %v1524 = vsel %vm1454, 1, 0
    %v1525 = vsel %vm1455, 1, 0
    %v1526 = vsel %vm1456, 1, 0
    %v1527 = vsel %vm1457, 1, 0
    %v1528 = vsel %vm1458, 1, 0
    %v1529 = vsel %vm1459, 1, 0
    %v1530 = vsel %vm1460, 1, 0
    %v1531 = vsel %vm1461, 1, 0
    %v1532 = vsel %vm1462, 1, 0
    %v1533 = vsel %vm1463, 1, 0
    %v1534 = vsel %vm1464, 1, 0
    %v1535 = vsel %vm1465, 1, 0
    %v1536 = vsel %vm1466, 1, 0
    %v1537 = vsel %vm1467, 1, 0
    %v1538 = vsel %vm1468, 1, 0
    %v1539 = vsel %vm1469, 1, 0
    %v1540 = vsel %vm1470, 1, 0
    %v1541 = vsel %vm1471, 1, 0
    %v1542 = vsel %vm1472, 1, 0
    %v1543 = vsel %vm1473, 1, 0
    %v1544 = vsel %vm1474, 1, 0
    %v1545 = vsel %vm1475, 1, 0
    %v1546 = vsel %vm1476, 1, 0
    %v1547 = vsel %vm1477, 1, 0
    %v1548 = vsel %vm1478, 1, 0
    %v1549 = vsel %vm1479, 1, 0
    %v1550 = vsel %vm1480, 1, 0
    %v1551 = vcvt.s32.f32 %v1481
    %v1552 = vcvt.s32.f32 %v1482
    %v1553 = vcvt.s32.f32 %v1483
    %v1554 = vcvt.s32.f32 %v1484
    %v1555 = vcvt.s32.f32 %v1485
    %v1556 = vcvt.s32.f32 %v1486
    %v1557 = vcvt.s32.f32 %v1487
    %v1558 = vcvt.s32.f32 %v1488
    %v1559 = vcvt.s32.f32 %v1489
    %v1560 = vcvt.s32.f32 %v1490
    %v1561 = vcvt.s32.f32 %v1491
    %v1562 = vcvt.s32.f32 %v1492
    %v1563 = vcvt.s32.f32 %v1493
    %v1564 = vcvt.s32.f32 %v1494
    %v1565 = vcvt.s32.f32 %v1495
    %v1566 = vcvt.s32.f32 %v1496
    %v1567 = vcvt.s32.f32 %v1497
    %v1568 = vcvt.s32.f32 %v1498
    %v1569 = vcvt.s32.f32 %v1499
    %v1570 = vcvt.s32.f32 %v1500
    %v1571 = vcvt.s32.f32 %v1501
    %v1572 = vcvt.s32.f32 %v1502
    %v1573 = vcvt.s32.f32 %v1503
    %v1574 = vcvt.s32.f32 %v1504
    %v1575 = vcvt.s32.f32 %v1505
    %v1576 = vcvt.s32.f32 %v1506
    %v1577 = vcvt.s32.f32 %v1507
    %v1578 = vcvt.s32.f32 %v1508
    %v1579 = vcvt.s32.f32 %v1509
    %v1580 = vcvt.s32.f32 %v1510
    %v1581 = vcvt.s32.f32 %v1511
    %v1582 = vcvt.s32.f32 %v1512
    %v1583 = vcvt.s32.f32 %v1513
    %v1584 = vcvt.s32.f32 %v1514
    %v1585 = vcvt.s32.f32 %v1515
    %v1586 = vcvt.s32.f32 %v1516
    %v1587 = vcvt.s32.f32 %v1517
    %v1588 = vcvt.s32.f32 %v1518
    %v1589 = vcvt.s32.f32 %v1519
    %v1590 = vcvt.s32.f32 %v1520
    %v1591 = vcvt.s32.f32 %v1521
    %v1592 = vcvt.s32.f32 %v1522
    %v1593 = vcvt.s32.f32 %v1523
    %v1594 = vcvt.s32.f32 %v1524
    %v1595 = vcvt.s32.f32 %v1525
    %v1596 = vcvt.s32.f32 %v1526
    %v1597 = vcvt.s32.f32 %v1527
    %v1598 = vcvt.s32.f32 %v1528
    %v1599 = vcvt.s32.f32 %v1529
    %v1600 = vcvt.s32.f32 %v1530
    %v1601 = vcvt.s32.f32 %v1531
    %v1602 = vcvt.s32.f32 %v1532
    %v1603 = vcvt.s32.f32 %v1533
    %v1604 = vcvt.s32.f32 %v1534
    %v1605 = vcvt.s32.f32 %v1535
    %v1606 = vcvt.s32.f32 %v1536
    %v1607 = vcvt.s32.f32 %v1537
    %v1608 = vcvt.s32.f32 %v1538
    %v1609 = vcvt.s32.f32 %v1539
    %v1610 = vcvt.s32.f32 %v1540
    %v1611 = vcvt.s32.f32 %v1541
    %v1612 = vcvt.s32.f32 %v1542
    %v1613 = vcvt.s32.f32 %v1543
    %v1614 = vcvt.s32.f32 %v1544
    %v1615 = vcvt.s32.f32 %v1545
    %v1616 = vcvt.s32.f32 %v1546
    %v1617 = vcvt.s32.f32 %v1547
    %v1618 = vcvt.s32.f32 %v1548
    %v1619 = vcvt.s32.f32 %v1549
    %v1620 = vcvt.s32.f32 %v1550
    %v1621 = vld [vmem:[%s4] sm:$0x1]
    %v1622 = vld [vmem:[#allocation2] sm:$0xff]
    %v1623 = vld [vmem:[#allocation2 + $0x8] sm:$0xff]
    %v1624 = vld [vmem:[#allocation2 + $0x10] sm:$0xff]
    %v1625 = vld [vmem:[#allocation2 + $0x18] sm:$0xff]
    %v1626 = vld [vmem:[#allocation2 + $0x20] sm:$0xff]
    %v1627 = vld [vmem:[#allocation2 + $0x28] sm:$0xff]
    %v1628 = vld [vmem:[#allocation2 + $0x30] sm:$0xff]
    %v1629 = vld [vmem:[#allocation2 + $0x38] sm:$0xff]
    %v1630 = vld [vmem:[#allocation2 + $0x40] sm:$0xff]
    %v1631 = vld [vmem:[#allocation2 + $0x48] sm:$0xff]
    %v1632 = vld [vmem:[#allocation2 + $0x50] sm:$0xff]
    %v1633 = vld [vmem:[#allocation2 + $0x58] sm:$0xff]
    %v1634 = vld [vmem:[#allocation2 + $0x60] sm:$0xff]
    %v1635 = vld [vmem:[#allocation2 + $0x68] sm:$0xff]
    %v1636 = vld [vmem:[#allocation2 + $0x70] sm:$0xff]
    %v1637 = vld [vmem:[#allocation2 + $0x78] sm:$0xff]
    %v1638 = vld [vmem:[#allocation2 + $0x80] sm:$0xff]
    %v1639 = vld [vmem:[#allocation2 + $0x88] sm:$0xff]
    %v1640 = vld [vmem:[#allocation2 + $0x90] sm:$0xff]
    %v1641 = vld [vmem:[#allocation2 + $0x98] sm:$0xff]
    %v1642 = vld [vmem:[#allocation2 + $0xa0] sm:$0xff]
    %v1643 = vld [vmem:[#allocation2 + $0xa8] sm:$0xff]
    %v1644 = vld [vmem:[#allocation2 + $0xb0] sm:$0xff]
    %v1645 = vld [vmem:[#allocation2 + $0xb8] sm:$0xff]
    %v1646 = vld [vmem:[#allocation2 + $0xc0] sm:$0xff]
    %v1647 = vld [vmem:[#allocation2 + $0xc8] sm:$0xff]
    %v1648 = vld [vmem:[#allocation2 + $0xd0] sm:$0xff]
    %v1649 = vld [vmem:[#allocation2 + $0xd8] sm:$0xff]
    %v1650 = vld [vmem:[#allocation2 + $0xe0] sm:$0xff]
    %v1651 = vld [vmem:[#allocation2 + $0xe8] sm:$0xff]
    %v1652 = vld [vmem:[#allocation2 + $0xf0] sm:$0xff]
    %v1653 = vld [vmem:[#allocation2 + $0xf8] sm:$0xff]
    %v1654 = vld [vmem:[#allocation2 + $0x100] sm:$0xff]
    %v1655 = vld [vmem:[#allocation2 + $0x108] sm:$0xff]
    %v1656 = vld [vmem:[#allocation2 + $0x110] sm:$0xff]
    %v1657 = vld [vmem:[#allocation2 + $0x118] sm:$0xff]
    %v1658 = vld [vmem:[#allocation2 + $0x120] sm:$0xff]
    %v1659 = vld [vmem:[#allocation2 + $0x128] sm:$0xff]
    %v1660 = vld [vmem:[#allocation2 + $0x130] sm:$0xff]
    %v1661 = vld [vmem:[#allocation2 + $0x138] sm:$0xff]
    %v1662 = vld [vmem:[#allocation2 + $0x140] sm:$0xff]
    %v1663 = vld [vmem:[#allocation2 + $0x148] sm:$0xff]
    %v1664 = vld [vmem:[#allocation2 + $0x150] sm:$0xff]
    %v1665 = vld [vmem:[#allocation2 + $0x158] sm:$0xff]
    %v1666 = vld [vmem:[#allocation2 + $0x160] sm:$0xff]
    %v1667 = vld [vmem:[#allocation2 + $0x168] sm:$0xff]
    %v1668 = vld [vmem:[#allocation2 + $0x170] sm:$0xff]
    %v1669 = vld [vmem:[#allocation2 + $0x178] sm:$0xff]
    %v1670 = vld [vmem:[#allocation2 + $0x180] sm:$0xff]
    %v1671 = vld [vmem:[#allocation2 + $0x188] sm:$0xff]
    %v1672 = vld [vmem:[#allocation2 + $0x190] sm:$0xff]
    %v1673 = vld [vmem:[#allocation2 + $0x198] sm:$0xff]
    %v1674 = vld [vmem:[#allocation2 + $0x1a0] sm:$0xff]
    %v1675 = vld [vmem:[#allocation2 + $0x1a8] sm:$0xff]
    %v1676 = vld [vmem:[#allocation2 + $0x1b0] sm:$0xff]
    %v1677 = vld [vmem:[#allocation2 + $0x1b8] sm:$0xff]
    %v1678 = vld [vmem:[#allocation2 + $0x1c0] sm:$0xff]
    %v1679 = vld [vmem:[#allocation2 + $0x1c8] sm:$0xff]
    %v1680 = vld [vmem:[#allocation2 + $0x1d0] sm:$0xff]
    %v1681 = vld [vmem:[#allocation2 + $0x1d8] sm:$0xff]
    %v1682 = vld [vmem:[#allocation2 + $0x1e0] sm:$0xff]
    %v1683 = vld [vmem:[#allocation2 + $0x1e8] sm:$0xff]
    %v1684 = vld [vmem:[#allocation2 + $0x1f0] sm:$0xff]
    %v1685 = vld [vmem:[#allocation2 + $0x1f8] sm:$0xff]
    %v1686 = vld [vmem:[#allocation2 + $0x200] sm:$0xff]
    %v1687 = vld [vmem:[#allocation2 + $0x208] sm:$0xff]
    %v1688 = vld [vmem:[#allocation2 + $0x210] sm:$0xff]
    %v1689 = vld [vmem:[#allocation2 + $0x218] sm:$0xff]
    %v1690 = vld [vmem:[#allocation2 + $0x220] sm:$0xff]
    %v1691 = vld [vmem:[#allocation2 + $0x228] sm:$0xff]
    %v1692 = vld [vmem:[%s3] sm:$0xf]
    %v1694 = vsel %vm117, %v1622, 0
    %v1697 = vsel %vm117, %v1623, 0
    %v1700 = vsel %vm117, %v1624, 0
    %v1703 = vsel %vm117, %v1625, 0
    %v1706 = vsel %vm117, %v1626, 0
    %v1709 = vsel %vm117, %v1627, 0
    %v1712 = vsel %vm117, %v1628, 0
    %v1715 = vsel %vm117, %v1629, 0
    %v1718 = vsel %vm117, %v1630, 0
    %v1721 = vsel %vm117, %v1631, 0
    %v1724 = vsel %vm117, %v1632, 0
    %v1727 = vsel %vm117, %v1633, 0
    %v1730 = vsel %vm117, %v1634, 0
    %v1733 = vsel %vm117, %v1635, 0
    %v1736 = vsel %vm117, %v1636, 0
    %v1739 = vsel %vm117, %v1637, 0
    %v1742 = vsel %vm117, %v1638, 0
    %v1745 = vsel %vm117, %v1639, 0
    %v1748 = vsel %vm117, %v1640, 0
    %v1751 = vsel %vm117, %v1641, 0
    %v1754 = vsel %vm117, %v1642, 0
    %v1757 = vsel %vm117, %v1643, 0
    %v1760 = vsel %vm117, %v1644, 0
    %v1763 = vsel %vm117, %v1645, 0
    %v1766 = vsel %vm117, %v1646, 0
    %v1769 = vsel %vm117, %v1647, 0
    %v1772 = vsel %vm117, %v1648, 0
    %v1775 = vsel %vm117, %v1649, 0
    %v1778 = vsel %vm117, %v1650, 0
    %v1781 = vsel %vm117, %v1651, 0
    %v1784 = vsel %vm117, %v1652, 0
    %v1787 = vsel %vm117, %v1653, 0
    %v1790 = vsel %vm117, %v1654, 0
    %v1793 = vsel %vm117, %v1655, 0
    %v1796 = vsel %vm117, %v1656, 0
    %v1799 = vsel %vm117, %v1657, 0
    %v1802 = vsel %vm117, %v1658, 0
    %v1805 = vsel %vm117, %v1659, 0
    %v1808 = vsel %vm117, %v1660, 0
    %v1811 = vsel %vm117, %v1661, 0
    %v1814 = vsel %vm117, %v1662, 0
    %v1817 = vsel %vm117, %v1663, 0
    %v1820 = vsel %vm117, %v1664, 0
    %v1823 = vsel %vm117, %v1665, 0
    %v1826 = vsel %vm117, %v1666, 0
    %v1829 = vsel %vm117, %v1667, 0
    %v1832 = vsel %vm117, %v1668, 0
    %v1835 = vsel %vm117, %v1669, 0
    %v1838 = vsel %vm117, %v1670, 0
    %v1841 = vsel %vm117, %v1671, 0
    %v1844 = vsel %vm117, %v1672, 0
    %v1847 = vsel %vm117, %v1673, 0
    %v1850 = vsel %vm117, %v1674, 0
    %v1853 = vsel %vm117, %v1675, 0
    %v1856 = vsel %vm117, %v1676, 0
    %v1859 = vsel %vm117, %v1677, 0
    %v1862 = vsel %vm117, %v1678, 0
    %v1865 = vsel %vm117, %v1679, 0
    %v1868 = vsel %vm117, %v1680, 0
    %v1871 = vsel %vm117, %v1681, 0
    %v1874 = vsel %vm117, %v1682, 0
    %v1877 = vsel %vm117, %v1683, 0
    %v1880 = vsel %vm117, %v1684, 0
    %v1883 = vsel %vm117, %v1685, 0
    %v1886 = vsel %vm117, %v1686, 0
    %v1889 = vsel %vm117, %v1687, 0
    %v1892 = vsel %vm117, %v1688, 0
    %v1895 = vsel %vm117, %v1689, 0
    %v1898 = vsel %vm117, %v1690, 0
    %v1901 = vsel %vm117, %v1691, 0
    %vm1903 = vcmask 1043456
    %v1905 = vsel %vm1903, %v1692, 0
    %1907 = vmatprep.subr.mxu0 0.0
    %1908 = vmatpush1.msra.mxu0 %v1905
    %1909 = vmatprep.subr.mxu0 0.0
    %1910 = vmatpush1.msra.mxu0 0.0
    %1911 = vmatprep.subr.mxu0 0.0
    %1912 = vmatpush1.msra.mxu0 0.0
    %1913 = vmatprep.subr.mxu0 0.0
    %1914 = vmatpush1.msra.mxu0 0.0
    %1915 = vmatprep.subr.mxu0 0.0
    %1916 = vmatpush1.msra.mxu0 0.0
    %1917 = vmatprep.subr.mxu0 0.0
    %1918 = vmatpush1.msra.mxu0 0.0
    %1919 = vmatprep.subr.mxu0 0.0
    %1920 = vmatpush1.msra.mxu0 0.0
    %1921 = vmatprep.subr.mxu0 0.0
    %1922 = vmatpush1.msra.mxu0 0.0
    %1923 = vmatprep.subr.mxu0 0.0
    %1924 = vmatpush1.msra.mxu0 0.0
    %1925 = vmatprep.subr.mxu0 0.0
    %1926 = vmatpush1.msra.mxu0 0.0
    %1927 = vmatprep.subr.mxu0 0.0
    %1928 = vmatpush1.msra.mxu0 0.0
    %1929 = vmatprep.subr.mxu0 0.0
    %1930 = vmatpush1.msra.mxu0 0.0
    %1931 = vmatprep.subr.mxu0 0.0
    %1932 = vmatpush1.msra.mxu0 0.0
    %1933 = vmatprep.subr.mxu0 0.0
    %1934 = vmatpush1.msra.mxu0 0.0
    %1935 = vmatprep.subr.mxu0 0.0
    %1936 = vmatpush1.msra.mxu0 0.0
    %1937 = vmatprep.subr.mxu0 0.0
    %1938 = vmatpush1.msra.mxu0 0.0
    %1939 = vmatprep.subr.mxu0 0.0
    %1940 = vmatpush1.msra.mxu0 0.0
    %1941 = vmatprep.subr.mxu0 0.0
    %1942 = vmatpush1.msra.mxu0 0.0
    %1943 = vmatprep.subr.mxu0 0.0
    %1944 = vmatpush1.msra.mxu0 0.0
    %1945 = vmatprep.subr.mxu0 0.0
    %1946 = vmatpush1.msra.mxu0 0.0
    %1947 = vmatprep.subr.mxu0 0.0
    %1948 = vmatpush1.msra.mxu0 0.0
    %1949 = vmatprep.subr.mxu0 0.0
    %1950 = vmatpush1.msra.mxu0 0.0
    %1951 = vmatprep.subr.mxu0 0.0
    %1952 = vmatpush1.msra.mxu0 0.0
    %1953 = vmatprep.subr.mxu0 0.0
    %1954 = vmatpush1.msra.mxu0 0.0
    %1955 = vmatprep.subr.mxu0 0.0
    %1956 = vmatpush1.msra.mxu0 0.0
    %1957 = vmatprep.subr.mxu0 0.0
    %1958 = vmatpush1.msra.mxu0 0.0
    %1959 = vmatprep.subr.mxu0 0.0
    %1960 = vmatpush1.msra.mxu0 0.0
    %1961 = vmatprep.subr.mxu0 0.0
    %1962 = vmatpush1.msra.mxu0 0.0
    %1963 = vmatprep.subr.mxu0 0.0
    %1964 = vmatpush1.msra.mxu0 0.0
    %1965 = vmatprep.subr.mxu0 0.0
    %1966 = vmatpush1.msra.mxu0 0.0
    %1967 = vmatprep.subr.mxu0 0.0
    %1968 = vmatpush1.msra.mxu0 0.0
    %1969 = vmatprep.subr.mxu0 0.0
    %1970 = vmatpush1.msra.mxu0 0.0
    %1971 = vmatprep.mubr.f32.mxu0 0.0
    %1972 = vmatmul.mubr.f32.gmra.mrb[0].mxu0 %v1694
    %v1973 = vpop.f32.mrb[0].mxu0
    %v1974 = vadd.f32 0.0, %v1973
    %v1975 = vpop.f32.mrb[0].mxu0
    %1976 = vmatprep.mubr.f32.mxu0 0.0
    %1977 = vmatmul.mubr.f32.gmra.mrb[0].mxu0 %v1697
    %v1978 = vpop.f32.mrb[0].mxu0
    %v1979 = vadd.f32 0.0, %v1978
    %v1980 = vpop.f32.mrb[0].mxu0
    %1981 = vmatprep.mubr.f32.mxu0 0.0
    %1982 = vmatmul.mubr.f32.gmra.mrb[0].mxu0 %v1700
    %v1983 = vpop.f32.mrb[0].mxu0
    %v1984 = vadd.f32 0.0, %v1983
    %v1985 = vpop.f32.mrb[0].mxu0
    %1986 = vmatprep.mubr.f32.mxu0 0.0
    %1987 = vmatmul.mubr.f32.gmra.mrb[0].mxu0 %v1703
    %v1988 = vpop.f32.mrb[0].mxu0
    %v1989 = vadd.f32 0.0, %v1988
    %v1990 = vpop.f32.mrb[0].mxu0
    %1991 = vmatprep.mubr.f32.mxu0 0.0
    %1992 = vmatmul.mubr.f32.gmra.mrb[0].mxu0 %v1706
    %v1993 = vpop.f32.mrb[0].mxu0
    %v1994 = vadd.f32 0.0, %v1993
    %v1995 = vpop.f32.mrb[0].mxu0
    %1996 = vmatprep.mubr.f32.mxu0 0.0
    %1997 = vmatmul.mubr.f32.gmra.mrb[0].mxu0 %v1709
    %v1998 = vpop.f32.mrb[0].mxu0
    %v1999 = vadd.f32 0.0, %v1998
    %v2000 = vpop.f32.mrb[0].mxu0
    %2001 = vmatprep.mubr.f32.mxu0 0.0
    %2002 = vmatmul.mubr.f32.gmra.mrb[0].mxu0 %v1712
    %v2003 = vpop.f32.mrb[0].mxu0
    %v2004 = vadd.f32 0.0, %v2003
    %v2005 = vpop.f32.mrb[0].mxu0
    %2006 = vmatprep.mubr.f32.mxu0 0.0
    %2007 = vmatmul.mubr.f32.gmra.mrb[0].mxu0 %v1715
    %v2008 = vpop.f32.mrb[0].mxu0
    %v2009 = vadd.f32 0.0, %v2008
    %v2010 = vpop.f32.mrb[0].mxu0
    %2011 = vmatprep.mubr.f32.mxu0 0.0
    %2012 = vmatmul.mubr.f32.gmra.mrb[0].mxu0 %v1718
    %v2013 = vpop.f32.mrb[0].mxu0
    %v2014 = vadd.f32 0.0, %v2013
    %v2015 = vpop.f32.mrb[0].mxu0
    %2016 = vmatprep.mubr.f32.mxu0 0.0
    %2017 = vmatmul.mubr.f32.gmra.mrb[0].mxu0 %v1721
    %v2018 = vpop.f32.mrb[0].mxu0
    %v2019 = vadd.f32 0.0, %v2018
    %v2020 = vpop.f32.mrb[0].mxu0
    %2021 = vmatprep.mubr.f32.mxu0 0.0
    %2022 = vmatmul.mubr.f32.gmra.mrb[0].mxu0 %v1724
    %v2023 = vpop.f32.mrb[0].mxu0
    %v2024 = vadd.f32 0.0, %v2023
    %v2025 = vpop.f32.mrb[0].mxu0
    %2026 = vmatprep.mubr.f32.mxu0 0.0
    %2027 = vmatmul.mubr.f32.gmra.mrb[0].mxu0 %v1727
    %v2028 = vpop.f32.mrb[0].mxu0
    %v2029 = vadd.f32 0.0, %v2028
    %v2030 = vpop.f32.mrb[0].mxu0
    %2031 = vmatprep.mubr.f32.mxu0 0.0
    %2032 = vmatmul.mubr.f32.gmra.mrb[0].mxu0 %v1730
    %v2033 = vpop.f32.mrb[0].mxu0
    %v2034 = vadd.f32 0.0, %v2033
    %v2035 = vpop.f32.mrb[0].mxu0
    %2036 = vmatprep.mubr.f32.mxu0 0.0
    %2037 = vmatmul.mubr.f32.gmra.mrb[0].mxu0 %v1733
    %v2038 = vpop.f32.mrb[0].mxu0
    %v2039 = vadd.f32 0.0, %v2038
    %v2040 = vpop.f32.mrb[0].mxu0
    %2041 = vmatprep.mubr.f32.mxu0 0.0
    %2042 = vmatmul.mubr.f32.gmra.mrb[0].mxu0 %v1736
    %v2043 = vpop.f32.mrb[0].mxu0
    %v2044 = vadd.f32 0.0, %v2043
    %v2045 = vpop.f32.mrb[0].mxu0
    %2046 = vmatprep.mubr.f32.mxu0 0.0
    %2047 = vmatmul.mubr.f32.gmra.mrb[0].mxu0 %v1739
    %v2048 = vpop.f32.mrb[0].mxu0
    %v2049 = vadd.f32 0.0, %v2048
    %v2050 = vpop.f32.mrb[0].mxu0
    %2051 = vmatprep.mubr.f32.mxu0 0.0
    %2052 = vmatmul.mubr.f32.gmra.mrb[0].mxu0 %v1742
    %v2053 = vpop.f32.mrb[0].mxu0
    %v2054 = vadd.f32 0.0, %v2053
    %v2055 = vpop.f32.mrb[0].mxu0
    %2056 = vmatprep.mubr.f32.mxu0 0.0
    %2057 = vmatmul.mubr.f32.gmra.mrb[0].mxu0 %v1745
    %v2058 = vpop.f32.mrb[0].mxu0
    %v2059 = vadd.f32 0.0, %v2058
    %v2060 = vpop.f32.mrb[0].mxu0
    %2061 = vmatprep.mubr.f32.mxu0 0.0
    %2062 = vmatmul.mubr.f32.gmra.mrb[0].mxu0 %v1748
    %v2063 = vpop.f32.mrb[0].mxu0
    %v2064 = vadd.f32 0.0, %v2063
    %v2065 = vpop.f32.mrb[0].mxu0
    %2066 = vmatprep.mubr.f32.mxu0 0.0
    %2067 = vmatmul.mubr.f32.gmra.mrb[0].mxu0 %v1751
    %v2068 = vpop.f32.mrb[0].mxu0
    %v2069 = vadd.f32 0.0, %v2068
    %v2070 = vpop.f32.mrb[0].mxu0
    %2071 = vmatprep.mubr.f32.mxu0 0.0
    %2072 = vmatmul.mubr.f32.gmra.mrb[0].mxu0 %v1754
    %v2073 = vpop.f32.mrb[0].mxu0
    %v2074 = vadd.f32 0.0, %v2073
    %v2075 = vpop.f32.mrb[0].mxu0
    %2076 = vmatprep.mubr.f32.mxu0 0.0
    %2077 = vmatmul.mubr.f32.gmra.mrb[0].mxu0 %v1757
    %v2078 = vpop.f32.mrb[0].mxu0
    %v2079 = vadd.f32 0.0, %v2078
    %v2080 = vpop.f32.mrb[0].mxu0
    %2081 = vmatprep.mubr.f32.mxu0 0.0
    %2082 = vmatmul.mubr.f32.gmra.mrb[0].mxu0 %v1760
    %v2083 = vpop.f32.mrb[0].mxu0
    %v2084 = vadd.f32 0.0, %v2083
    %v2085 = vpop.f32.mrb[0].mxu0
    %2086 = vmatprep.mubr.f32.mxu0 0.0
    %2087 = vmatmul.mubr.f32.gmra.mrb[0].mxu0 %v1763
    %v2088 = vpop.f32.mrb[0].mxu0
    %v2089 = vadd.f32 0.0, %v2088
    %v2090 = vpop.f32.mrb[0].mxu0
    %2091 = vmatprep.mubr.f32.mxu0 0.0
    %2092 = vmatmul.mubr.f32.gmra.mrb[0].mxu0 %v1766
    %v2093 = vpop.f32.mrb[0].mxu0
    %v2094 = vadd.f32 0.0, %v2093
    %v2095 = vpop.f32.mrb[0].mxu0
    %2096 = vmatprep.mubr.f32.mxu0 0.0
    %2097 = vmatmul.mubr.f32.gmra.mrb[0].mxu0 %v1769
    %v2098 = vpop.f32.mrb[0].mxu0
    %v2099 = vadd.f32 0.0, %v2098
    %v2100 = vpop.f32.mrb[0].mxu0
    %2101 = vmatprep.mubr.f32.mxu0 0.0
    %2102 = vmatmul.mubr.f32.gmra.mrb[0].mxu0 %v1772
    %v2103 = vpop.f32.mrb[0].mxu0
    %v2104 = vadd.f32 0.0, %v2103
    %v2105 = vpop.f32.mrb[0].mxu0
    %2106 = vmatprep.mubr.f32.mxu0 0.0
    %2107 = vmatmul.mubr.f32.gmra.mrb[0].mxu0 %v1775
    %v2108 = vpop.f32.mrb[0].mxu0
    %v2109 = vadd.f32 0.0, %v2108
    %v2110 = vpop.f32.mrb[0].mxu0
    %2111 = vmatprep.mubr.f32.mxu0 0.0
    %2112 = vmatmul.mubr.f32.gmra.mrb[0].mxu0 %v1778
    %v2113 = vpop.f32.mrb[0].mxu0
    %v2114 = vadd.f32 0.0, %v2113
    %v2115 = vpop.f32.mrb[0].mxu0
    %2116 = vmatprep.mubr.f32.mxu0 0.0
    %2117 = vmatmul.mubr.f32.gmra.mrb[0].mxu0 %v1781
    %v2118 = vpop.f32.mrb[0].mxu0
    %v2119 = vadd.f32 0.0, %v2118
    %v2120 = vpop.f32.mrb[0].mxu0
    %2121 = vmatprep.mubr.f32.mxu0 0.0
    %2122 = vmatmul.mubr.f32.gmra.mrb[0].mxu0 %v1784
    %v2123 = vpop.f32.mrb[0].mxu0
    %v2124 = vadd.f32 0.0, %v2123
    %v2125 = vpop.f32.mrb[0].mxu0
    %2126 = vmatprep.mubr.f32.mxu0 0.0
    %2127 = vmatmul.mubr.f32.gmra.mrb[0].mxu0 %v1787
    %v2128 = vpop.f32.mrb[0].mxu0
    %v2129 = vadd.f32 0.0, %v2128
    %v2130 = vpop.f32.mrb[0].mxu0
    %2131 = vmatprep.mubr.f32.mxu0 0.0
    %2132 = vmatmul.mubr.f32.gmra.mrb[0].mxu0 %v1790
    %v2133 = vpop.f32.mrb[0].mxu0
    %v2134 = vadd.f32 0.0, %v2133
    %v2135 = vpop.f32.mrb[0].mxu0
    %2136 = vmatprep.mubr.f32.mxu0 0.0
    %2137 = vmatmul.mubr.f32.gmra.mrb[0].mxu0 %v1793
    %v2138 = vpop.f32.mrb[0].mxu0
    %v2139 = vadd.f32 0.0, %v2138
    %v2140 = vpop.f32.mrb[0].mxu0
    %2141 = vmatprep.mubr.f32.mxu0 0.0
    %2142 = vmatmul.mubr.f32.gmra.mrb[0].mxu0 %v1796
    %v2143 = vpop.f32.mrb[0].mxu0
    %v2144 = vadd.f32 0.0, %v2143
    %v2145 = vpop.f32.mrb[0].mxu0
    %2146 = vmatprep.mubr.f32.mxu0 0.0
    %2147 = vmatmul.mubr.f32.gmra.mrb[0].mxu0 %v1799
    %v2148 = vpop.f32.mrb[0].mxu0
    %v2149 = vadd.f32 0.0, %v2148
    %v2150 = vpop.f32.mrb[0].mxu0
    %2151 = vmatprep.mubr.f32.mxu0 0.0
    %2152 = vmatmul.mubr.f32.gmra.mrb[0].mxu0 %v1802
    %v2153 = vpop.f32.mrb[0].mxu0
    %v2154 = vadd.f32 0.0, %v2153
    %v2155 = vpop.f32.mrb[0].mxu0
    %2156 = vmatprep.mubr.f32.mxu0 0.0
    %2157 = vmatmul.mubr.f32.gmra.mrb[0].mxu0 %v1805
    %v2158 = vpop.f32.mrb[0].mxu0
    %v2159 = vadd.f32 0.0, %v2158
    %v2160 = vpop.f32.mrb[0].mxu0
    %2161 = vmatprep.mubr.f32.mxu0 0.0
    %2162 = vmatmul.mubr.f32.gmra.mrb[0].mxu0 %v1808
    %v2163 = vpop.f32.mrb[0].mxu0
    %v2164 = vadd.f32 0.0, %v2163
    %v2165 = vpop.f32.mrb[0].mxu0
    %2166 = vmatprep.mubr.f32.mxu0 0.0
    %2167 = vmatmul.mubr.f32.gmra.mrb[0].mxu0 %v1811
    %v2168 = vpop.f32.mrb[0].mxu0
    %v2169 = vadd.f32 0.0, %v2168
    %v2170 = vpop.f32.mrb[0].mxu0
    %2171 = vmatprep.mubr.f32.mxu0 0.0
    %2172 = vmatmul.mubr.f32.gmra.mrb[0].mxu0 %v1814
    %v2173 = vpop.f32.mrb[0].mxu0
    %v2174 = vadd.f32 0.0, %v2173
    %v2175 = vpop.f32.mrb[0].mxu0
    %2176 = vmatprep.mubr.f32.mxu0 0.0
    %2177 = vmatmul.mubr.f32.gmra.mrb[0].mxu0 %v1817
    %v2178 = vpop.f32.mrb[0].mxu0
    %v2179 = vadd.f32 0.0, %v2178
    %v2180 = vpop.f32.mrb[0].mxu0
    %2181 = vmatprep.mubr.f32.mxu0 0.0
    %2182 = vmatmul.mubr.f32.gmra.mrb[0].mxu0 %v1820
    %v2183 = vpop.f32.mrb[0].mxu0
    %v2184 = vadd.f32 0.0, %v2183
    %v2185 = vpop.f32.mrb[0].mxu0
    %2186 = vmatprep.mubr.f32.mxu0 0.0
    %2187 = vmatmul.mubr.f32.gmra.mrb[0].mxu0 %v1823
    %v2188 = vpop.f32.mrb[0].mxu0
    %v2189 = vadd.f32 0.0, %v2188
    %v2190 = vpop.f32.mrb[0].mxu0
    %2191 = vmatprep.mubr.f32.mxu0 0.0
    %2192 = vmatmul.mubr.f32.gmra.mrb[0].mxu0 %v1826
    %v2193 = vpop.f32.mrb[0].mxu0
    %v2194 = vadd.f32 0.0, %v2193
    %v2195 = vpop.f32.mrb[0].mxu0
    %2196 = vmatprep.mubr.f32.mxu0 0.0
    %2197 = vmatmul.mubr.f32.gmra.mrb[0].mxu0 %v1829
    %v2198 = vpop.f32.mrb[0].mxu0
    %v2199 = vadd.f32 0.0, %v2198
    %v2200 = vpop.f32.mrb[0].mxu0
    %2201 = vmatprep.mubr.f32.mxu0 0.0
    %2202 = vmatmul.mubr.f32.gmra.mrb[0].mxu0 %v1832
    %v2203 = vpop.f32.mrb[0].mxu0
    %v2204 = vadd.f32 0.0, %v2203
    %v2205 = vpop.f32.mrb[0].mxu0
    %2206 = vmatprep.mubr.f32.mxu0 0.0
    %2207 = vmatmul.mubr.f32.gmra.mrb[0].mxu0 %v1835
    %v2208 = vpop.f32.mrb[0].mxu0
    %v2209 = vadd.f32 0.0, %v2208
    %v2210 = vpop.f32.mrb[0].mxu0
    %2211 = vmatprep.mubr.f32.mxu0 0.0
    %2212 = vmatmul.mubr.f32.gmra.mrb[0].mxu0 %v1838
    %v2213 = vpop.f32.mrb[0].mxu0
    %v2214 = vadd.f32 0.0, %v2213
    %v2215 = vpop.f32.mrb[0].mxu0
    %2216 = vmatprep.mubr.f32.mxu0 0.0
    %2217 = vmatmul.mubr.f32.gmra.mrb[0].mxu0 %v1841
    %v2218 = vpop.f32.mrb[0].mxu0
    %v2219 = vadd.f32 0.0, %v2218
    %v2220 = vpop.f32.mrb[0].mxu0
    %2221 = vmatprep.mubr.f32.mxu0 0.0
    %2222 = vmatmul.mubr.f32.gmra.mrb[0].mxu0 %v1844
    %v2223 = vpop.f32.mrb[0].mxu0
    %v2224 = vadd.f32 0.0, %v2223
    %v2225 = vpop.f32.mrb[0].mxu0
    %2226 = vmatprep.mubr.f32.mxu0 0.0
    %2227 = vmatmul.mubr.f32.gmra.mrb[0].mxu0 %v1847
    %v2228 = vpop.f32.mrb[0].mxu0
    %v2229 = vadd.f32 0.0, %v2228
    %v2230 = vpop.f32.mrb[0].mxu0
    %2231 = vmatprep.mubr.f32.mxu0 0.0
    %2232 = vmatmul.mubr.f32.gmra.mrb[0].mxu0 %v1850
    %v2233 = vpop.f32.mrb[0].mxu0
    %v2234 = vadd.f32 0.0, %v2233
    %v2235 = vpop.f32.mrb[0].mxu0
    %2236 = vmatprep.mubr.f32.mxu0 0.0
    %2237 = vmatmul.mubr.f32.gmra.mrb[0].mxu0 %v1853
    %v2238 = vpop.f32.mrb[0].mxu0
    %v2239 = vadd.f32 0.0, %v2238
    %v2240 = vpop.f32.mrb[0].mxu0
    %2241 = vmatprep.mubr.f32.mxu0 0.0
    %2242 = vmatmul.mubr.f32.gmra.mrb[0].mxu0 %v1856
    %v2243 = vpop.f32.mrb[0].mxu0
    %v2244 = vadd.f32 0.0, %v2243
    %v2245 = vpop.f32.mrb[0].mxu0
    %2246 = vmatprep.mubr.f32.mxu0 0.0
    %2247 = vmatmul.mubr.f32.gmra.mrb[0].mxu0 %v1859
    %v2248 = vpop.f32.mrb[0].mxu0
    %v2249 = vadd.f32 0.0, %v2248
    %v2250 = vpop.f32.mrb[0].mxu0
    %2251 = vmatprep.mubr.f32.mxu0 0.0
    %2252 = vmatmul.mubr.f32.gmra.mrb[0].mxu0 %v1862
    %v2253 = vpop.f32.mrb[0].mxu0
    %v2254 = vadd.f32 0.0, %v2253
    %v2255 = vpop.f32.mrb[0].mxu0
    %2256 = vmatprep.mubr.f32.mxu0 0.0
    %2257 = vmatmul.mubr.f32.gmra.mrb[0].mxu0 %v1865
    %v2258 = vpop.f32.mrb[0].mxu0
    %v2259 = vadd.f32 0.0, %v2258
    %v2260 = vpop.f32.mrb[0].mxu0
    %2261 = vmatprep.mubr.f32.mxu0 0.0
    %2262 = vmatmul.mubr.f32.gmra.mrb[0].mxu0 %v1868
    %v2263 = vpop.f32.mrb[0].mxu0
    %v2264 = vadd.f32 0.0, %v2263
    %v2265 = vpop.f32.mrb[0].mxu0
    %2266 = vmatprep.mubr.f32.mxu0 0.0
    %2267 = vmatmul.mubr.f32.gmra.mrb[0].mxu0 %v1871
    %v2268 = vpop.f32.mrb[0].mxu0
    %v2269 = vadd.f32 0.0, %v2268
    %v2270 = vpop.f32.mrb[0].mxu0
    %2271 = vmatprep.mubr.f32.mxu0 0.0
    %2272 = vmatmul.mubr.f32.gmra.mrb[0].mxu0 %v1874
    %v2273 = vpop.f32.mrb[0].mxu0
    %v2274 = vadd.f32 0.0, %v2273
    %v2275 = vpop.f32.mrb[0].mxu0
    %2276 = vmatprep.mubr.f32.mxu0 0.0
    %2277 = vmatmul.mubr.f32.gmra.mrb[0].mxu0 %v1877
    %v2278 = vpop.f32.mrb[0].mxu0
    %v2279 = vadd.f32 0.0, %v2278
    %v2280 = vpop.f32.mrb[0].mxu0
    %2281 = vmatprep.mubr.f32.mxu0 0.0
    %2282 = vmatmul.mubr.f32.gmra.mrb[0].mxu0 %v1880
    %v2283 = vpop.f32.mrb[0].mxu0
    %v2284 = vadd.f32 0.0, %v2283
    %v2285 = vpop.f32.mrb[0].mxu0
    %2286 = vmatprep.mubr.f32.mxu0 0.0
    %2287 = vmatmul.mubr.f32.gmra.mrb[0].mxu0 %v1883
    %v2288 = vpop.f32.mrb[0].mxu0
    %v2289 = vadd.f32 0.0, %v2288
    %v2290 = vpop.f32.mrb[0].mxu0
    %2291 = vmatprep.mubr.f32.mxu0 0.0
    %2292 = vmatmul.mubr.f32.gmra.mrb[0].mxu0 %v1886
    %v2293 = vpop.f32.mrb[0].mxu0
    %v2294 = vadd.f32 0.0, %v2293
    %v2295 = vpop.f32.mrb[0].mxu0
    %2296 = vmatprep.mubr.f32.mxu0 0.0
    %2297 = vmatmul.mubr.f32.gmra.mrb[0].mxu0 %v1889
    %v2298 = vpop.f32.mrb[0].mxu0
    %v2299 = vadd.f32 0.0, %v2298
    %v2300 = vpop.f32.mrb[0].mxu0
    %2301 = vmatprep.mubr.f32.mxu0 0.0
    %2302 = vmatmul.mubr.f32.gmra.mrb[0].mxu0 %v1892
    %v2303 = vpop.f32.mrb[0].mxu0
    %v2304 = vadd.f32 0.0, %v2303
    %v2305 = vpop.f32.mrb[0].mxu0
    %2306 = vmatprep.mubr.f32.mxu0 0.0
    %2307 = vmatmul.mubr.f32.gmra.mrb[0].mxu0 %v1895
    %v2308 = vpop.f32.mrb[0].mxu0
    %v2309 = vadd.f32 0.0, %v2308
    %v2310 = vpop.f32.mrb[0].mxu0
    %2311 = vmatprep.mubr.f32.mxu0 0.0
    %2312 = vmatmul.mubr.f32.gmra.mrb[0].mxu0 %v1898
    %v2313 = vpop.f32.mrb[0].mxu0
    %v2314 = vadd.f32 0.0, %v2313
    %v2315 = vpop.f32.mrb[0].mxu0
    %2316 = vmatprep.mubr.f32.mxu0 0.0
    %2317 = vmatmul.mubr.f32.gmra.mrb[0].mxu0 %v1901
    %v2318 = vpop.f32.mrb[0].mxu0
    %v2319 = vadd.f32 0.0, %v2318
    %v2320 = vpop.f32.mrb[0].mxu0
    %2321 = vdwg.mxu0
    %v2323 = vlaneseq
    %v2324 = vshrl.u32 %v2323, 7
    %v2325 = vsub.s32 0, %v2324
    %v2326 = vrot.slane %v1621, %v2325
    %v2328 = vadd.f32 %v2326, %v1974
    %v2329 = vadd.f32 %v2326, %v1979
    %v2330 = vadd.f32 %v2326, %v1984
    %v2331 = vadd.f32 %v2326, %v1989
    %v2332 = vadd.f32 %v2326, %v1994
    %v2333 = vadd.f32 %v2326, %v1999
    %v2334 = vadd.f32 %v2326, %v2004
    %v2335 = vadd.f32 %v2326, %v2009
    %v2336 = vadd.f32 %v2326, %v2014
    %v2337 = vadd.f32 %v2326, %v2019
    %v2338 = vadd.f32 %v2326, %v2024
    %v2339 = vadd.f32 %v2326, %v2029
    %v2340 = vadd.f32 %v2326, %v2034
    %v2341 = vadd.f32 %v2326, %v2039
    %v2342 = vadd.f32 %v2326, %v2044
    %v2343 = vadd.f32 %v2326, %v2049
    %v2344 = vadd.f32 %v2326, %v2054
    %v2345 = vadd.f32 %v2326, %v2059
    %v2346 = vadd.f32 %v2326, %v2064
    %v2347 = vadd.f32 %v2326, %v2069
    %v2348 = vadd.f32 %v2326, %v2074
    %v2349 = vadd.f32 %v2326, %v2079
    %v2350 = vadd.f32 %v2326, %v2084
    %v2351 = vadd.f32 %v2326, %v2089
    %v2352 = vadd.f32 %v2326, %v2094
    %v2353 = vadd.f32 %v2326, %v2099
    %v2354 = vadd.f32 %v2326, %v2104
    %v2355 = vadd.f32 %v2326, %v2109
    %v2356 = vadd.f32 %v2326, %v2114
    %v2357 = vadd.f32 %v2326, %v2119
    %v2358 = vadd.f32 %v2326, %v2124
    %v2359 = vadd.f32 %v2326, %v2129
    %v2360 = vadd.f32 %v2326, %v2134
    %v2361 = vadd.f32 %v2326, %v2139
    %v2362 = vadd.f32 %v2326, %v2144
    %v2363 = vadd.f32 %v2326, %v2149
    %v2364 = vadd.f32 %v2326, %v2154
    %v2365 = vadd.f32 %v2326, %v2159
    %v2366 = vadd.f32 %v2326, %v2164
    %v2367 = vadd.f32 %v2326, %v2169
    %v2368 = vadd.f32 %v2326, %v2174
    %v2369 = vadd.f32 %v2326, %v2179
    %v2370 = vadd.f32 %v2326, %v2184
    %v2371 = vadd.f32 %v2326, %v2189
    %v2372 = vadd.f32 %v2326, %v2194
    %v2373 = vadd.f32 %v2326, %v2199
    %v2374 = vadd.f32 %v2326, %v2204
    %v2375 = vadd.f32 %v2326, %v2209
    %v2376 = vadd.f32 %v2326, %v2214
    %v2377 = vadd.f32 %v2326, %v2219
    %v2378 = vadd.f32 %v2326, %v2224
    %v2379 = vadd.f32 %v2326, %v2229
    %v2380 = vadd.f32 %v2326, %v2234
    %v2381 = vadd.f32 %v2326, %v2239
    %v2382 = vadd.f32 %v2326, %v2244
    %v2383 = vadd.f32 %v2326, %v2249
    %v2384 = vadd.f32 %v2326, %v2254
    %v2385 = vadd.f32 %v2326, %v2259
    %v2386 = vadd.f32 %v2326, %v2264
    %v2387 = vadd.f32 %v2326, %v2269
    %v2388 = vadd.f32 %v2326, %v2274
    %v2389 = vadd.f32 %v2326, %v2279
    %v2390 = vadd.f32 %v2326, %v2284
    %v2391 = vadd.f32 %v2326, %v2289
    %v2392 = vadd.f32 %v2326, %v2294
    %v2393 = vadd.f32 %v2326, %v2299
    %v2394 = vadd.f32 %v2326, %v2304
    %v2395 = vadd.f32 %v2326, %v2309
    %v2396 = vadd.f32 %v2326, %v2314
    %v2397 = vadd.f32 %v2326, %v2319
    %v2398 = vld [vmem:[#allocation2 + $0x1] sm:$0xff]
    %v2399 = vld [vmem:[#allocation2 + $0x9] sm:$0xff]
    %v2400 = vld [vmem:[#allocation2 + $0x11] sm:$0xff]
    %v2401 = vld [vmem:[#allocation2 + $0x19] sm:$0xff]
    %v2402 = vld [vmem:[#allocation2 + $0x21] sm:$0xff]
    %v2403 = vld [vmem:[#allocation2 + $0x29] sm:$0xff]
    %v2404 = vld [vmem:[#allocation2 + $0x31] sm:$0xff]
    %v2405 = vld [vmem:[#allocation2 + $0x39] sm:$0xff]
    %v2406 = vld [vmem:[#allocation2 + $0x41] sm:$0xff]
    %v2407 = vld [vmem:[#allocation2 + $0x49] sm:$0xff]
    %v2408 = vld [vmem:[#allocation2 + $0x51] sm:$0xff]
    %v2409 = vld [vmem:[#allocation2 + $0x59] sm:$0xff]
    %v2410 = vld [vmem:[#allocation2 + $0x61] sm:$0xff]
    %v2411 = vld [vmem:[#allocation2 + $0x69] sm:$0xff]
    %v2412 = vld [vmem:[#allocation2 + $0x71] sm:$0xff]
    %v2413 = vld [vmem:[#allocation2 + $0x79] sm:$0xff]
    %v2414 = vld [vmem:[#allocation2 + $0x81] sm:$0xff]
    %v2415 = vld [vmem:[#allocation2 + $0x89] sm:$0xff]
    %v2416 = vld [vmem:[#allocation2 + $0x91] sm:$0xff]
    %v2417 = vld [vmem:[#allocation2 + $0x99] sm:$0xff]
    %v2418 = vld [vmem:[#allocation2 + $0xa1] sm:$0xff]
    %v2419 = vld [vmem:[#allocation2 + $0xa9] sm:$0xff]
    %v2420 = vld [vmem:[#allocation2 + $0xb1] sm:$0xff]
    %v2421 = vld [vmem:[#allocation2 + $0xb9] sm:$0xff]
    %v2422 = vld [vmem:[#allocation2 + $0xc1] sm:$0xff]
    %v2423 = vld [vmem:[#allocation2 + $0xc9] sm:$0xff]
    %v2424 = vld [vmem:[#allocation2 + $0xd1] sm:$0xff]
    %v2425 = vld [vmem:[#allocation2 + $0xd9] sm:$0xff]
    %v2426 = vld [vmem:[#allocation2 + $0xe1] sm:$0xff]
    %v2427 = vld [vmem:[#allocation2 + $0xe9] sm:$0xff]
    %v2428 = vld [vmem:[#allocation2 + $0xf1] sm:$0xff]
    %v2429 = vld [vmem:[#allocation2 + $0xf9] sm:$0xff]
    %v2430 = vld [vmem:[#allocation2 + $0x101] sm:$0xff]
    %v2431 = vld [vmem:[#allocation2 + $0x109] sm:$0xff]
    %v2432 = vld [vmem:[#allocation2 + $0x111] sm:$0xff]
    %v2433 = vld [vmem:[#allocation2 + $0x119] sm:$0xff]
    %v2434 = vld [vmem:[#allocation2 + $0x121] sm:$0xff]
    %v2435 = vld [vmem:[#allocation2 + $0x129] sm:$0xff]
    %v2436 = vld [vmem:[#allocation2 + $0x131] sm:$0xff]
    %v2437 = vld [vmem:[#allocation2 + $0x139] sm:$0xff]
    %v2438 = vld [vmem:[#allocation2 + $0x141] sm:$0xff]
    %v2439 = vld [vmem:[#allocation2 + $0x149] sm:$0xff]
    %v2440 = vld [vmem:[#allocation2 + $0x151] sm:$0xff]
    %v2441 = vld [vmem:[#allocation2 + $0x159] sm:$0xff]
    %v2442 = vld [vmem:[#allocation2 + $0x161] sm:$0xff]
    %v2443 = vld [vmem:[#allocation2 + $0x169] sm:$0xff]
    %v2444 = vld [vmem:[#allocation2 + $0x171] sm:$0xff]
    %v2445 = vld [vmem:[#allocation2 + $0x179] sm:$0xff]
    %v2446 = vld [vmem:[#allocation2 + $0x181] sm:$0xff]
    %v2447 = vld [vmem:[#allocation2 + $0x189] sm:$0xff]
    %v2448 = vld [vmem:[#allocation2 + $0x191] sm:$0xff]
    %v2449 = vld [vmem:[#allocation2 + $0x199] sm:$0xff]
    %v2450 = vld [vmem:[#allocation2 + $0x1a1] sm:$0xff]
    %v2451 = vld [vmem:[#allocation2 + $0x1a9] sm:$0xff]
    %v2452 = vld [vmem:[#allocation2 + $0x1b1] sm:$0xff]
    %v2453 = vld [vmem:[#allocation2 + $0x1b9] sm:$0xff]
    %v2454 = vld [vmem:[#allocation2 + $0x1c1] sm:$0xff]
    %v2455 = vld [vmem:[#allocation2 + $0x1c9] sm:$0xff]
    %v2456 = vld [vmem:[#allocation2 + $0x1d1] sm:$0xff]
    %v2457 = vld [vmem:[#allocation2 + $0x1d9] sm:$0xff]
    %v2458 = vld [vmem:[#allocation2 + $0x1e1] sm:$0xff]
    %v2459 = vld [vmem:[#allocation2 + $0x1e9] sm:$0xff]
    %v2460 = vld [vmem:[#allocation2 + $0x1f1] sm:$0xff]
    %v2461 = vld [vmem:[#allocation2 + $0x1f9] sm:$0xff]
    %v2462 = vld [vmem:[#allocation2 + $0x201] sm:$0xff]
    %v2463 = vld [vmem:[#allocation2 + $0x209] sm:$0xff]
    %v2464 = vld [vmem:[#allocation2 + $0x211] sm:$0xff]
    %v2465 = vld [vmem:[#allocation2 + $0x219] sm:$0xff]
    %v2466 = vld [vmem:[#allocation2 + $0x221] sm:$0xff]
    %v2467 = vld [vmem:[#allocation2 + $0x229] sm:$0xff]
    %s2468 = scalar_lea.vmem %s3, 4
    %v2469 = vld [vmem:[%s2468] sm:$0xf]
    %v2471 = vsel %vm117, %v2398, 0
    %v2474 = vsel %vm117, %v2399, 0
    %v2477 = vsel %vm117, %v2400, 0
    %v2480 = vsel %vm117, %v2401, 0
    %v2483 = vsel %vm117, %v2402, 0
    %v2486 = vsel %vm117, %v2403, 0
    %v2489 = vsel %vm117, %v2404, 0
    %v2492 = vsel %vm117, %v2405, 0
    %v2495 = vsel %vm117, %v2406, 0
    %v2498 = vsel %vm117, %v2407, 0
    %v2501 = vsel %vm117, %v2408, 0
    %v2504 = vsel %vm117, %v2409, 0
    %v2507 = vsel %vm117, %v2410, 0
    %v2510 = vsel %vm117, %v2411, 0
    %v2513 = vsel %vm117, %v2412, 0
    %v2516 = vsel %vm117, %v2413, 0
    %v2519 = vsel %vm117, %v2414, 0
    %v2522 = vsel %vm117, %v2415, 0
    %v2525 = vsel %vm117, %v2416, 0
    %v2528 = vsel %vm117, %v2417, 0
    %v2531 = vsel %vm117, %v2418, 0
    %v2534 = vsel %vm117, %v2419, 0
    %v2537 = vsel %vm117, %v2420, 0
    %v2540 = vsel %vm117, %v2421, 0
    %v2543 = vsel %vm117, %v2422, 0
    %v2546 = vsel %vm117, %v2423, 0
    %v2549 = vsel %vm117, %v2424, 0
    %v2552 = vsel %vm117, %v2425, 0
    %v2555 = vsel %vm117, %v2426, 0
    %v2558 = vsel %vm117, %v2427, 0
    %v2561 = vsel %vm117, %v2428, 0
    %v2564 = vsel %vm117, %v2429, 0
    %v2567 = vsel %vm117, %v2430, 0
    %v2570 = vsel %vm117, %v2431, 0
    %v2573 = vsel %vm117, %v2432, 0
    %v2576 = vsel %vm117, %v2433, 0
    %v2579 = vsel %vm117, %v2434, 0
    %v2582 = vsel %vm117, %v2435, 0
    %v2585 = vsel %vm117, %v2436, 0
    %v2588 = vsel %vm117, %v2437, 0
    %v2591 = vsel %vm117, %v2438, 0
    %v2594 = vsel %vm117, %v2439, 0
    %v2597 = vsel %vm117, %v2440, 0
    %v2600 = vsel %vm117, %v2441, 0
    %v2603 = vsel %vm117, %v2442, 0
    %v2606 = vsel %vm117, %v2443, 0
    %v2609 = vsel %vm117, %v2444, 0
    %v2612 = vsel %vm117, %v2445, 0
    %v2615 = vsel %vm117, %v2446, 0
    %v2618 = vsel %vm117, %v2447, 0
    %v2621 = vsel %vm117, %v2448, 0
    %v2624 = vsel %vm117, %v2449, 0
    %v2627 = vsel %vm117, %v2450, 0
    %v2630 = vsel %vm117, %v2451, 0
    %v2633 = vsel %vm117, %v2452, 0
    %v2636 = vsel %vm117, %v2453, 0
    %v2639 = vsel %vm117, %v2454, 0
    %v2642 = vsel %vm117, %v2455, 0
    %v2645 = vsel %vm117, %v2456, 0
    %v2648 = vsel %vm117, %v2457, 0
    %v2651 = vsel %vm117, %v2458, 0
    %v2654 = vsel %vm117, %v2459, 0
    %v2657 = vsel %vm117, %v2460, 0
    %v2660 = vsel %vm117, %v2461, 0
    %v2663 = vsel %vm117, %v2462, 0
    %v2666 = vsel %vm117, %v2463, 0
    %v2669 = vsel %vm117, %v2464, 0
    %v2672 = vsel %vm117, %v2465, 0
    %v2675 = vsel %vm117, %v2466, 0
    %v2678 = vsel %vm117, %v2467, 0
    %v2681 = vsel %vm1903, %v2469, 0
    %2683 = vmatprep.subr.mxu0 0.0
    %2684 = vmatpush1.msra.mxu0 %v2681
    %2685 = vmatprep.subr.mxu0 0.0
    %2686 = vmatpush1.msra.mxu0 0.0
    %2687 = vmatprep.subr.mxu0 0.0
    %2688 = vmatpush1.msra.mxu0 0.0
    %2689 = vmatprep.subr.mxu0 0.0
    %2690 = vmatpush1.msra.mxu0 0.0
    %2691 = vmatprep.subr.mxu0 0.0
    %2692 = vmatpush1.msra.mxu0 0.0
    %2693 = vmatprep.subr.mxu0 0.0
    %2694 = vmatpush1.msra.mxu0 0.0
    %2695 = vmatprep.subr.mxu0 0.0
    %2696 = vmatpush1.msra.mxu0 0.0
    %2697 = vmatprep.subr.mxu0 0.0
    %2698 = vmatpush1.msra.mxu0 0.0
    %2699 = vmatprep.subr.mxu0 0.0
    %2700 = vmatpush1.msra.mxu0 0.0
    %2701 = vmatprep.subr.mxu0 0.0
    %2702 = vmatpush1.msra.mxu0 0.0
    %2703 = vmatprep.subr.mxu0 0.0
    %2704 = vmatpush1.msra.mxu0 0.0
    %2705 = vmatprep.subr.mxu0 0.0
    %2706 = vmatpush1.msra.mxu0 0.0
    %2707 = vmatprep.subr.mxu0 0.0
    %2708 = vmatpush1.msra.mxu0 0.0
    %2709 = vmatprep.subr.mxu0 0.0
    %2710 = vmatpush1.msra.mxu0 0.0
    %2711 = vmatprep.subr.mxu0 0.0
    %2712 = vmatpush1.msra.mxu0 0.0
    %2713 = vmatprep.subr.mxu0 0.0
    %2714 = vmatpush1.msra.mxu0 0.0
    %2715 = vmatprep.subr.mxu0 0.0
    %2716 = vmatpush1.msra.mxu0 0.0
    %2717 = vmatprep.subr.mxu0 0.0
    %2718 = vmatpush1.msra.mxu0 0.0
    %2719 = vmatprep.subr.mxu0 0.0
    %2720 = vmatpush1.msra.mxu0 0.0
    %2721 = vmatprep.subr.mxu0 0.0
    %2722 = vmatpush1.msra.mxu0 0.0
    %2723 = vmatprep.subr.mxu0 0.0
    %2724 = vmatpush1.msra.mxu0 0.0
    %2725 = vmatprep.subr.mxu0 0.0
    %2726 = vmatpush1.msra.mxu0 0.0
    %2727 = vmatprep.subr.mxu0 0.0
    %2728 = vmatpush1.msra.mxu0 0.0
    %2729 = vmatprep.subr.mxu0 0.0
    %2730 = vmatpush1.msra.mxu0 0.0
    %2731 = vmatprep.subr.mxu0 0.0
    %2732 = vmatpush1.msra.mxu0 0.0
    %2733 = vmatprep.subr.mxu0 0.0
    %2734 = vmatpush1.msra.mxu0 0.0
    %2735 = vmatprep.subr.mxu0 0.0
    %2736 = vmatpush1.msra.mxu0 0.0
    %2737 = vmatprep.subr.mxu0 0.0
    %2738 = vmatpush1.msra.mxu0 0.0
    %2739 = vmatprep.subr.mxu0 0.0
    %2740 = vmatpush1.msra.mxu0 0.0
    %2741 = vmatprep.subr.mxu0 0.0
    %2742 = vmatpush1.msra.mxu0 0.0
    %2743 = vmatprep.subr.mxu0 0.0
    %2744 = vmatpush1.msra.mxu0 0.0
    %2745 = vmatprep.subr.mxu0 0.0
    %2746 = vmatpush1.msra.mxu0 0.0
    %2747 = vmatprep.mubr.f32.mxu0 0.0
    %2748 = vmatmul.mubr.f32.gmra.mrb[0].mxu0 %v2471
    %v2749 = vpop.f32.mrb[0].mxu0
    %v2750 = vadd.f32 0.0, %v2749
    %v2751 = vpop.f32.mrb[0].mxu0
    %2752 = vmatprep.mubr.f32.mxu0 0.0
    %2753 = vmatmul.mubr.f32.gmra.mrb[0].mxu0 %v2474
    %v2754 = vpop.f32.mrb[0].mxu0
    %v2755 = vadd.f32 0.0, %v2754
    %v2756 = vpop.f32.mrb[0].mxu0
    %2757 = vmatprep.mubr.f32.mxu0 0.0
    %2758 = vmatmul.mubr.f32.gmra.mrb[0].mxu0 %v2477
    %v2759 = vpop.f32.mrb[0].mxu0
    %v2760 = vadd.f32 0.0, %v2759
    %v2761 = vpop.f32.mrb[0].mxu0
    %2762 = vmatprep.mubr.f32.mxu0 0.0
    %2763 = vmatmul.mubr.f32.gmra.mrb[0].mxu0 %v2480
    %v2764 = vpop.f32.mrb[0].mxu0
    %v2765 = vadd.f32 0.0, %v2764
    %v2766 = vpop.f32.mrb[0].mxu0
    %2767 = vmatprep.mubr.f32.mxu0 0.0
    %2768 = vmatmul.mubr.f32.gmra.mrb[0].mxu0 %v2483
    %v2769 = vpop.f32.mrb[0].mxu0
    %v2770 = vadd.f32 0.0, %v2769
    %v2771 = vpop.f32.mrb[0].mxu0
    %2772 = vmatprep.mubr.f32.mxu0 0.0
    %2773 = vmatmul.mubr.f32.gmra.mrb[0].mxu0 %v2486
    %v2774 = vpop.f32.mrb[0].mxu0
    %v2775 = vadd.f32 0.0, %v2774
    %v2776 = vpop.f32.mrb[0].mxu0
    %2777 = vmatprep.mubr.f32.mxu0 0.0
    %2778 = vmatmul.mubr.f32.gmra.mrb[0].mxu0 %v2489
    %v2779 = vpop.f32.mrb[0].mxu0
    %v2780 = vadd.f32 0.0, %v2779
    %v2781 = vpop.f32.mrb[0].mxu0
    %2782 = vmatprep.mubr.f32.mxu0 0.0
    %2783 = vmatmul.mubr.f32.gmra.mrb[0].mxu0 %v2492
    %v2784 = vpop.f32.mrb[0].mxu0
    %v2785 = vadd.f32 0.0, %v2784
    %v2786 = vpop.f32.mrb[0].mxu0
    %2787 = vmatprep.mubr.f32.mxu0 0.0
    %2788 = vmatmul.mubr.f32.gmra.mrb[0].mxu0 %v2495
    %v2789 = vpop.f32.mrb[0].mxu0
    %v2790 = vadd.f32 0.0, %v2789
    %v2791 = vpop.f32.mrb[0].mxu0
    %2792 = vmatprep.mubr.f32.mxu0 0.0
    %2793 = vmatmul.mubr.f32.gmra.mrb[0].mxu0 %v2498
    %v2794 = vpop.f32.mrb[0].mxu0
    %v2795 = vadd.f32 0.0, %v2794
    %v2796 = vpop.f32.mrb[0].mxu0
    %2797 = vmatprep.mubr.f32.mxu0 0.0
    %2798 = vmatmul.mubr.f32.gmra.mrb[0].mxu0 %v2501
    %v2799 = vpop.f32.mrb[0].mxu0
    %v2800 = vadd.f32 0.0, %v2799
    %v2801 = vpop.f32.mrb[0].mxu0
    %2802 = vmatprep.mubr.f32.mxu0 0.0
    %2803 = vmatmul.mubr.f32.gmra.mrb[0].mxu0 %v2504
    %v2804 = vpop.f32.mrb[0].mxu0
    %v2805 = vadd.f32 0.0, %v2804
    %v2806 = vpop.f32.mrb[0].mxu0
    %2807 = vmatprep.mubr.f32.mxu0 0.0
    %2808 = vmatmul.mubr.f32.gmra.mrb[0].mxu0 %v2507
    %v2809 = vpop.f32.mrb[0].mxu0
    %v2810 = vadd.f32 0.0, %v2809
    %v2811 = vpop.f32.mrb[0].mxu0
    %2812 = vmatprep.mubr.f32.mxu0 0.0
    %2813 = vmatmul.mubr.f32.gmra.mrb[0].mxu0 %v2510
    %v2814 = vpop.f32.mrb[0].mxu0
    %v2815 = vadd.f32 0.0, %v2814
    %v2816 = vpop.f32.mrb[0].mxu0
    %2817 = vmatprep.mubr.f32.mxu0 0.0
    %2818 = vmatmul.mubr.f32.gmra.mrb[0].mxu0 %v2513
    %v2819 = vpop.f32.mrb[0].mxu0
    %v2820 = vadd.f32 0.0, %v2819
    %v2821 = vpop.f32.mrb[0].mxu0
    %2822 = vmatprep.mubr.f32.mxu0 0.0
    %2823 = vmatmul.mubr.f32.gmra.mrb[0].mxu0 %v2516
    %v2824 = vpop.f32.mrb[0].mxu0
    %v2825 = vadd.f32 0.0, %v2824
    %v2826 = vpop.f32.mrb[0].mxu0
    %2827 = vmatprep.mubr.f32.mxu0 0.0
    %2828 = vmatmul.mubr.f32.gmra.mrb[0].mxu0 %v2519
    %v2829 = vpop.f32.mrb[0].mxu0
    %v2830 = vadd.f32 0.0, %v2829
    %v2831 = vpop.f32.mrb[0].mxu0
    %2832 = vmatprep.mubr.f32.mxu0 0.0
    %2833 = vmatmul.mubr.f32.gmra.mrb[0].mxu0 %v2522
    %v2834 = vpop.f32.mrb[0].mxu0
    %v2835 = vadd.f32 0.0, %v2834
    %v2836 = vpop.f32.mrb[0].mxu0
    %2837 = vmatprep.mubr.f32.mxu0 0.0
    %2838 = vmatmul.mubr.f32.gmra.mrb[0].mxu0 %v2525
    %v2839 = vpop.f32.mrb[0].mxu0
    %v2840 = vadd.f32 0.0, %v2839
    %v2841 = vpop.f32.mrb[0].mxu0
    %2842 = vmatprep.mubr.f32.mxu0 0.0
    %2843 = vmatmul.mubr.f32.gmra.mrb[0].mxu0 %v2528
    %v2844 = vpop.f32.mrb[0].mxu0
    %v2845 = vadd.f32 0.0, %v2844
    %v2846 = vpop.f32.mrb[0].mxu0
    %2847 = vmatprep.mubr.f32.mxu0 0.0
    %2848 = vmatmul.mubr.f32.gmra.mrb[0].mxu0 %v2531
    %v2849 = vpop.f32.mrb[0].mxu0
    %v2850 = vadd.f32 0.0, %v2849
    %v2851 = vpop.f32.mrb[0].mxu0
    %2852 = vmatprep.mubr.f32.mxu0 0.0
    %2853 = vmatmul.mubr.f32.gmra.mrb[0].mxu0 %v2534
    %v2854 = vpop.f32.mrb[0].mxu0
    %v2855 = vadd.f32 0.0, %v2854
    %v2856 = vpop.f32.mrb[0].mxu0
    %2857 = vmatprep.mubr.f32.mxu0 0.0
    %2858 = vmatmul.mubr.f32.gmra.mrb[0].mxu0 %v2537
    %v2859 = vpop.f32.mrb[0].mxu0
    %v2860 = vadd.f32 0.0, %v2859
    %v2861 = vpop.f32.mrb[0].mxu0
    %2862 = vmatprep.mubr.f32.mxu0 0.0
    %2863 = vmatmul.mubr.f32.gmra.mrb[0].mxu0 %v2540
    %v2864 = vpop.f32.mrb[0].mxu0
    %v2865 = vadd.f32 0.0, %v2864
    %v2866 = vpop.f32.mrb[0].mxu0
    %2867 = vmatprep.mubr.f32.mxu0 0.0
    %2868 = vmatmul.mubr.f32.gmra.mrb[0].mxu0 %v2543
    %v2869 = vpop.f32.mrb[0].mxu0
    %v2870 = vadd.f32 0.0, %v2869
    %v2871 = vpop.f32.mrb[0].mxu0
    %2872 = vmatprep.mubr.f32.mxu0 0.0
    %2873 = vmatmul.mubr.f32.gmra.mrb[0].mxu0 %v2546
    %v2874 = vpop.f32.mrb[0].mxu0
    %v2875 = vadd.f32 0.0, %v2874
    %v2876 = vpop.f32.mrb[0].mxu0
    %2877 = vmatprep.mubr.f32.mxu0 0.0
    %2878 = vmatmul.mubr.f32.gmra.mrb[0].mxu0 %v2549
    %v2879 = vpop.f32.mrb[0].mxu0
    %v2880 = vadd.f32 0.0, %v2879
    %v2881 = vpop.f32.mrb[0].mxu0
    %2882 = vmatprep.mubr.f32.mxu0 0.0
    %2883 = vmatmul.mubr.f32.gmra.mrb[0].mxu0 %v2552
    %v2884 = vpop.f32.mrb[0].mxu0
    %v2885 = vadd.f32 0.0, %v2884
    %v2886 = vpop.f32.mrb[0].mxu0
    %2887 = vmatprep.mubr.f32.mxu0 0.0
    %2888 = vmatmul.mubr.f32.gmra.mrb[0].mxu0 %v2555
    %v2889 = vpop.f32.mrb[0].mxu0
    %v2890 = vadd.f32 0.0, %v2889
    %v2891 = vpop.f32.mrb[0].mxu0
    %2892 = vmatprep.mubr.f32.mxu0 0.0
    %2893 = vmatmul.mubr.f32.gmra.mrb[0].mxu0 %v2558
    %v2894 = vpop.f32.mrb[0].mxu0
    %v2895 = vadd.f32 0.0, %v2894
    %v2896 = vpop.f32.mrb[0].mxu0
    %2897 = vmatprep.mubr.f32.mxu0 0.0
    %2898 = vmatmul.mubr.f32.gmra.mrb[0].mxu0 %v2561
    %v2899 = vpop.f32.mrb[0].mxu0
    %v2900 = vadd.f32 0.0, %v2899
    %v2901 = vpop.f32.mrb[0].mxu0
    %2902 = vmatprep.mubr.f32.mxu0 0.0
    %2903 = vmatmul.mubr.f32.gmra.mrb[0].mxu0 %v2564
    %v2904 = vpop.f32.mrb[0].mxu0
    %v2905 = vadd.f32 0.0, %v2904
    %v2906 = vpop.f32.mrb[0].mxu0
    %2907 = vmatprep.mubr.f32.mxu0 0.0
    %2908 = vmatmul.mubr.f32.gmra.mrb[0].mxu0 %v2567
    %v2909 = vpop.f32.mrb[0].mxu0
    %v2910 = vadd.f32 0.0, %v2909
    %v2911 = vpop.f32.mrb[0].mxu0
    %2912 = vmatprep.mubr.f32.mxu0 0.0
    %2913 = vmatmul.mubr.f32.gmra.mrb[0].mxu0 %v2570
    %v2914 = vpop.f32.mrb[0].mxu0
    %v2915 = vadd.f32 0.0, %v2914
    %v2916 = vpop.f32.mrb[0].mxu0
    %2917 = vmatprep.mubr.f32.mxu0 0.0
    %2918 = vmatmul.mubr.f32.gmra.mrb[0].mxu0 %v2573
    %v2919 = vpop.f32.mrb[0].mxu0
    %v2920 = vadd.f32 0.0, %v2919
    %v2921 = vpop.f32.mrb[0].mxu0
    %2922 = vmatprep.mubr.f32.mxu0 0.0
    %2923 = vmatmul.mubr.f32.gmra.mrb[0].mxu0 %v2576
    %v2924 = vpop.f32.mrb[0].mxu0
    %v2925 = vadd.f32 0.0, %v2924
    %v2926 = vpop.f32.mrb[0].mxu0
    %2927 = vmatprep.mubr.f32.mxu0 0.0
    %2928 = vmatmul.mubr.f32.gmra.mrb[0].mxu0 %v2579
    %v2929 = vpop.f32.mrb[0].mxu0
    %v2930 = vadd.f32 0.0, %v2929
    %v2931 = vpop.f32.mrb[0].mxu0
    %2932 = vmatprep.mubr.f32.mxu0 0.0
    %2933 = vmatmul.mubr.f32.gmra.mrb[0].mxu0 %v2582
    %v2934 = vpop.f32.mrb[0].mxu0
    %v2935 = vadd.f32 0.0, %v2934
    %v2936 = vpop.f32.mrb[0].mxu0
    %2937 = vmatprep.mubr.f32.mxu0 0.0
    %2938 = vmatmul.mubr.f32.gmra.mrb[0].mxu0 %v2585
    %v2939 = vpop.f32.mrb[0].mxu0
    %v2940 = vadd.f32 0.0, %v2939
    %v2941 = vpop.f32.mrb[0].mxu0
    %2942 = vmatprep.mubr.f32.mxu0 0.0
    %2943 = vmatmul.mubr.f32.gmra.mrb[0].mxu0 %v2588
    %v2944 = vpop.f32.mrb[0].mxu0
    %v2945 = vadd.f32 0.0, %v2944
    %v2946 = vpop.f32.mrb[0].mxu0
    %2947 = vmatprep.mubr.f32.mxu0 0.0
    %2948 = vmatmul.mubr.f32.gmra.mrb[0].mxu0 %v2591
    %v2949 = vpop.f32.mrb[0].mxu0
    %v2950 = vadd.f32 0.0, %v2949
    %v2951 = vpop.f32.mrb[0].mxu0
    %2952 = vmatprep.mubr.f32.mxu0 0.0
    %2953 = vmatmul.mubr.f32.gmra.mrb[0].mxu0 %v2594
    %v2954 = vpop.f32.mrb[0].mxu0
    %v2955 = vadd.f32 0.0, %v2954
    %v2956 = vpop.f32.mrb[0].mxu0
    %2957 = vmatprep.mubr.f32.mxu0 0.0
    %2958 = vmatmul.mubr.f32.gmra.mrb[0].mxu0 %v2597
    %v2959 = vpop.f32.mrb[0].mxu0
    %v2960 = vadd.f32 0.0, %v2959
    %v2961 = vpop.f32.mrb[0].mxu0
    %2962 = vmatprep.mubr.f32.mxu0 0.0
    %2963 = vmatmul.mubr.f32.gmra.mrb[0].mxu0 %v2600
    %v2964 = vpop.f32.mrb[0].mxu0
    %v2965 = vadd.f32 0.0, %v2964
    %v2966 = vpop.f32.mrb[0].mxu0
    %2967 = vmatprep.mubr.f32.mxu0 0.0
    %2968 = vmatmul.mubr.f32.gmra.mrb[0].mxu0 %v2603
    %v2969 = vpop.f32.mrb[0].mxu0
    %v2970 = vadd.f32 0.0, %v2969
    %v2971 = vpop.f32.mrb[0].mxu0
    %2972 = vmatprep.mubr.f32.mxu0 0.0
    %2973 = vmatmul.mubr.f32.gmra.mrb[0].mxu0 %v2606
    %v2974 = vpop.f32.mrb[0].mxu0
    %v2975 = vadd.f32 0.0, %v2974
    %v2976 = vpop.f32.mrb[0].mxu0
    %2977 = vmatprep.mubr.f32.mxu0 0.0
    %2978 = vmatmul.mubr.f32.gmra.mrb[0].mxu0 %v2609
    %v2979 = vpop.f32.mrb[0].mxu0
    %v2980 = vadd.f32 0.0, %v2979
    %v2981 = vpop.f32.mrb[0].mxu0
    %2982 = vmatprep.mubr.f32.mxu0 0.0
    %2983 = vmatmul.mubr.f32.gmra.mrb[0].mxu0 %v2612
    %v2984 = vpop.f32.mrb[0].mxu0
    %v2985 = vadd.f32 0.0, %v2984
    %v2986 = vpop.f32.mrb[0].mxu0
    %2987 = vmatprep.mubr.f32.mxu0 0.0
    %2988 = vmatmul.mubr.f32.gmra.mrb[0].mxu0 %v2615
    %v2989 = vpop.f32.mrb[0].mxu0
    %v2990 = vadd.f32 0.0, %v2989
    %v2991 = vpop.f32.mrb[0].mxu0
    %2992 = vmatprep.mubr.f32.mxu0 0.0
    %2993 = vmatmul.mubr.f32.gmra.mrb[0].mxu0 %v2618
    %v2994 = vpop.f32.mrb[0].mxu0
    %v2995 = vadd.f32 0.0, %v2994
    %v2996 = vpop.f32.mrb[0].mxu0
    %2997 = vmatprep.mubr.f32.mxu0 0.0
    %2998 = vmatmul.mubr.f32.gmra.mrb[0].mxu0 %v2621
    %v2999 = vpop.f32.mrb[0].mxu0
    %v3000 = vadd.f32 0.0, %v2999
    %v3001 = vpop.f32.mrb[0].mxu0
    %3002 = vmatprep.mubr.f32.mxu0 0.0
    %3003 = vmatmul.mubr.f32.gmra.mrb[0].mxu0 %v2624
    %v3004 = vpop.f32.mrb[0].mxu0
    %v3005 = vadd.f32 0.0, %v3004
    %v3006 = vpop.f32.mrb[0].mxu0
    %3007 = vmatprep.mubr.f32.mxu0 0.0
    %3008 = vmatmul.mubr.f32.gmra.mrb[0].mxu0 %v2627
    %v3009 = vpop.f32.mrb[0].mxu0
    %v3010 = vadd.f32 0.0, %v3009
    %v3011 = vpop.f32.mrb[0].mxu0
    %3012 = vmatprep.mubr.f32.mxu0 0.0
    %3013 = vmatmul.mubr.f32.gmra.mrb[0].mxu0 %v2630
    %v3014 = vpop.f32.mrb[0].mxu0
    %v3015 = vadd.f32 0.0, %v3014
    %v3016 = vpop.f32.mrb[0].mxu0
    %3017 = vmatprep.mubr.f32.mxu0 0.0
    %3018 = vmatmul.mubr.f32.gmra.mrb[0].mxu0 %v2633
    %v3019 = vpop.f32.mrb[0].mxu0
    %v3020 = vadd.f32 0.0, %v3019
    %v3021 = vpop.f32.mrb[0].mxu0
    %3022 = vmatprep.mubr.f32.mxu0 0.0
    %3023 = vmatmul.mubr.f32.gmra.mrb[0].mxu0 %v2636
    %v3024 = vpop.f32.mrb[0].mxu0
    %v3025 = vadd.f32 0.0, %v3024
    %v3026 = vpop.f32.mrb[0].mxu0
    %3027 = vmatprep.mubr.f32.mxu0 0.0
    %3028 = vmatmul.mubr.f32.gmra.mrb[0].mxu0 %v2639
    %v3029 = vpop.f32.mrb[0].mxu0
    %v3030 = vadd.f32 0.0, %v3029
    %v3031 = vpop.f32.mrb[0].mxu0
    %3032 = vmatprep.mubr.f32.mxu0 0.0
    %3033 = vmatmul.mubr.f32.gmra.mrb[0].mxu0 %v2642
    %v3034 = vpop.f32.mrb[0].mxu0
    %v3035 = vadd.f32 0.0, %v3034
    %v3036 = vpop.f32.mrb[0].mxu0
    %3037 = vmatprep.mubr.f32.mxu0 0.0
    %3038 = vmatmul.mubr.f32.gmra.mrb[0].mxu0 %v2645
    %v3039 = vpop.f32.mrb[0].mxu0
    %v3040 = vadd.f32 0.0, %v3039
    %v3041 = vpop.f32.mrb[0].mxu0
    %3042 = vmatprep.mubr.f32.mxu0 0.0
    %3043 = vmatmul.mubr.f32.gmra.mrb[0].mxu0 %v2648
    %v3044 = vpop.f32.mrb[0].mxu0
    %v3045 = vadd.f32 0.0, %v3044
    %v3046 = vpop.f32.mrb[0].mxu0
    %3047 = vmatprep.mubr.f32.mxu0 0.0
    %3048 = vmatmul.mubr.f32.gmra.mrb[0].mxu0 %v2651
    %v3049 = vpop.f32.mrb[0].mxu0
    %v3050 = vadd.f32 0.0, %v3049
    %v3051 = vpop.f32.mrb[0].mxu0
    %3052 = vmatprep.mubr.f32.mxu0 0.0
    %3053 = vmatmul.mubr.f32.gmra.mrb[0].mxu0 %v2654
    %v3054 = vpop.f32.mrb[0].mxu0
    %v3055 = vadd.f32 0.0, %v3054
    %v3056 = vpop.f32.mrb[0].mxu0
    %3057 = vmatprep.mubr.f32.mxu0 0.0
    %3058 = vmatmul.mubr.f32.gmra.mrb[0].mxu0 %v2657
    %v3059 = vpop.f32.mrb[0].mxu0
    %v3060 = vadd.f32 0.0, %v3059
    %v3061 = vpop.f32.mrb[0].mxu0
    %3062 = vmatprep.mubr.f32.mxu0 0.0
    %3063 = vmatmul.mubr.f32.gmra.mrb[0].mxu0 %v2660
    %v3064 = vpop.f32.mrb[0].mxu0
    %v3065 = vadd.f32 0.0, %v3064
    %v3066 = vpop.f32.mrb[0].mxu0
    %3067 = vmatprep.mubr.f32.mxu0 0.0
    %3068 = vmatmul.mubr.f32.gmra.mrb[0].mxu0 %v2663
    %v3069 = vpop.f32.mrb[0].mxu0
    %v3070 = vadd.f32 0.0, %v3069
    %v3071 = vpop.f32.mrb[0].mxu0
    %3072 = vmatprep.mubr.f32.mxu0 0.0
    %3073 = vmatmul.mubr.f32.gmra.mrb[0].mxu0 %v2666
    %v3074 = vpop.f32.mrb[0].mxu0
    %v3075 = vadd.f32 0.0, %v3074
    %v3076 = vpop.f32.mrb[0].mxu0
    %3077 = vmatprep.mubr.f32.mxu0 0.0
    %3078 = vmatmul.mubr.f32.gmra.mrb[0].mxu0 %v2669
    %v3079 = vpop.f32.mrb[0].mxu0
    %v3080 = vadd.f32 0.0, %v3079
    %v3081 = vpop.f32.mrb[0].mxu0
    %3082 = vmatprep.mubr.f32.mxu0 0.0
    %3083 = vmatmul.mubr.f32.gmra.mrb[0].mxu0 %v2672
    %v3084 = vpop.f32.mrb[0].mxu0
    %v3085 = vadd.f32 0.0, %v3084
    %v3086 = vpop.f32.mrb[0].mxu0
    %3087 = vmatprep.mubr.f32.mxu0 0.0
    %3088 = vmatmul.mubr.f32.gmra.mrb[0].mxu0 %v2675
    %v3089 = vpop.f32.mrb[0].mxu0
    %v3090 = vadd.f32 0.0, %v3089
    %v3091 = vpop.f32.mrb[0].mxu0
    %3092 = vmatprep.mubr.f32.mxu0 0.0
    %3093 = vmatmul.mubr.f32.gmra.mrb[0].mxu0 %v2678
    %v3094 = vpop.f32.mrb[0].mxu0
    %v3095 = vadd.f32 0.0, %v3094
    %v3096 = vpop.f32.mrb[0].mxu0
    %3097 = vdwg.mxu0
    %v3098 = vadd.f32 %v2328, %v2750
    %v3099 = vadd.f32 %v2329, %v2755
    %v3100 = vadd.f32 %v2330, %v2760
    %v3101 = vadd.f32 %v2331, %v2765
    %v3102 = vadd.f32 %v2332, %v2770
    %v3103 = vadd.f32 %v2333, %v2775
    %v3104 = vadd.f32 %v2334, %v2780
    %v3105 = vadd.f32 %v2335, %v2785
    %v3106 = vadd.f32 %v2336, %v2790
    %v3107 = vadd.f32 %v2337, %v2795
    %v3108 = vadd.f32 %v2338, %v2800
    %v3109 = vadd.f32 %v2339, %v2805
    %v3110 = vadd.f32 %v2340, %v2810
    %v3111 = vadd.f32 %v2341, %v2815
    %v3112 = vadd.f32 %v2342, %v2820
    %v3113 = vadd.f32 %v2343, %v2825
    %v3114 = vadd.f32 %v2344, %v2830
    %v3115 = vadd.f32 %v2345, %v2835
    %v3116 = vadd.f32 %v2346, %v2840
    %v3117 = vadd.f32 %v2347, %v2845
    %v3118 = vadd.f32 %v2348, %v2850
    %v3119 = vadd.f32 %v2349, %v2855
    %v3120 = vadd.f32 %v2350, %v2860
    %v3121 = vadd.f32 %v2351, %v2865
    %v3122 = vadd.f32 %v2352, %v2870
    %v3123 = vadd.f32 %v2353, %v2875
    %v3124 = vadd.f32 %v2354, %v2880
    %v3125 = vadd.f32 %v2355, %v2885
    %v3126 = vadd.f32 %v2356, %v2890
    %v3127 = vadd.f32 %v2357, %v2895
    %v3128 = vadd.f32 %v2358, %v2900
    %v3129 = vadd.f32 %v2359, %v2905
    %v3130 = vadd.f32 %v2360, %v2910
    %v3131 = vadd.f32 %v2361, %v2915
    %v3132 = vadd.f32 %v2362, %v2920
    %v3133 = vadd.f32 %v2363, %v2925
    %v3134 = vadd.f32 %v2364, %v2930
    %v3135 = vadd.f32 %v2365, %v2935
    %v3136 = vadd.f32 %v2366, %v2940
    %v3137 = vadd.f32 %v2367, %v2945
    %v3138 = vadd.f32 %v2368, %v2950
    %v3139 = vadd.f32 %v2369, %v2955
    %v3140 = vadd.f32 %v2370, %v2960
    %v3141 = vadd.f32 %v2371, %v2965
    %v3142 = vadd.f32 %v2372, %v2970
    %v3143 = vadd.f32 %v2373, %v2975
    %v3144 = vadd.f32 %v2374, %v2980
    %v3145 = vadd.f32 %v2375, %v2985
    %v3146 = vadd.f32 %v2376, %v2990
    %v3147 = vadd.f32 %v2377, %v2995
    %v3148 = vadd.f32 %v2378, %v3000
    %v3149 = vadd.f32 %v2379, %v3005
    %v3150 = vadd.f32 %v2380, %v3010
    %v3151 = vadd.f32 %v2381, %v3015
    %v3152 = vadd.f32 %v2382, %v3020
    %v3153 = vadd.f32 %v2383, %v3025
    %v3154 = vadd.f32 %v2384, %v3030
    %v3155 = vadd.f32 %v2385, %v3035
    %v3156 = vadd.f32 %v2386, %v3040
    %v3157 = vadd.f32 %v2387, %v3045
    %v3158 = vadd.f32 %v2388, %v3050
    %v3159 = vadd.f32 %v2389, %v3055
    %v3160 = vadd.f32 %v2390, %v3060
    %v3161 = vadd.f32 %v2391, %v3065
    %v3162 = vadd.f32 %v2392, %v3070
    %v3163 = vadd.f32 %v2393, %v3075
    %v3164 = vadd.f32 %v2394, %v3080
    %v3165 = vadd.f32 %v2395, %v3085
    %v3166 = vadd.f32 %v2396, %v3090
    %v3167 = vadd.f32 %v2397, %v3095
    %v3168 = vld [vmem:[#allocation2 + $0x2] sm:$0xff]
    %v3169 = vld [vmem:[#allocation2 + $0xa] sm:$0xff]
    %v3170 = vld [vmem:[#allocation2 + $0x12] sm:$0xff]
    %v3171 = vld [vmem:[#allocation2 + $0x1a] sm:$0xff]
    %v3172 = vld [vmem:[#allocation2 + $0x22] sm:$0xff]
    %v3173 = vld [vmem:[#allocation2 + $0x2a] sm:$0xff]
    %v3174 = vld [vmem:[#allocation2 + $0x32] sm:$0xff]
    %v3175 = vld [vmem:[#allocation2 + $0x3a] sm:$0xff]
    %v3176 = vld [vmem:[#allocation2 + $0x42] sm:$0xff]
    %v3177 = vld [vmem:[#allocation2 + $0x4a] sm:$0xff]
    %v3178 = vld [vmem:[#allocation2 + $0x52] sm:$0xff]
    %v3179 = vld [vmem:[#allocation2 + $0x5a] sm:$0xff]
    %v3180 = vld [vmem:[#allocation2 + $0x62] sm:$0xff]
    %v3181 = vld [vmem:[#allocation2 + $0x6a] sm:$0xff]
    %v3182 = vld [vmem:[#allocation2 + $0x72] sm:$0xff]
    %v3183 = vld [vmem:[#allocation2 + $0x7a] sm:$0xff]
    %v3184 = vld [vmem:[#allocation2 + $0x82] sm:$0xff]
    %v3185 = vld [vmem:[#allocation2 + $0x8a] sm:$0xff]
    %v3186 = vld [vmem:[#allocation2 + $0x92] sm:$0xff]
    %v3187 = vld [vmem:[#allocation2 + $0x9a] sm:$0xff]
    %v3188 = vld [vmem:[#allocation2 + $0xa2] sm:$0xff]
    %v3189 = vld [vmem:[#allocation2 + $0xaa] sm:$0xff]
    %v3190 = vld [vmem:[#allocation2 + $0xb2] sm:$0xff]
    %v3191 = vld [vmem:[#allocation2 + $0xba] sm:$0xff]
    %v3192 = vld [vmem:[#allocation2 + $0xc2] sm:$0xff]
    %v3193 = vld [vmem:[#allocation2 + $0xca] sm:$0xff]
    %v3194 = vld [vmem:[#allocation2 + $0xd2] sm:$0xff]
    %v3195 = vld [vmem:[#allocation2 + $0xda] sm:$0xff]
    %v3196 = vld [vmem:[#allocation2 + $0xe2] sm:$0xff]
    %v3197 = vld [vmem:[#allocation2 + $0xea] sm:$0xff]
    %v3198 = vld [vmem:[#allocation2 + $0xf2] sm:$0xff]
    %v3199 = vld [vmem:[#allocation2 + $0xfa] sm:$0xff]
    %v3200 = vld [vmem:[#allocation2 + $0x102] sm:$0xff]
    %v3201 = vld [vmem:[#allocation2 + $0x10a] sm:$0xff]
    %v3202 = vld [vmem:[#allocation2 + $0x112] sm:$0xff]
    %v3203 = vld [vmem:[#allocation2 + $0x11a] sm:$0xff]
    %v3204 = vld [vmem:[#allocation2 + $0x122] sm:$0xff]
    %v3205 = vld [vmem:[#allocation2 + $0x12a] sm:$0xff]
    %v3206 = vld [vmem:[#allocation2 + $0x132] sm:$0xff]
    %v3207 = vld [vmem:[#allocation2 + $0x13a] sm:$0xff]
    %v3208 = vld [vmem:[#allocation2 + $0x142] sm:$0xff]
    %v3209 = vld [vmem:[#allocation2 + $0x14a] sm:$0xff]
    %v3210 = vld [vmem:[#allocation2 + $0x152] sm:$0xff]
    %v3211 = vld [vmem:[#allocation2 + $0x15a] sm:$0xff]
    %v3212 = vld [vmem:[#allocation2 + $0x162] sm:$0xff]
    %v3213 = vld [vmem:[#allocation2 + $0x16a] sm:$0xff]
    %v3214 = vld [vmem:[#allocation2 + $0x172] sm:$0xff]
    %v3215 = vld [vmem:[#allocation2 + $0x17a] sm:$0xff]
    %v3216 = vld [vmem:[#allocation2 + $0x182] sm:$0xff]
    %v3217 = vld [vmem:[#allocation2 + $0x18a] sm:$0xff]
    %v3218 = vld [vmem:[#allocation2 + $0x192] sm:$0xff]
    %v3219 = vld [vmem:[#allocation2 + $0x19a] sm:$0xff]
    %v3220 = vld [vmem:[#allocation2 + $0x1a2] sm:$0xff]
    %v3221 = vld [vmem:[#allocation2 + $0x1aa] sm:$0xff]
    %v3222 = vld [vmem:[#allocation2 + $0x1b2] sm:$0xff]
    %v3223 = vld [vmem:[#allocation2 + $0x1ba] sm:$0xff]
    %v3224 = vld [vmem:[#allocation2 + $0x1c2] sm:$0xff]
    %v3225 = vld [vmem:[#allocation2 + $0x1ca] sm:$0xff]
    %v3226 = vld [vmem:[#allocation2 + $0x1d2] sm:$0xff]
    %v3227 = vld [vmem:[#allocation2 + $0x1da] sm:$0xff]
    %v3228 = vld [vmem:[#allocation2 + $0x1e2] sm:$0xff]
    %v3229 = vld [vmem:[#allocation2 + $0x1ea] sm:$0xff]
    %v3230 = vld [vmem:[#allocation2 + $0x1f2] sm:$0xff]
    %v3231 = vld [vmem:[#allocation2 + $0x1fa] sm:$0xff]
    %v3232 = vld [vmem:[#allocation2 + $0x202] sm:$0xff]
    %v3233 = vld [vmem:[#allocation2 + $0x20a] sm:$0xff]
    %v3234 = vld [vmem:[#allocation2 + $0x212] sm:$0xff]
    %v3235 = vld [vmem:[#allocation2 + $0x21a] sm:$0xff]
    %v3236 = vld [vmem:[#allocation2 + $0x222] sm:$0xff]
    %v3237 = vld [vmem:[#allocation2 + $0x22a] sm:$0xff]
    %s3238 = scalar_lea.vmem %s3, 8
    %v3239 = vld [vmem:[%s3238] sm:$0xf]
    %v3241 = vsel %vm117, %v3168, 0
    %v3244 = vsel %vm117, %v3169, 0
    %v3247 = vsel %vm117, %v3170, 0
    %v3250 = vsel %vm117, %v3171, 0
    %v3253 = vsel %vm117, %v3172, 0
    %v3256 = vsel %vm117, %v3173, 0
    %v3259 = vsel %vm117, %v3174, 0
    %v3262 = vsel %vm117, %v3175, 0
    %v3265 = vsel %vm117, %v3176, 0
    %v3268 = vsel %vm117, %v3177, 0
    %v3271 = vsel %vm117, %v3178, 0
    %v3274 = vsel %vm117, %v3179, 0
    %v3277 = vsel %vm117, %v3180, 0
    %v3280 = vsel %vm117, %v3181, 0
    %v3283 = vsel %vm117, %v3182, 0
    %v3286 = vsel %vm117, %v3183, 0
    %v3289 = vsel %vm117, %v3184, 0
    %v3292 = vsel %vm117, %v3185, 0
    %v3295 = vsel %vm117, %v3186, 0
    %v3298 = vsel %vm117, %v3187, 0
    %v3301 = vsel %vm117, %v3188, 0
    %v3304 = vsel %vm117, %v3189, 0
    %v3307 = vsel %vm117, %v3190, 0
    %v3310 = vsel %vm117, %v3191, 0
    %v3313 = vsel %vm117, %v3192, 0
    %v3316 = vsel %vm117, %v3193, 0
    %v3319 = vsel %vm117, %v3194, 0
    %v3322 = vsel %vm117, %v3195, 0
    %v3325 = vsel %vm117, %v3196, 0
    %v3328 = vsel %vm117, %v3197, 0
    %v3331 = vsel %vm117, %v3198, 0
    %v3334 = vsel %vm117, %v3199, 0
    %v3337 = vsel %vm117, %v3200, 0
    %v3340 = vsel %vm117, %v3201, 0
    %v3343 = vsel %vm117, %v3202, 0
    %v3346 = vsel %vm117, %v3203, 0
    %v3349 = vsel %vm117, %v3204, 0
    %v3352 = vsel %vm117, %v3205, 0
    %v3355 = vsel %vm117, %v3206, 0
    %v3358 = vsel %vm117, %v3207, 0
    %v3361 = vsel %vm117, %v3208, 0
    %v3364 = vsel %vm117, %v3209, 0
    %v3367 = vsel %vm117, %v3210, 0
    %v3370 = vsel %vm117, %v3211, 0
    %v3373 = vsel %vm117, %v3212, 0
    %v3376 = vsel %vm117, %v3213, 0
    %v3379 = vsel %vm117, %v3214, 0
    %v3382 = vsel %vm117, %v3215, 0
    %v3385 = vsel %vm117, %v3216, 0
    %v3388 = vsel %vm117, %v3217, 0
    %v3391 = vsel %vm117, %v3218, 0
    %v3394 = vsel %vm117, %v3219, 0
    %v3397 = vsel %vm117, %v3220, 0
    %v3400 = vsel %vm117, %v3221, 0
    %v3403 = vsel %vm117, %v3222, 0
    %v3406 = vsel %vm117, %v3223, 0
    %v3409 = vsel %vm117, %v3224, 0
    %v3412 = vsel %vm117, %v3225, 0
    %v3415 = vsel %vm117, %v3226, 0
    %v3418 = vsel %vm117, %v3227, 0
    %v3421 = vsel %vm117, %v3228, 0
    %v3424 = vsel %vm117, %v3229, 0
    %v3427 = vsel %vm117, %v3230, 0
    %v3430 = vsel %vm117, %v3231, 0
    %v3433 = vsel %vm117, %v3232, 0
    %v3436 = vsel %vm117, %v3233, 0
    %v3439 = vsel %vm117, %v3234, 0
    %v3442 = vsel %vm117, %v3235, 0
    %v3445 = vsel %vm117, %v3236, 0
    %v3448 = vsel %vm117, %v3237, 0
    %v3451 = vsel %vm1903, %v3239, 0
    %3453 = vmatprep.subr.mxu0 0.0
    %3454 = vmatpush1.msra.mxu0 %v3451
    %3455 = vmatprep.subr.mxu0 0.0
    %3456 = vmatpush1.msra.mxu0 0.0
    %3457 = vmatprep.subr.mxu0 0.0
    %3458 = vmatpush1.msra.mxu0 0.0
    %3459 = vmatprep.subr.mxu0 0.0
    %3460 = vmatpush1.msra.mxu0 0.0
    %3461 = vmatprep.subr.mxu0 0.0
    %3462 = vmatpush1.msra.mxu0 0.0
    %3463 = vmatprep.subr.mxu0 0.0
    %3464 = vmatpush1.msra.mxu0 0.0
    %3465 = vmatprep.subr.mxu0 0.0
    %3466 = vmatpush1.msra.mxu0 0.0
    %3467 = vmatprep.subr.mxu0 0.0
    %3468 = vmatpush1.msra.mxu0 0.0
    %3469 = vmatprep.subr.mxu0 0.0
    %3470 = vmatpush1.msra.mxu0 0.0
    %3471 = vmatprep.subr.mxu0 0.0
    %3472 = vmatpush1.msra.mxu0 0.0
    %3473 = vmatprep.subr.mxu0 0.0
    %3474 = vmatpush1.msra.mxu0 0.0
    %3475 = vmatprep.subr.mxu0 0.0
    %3476 = vmatpush1.msra.mxu0 0.0
    %3477 = vmatprep.subr.mxu0 0.0
    %3478 = vmatpush1.msra.mxu0 0.0
    %3479 = vmatprep.subr.mxu0 0.0
    %3480 = vmatpush1.msra.mxu0 0.0
    %3481 = vmatprep.subr.mxu0 0.0
    %3482 = vmatpush1.msra.mxu0 0.0
    %3483 = vmatprep.subr.mxu0 0.0
    %3484 = vmatpush1.msra.mxu0 0.0
    %3485 = vmatprep.subr.mxu0 0.0
    %3486 = vmatpush1.msra.mxu0 0.0
    %3487 = vmatprep.subr.mxu0 0.0
    %3488 = vmatpush1.msra.mxu0 0.0
    %3489 = vmatprep.subr.mxu0 0.0
    %3490 = vmatpush1.msra.mxu0 0.0
    %3491 = vmatprep.subr.mxu0 0.0
    %3492 = vmatpush1.msra.mxu0 0.0
    %3493 = vmatprep.subr.mxu0 0.0
    %3494 = vmatpush1.msra.mxu0 0.0
    %3495 = vmatprep.subr.mxu0 0.0
    %3496 = vmatpush1.msra.mxu0 0.0
    %3497 = vmatprep.subr.mxu0 0.0
    %3498 = vmatpush1.msra.mxu0 0.0
    %3499 = vmatprep.subr.mxu0 0.0
    %3500 = vmatpush1.msra.mxu0 0.0
    %3501 = vmatprep.subr.mxu0 0.0
    %3502 = vmatpush1.msra.mxu0 0.0
    %3503 = vmatprep.subr.mxu0 0.0
    %3504 = vmatpush1.msra.mxu0 0.0
    %3505 = vmatprep.subr.mxu0 0.0
    %3506 = vmatpush1.msra.mxu0 0.0
    %3507 = vmatprep.subr.mxu0 0.0
    %3508 = vmatpush1.msra.mxu0 0.0
    %3509 = vmatprep.subr.mxu0 0.0
    %3510 = vmatpush1.msra.mxu0 0.0
    %3511 = vmatprep.subr.mxu0 0.0
    %3512 = vmatpush1.msra.mxu0 0.0
    %3513 = vmatprep.subr.mxu0 0.0
    %3514 = vmatpush1.msra.mxu0 0.0
    %3515 = vmatprep.subr.mxu0 0.0
    %3516 = vmatpush1.msra.mxu0 0.0
    %3517 = vmatprep.mubr.f32.mxu0 0.0
    %3518 = vmatmul.mubr.f32.gmra.mrb[0].mxu0 %v3241
    %v3519 = vpop.f32.mrb[0].mxu0
    %v3520 = vadd.f32 0.0, %v3519
    %v3521 = vpop.f32.mrb[0].mxu0
    %3522 = vmatprep.mubr.f32.mxu0 0.0
    %3523 = vmatmul.mubr.f32.gmra.mrb[0].mxu0 %v3244
    %v3524 = vpop.f32.mrb[0].mxu0
    %v3525 = vadd.f32 0.0, %v3524
    %v3526 = vpop.f32.mrb[0].mxu0
    %3527 = vmatprep.mubr.f32.mxu0 0.0
    %3528 = vmatmul.mubr.f32.gmra.mrb[0].mxu0 %v3247
    %v3529 = vpop.f32.mrb[0].mxu0
    %v3530 = vadd.f32 0.0, %v3529
    %v3531 = vpop.f32.mrb[0].mxu0
    %3532 = vmatprep.mubr.f32.mxu0 0.0
    %3533 = vmatmul.mubr.f32.gmra.mrb[0].mxu0 %v3250
    %v3534 = vpop.f32.mrb[0].mxu0
    %v3535 = vadd.f32 0.0, %v3534
    %v3536 = vpop.f32.mrb[0].mxu0
    %3537 = vmatprep.mubr.f32.mxu0 0.0
    %3538 = vmatmul.mubr.f32.gmra.mrb[0].mxu0 %v3253
    %v3539 = vpop.f32.mrb[0].mxu0
    %v3540 = vadd.f32 0.0, %v3539
    %v3541 = vpop.f32.mrb[0].mxu0
    %3542 = vmatprep.mubr.f32.mxu0 0.0
    %3543 = vmatmul.mubr.f32.gmra.mrb[0].mxu0 %v3256
    %v3544 = vpop.f32.mrb[0].mxu0
    %v3545 = vadd.f32 0.0, %v3544
    %v3546 = vpop.f32.mrb[0].mxu0
    %3547 = vmatprep.mubr.f32.mxu0 0.0
    %3548 = vmatmul.mubr.f32.gmra.mrb[0].mxu0 %v3259
    %v3549 = vpop.f32.mrb[0].mxu0
    %v3550 = vadd.f32 0.0, %v3549
    %v3551 = vpop.f32.mrb[0].mxu0
    %3552 = vmatprep.mubr.f32.mxu0 0.0
    %3553 = vmatmul.mubr.f32.gmra.mrb[0].mxu0 %v3262
    %v3554 = vpop.f32.mrb[0].mxu0
    %v3555 = vadd.f32 0.0, %v3554
    %v3556 = vpop.f32.mrb[0].mxu0
    %3557 = vmatprep.mubr.f32.mxu0 0.0
    %3558 = vmatmul.mubr.f32.gmra.mrb[0].mxu0 %v3265
    %v3559 = vpop.f32.mrb[0].mxu0
    %v3560 = vadd.f32 0.0, %v3559
    %v3561 = vpop.f32.mrb[0].mxu0
    %3562 = vmatprep.mubr.f32.mxu0 0.0
    %3563 = vmatmul.mubr.f32.gmra.mrb[0].mxu0 %v3268
    %v3564 = vpop.f32.mrb[0].mxu0
    %v3565 = vadd.f32 0.0, %v3564
    %v3566 = vpop.f32.mrb[0].mxu0
    %3567 = vmatprep.mubr.f32.mxu0 0.0
    %3568 = vmatmul.mubr.f32.gmra.mrb[0].mxu0 %v3271
    %v3569 = vpop.f32.mrb[0].mxu0
    %v3570 = vadd.f32 0.0, %v3569
    %v3571 = vpop.f32.mrb[0].mxu0
    %3572 = vmatprep.mubr.f32.mxu0 0.0
    %3573 = vmatmul.mubr.f32.gmra.mrb[0].mxu0 %v3274
    %v3574 = vpop.f32.mrb[0].mxu0
    %v3575 = vadd.f32 0.0, %v3574
    %v3576 = vpop.f32.mrb[0].mxu0
    %3577 = vmatprep.mubr.f32.mxu0 0.0
    %3578 = vmatmul.mubr.f32.gmra.mrb[0].mxu0 %v3277
    %v3579 = vpop.f32.mrb[0].mxu0
    %v3580 = vadd.f32 0.0, %v3579
    %v3581 = vpop.f32.mrb[0].mxu0
    %3582 = vmatprep.mubr.f32.mxu0 0.0
    %3583 = vmatmul.mubr.f32.gmra.mrb[0].mxu0 %v3280
    %v3584 = vpop.f32.mrb[0].mxu0
    %v3585 = vadd.f32 0.0, %v3584
    %v3586 = vpop.f32.mrb[0].mxu0
    %3587 = vmatprep.mubr.f32.mxu0 0.0
    %3588 = vmatmul.mubr.f32.gmra.mrb[0].mxu0 %v3283
    %v3589 = vpop.f32.mrb[0].mxu0
    %v3590 = vadd.f32 0.0, %v3589
    %v3591 = vpop.f32.mrb[0].mxu0
    %3592 = vmatprep.mubr.f32.mxu0 0.0
    %3593 = vmatmul.mubr.f32.gmra.mrb[0].mxu0 %v3286
    %v3594 = vpop.f32.mrb[0].mxu0
    %v3595 = vadd.f32 0.0, %v3594
    %v3596 = vpop.f32.mrb[0].mxu0
    %3597 = vmatprep.mubr.f32.mxu0 0.0
    %3598 = vmatmul.mubr.f32.gmra.mrb[0].mxu0 %v3289
    %v3599 = vpop.f32.mrb[0].mxu0
    %v3600 = vadd.f32 0.0, %v3599
    %v3601 = vpop.f32.mrb[0].mxu0
    %3602 = vmatprep.mubr.f32.mxu0 0.0
    %3603 = vmatmul.mubr.f32.gmra.mrb[0].mxu0 %v3292
    %v3604 = vpop.f32.mrb[0].mxu0
    %v3605 = vadd.f32 0.0, %v3604
    %v3606 = vpop.f32.mrb[0].mxu0
    %3607 = vmatprep.mubr.f32.mxu0 0.0
    %3608 = vmatmul.mubr.f32.gmra.mrb[0].mxu0 %v3295
    %v3609 = vpop.f32.mrb[0].mxu0
    %v3610 = vadd.f32 0.0, %v3609
    %v3611 = vpop.f32.mrb[0].mxu0
    %3612 = vmatprep.mubr.f32.mxu0 0.0
    %3613 = vmatmul.mubr.f32.gmra.mrb[0].mxu0 %v3298
    %v3614 = vpop.f32.mrb[0].mxu0
    %v3615 = vadd.f32 0.0, %v3614
    %v3616 = vpop.f32.mrb[0].mxu0
    %3617 = vmatprep.mubr.f32.mxu0 0.0
    %3618 = vmatmul.mubr.f32.gmra.mrb[0].mxu0 %v3301
    %v3619 = vpop.f32.mrb[0].mxu0
    %v3620 = vadd.f32 0.0, %v3619
    %v3621 = vpop.f32.mrb[0].mxu0
    %3622 = vmatprep.mubr.f32.mxu0 0.0
    %3623 = vmatmul.mubr.f32.gmra.mrb[0].mxu0 %v3304
    %v3624 = vpop.f32.mrb[0].mxu0
    %v3625 = vadd.f32 0.0, %v3624
    %v3626 = vpop.f32.mrb[0].mxu0
    %3627 = vmatprep.mubr.f32.mxu0 0.0
    %3628 = vmatmul.mubr.f32.gmra.mrb[0].mxu0 %v3307
    %v3629 = vpop.f32.mrb[0].mxu0
    %v3630 = vadd.f32 0.0, %v3629
    %v3631 = vpop.f32.mrb[0].mxu0
    %3632 = vmatprep.mubr.f32.mxu0 0.0
    %3633 = vmatmul.mubr.f32.gmra.mrb[0].mxu0 %v3310
    %v3634 = vpop.f32.mrb[0].mxu0
    %v3635 = vadd.f32 0.0, %v3634
    %v3636 = vpop.f32.mrb[0].mxu0
    %3637 = vmatprep.mubr.f32.mxu0 0.0
    %3638 = vmatmul.mubr.f32.gmra.mrb[0].mxu0 %v3313
    %v3639 = vpop.f32.mrb[0].mxu0
    %v3640 = vadd.f32 0.0, %v3639
    %v3641 = vpop.f32.mrb[0].mxu0
    %3642 = vmatprep.mubr.f32.mxu0 0.0
    %3643 = vmatmul.mubr.f32.gmra.mrb[0].mxu0 %v3316
    %v3644 = vpop.f32.mrb[0].mxu0
    %v3645 = vadd.f32 0.0, %v3644
    %v3646 = vpop.f32.mrb[0].mxu0
    %3647 = vmatprep.mubr.f32.mxu0 0.0
    %3648 = vmatmul.mubr.f32.gmra.mrb[0].mxu0 %v3319
    %v3649 = vpop.f32.mrb[0].mxu0
    %v3650 = vadd.f32 0.0, %v3649
    %v3651 = vpop.f32.mrb[0].mxu0
    %3652 = vmatprep.mubr.f32.mxu0 0.0
    %3653 = vmatmul.mubr.f32.gmra.mrb[0].mxu0 %v3322
    %v3654 = vpop.f32.mrb[0].mxu0
    %v3655 = vadd.f32 0.0, %v3654
    %v3656 = vpop.f32.mrb[0].mxu0
    %3657 = vmatprep.mubr.f32.mxu0 0.0
    %3658 = vmatmul.mubr.f32.gmra.mrb[0].mxu0 %v3325
    %v3659 = vpop.f32.mrb[0].mxu0
    %v3660 = vadd.f32 0.0, %v3659
    %v3661 = vpop.f32.mrb[0].mxu0
    %3662 = vmatprep.mubr.f32.mxu0 0.0
    %3663 = vmatmul.mubr.f32.gmra.mrb[0].mxu0 %v3328
    %v3664 = vpop.f32.mrb[0].mxu0
    %v3665 = vadd.f32 0.0, %v3664
    %v3666 = vpop.f32.mrb[0].mxu0
    %3667 = vmatprep.mubr.f32.mxu0 0.0
    %3668 = vmatmul.mubr.f32.gmra.mrb[0].mxu0 %v3331
    %v3669 = vpop.f32.mrb[0].mxu0
    %v3670 = vadd.f32 0.0, %v3669
    %v3671 = vpop.f32.mrb[0].mxu0
    %3672 = vmatprep.mubr.f32.mxu0 0.0
    %3673 = vmatmul.mubr.f32.gmra.mrb[0].mxu0 %v3334
    %v3674 = vpop.f32.mrb[0].mxu0
    %v3675 = vadd.f32 0.0, %v3674
    %v3676 = vpop.f32.mrb[0].mxu0
    %3677 = vmatprep.mubr.f32.mxu0 0.0
    %3678 = vmatmul.mubr.f32.gmra.mrb[0].mxu0 %v3337
    %v3679 = vpop.f32.mrb[0].mxu0
    %v3680 = vadd.f32 0.0, %v3679
    %v3681 = vpop.f32.mrb[0].mxu0
    %3682 = vmatprep.mubr.f32.mxu0 0.0
    %3683 = vmatmul.mubr.f32.gmra.mrb[0].mxu0 %v3340
    %v3684 = vpop.f32.mrb[0].mxu0
    %v3685 = vadd.f32 0.0, %v3684
    %v3686 = vpop.f32.mrb[0].mxu0
    %3687 = vmatprep.mubr.f32.mxu0 0.0
    %3688 = vmatmul.mubr.f32.gmra.mrb[0].mxu0 %v3343
    %v3689 = vpop.f32.mrb[0].mxu0
    %v3690 = vadd.f32 0.0, %v3689
    %v3691 = vpop.f32.mrb[0].mxu0
    %3692 = vmatprep.mubr.f32.mxu0 0.0
    %3693 = vmatmul.mubr.f32.gmra.mrb[0].mxu0 %v3346
    %v3694 = vpop.f32.mrb[0].mxu0
    %v3695 = vadd.f32 0.0, %v3694
    %v3696 = vpop.f32.mrb[0].mxu0
    %3697 = vmatprep.mubr.f32.mxu0 0.0
    %3698 = vmatmul.mubr.f32.gmra.mrb[0].mxu0 %v3349
    %v3699 = vpop.f32.mrb[0].mxu0
    %v3700 = vadd.f32 0.0, %v3699
    %v3701 = vpop.f32.mrb[0].mxu0
    %3702 = vmatprep.mubr.f32.mxu0 0.0
    %3703 = vmatmul.mubr.f32.gmra.mrb[0].mxu0 %v3352
    %v3704 = vpop.f32.mrb[0].mxu0
    %v3705 = vadd.f32 0.0, %v3704
    %v3706 = vpop.f32.mrb[0].mxu0
    %3707 = vmatprep.mubr.f32.mxu0 0.0
    %3708 = vmatmul.mubr.f32.gmra.mrb[0].mxu0 %v3355
    %v3709 = vpop.f32.mrb[0].mxu0
    %v3710 = vadd.f32 0.0, %v3709
    %v3711 = vpop.f32.mrb[0].mxu0
    %3712 = vmatprep.mubr.f32.mxu0 0.0
    %3713 = vmatmul.mubr.f32.gmra.mrb[0].mxu0 %v3358
    %v3714 = vpop.f32.mrb[0].mxu0
    %v3715 = vadd.f32 0.0, %v3714
    %v3716 = vpop.f32.mrb[0].mxu0
    %3717 = vmatprep.mubr.f32.mxu0 0.0
    %3718 = vmatmul.mubr.f32.gmra.mrb[0].mxu0 %v3361
    %v3719 = vpop.f32.mrb[0].mxu0
    %v3720 = vadd.f32 0.0, %v3719
    %v3721 = vpop.f32.mrb[0].mxu0
    %3722 = vmatprep.mubr.f32.mxu0 0.0
    %3723 = vmatmul.mubr.f32.gmra.mrb[0].mxu0 %v3364
    %v3724 = vpop.f32.mrb[0].mxu0
    %v3725 = vadd.f32 0.0, %v3724
    %v3726 = vpop.f32.mrb[0].mxu0
    %3727 = vmatprep.mubr.f32.mxu0 0.0
    %3728 = vmatmul.mubr.f32.gmra.mrb[0].mxu0 %v3367
    %v3729 = vpop.f32.mrb[0].mxu0
    %v3730 = vadd.f32 0.0, %v3729
    %v3731 = vpop.f32.mrb[0].mxu0
    %3732 = vmatprep.mubr.f32.mxu0 0.0
    %3733 = vmatmul.mubr.f32.gmra.mrb[0].mxu0 %v3370
    %v3734 = vpop.f32.mrb[0].mxu0
    %v3735 = vadd.f32 0.0, %v3734
    %v3736 = vpop.f32.mrb[0].mxu0
    %3737 = vmatprep.mubr.f32.mxu0 0.0
    %3738 = vmatmul.mubr.f32.gmra.mrb[0].mxu0 %v3373
    %v3739 = vpop.f32.mrb[0].mxu0
    %v3740 = vadd.f32 0.0, %v3739
    %v3741 = vpop.f32.mrb[0].mxu0
    %3742 = vmatprep.mubr.f32.mxu0 0.0
    %3743 = vmatmul.mubr.f32.gmra.mrb[0].mxu0 %v3376
    %v3744 = vpop.f32.mrb[0].mxu0
    %v3745 = vadd.f32 0.0, %v3744
    %v3746 = vpop.f32.mrb[0].mxu0
    %3747 = vmatprep.mubr.f32.mxu0 0.0
    %3748 = vmatmul.mubr.f32.gmra.mrb[0].mxu0 %v3379
    %v3749 = vpop.f32.mrb[0].mxu0
    %v3750 = vadd.f32 0.0, %v3749
    %v3751 = vpop.f32.mrb[0].mxu0
    %3752 = vmatprep.mubr.f32.mxu0 0.0
    %3753 = vmatmul.mubr.f32.gmra.mrb[0].mxu0 %v3382
    %v3754 = vpop.f32.mrb[0].mxu0
    %v3755 = vadd.f32 0.0, %v3754
    %v3756 = vpop.f32.mrb[0].mxu0
    %3757 = vmatprep.mubr.f32.mxu0 0.0
    %3758 = vmatmul.mubr.f32.gmra.mrb[0].mxu0 %v3385
    %v3759 = vpop.f32.mrb[0].mxu0
    %v3760 = vadd.f32 0.0, %v3759
    %v3761 = vpop.f32.mrb[0].mxu0
    %3762 = vmatprep.mubr.f32.mxu0 0.0
    %3763 = vmatmul.mubr.f32.gmra.mrb[0].mxu0 %v3388
    %v3764 = vpop.f32.mrb[0].mxu0
    %v3765 = vadd.f32 0.0, %v3764
    %v3766 = vpop.f32.mrb[0].mxu0
    %3767 = vmatprep.mubr.f32.mxu0 0.0
    %3768 = vmatmul.mubr.f32.gmra.mrb[0].mxu0 %v3391
    %v3769 = vpop.f32.mrb[0].mxu0
    %v3770 = vadd.f32 0.0, %v3769
    %v3771 = vpop.f32.mrb[0].mxu0
    %3772 = vmatprep.mubr.f32.mxu0 0.0
    %3773 = vmatmul.mubr.f32.gmra.mrb[0].mxu0 %v3394
    %v3774 = vpop.f32.mrb[0].mxu0
    %v3775 = vadd.f32 0.0, %v3774
    %v3776 = vpop.f32.mrb[0].mxu0
    %3777 = vmatprep.mubr.f32.mxu0 0.0
    %3778 = vmatmul.mubr.f32.gmra.mrb[0].mxu0 %v3397
    %v3779 = vpop.f32.mrb[0].mxu0
    %v3780 = vadd.f32 0.0, %v3779
    %v3781 = vpop.f32.mrb[0].mxu0
    %3782 = vmatprep.mubr.f32.mxu0 0.0
    %3783 = vmatmul.mubr.f32.gmra.mrb[0].mxu0 %v3400
    %v3784 = vpop.f32.mrb[0].mxu0
    %v3785 = vadd.f32 0.0, %v3784
    %v3786 = vpop.f32.mrb[0].mxu0
    %3787 = vmatprep.mubr.f32.mxu0 0.0
    %3788 = vmatmul.mubr.f32.gmra.mrb[0].mxu0 %v3403
    %v3789 = vpop.f32.mrb[0].mxu0
    %v3790 = vadd.f32 0.0, %v3789
    %v3791 = vpop.f32.mrb[0].mxu0
    %3792 = vmatprep.mubr.f32.mxu0 0.0
    %3793 = vmatmul.mubr.f32.gmra.mrb[0].mxu0 %v3406
    %v3794 = vpop.f32.mrb[0].mxu0
    %v3795 = vadd.f32 0.0, %v3794
    %v3796 = vpop.f32.mrb[0].mxu0
    %3797 = vmatprep.mubr.f32.mxu0 0.0
    %3798 = vmatmul.mubr.f32.gmra.mrb[0].mxu0 %v3409
    %v3799 = vpop.f32.mrb[0].mxu0
    %v3800 = vadd.f32 0.0, %v3799
    %v3801 = vpop.f32.mrb[0].mxu0
    %3802 = vmatprep.mubr.f32.mxu0 0.0
    %3803 = vmatmul.mubr.f32.gmra.mrb[0].mxu0 %v3412
    %v3804 = vpop.f32.mrb[0].mxu0
    %v3805 = vadd.f32 0.0, %v3804
    %v3806 = vpop.f32.mrb[0].mxu0
    %3807 = vmatprep.mubr.f32.mxu0 0.0
    %3808 = vmatmul.mubr.f32.gmra.mrb[0].mxu0 %v3415
    %v3809 = vpop.f32.mrb[0].mxu0
    %v3810 = vadd.f32 0.0, %v3809
    %v3811 = vpop.f32.mrb[0].mxu0
    %3812 = vmatprep.mubr.f32.mxu0 0.0
    %3813 = vmatmul.mubr.f32.gmra.mrb[0].mxu0 %v3418
    %v3814 = vpop.f32.mrb[0].mxu0
    %v3815 = vadd.f32 0.0, %v3814
    %v3816 = vpop.f32.mrb[0].mxu0
    %3817 = vmatprep.mubr.f32.mxu0 0.0
    %3818 = vmatmul.mubr.f32.gmra.mrb[0].mxu0 %v3421
    %v3819 = vpop.f32.mrb[0].mxu0
    %v3820 = vadd.f32 0.0, %v3819
    %v3821 = vpop.f32.mrb[0].mxu0
    %3822 = vmatprep.mubr.f32.mxu0 0.0
    %3823 = vmatmul.mubr.f32.gmra.mrb[0].mxu0 %v3424
    %v3824 = vpop.f32.mrb[0].mxu0
    %v3825 = vadd.f32 0.0, %v3824
    %v3826 = vpop.f32.mrb[0].mxu0
    %3827 = vmatprep.mubr.f32.mxu0 0.0
    %3828 = vmatmul.mubr.f32.gmra.mrb[0].mxu0 %v3427
    %v3829 = vpop.f32.mrb[0].mxu0
    %v3830 = vadd.f32 0.0, %v3829
    %v3831 = vpop.f32.mrb[0].mxu0
    %3832 = vmatprep.mubr.f32.mxu0 0.0
    %3833 = vmatmul.mubr.f32.gmra.mrb[0].mxu0 %v3430
    %v3834 = vpop.f32.mrb[0].mxu0
    %v3835 = vadd.f32 0.0, %v3834
    %v3836 = vpop.f32.mrb[0].mxu0
    %3837 = vmatprep.mubr.f32.mxu0 0.0
    %3838 = vmatmul.mubr.f32.gmra.mrb[0].mxu0 %v3433
    %v3839 = vpop.f32.mrb[0].mxu0
    %v3840 = vadd.f32 0.0, %v3839
    %v3841 = vpop.f32.mrb[0].mxu0
    %3842 = vmatprep.mubr.f32.mxu0 0.0
    %3843 = vmatmul.mubr.f32.gmra.mrb[0].mxu0 %v3436
    %v3844 = vpop.f32.mrb[0].mxu0
    %v3845 = vadd.f32 0.0, %v3844
    %v3846 = vpop.f32.mrb[0].mxu0
    %3847 = vmatprep.mubr.f32.mxu0 0.0
    %3848 = vmatmul.mubr.f32.gmra.mrb[0].mxu0 %v3439
    %v3849 = vpop.f32.mrb[0].mxu0
    %v3850 = vadd.f32 0.0, %v3849
    %v3851 = vpop.f32.mrb[0].mxu0
    %3852 = vmatprep.mubr.f32.mxu0 0.0
    %3853 = vmatmul.mubr.f32.gmra.mrb[0].mxu0 %v3442
    %v3854 = vpop.f32.mrb[0].mxu0
    %v3855 = vadd.f32 0.0, %v3854
    %v3856 = vpop.f32.mrb[0].mxu0
    %3857 = vmatprep.mubr.f32.mxu0 0.0
    %3858 = vmatmul.mubr.f32.gmra.mrb[0].mxu0 %v3445
    %v3859 = vpop.f32.mrb[0].mxu0
    %v3860 = vadd.f32 0.0, %v3859
    %v3861 = vpop.f32.mrb[0].mxu0
    %3862 = vmatprep.mubr.f32.mxu0 0.0
    %3863 = vmatmul.mubr.f32.gmra.mrb[0].mxu0 %v3448
    %v3864 = vpop.f32.mrb[0].mxu0
    %v3865 = vadd.f32 0.0, %v3864
    %v3866 = vpop.f32.mrb[0].mxu0
    %3867 = vdwg.mxu0
    %v3868 = vadd.f32 %v3098, %v3520
    %v3869 = vadd.f32 %v3099, %v3525
    %v3870 = vadd.f32 %v3100, %v3530
    %v3871 = vadd.f32 %v3101, %v3535
    %v3872 = vadd.f32 %v3102, %v3540
    %v3873 = vadd.f32 %v3103, %v3545
    %v3874 = vadd.f32 %v3104, %v3550
    %v3875 = vadd.f32 %v3105, %v3555
    %v3876 = vadd.f32 %v3106, %v3560
    %v3877 = vadd.f32 %v3107, %v3565
    %v3878 = vadd.f32 %v3108, %v3570
    %v3879 = vadd.f32 %v3109, %v3575
    %v3880 = vadd.f32 %v3110, %v3580
    %v3881 = vadd.f32 %v3111, %v3585
    %v3882 = vadd.f32 %v3112, %v3590
    %v3883 = vadd.f32 %v3113, %v3595
    %v3884 = vadd.f32 %v3114, %v3600
    %v3885 = vadd.f32 %v3115, %v3605
    %v3886 = vadd.f32 %v3116, %v3610
    %v3887 = vadd.f32 %v3117, %v3615
    %v3888 = vadd.f32 %v3118, %v3620
    %v3889 = vadd.f32 %v3119, %v3625
    %v3890 = vadd.f32 %v3120, %v3630
    %v3891 = vadd.f32 %v3121, %v3635
    %v3892 = vadd.f32 %v3122, %v3640
    %v3893 = vadd.f32 %v3123, %v3645
    %v3894 = vadd.f32 %v3124, %v3650
    %v3895 = vadd.f32 %v3125, %v3655
    %v3896 = vadd.f32 %v3126, %v3660
    %v3897 = vadd.f32 %v3127, %v3665
    %v3898 = vadd.f32 %v3128, %v3670
    %v3899 = vadd.f32 %v3129, %v3675
    %v3900 = vadd.f32 %v3130, %v3680
    %v3901 = vadd.f32 %v3131, %v3685
    %v3902 = vadd.f32 %v3132, %v3690
    %v3903 = vadd.f32 %v3133, %v3695
    %v3904 = vadd.f32 %v3134, %v3700
    %v3905 = vadd.f32 %v3135, %v3705
    %v3906 = vadd.f32 %v3136, %v3710
    %v3907 = vadd.f32 %v3137, %v3715
    %v3908 = vadd.f32 %v3138, %v3720
    %v3909 = vadd.f32 %v3139, %v3725
    %v3910 = vadd.f32 %v3140, %v3730
    %v3911 = vadd.f32 %v3141, %v3735
    %v3912 = vadd.f32 %v3142, %v3740
    %v3913 = vadd.f32 %v3143, %v3745
    %v3914 = vadd.f32 %v3144, %v3750
    %v3915 = vadd.f32 %v3145, %v3755
    %v3916 = vadd.f32 %v3146, %v3760
    %v3917 = vadd.f32 %v3147, %v3765
    %v3918 = vadd.f32 %v3148, %v3770
    %v3919 = vadd.f32 %v3149, %v3775
    %v3920 = vadd.f32 %v3150, %v3780
    %v3921 = vadd.f32 %v3151, %v3785
    %v3922 = vadd.f32 %v3152, %v3790
    %v3923 = vadd.f32 %v3153, %v3795
    %v3924 = vadd.f32 %v3154, %v3800
    %v3925 = vadd.f32 %v3155, %v3805
    %v3926 = vadd.f32 %v3156, %v3810
    %v3927 = vadd.f32 %v3157, %v3815
    %v3928 = vadd.f32 %v3158, %v3820
    %v3929 = vadd.f32 %v3159, %v3825
    %v3930 = vadd.f32 %v3160, %v3830
    %v3931 = vadd.f32 %v3161, %v3835
    %v3932 = vadd.f32 %v3162, %v3840
    %v3933 = vadd.f32 %v3163, %v3845
    %v3934 = vadd.f32 %v3164, %v3850
    %v3935 = vadd.f32 %v3165, %v3855
    %v3936 = vadd.f32 %v3166, %v3860
    %v3937 = vadd.f32 %v3167, %v3865
    %v3938 = vmul.f32 %v3868, %v1341
    %v3939 = vmul.f32 %v3869, %v1342
    %v3940 = vmul.f32 %v3870, %v1343
    %v3941 = vmul.f32 %v3871, %v1344
    %v3942 = vmul.f32 %v3872, %v1345
    %v3943 = vmul.f32 %v3873, %v1346
    %v3944 = vmul.f32 %v3874, %v1347
    %v3945 = vmul.f32 %v3875, %v1348
    %v3946 = vmul.f32 %v3876, %v1349
    %v3947 = vmul.f32 %v3877, %v1350
    %v3948 = vmul.f32 %v3878, %v1351
    %v3949 = vmul.f32 %v3879, %v1352
    %v3950 = vmul.f32 %v3880, %v1353
    %v3951 = vmul.f32 %v3881, %v1354
    %v3952 = vmul.f32 %v3882, %v1355
    %v3953 = vmul.f32 %v3883, %v1356
    %v3954 = vmul.f32 %v3884, %v1357
    %v3955 = vmul.f32 %v3885, %v1358
    %v3956 = vmul.f32 %v3886, %v1359
    %v3957 = vmul.f32 %v3887, %v1360
    %v3958 = vmul.f32 %v3888, %v1361
    %v3959 = vmul.f32 %v3889, %v1362
    %v3960 = vmul.f32 %v3890, %v1363
    %v3961 = vmul.f32 %v3891, %v1364
    %v3962 = vmul.f32 %v3892, %v1365
    %v3963 = vmul.f32 %v3893, %v1366
    %v3964 = vmul.f32 %v3894, %v1367
    %v3965 = vmul.f32 %v3895, %v1368
    %v3966 = vmul.f32 %v3896, %v1369
    %v3967 = vmul.f32 %v3897, %v1370
    %v3968 = vmul.f32 %v3898, %v1371
    %v3969 = vmul.f32 %v3899, %v1372
    %v3970 = vmul.f32 %v3900, %v1373
    %v3971 = vmul.f32 %v3901, %v1374
    %v3972 = vmul.f32 %v3902, %v1375
    %v3973 = vmul.f32 %v3903, %v1376
    %v3974 = vmul.f32 %v3904, %v1377
    %v3975 = vmul.f32 %v3905, %v1378
    %v3976 = vmul.f32 %v3906, %v1379
    %v3977 = vmul.f32 %v3907, %v1380
    %v3978 = vmul.f32 %v3908, %v1381
    %v3979 = vmul.f32 %v3909, %v1382
    %v3980 = vmul.f32 %v3910, %v1383
    %v3981 = vmul.f32 %v3911, %v1384
    %v3982 = vmul.f32 %v3912, %v1385
    %v3983 = vmul.f32 %v3913, %v1386
    %v3984 = vmul.f32 %v3914, %v1387
    %v3985 = vmul.f32 %v3915, %v1388
    %v3986 = vmul.f32 %v3916, %v1389
    %v3987 = vmul.f32 %v3917, %v1390
    %v3988 = vmul.f32 %v3918, %v1391
    %v3989 = vmul.f32 %v3919, %v1392
    %v3990 = vmul.f32 %v3920, %v1393
    %v3991 = vmul.f32 %v3921, %v1394
    %v3992 = vmul.f32 %v3922, %v1395
    %v3993 = vmul.f32 %v3923, %v1396
    %v3994 = vmul.f32 %v3924, %v1397
    %v3995 = vmul.f32 %v3925, %v1398
    %v3996 = vmul.f32 %v3926, %v1399
    %v3997 = vmul.f32 %v3927, %v1400
    %v3998 = vmul.f32 %v3928, %v1401
    %v3999 = vmul.f32 %v3929, %v1402
    %v4000 = vmul.f32 %v3930, %v1403
    %v4001 = vmul.f32 %v3931, %v1404
    %v4002 = vmul.f32 %v3932, %v1405
    %v4003 = vmul.f32 %v3933, %v1406
    %v4004 = vmul.f32 %v3934, %v1407
    %v4005 = vmul.f32 %v3935, %v1408
    %v4006 = vmul.f32 %v3936, %v1409
    %v4007 = vmul.f32 %v3937, %v1410
    %vm4008 = vcmask 523264
    %v4009 = vsel %vm4008, %v3938, 0.0
    %v4010 = vsel %vm4008, %v3939, 0.0
    %v4011 = vadd.f32 %v4009, %v4010
    %v4012 = vsel %vm4008, %v3940, 0.0
    %v4013 = vadd.f32 %v4011, %v4012
    %v4014 = vsel %vm4008, %v3941, 0.0
    %v4015 = vadd.f32 %v4013, %v4014
    %v4016 = vsel %vm4008, %v3942, 0.0
    %v4017 = vadd.f32 %v4015, %v4016
    %v4018 = vsel %vm4008, %v3943, 0.0
    %v4019 = vadd.f32 %v4017, %v4018
    %v4020 = vsel %vm4008, %v3944, 0.0
    %v4021 = vadd.f32 %v4019, %v4020
    %v4022 = vsel %vm4008, %v3945, 0.0
    %v4023 = vadd.f32 %v4021, %v4022
    %v4024 = vsel %vm4008, %v3946, 0.0
    %v4025 = vadd.f32 %v4023, %v4024
    %v4026 = vsel %vm4008, %v3947, 0.0
    %v4027 = vadd.f32 %v4025, %v4026
    %v4028 = vsel %vm4008, %v3948, 0.0
    %v4029 = vadd.f32 %v4027, %v4028
    %v4030 = vsel %vm4008, %v3949, 0.0
    %v4031 = vadd.f32 %v4029, %v4030
    %v4032 = vsel %vm4008, %v3950, 0.0
    %v4033 = vadd.f32 %v4031, %v4032
    %v4034 = vsel %vm4008, %v3951, 0.0
    %v4035 = vadd.f32 %v4033, %v4034
    %v4036 = vsel %vm4008, %v3952, 0.0
    %v4037 = vadd.f32 %v4035, %v4036
    %v4038 = vsel %vm4008, %v3953, 0.0
    %v4039 = vadd.f32 %v4037, %v4038
    %v4040 = vsel %vm4008, %v3954, 0.0
    %v4041 = vadd.f32 %v4039, %v4040
    %v4042 = vsel %vm4008, %v3955, 0.0
    %v4043 = vadd.f32 %v4041, %v4042
    %v4044 = vsel %vm4008, %v3956, 0.0
    %v4045 = vadd.f32 %v4043, %v4044
    %v4046 = vsel %vm4008, %v3957, 0.0
    %v4047 = vadd.f32 %v4045, %v4046
    %v4048 = vsel %vm4008, %v3958, 0.0
    %v4049 = vadd.f32 %v4047, %v4048
    %v4050 = vsel %vm4008, %v3959, 0.0
    %v4051 = vadd.f32 %v4049, %v4050
    %v4052 = vsel %vm4008, %v3960, 0.0
    %v4053 = vadd.f32 %v4051, %v4052
    %v4054 = vsel %vm4008, %v3961, 0.0
    %v4055 = vadd.f32 %v4053, %v4054
    %v4056 = vsel %vm4008, %v3962, 0.0
    %v4057 = vadd.f32 %v4055, %v4056
    %v4058 = vsel %vm4008, %v3963, 0.0
    %v4059 = vadd.f32 %v4057, %v4058
    %v4060 = vsel %vm4008, %v3964, 0.0
    %v4061 = vadd.f32 %v4059, %v4060
    %v4062 = vsel %vm4008, %v3965, 0.0
    %v4063 = vadd.f32 %v4061, %v4062
    %v4064 = vsel %vm4008, %v3966, 0.0
    %v4065 = vadd.f32 %v4063, %v4064
    %v4066 = vsel %vm4008, %v3967, 0.0
    %v4067 = vadd.f32 %v4065, %v4066
    %v4068 = vsel %vm4008, %v3968, 0.0
    %v4069 = vadd.f32 %v4067, %v4068
    %v4070 = vsel %vm4008, %v3969, 0.0
    %v4071 = vadd.f32 %v4069, %v4070
    %v4072 = vsel %vm4008, %v3970, 0.0
    %v4073 = vadd.f32 %v4071, %v4072
    %v4074 = vsel %vm4008, %v3971, 0.0
    %v4075 = vadd.f32 %v4073, %v4074
    %v4076 = vsel %vm4008, %v3972, 0.0
    %v4077 = vadd.f32 %v4075, %v4076
    %v4078 = vsel %vm4008, %v3973, 0.0
    %v4079 = vadd.f32 %v4077, %v4078
    %v4080 = vsel %vm4008, %v3974, 0.0
    %v4081 = vadd.f32 %v4079, %v4080
    %v4082 = vsel %vm4008, %v3975, 0.0
    %v4083 = vadd.f32 %v4081, %v4082
    %v4084 = vsel %vm4008, %v3976, 0.0
    %v4085 = vadd.f32 %v4083, %v4084
    %v4086 = vsel %vm4008, %v3977, 0.0
    %v4087 = vadd.f32 %v4085, %v4086
    %v4088 = vsel %vm4008, %v3978, 0.0
    %v4089 = vadd.f32 %v4087, %v4088
    %v4090 = vsel %vm4008, %v3979, 0.0
    %v4091 = vadd.f32 %v4089, %v4090
    %v4092 = vsel %vm4008, %v3980, 0.0
    %v4093 = vadd.f32 %v4091, %v4092
    %v4094 = vsel %vm4008, %v3981, 0.0
    %v4095 = vadd.f32 %v4093, %v4094
    %v4096 = vsel %vm4008, %v3982, 0.0
    %v4097 = vadd.f32 %v4095, %v4096
    %v4098 = vsel %vm4008, %v3983, 0.0
    %v4099 = vadd.f32 %v4097, %v4098
    %v4100 = vsel %vm4008, %v3984, 0.0
    %v4101 = vadd.f32 %v4099, %v4100
    %v4102 = vsel %vm4008, %v3985, 0.0
    %v4103 = vadd.f32 %v4101, %v4102
    %v4104 = vsel %vm4008, %v3986, 0.0
    %v4105 = vadd.f32 %v4103, %v4104
    %v4106 = vsel %vm4008, %v3987, 0.0
    %v4107 = vadd.f32 %v4105, %v4106
    %v4108 = vsel %vm4008, %v3988, 0.0
    %v4109 = vadd.f32 %v4107, %v4108
    %v4110 = vsel %vm4008, %v3989, 0.0
    %v4111 = vadd.f32 %v4109, %v4110
    %v4112 = vsel %vm4008, %v3990, 0.0
    %v4113 = vadd.f32 %v4111, %v4112
    %v4114 = vsel %vm4008, %v3991, 0.0
    %v4115 = vadd.f32 %v4113, %v4114
    %v4116 = vsel %vm4008, %v3992, 0.0
    %v4117 = vadd.f32 %v4115, %v4116
    %v4118 = vsel %vm4008, %v3993, 0.0
    %v4119 = vadd.f32 %v4117, %v4118
    %v4120 = vsel %vm4008, %v3994, 0.0
    %v4121 = vadd.f32 %v4119, %v4120
    %v4122 = vsel %vm4008, %v3995, 0.0
    %v4123 = vadd.f32 %v4121, %v4122
    %v4124 = vsel %vm4008, %v3996, 0.0
    %v4125 = vadd.f32 %v4123, %v4124
    %v4126 = vsel %vm4008, %v3997, 0.0
    %v4127 = vadd.f32 %v4125, %v4126
    %v4128 = vsel %vm4008, %v3998, 0.0
    %v4129 = vadd.f32 %v4127, %v4128
    %v4130 = vsel %vm4008, %v3999, 0.0
    %v4131 = vadd.f32 %v4129, %v4130
    %v4132 = vsel %vm4008, %v4000, 0.0
    %v4133 = vadd.f32 %v4131, %v4132
    %v4134 = vsel %vm4008, %v4001, 0.0
    %v4135 = vadd.f32 %v4133, %v4134
    %v4136 = vsel %vm4008, %v4002, 0.0
    %v4137 = vadd.f32 %v4135, %v4136
    %v4138 = vsel %vm4008, %v4003, 0.0
    %v4139 = vadd.f32 %v4137, %v4138
    %v4140 = vsel %vm4008, %v4004, 0.0
    %v4141 = vadd.f32 %v4139, %v4140
    %v4142 = vsel %vm4008, %v4005, 0.0
    %v4143 = vadd.f32 %v4141, %v4142
    %v4144 = vsel %vm4008, %v4006, 0.0
    %v4145 = vadd.f32 %v4143, %v4144
    %v4146 = vsel %vm4008, %v4007, 0.0
    %v4147 = vadd.f32 %v4145, %v4146
    %v4148 = vrot.slane %v4147, 4
    %v4149 = vadd.f32 %v4147, %v4148
    %v4150 = vrot.slane %v4149, 2
    %v4151 = vadd.f32 %v4149, %v4150
    %v4152 = vrot.slane %v4151, 1
    %v4153 = vadd.f32 %v4151, %v4152
    %v4154 = vmul.f32 %v4153, 0.0020408162
    %v4155 = vmul.f32 %v3938, %v3868
    %v4156 = vmul.f32 %v3939, %v3869
    %v4157 = vmul.f32 %v3940, %v3870
    %v4158 = vmul.f32 %v3941, %v3871
    %v4159 = vmul.f32 %v3942, %v3872
    %v4160 = vmul.f32 %v3943, %v3873
    %v4161 = vmul.f32 %v3944, %v3874
    %v4162 = vmul.f32 %v3945, %v3875
    %v4163 = vmul.f32 %v3946, %v3876
    %v4164 = vmul.f32 %v3947, %v3877
    %v4165 = vmul.f32 %v3948, %v3878
    %v4166 = vmul.f32 %v3949, %v3879
    %v4167 = vmul.f32 %v3950, %v3880
    %v4168 = vmul.f32 %v3951, %v3881
    %v4169 = vmul.f32 %v3952, %v3882
    %v4170 = vmul.f32 %v3953, %v3883
    %v4171 = vmul.f32 %v3954, %v3884
    %v4172 = vmul.f32 %v3955, %v3885
    %v4173 = vmul.f32 %v3956, %v3886
    %v4174 = vmul.f32 %v3957, %v3887
    %v4175 = vmul.f32 %v3958, %v3888
    %v4176 = vmul.f32 %v3959, %v3889
    %v4177 = vmul.f32 %v3960, %v3890
    %v4178 = vmul.f32 %v3961, %v3891
    %v4179 = vmul.f32 %v3962, %v3892
    %v4180 = vmul.f32 %v3963, %v3893
    %v4181 = vmul.f32 %v3964, %v3894
    %v4182 = vmul.f32 %v3965, %v3895
    %v4183 = vmul.f32 %v3966, %v3896
    %v4184 = vmul.f32 %v3967, %v3897
    %v4185 = vmul.f32 %v3968, %v3898
    %v4186 = vmul.f32 %v3969, %v3899
    %v4187 = vmul.f32 %v3970, %v3900
    %v4188 = vmul.f32 %v3971, %v3901
    %v4189 = vmul.f32 %v3972, %v3902
    %v4190 = vmul.f32 %v3973, %v3903
    %v4191 = vmul.f32 %v3974, %v3904
    %v4192 = vmul.f32 %v3975, %v3905
    %v4193 = vmul.f32 %v3976, %v3906
    %v4194 = vmul.f32 %v3977, %v3907
    %v4195 = vmul.f32 %v3978, %v3908
    %v4196 = vmul.f32 %v3979, %v3909
    %v4197 = vmul.f32 %v3980, %v3910
    %v4198 = vmul.f32 %v3981, %v3911
    %v4199 = vmul.f32 %v3982, %v3912
    %v4200 = vmul.f32 %v3983, %v3913
    %v4201 = vmul.f32 %v3984, %v3914
    %v4202 = vmul.f32 %v3985, %v3915
    %v4203 = vmul.f32 %v3986, %v3916
    %v4204 = vmul.f32 %v3987, %v3917
    %v4205 = vmul.f32 %v3988, %v3918
    %v4206 = vmul.f32 %v3989, %v3919
    %v4207 = vmul.f32 %v3990, %v3920
    %v4208 = vmul.f32 %v3991, %v3921
    %v4209 = vmul.f32 %v3992, %v3922
    %v4210 = vmul.f32 %v3993, %v3923
    %v4211 = vmul.f32 %v3994, %v3924
    %v4212 = vmul.f32 %v3995, %v3925
    %v4213 = vmul.f32 %v3996, %v3926
    %v4214 = vmul.f32 %v3997, %v3927
    %v4215 = vmul.f32 %v3998, %v3928
    %v4216 = vmul.f32 %v3999, %v3929
    %v4217 = vmul.f32 %v4000, %v3930
    %v4218 = vmul.f32 %v4001, %v3931
    %v4219 = vmul.f32 %v4002, %v3932
    %v4220 = vmul.f32 %v4003, %v3933
    %v4221 = vmul.f32 %v4004, %v3934
    %v4222 = vmul.f32 %v4005, %v3935
    %v4223 = vmul.f32 %v4006, %v3936
    %v4224 = vmul.f32 %v4007, %v3937
    %v4225 = vsel %vm4008, %v4155, 0.0
    %v4226 = vsel %vm4008, %v4156, 0.0
    %v4227 = vadd.f32 %v4225, %v4226
    %v4228 = vsel %vm4008, %v4157, 0.0
    %v4229 = vadd.f32 %v4227, %v4228
    %v4230 = vsel %vm4008, %v4158, 0.0
    %v4231 = vadd.f32 %v4229, %v4230
    %v4232 = vsel %vm4008, %v4159, 0.0
    %v4233 = vadd.f32 %v4231, %v4232
    %v4234 = vsel %vm4008, %v4160, 0.0
    %v4235 = vadd.f32 %v4233, %v4234
    %v4236 = vsel %vm4008, %v4161, 0.0
    %v4237 = vadd.f32 %v4235, %v4236
    %v4238 = vsel %vm4008, %v4162, 0.0
    %v4239 = vadd.f32 %v4237, %v4238
    %v4240 = vsel %vm4008, %v4163, 0.0
    %v4241 = vadd.f32 %v4239, %v4240
    %v4242 = vsel %vm4008, %v4164, 0.0
    %v4243 = vadd.f32 %v4241, %v4242
    %v4244 = vsel %vm4008, %v4165, 0.0
    %v4245 = vadd.f32 %v4243, %v4244
    %v4246 = vsel %vm4008, %v4166, 0.0
    %v4247 = vadd.f32 %v4245, %v4246
    %v4248 = vsel %vm4008, %v4167, 0.0
    %v4249 = vadd.f32 %v4247, %v4248
    %v4250 = vsel %vm4008, %v4168, 0.0
    %v4251 = vadd.f32 %v4249, %v4250
    %v4252 = vsel %vm4008, %v4169, 0.0
    %v4253 = vadd.f32 %v4251, %v4252
    %v4254 = vsel %vm4008, %v4170, 0.0
    %v4255 = vadd.f32 %v4253, %v4254
    %v4256 = vsel %vm4008, %v4171, 0.0
    %v4257 = vadd.f32 %v4255, %v4256
    %v4258 = vsel %vm4008, %v4172, 0.0
    %v4259 = vadd.f32 %v4257, %v4258
    %v4260 = vsel %vm4008, %v4173, 0.0
    %v4261 = vadd.f32 %v4259, %v4260
    %v4262 = vsel %vm4008, %v4174, 0.0
    %v4263 = vadd.f32 %v4261, %v4262
    %v4264 = vsel %vm4008, %v4175, 0.0
    %v4265 = vadd.f32 %v4263, %v4264
    %v4266 = vsel %vm4008, %v4176, 0.0
    %v4267 = vadd.f32 %v4265, %v4266
    %v4268 = vsel %vm4008, %v4177, 0.0
    %v4269 = vadd.f32 %v4267, %v4268
    %v4270 = vsel %vm4008, %v4178, 0.0
    %v4271 = vadd.f32 %v4269, %v4270
    %v4272 = vsel %vm4008, %v4179, 0.0
    %v4273 = vadd.f32 %v4271, %v4272
    %v4274 = vsel %vm4008, %v4180, 0.0
    %v4275 = vadd.f32 %v4273, %v4274
    %v4276 = vsel %vm4008, %v4181, 0.0
    %v4277 = vadd.f32 %v4275, %v4276
    %v4278 = vsel %vm4008, %v4182, 0.0
    %v4279 = vadd.f32 %v4277, %v4278
    %v4280 = vsel %vm4008, %v4183, 0.0
    %v4281 = vadd.f32 %v4279, %v4280
    %v4282 = vsel %vm4008, %v4184, 0.0
    %v4283 = vadd.f32 %v4281, %v4282
    %v4284 = vsel %vm4008, %v4185, 0.0
    %v4285 = vadd.f32 %v4283, %v4284
    %v4286 = vsel %vm4008, %v4186, 0.0
    %v4287 = vadd.f32 %v4285, %v4286
    %v4288 = vsel %vm4008, %v4187, 0.0
    %v4289 = vadd.f32 %v4287, %v4288
    %v4290 = vsel %vm4008, %v4188, 0.0
    %v4291 = vadd.f32 %v4289, %v4290
    %v4292 = vsel %vm4008, %v4189, 0.0
    %v4293 = vadd.f32 %v4291, %v4292
    %v4294 = vsel %vm4008, %v4190, 0.0
    %v4295 = vadd.f32 %v4293, %v4294
    %v4296 = vsel %vm4008, %v4191, 0.0
    %v4297 = vadd.f32 %v4295, %v4296
    %v4298 = vsel %vm4008, %v4192, 0.0
    %v4299 = vadd.f32 %v4297, %v4298
    %v4300 = vsel %vm4008, %v4193, 0.0
    %v4301 = vadd.f32 %v4299, %v4300
    %v4302 = vsel %vm4008, %v4194, 0.0
    %v4303 = vadd.f32 %v4301, %v4302
    %v4304 = vsel %vm4008, %v4195, 0.0
    %v4305 = vadd.f32 %v4303, %v4304
    %v4306 = vsel %vm4008, %v4196, 0.0
    %v4307 = vadd.f32 %v4305, %v4306
    %v4308 = vsel %vm4008, %v4197, 0.0
    %v4309 = vadd.f32 %v4307, %v4308
    %v4310 = vsel %vm4008, %v4198, 0.0
    %v4311 = vadd.f32 %v4309, %v4310
    %v4312 = vsel %vm4008, %v4199, 0.0
    %v4313 = vadd.f32 %v4311, %v4312
    %v4314 = vsel %vm4008, %v4200, 0.0
    %v4315 = vadd.f32 %v4313, %v4314
    %v4316 = vsel %vm4008, %v4201, 0.0
    %v4317 = vadd.f32 %v4315, %v4316
    %v4318 = vsel %vm4008, %v4202, 0.0
    %v4319 = vadd.f32 %v4317, %v4318
    %v4320 = vsel %vm4008, %v4203, 0.0
    %v4321 = vadd.f32 %v4319, %v4320
    %v4322 = vsel %vm4008, %v4204, 0.0
    %v4323 = vadd.f32 %v4321, %v4322
    %v4324 = vsel %vm4008, %v4205, 0.0
    %v4325 = vadd.f32 %v4323, %v4324
    %v4326 = vsel %vm4008, %v4206, 0.0
    %v4327 = vadd.f32 %v4325, %v4326
    %v4328 = vsel %vm4008, %v4207, 0.0
    %v4329 = vadd.f32 %v4327, %v4328
    %v4330 = vsel %vm4008, %v4208, 0.0
    %v4331 = vadd.f32 %v4329, %v4330
    %v4332 = vsel %vm4008, %v4209, 0.0
    %v4333 = vadd.f32 %v4331, %v4332
    %v4334 = vsel %vm4008, %v4210, 0.0
    %v4335 = vadd.f32 %v4333, %v4334
    %v4336 = vsel %vm4008, %v4211, 0.0
    %v4337 = vadd.f32 %v4335, %v4336
    %v4338 = vsel %vm4008, %v4212, 0.0
    %v4339 = vadd.f32 %v4337, %v4338
    %v4340 = vsel %vm4008, %v4213, 0.0
    %v4341 = vadd.f32 %v4339, %v4340
    %v4342 = vsel %vm4008, %v4214, 0.0
    %v4343 = vadd.f32 %v4341, %v4342
    %v4344 = vsel %vm4008, %v4215, 0.0
    %v4345 = vadd.f32 %v4343, %v4344
    %v4346 = vsel %vm4008, %v4216, 0.0
    %v4347 = vadd.f32 %v4345, %v4346
    %v4348 = vsel %vm4008, %v4217, 0.0
    %v4349 = vadd.f32 %v4347, %v4348
    %v4350 = vsel %vm4008, %v4218, 0.0
    %v4351 = vadd.f32 %v4349, %v4350
    %v4352 = vsel %vm4008, %v4219, 0.0
    %v4353 = vadd.f32 %v4351, %v4352
    %v4354 = vsel %vm4008, %v4220, 0.0
    %v4355 = vadd.f32 %v4353, %v4354
    %v4356 = vsel %vm4008, %v4221, 0.0
    %v4357 = vadd.f32 %v4355, %v4356
    %v4358 = vsel %vm4008, %v4222, 0.0
    %v4359 = vadd.f32 %v4357, %v4358
    %v4360 = vsel %vm4008, %v4223, 0.0
    %v4361 = vadd.f32 %v4359, %v4360
    %v4362 = vsel %vm4008, %v4224, 0.0
    %v4363 = vadd.f32 %v4361, %v4362
    %v4364 = vrot.slane %v4363, 4
    %v4365 = vadd.f32 %v4363, %v4364
    %v4366 = vrot.slane %v4365, 2
    %v4367 = vadd.f32 %v4365, %v4366
    %v4368 = vrot.slane %v4367, 1
    %v4369 = vadd.f32 %v4367, %v4368
    %v4370 = vmul.f32 %v4369, 0.0020408162
    %v4371 = vmul.f32 %v4154, %v4154
    %v4372 = vsub.f32 %v4370, %v4371
    %v4373 = vmax.f32 %v4372, 0.0
    %v4374 = vld [vmem:[%s5] sm:$0x1]
    %v4375 = vsub.f32 %v3868, %v4154
    %v4376 = vsub.f32 %v3869, %v4154
    %v4377 = vsub.f32 %v3870, %v4154
    %v4378 = vsub.f32 %v3871, %v4154
    %v4379 = vsub.f32 %v3872, %v4154
    %v4380 = vsub.f32 %v3873, %v4154
    %v4381 = vsub.f32 %v3874, %v4154
    %v4382 = vsub.f32 %v3875, %v4154
    %v4383 = vsub.f32 %v3876, %v4154
    %v4384 = vsub.f32 %v3877, %v4154
    %v4385 = vsub.f32 %v3878, %v4154
    %v4386 = vsub.f32 %v3879, %v4154
    %v4387 = vsub.f32 %v3880, %v4154
    %v4388 = vsub.f32 %v3881, %v4154
    %v4389 = vsub.f32 %v3882, %v4154
    %v4390 = vsub.f32 %v3883, %v4154
    %v4391 = vsub.f32 %v3884, %v4154
    %v4392 = vsub.f32 %v3885, %v4154
    %v4393 = vsub.f32 %v3886, %v4154
    %v4394 = vsub.f32 %v3887, %v4154
    %v4395 = vsub.f32 %v3888, %v4154
    %v4396 = vsub.f32 %v3889, %v4154
    %v4397 = vsub.f32 %v3890, %v4154
    %v4398 = vsub.f32 %v3891, %v4154
    %v4399 = vsub.f32 %v3892, %v4154
    %v4400 = vsub.f32 %v3893, %v4154
    %v4401 = vsub.f32 %v3894, %v4154
    %v4402 = vsub.f32 %v3895, %v4154
    %v4403 = vsub.f32 %v3896, %v4154
    %v4404 = vsub.f32 %v3897, %v4154
    %v4405 = vsub.f32 %v3898, %v4154
    %v4406 = vsub.f32 %v3899, %v4154
    %v4407 = vsub.f32 %v3900, %v4154
    %v4408 = vsub.f32 %v3901, %v4154
    %v4409 = vsub.f32 %v3902, %v4154
    %v4410 = vsub.f32 %v3903, %v4154
    %v4411 = vsub.f32 %v3904, %v4154
    %v4412 = vsub.f32 %v3905, %v4154
    %v4413 = vsub.f32 %v3906, %v4154
    %v4414 = vsub.f32 %v3907, %v4154
    %v4415 = vsub.f32 %v3908, %v4154
    %v4416 = vsub.f32 %v3909, %v4154
    %v4417 = vsub.f32 %v3910, %v4154
    %v4418 = vsub.f32 %v3911, %v4154
    %v4419 = vsub.f32 %v3912, %v4154
    %v4420 = vsub.f32 %v3913, %v4154
    %v4421 = vsub.f32 %v3914, %v4154
    %v4422 = vsub.f32 %v3915, %v4154
    %v4423 = vsub.f32 %v3916, %v4154
    %v4424 = vsub.f32 %v3917, %v4154
    %v4425 = vsub.f32 %v3918, %v4154
    %v4426 = vsub.f32 %v3919, %v4154
    %v4427 = vsub.f32 %v3920, %v4154
    %v4428 = vsub.f32 %v3921, %v4154
    %v4429 = vsub.f32 %v3922, %v4154
    %v4430 = vsub.f32 %v3923, %v4154
    %v4431 = vsub.f32 %v3924, %v4154
    %v4432 = vsub.f32 %v3925, %v4154
    %v4433 = vsub.f32 %v3926, %v4154
    %v4434 = vsub.f32 %v3927, %v4154
    %v4435 = vsub.f32 %v3928, %v4154
    %v4436 = vsub.f32 %v3929, %v4154
    %v4437 = vsub.f32 %v3930, %v4154
    %v4438 = vsub.f32 %v3931, %v4154
    %v4439 = vsub.f32 %v3932, %v4154
    %v4440 = vsub.f32 %v3933, %v4154
    %v4441 = vsub.f32 %v3934, %v4154
    %v4442 = vsub.f32 %v3935, %v4154
    %v4443 = vsub.f32 %v3936, %v4154
    %v4444 = vsub.f32 %v3937, %v4154
    %v4446 = vlaneseq
    %v4447 = vshrl.u32 %v4446, 7
    %v4448 = vsub.s32 0, %v4447
    %v4449 = vrot.slane %v4374, %v4448
    %v4451 = vmul.f32 %v4449, %v4375
    %v4452 = vmul.f32 %v4449, %v4376
    %v4453 = vmul.f32 %v4449, %v4377
    %v4454 = vmul.f32 %v4449, %v4378
    %v4455 = vmul.f32 %v4449, %v4379
    %v4456 = vmul.f32 %v4449, %v4380
    %v4457 = vmul.f32 %v4449, %v4381
    %v4458 = vmul.f32 %v4449, %v4382
    %v4459 = vmul.f32 %v4449, %v4383
    %v4460 = vmul.f32 %v4449, %v4384
    %v4461 = vmul.f32 %v4449, %v4385
    %v4462 = vmul.f32 %v4449, %v4386
    %v4463 = vmul.f32 %v4449, %v4387
    %v4464 = vmul.f32 %v4449, %v4388
    %v4465 = vmul.f32 %v4449, %v4389
    %v4466 = vmul.f32 %v4449, %v4390
    %v4467 = vmul.f32 %v4449, %v4391
    %v4468 = vmul.f32 %v4449, %v4392
    %v4469 = vmul.f32 %v4449, %v4393
    %v4470 = vmul.f32 %v4449, %v4394
    %v4471 = vmul.f32 %v4449, %v4395
    %v4472 = vmul.f32 %v4449, %v4396
    %v4473 = vmul.f32 %v4449, %v4397
    %v4474 = vmul.f32 %v4449, %v4398
    %v4475 = vmul.f32 %v4449, %v4399
    %v4476 = vmul.f32 %v4449, %v4400
    %v4477 = vmul.f32 %v4449, %v4401
    %v4478 = vmul.f32 %v4449, %v4402
    %v4479 = vmul.f32 %v4449, %v4403
    %v4480 = vmul.f32 %v4449, %v4404
    %v4481 = vmul.f32 %v4449, %v4405
    %v4482 = vmul.f32 %v4449, %v4406
    %v4483 = vmul.f32 %v4449, %v4407
    %v4484 = vmul.f32 %v4449, %v4408
    %v4485 = vmul.f32 %v4449, %v4409
    %v4486 = vmul.f32 %v4449, %v4410
    %v4487 = vmul.f32 %v4449, %v4411
    %v4488 = vmul.f32 %v4449, %v4412
    %v4489 = vmul.f32 %v4449, %v4413
    %v4490 = vmul.f32 %v4449, %v4414
    %v4491 = vmul.f32 %v4449, %v4415
    %v4492 = vmul.f32 %v4449, %v4416
    %v4493 = vmul.f32 %v4449, %v4417
    %v4494 = vmul.f32 %v4449, %v4418
    %v4495 = vmul.f32 %v4449, %v4419
    %v4496 = vmul.f32 %v4449, %v4420
    %v4497 = vmul.f32 %v4449, %v4421
    %v4498 = vmul.f32 %v4449, %v4422
    %v4499 = vmul.f32 %v4449, %v4423
    %v4500 = vmul.f32 %v4449, %v4424
    %v4501 = vmul.f32 %v4449, %v4425
    %v4502 = vmul.f32 %v4449, %v4426
    %v4503 = vmul.f32 %v4449, %v4427
    %v4504 = vmul.f32 %v4449, %v4428
    %v4505 = vmul.f32 %v4449, %v4429
    %v4506 = vmul.f32 %v4449, %v4430
    %v4507 = vmul.f32 %v4449, %v4431
    %v4508 = vmul.f32 %v4449, %v4432
    %v4509 = vmul.f32 %v4449, %v4433
    %v4510 = vmul.f32 %v4449, %v4434
    %v4511 = vmul.f32 %v4449, %v4435
    %v4512 = vmul.f32 %v4449, %v4436
    %v4513 = vmul.f32 %v4449, %v4437
    %v4514 = vmul.f32 %v4449, %v4438
    %v4515 = vmul.f32 %v4449, %v4439
    %v4516 = vmul.f32 %v4449, %v4440
    %v4517 = vmul.f32 %v4449, %v4441
    %v4518 = vmul.f32 %v4449, %v4442
    %v4519 = vmul.f32 %v4449, %v4443
    %v4520 = vmul.f32 %v4449, %v4444
    %v4521 = vadd.f32 %v4373, 1e-05
    %v4522 = vrsqrt.pop %v4521
    %v4523 = vmul.f32 %v4451, %v4522
    %v4524 = vmul.f32 %v4452, %v4522
    %v4525 = vmul.f32 %v4453, %v4522
    %v4526 = vmul.f32 %v4454, %v4522
    %v4527 = vmul.f32 %v4455, %v4522
    %v4528 = vmul.f32 %v4456, %v4522
    %v4529 = vmul.f32 %v4457, %v4522
    %v4530 = vmul.f32 %v4458, %v4522
    %v4531 = vmul.f32 %v4459, %v4522
    %v4532 = vmul.f32 %v4460, %v4522
    %v4533 = vmul.f32 %v4461, %v4522
    %v4534 = vmul.f32 %v4462, %v4522
    %v4535 = vmul.f32 %v4463, %v4522
    %v4536 = vmul.f32 %v4464, %v4522
    %v4537 = vmul.f32 %v4465, %v4522
    %v4538 = vmul.f32 %v4466, %v4522
    %v4539 = vmul.f32 %v4467, %v4522
    %v4540 = vmul.f32 %v4468, %v4522
    %v4541 = vmul.f32 %v4469, %v4522
    %v4542 = vmul.f32 %v4470, %v4522
    %v4543 = vmul.f32 %v4471, %v4522
    %v4544 = vmul.f32 %v4472, %v4522
    %v4545 = vmul.f32 %v4473, %v4522
    %v4546 = vmul.f32 %v4474, %v4522
    %v4547 = vmul.f32 %v4475, %v4522
    %v4548 = vmul.f32 %v4476, %v4522
    %v4549 = vmul.f32 %v4477, %v4522
    %v4550 = vmul.f32 %v4478, %v4522
    %v4551 = vmul.f32 %v4479, %v4522
    %v4552 = vmul.f32 %v4480, %v4522
    %v4553 = vmul.f32 %v4481, %v4522
    %v4554 = vmul.f32 %v4482, %v4522
    %v4555 = vmul.f32 %v4483, %v4522
    %v4556 = vmul.f32 %v4484, %v4522
    %v4557 = vmul.f32 %v4485, %v4522
    %v4558 = vmul.f32 %v4486, %v4522
    %v4559 = vmul.f32 %v4487, %v4522
    %v4560 = vmul.f32 %v4488, %v4522
    %v4561 = vmul.f32 %v4489, %v4522
    %v4562 = vmul.f32 %v4490, %v4522
    %v4563 = vmul.f32 %v4491, %v4522
    %v4564 = vmul.f32 %v4492, %v4522
    %v4565 = vmul.f32 %v4493, %v4522
    %v4566 = vmul.f32 %v4494, %v4522
    %v4567 = vmul.f32 %v4495, %v4522
    %v4568 = vmul.f32 %v4496, %v4522
    %v4569 = vmul.f32 %v4497, %v4522
    %v4570 = vmul.f32 %v4498, %v4522
    %v4571 = vmul.f32 %v4499, %v4522
    %v4572 = vmul.f32 %v4500, %v4522
    %v4573 = vmul.f32 %v4501, %v4522
    %v4574 = vmul.f32 %v4502, %v4522
    %v4575 = vmul.f32 %v4503, %v4522
    %v4576 = vmul.f32 %v4504, %v4522
    %v4577 = vmul.f32 %v4505, %v4522
    %v4578 = vmul.f32 %v4506, %v4522
    %v4579 = vmul.f32 %v4507, %v4522
    %v4580 = vmul.f32 %v4508, %v4522
    %v4581 = vmul.f32 %v4509, %v4522
    %v4582 = vmul.f32 %v4510, %v4522
    %v4583 = vmul.f32 %v4511, %v4522
    %v4584 = vmul.f32 %v4512, %v4522
    %v4585 = vmul.f32 %v4513, %v4522
    %v4586 = vmul.f32 %v4514, %v4522
    %v4587 = vmul.f32 %v4515, %v4522
    %v4588 = vmul.f32 %v4516, %v4522
    %v4589 = vmul.f32 %v4517, %v4522
    %v4590 = vmul.f32 %v4518, %v4522
    %v4591 = vmul.f32 %v4519, %v4522
    %v4592 = vmul.f32 %v4520, %v4522
    %v4593 = vld [vmem:[%s6] sm:$0x1]
    %v4595 = vlaneseq
    %v4596 = vshrl.u32 %v4595, 7
    %v4597 = vsub.s32 0, %v4596
    %v4598 = vrot.slane %v4593, %v4597
    %v4600 = vadd.f32 %v4523, %v4598
    %v4601 = vadd.f32 %v4524, %v4598
    %v4602 = vadd.f32 %v4525, %v4598
    %v4603 = vadd.f32 %v4526, %v4598
    %v4604 = vadd.f32 %v4527, %v4598
    %v4605 = vadd.f32 %v4528, %v4598
    %v4606 = vadd.f32 %v4529, %v4598
    %v4607 = vadd.f32 %v4530, %v4598
    %v4608 = vadd.f32 %v4531, %v4598
    %v4609 = vadd.f32 %v4532, %v4598
    %v4610 = vadd.f32 %v4533, %v4598
    %v4611 = vadd.f32 %v4534, %v4598
    %v4612 = vadd.f32 %v4535, %v4598
    %v4613 = vadd.f32 %v4536, %v4598
    %v4614 = vadd.f32 %v4537, %v4598
    %v4615 = vadd.f32 %v4538, %v4598
    %v4616 = vadd.f32 %v4539, %v4598
    %v4617 = vadd.f32 %v4540, %v4598
    %v4618 = vadd.f32 %v4541, %v4598
    %v4619 = vadd.f32 %v4542, %v4598
    %v4620 = vadd.f32 %v4543, %v4598
    %v4621 = vadd.f32 %v4544, %v4598
    %v4622 = vadd.f32 %v4545, %v4598
    %v4623 = vadd.f32 %v4546, %v4598
    %v4624 = vadd.f32 %v4547, %v4598
    %v4625 = vadd.f32 %v4548, %v4598
    %v4626 = vadd.f32 %v4549, %v4598
    %v4627 = vadd.f32 %v4550, %v4598
    %v4628 = vadd.f32 %v4551, %v4598
    %v4629 = vadd.f32 %v4552, %v4598
    %v4630 = vadd.f32 %v4553, %v4598
    %v4631 = vadd.f32 %v4554, %v4598
    %v4632 = vadd.f32 %v4555, %v4598
    %v4633 = vadd.f32 %v4556, %v4598
    %v4634 = vadd.f32 %v4557, %v4598
    %v4635 = vadd.f32 %v4558, %v4598
    %v4636 = vadd.f32 %v4559, %v4598
    %v4637 = vadd.f32 %v4560, %v4598
    %v4638 = vadd.f32 %v4561, %v4598
    %v4639 = vadd.f32 %v4562, %v4598
    %v4640 = vadd.f32 %v4563, %v4598
    %v4641 = vadd.f32 %v4564, %v4598
    %v4642 = vadd.f32 %v4565, %v4598
    %v4643 = vadd.f32 %v4566, %v4598
    %v4644 = vadd.f32 %v4567, %v4598
    %v4645 = vadd.f32 %v4568, %v4598
    %v4646 = vadd.f32 %v4569, %v4598
    %v4647 = vadd.f32 %v4570, %v4598
    %v4648 = vadd.f32 %v4571, %v4598
    %v4649 = vadd.f32 %v4572, %v4598
    %v4650 = vadd.f32 %v4573, %v4598
    %v4651 = vadd.f32 %v4574, %v4598
    %v4652 = vadd.f32 %v4575, %v4598
    %v4653 = vadd.f32 %v4576, %v4598
    %v4654 = vadd.f32 %v4577, %v4598
    %v4655 = vadd.f32 %v4578, %v4598
    %v4656 = vadd.f32 %v4579, %v4598
    %v4657 = vadd.f32 %v4580, %v4598
    %v4658 = vadd.f32 %v4581, %v4598
    %v4659 = vadd.f32 %v4582, %v4598
    %v4660 = vadd.f32 %v4583, %v4598
    %v4661 = vadd.f32 %v4584, %v4598
    %v4662 = vadd.f32 %v4585, %v4598
    %v4663 = vadd.f32 %v4586, %v4598
    %v4664 = vadd.f32 %v4587, %v4598
    %v4665 = vadd.f32 %v4588, %v4598
    %v4666 = vadd.f32 %v4589, %v4598
    %v4667 = vadd.f32 %v4590, %v4598
    %v4668 = vadd.f32 %v4591, %v4598
    %v4669 = vadd.f32 %v4592, %v4598
    %vm4670 = vcmp.ge.f32.partialorder %v4600, 0.0
    %vm4671 = vcmp.ge.f32.partialorder %v4601, 0.0
    %vm4672 = vcmp.ge.f32.partialorder %v4602, 0.0
    %vm4673 = vcmp.ge.f32.partialorder %v4603, 0.0
    %vm4674 = vcmp.ge.f32.partialorder %v4604, 0.0
    %vm4675 = vcmp.ge.f32.partialorder %v4605, 0.0
    %vm4676 = vcmp.ge.f32.partialorder %v4606, 0.0
    %vm4677 = vcmp.ge.f32.partialorder %v4607, 0.0
    %vm4678 = vcmp.ge.f32.partialorder %v4608, 0.0
    %vm4679 = vcmp.ge.f32.partialorder %v4609, 0.0
    %vm4680 = vcmp.ge.f32.partialorder %v4610, 0.0
    %vm4681 = vcmp.ge.f32.partialorder %v4611, 0.0
    %vm4682 = vcmp.ge.f32.partialorder %v4612, 0.0
    %vm4683 = vcmp.ge.f32.partialorder %v4613, 0.0
    %vm4684 = vcmp.ge.f32.partialorder %v4614, 0.0
    %vm4685 = vcmp.ge.f32.partialorder %v4615, 0.0
    %vm4686 = vcmp.ge.f32.partialorder %v4616, 0.0
    %vm4687 = vcmp.ge.f32.partialorder %v4617, 0.0
    %vm4688 = vcmp.ge.f32.partialorder %v4618, 0.0
    %vm4689 = vcmp.ge.f32.partialorder %v4619, 0.0
    %vm4690 = vcmp.ge.f32.partialorder %v4620, 0.0
    %vm4691 = vcmp.ge.f32.partialorder %v4621, 0.0
    %vm4692 = vcmp.ge.f32.partialorder %v4622, 0.0
    %vm4693 = vcmp.ge.f32.partialorder %v4623, 0.0
    %vm4694 = vcmp.ge.f32.partialorder %v4624, 0.0
    %vm4695 = vcmp.ge.f32.partialorder %v4625, 0.0
    %vm4696 = vcmp.ge.f32.partialorder %v4626, 0.0
    %vm4697 = vcmp.ge.f32.partialorder %v4627, 0.0
    %vm4698 = vcmp.ge.f32.partialorder %v4628, 0.0
    %vm4699 = vcmp.ge.f32.partialorder %v4629, 0.0
    %vm4700 = vcmp.ge.f32.partialorder %v4630, 0.0
    %vm4701 = vcmp.ge.f32.partialorder %v4631, 0.0
    %vm4702 = vcmp.ge.f32.partialorder %v4632, 0.0
    %vm4703 = vcmp.ge.f32.partialorder %v4633, 0.0
    %vm4704 = vcmp.ge.f32.partialorder %v4634, 0.0
    %vm4705 = vcmp.ge.f32.partialorder %v4635, 0.0
    %vm4706 = vcmp.ge.f32.partialorder %v4636, 0.0
    %vm4707 = vcmp.ge.f32.partialorder %v4637, 0.0
    %vm4708 = vcmp.ge.f32.partialorder %v4638, 0.0
    %vm4709 = vcmp.ge.f32.partialorder %v4639, 0.0
    %vm4710 = vcmp.ge.f32.partialorder %v4640, 0.0
    %vm4711 = vcmp.ge.f32.partialorder %v4641, 0.0
    %vm4712 = vcmp.ge.f32.partialorder %v4642, 0.0
    %vm4713 = vcmp.ge.f32.partialorder %v4643, 0.0
    %vm4714 = vcmp.ge.f32.partialorder %v4644, 0.0
    %vm4715 = vcmp.ge.f32.partialorder %v4645, 0.0
    %vm4716 = vcmp.ge.f32.partialorder %v4646, 0.0
    %vm4717 = vcmp.ge.f32.partialorder %v4647, 0.0
    %vm4718 = vcmp.ge.f32.partialorder %v4648, 0.0
    %vm4719 = vcmp.ge.f32.partialorder %v4649, 0.0
    %vm4720 = vcmp.ge.f32.partialorder %v4650, 0.0
    %vm4721 = vcmp.ge.f32.partialorder %v4651, 0.0
    %vm4722 = vcmp.ge.f32.partialorder %v4652, 0.0
    %vm4723 = vcmp.ge.f32.partialorder %v4653, 0.0
    %vm4724 = vcmp.ge.f32.partialorder %v4654, 0.0
    %vm4725 = vcmp.ge.f32.partialorder %v4655, 0.0
    %vm4726 = vcmp.ge.f32.partialorder %v4656, 0.0
    %vm4727 = vcmp.ge.f32.partialorder %v4657, 0.0
    %vm4728 = vcmp.ge.f32.partialorder %v4658, 0.0
    %vm4729 = vcmp.ge.f32.partialorder %v4659, 0.0
    %vm4730 = vcmp.ge.f32.partialorder %v4660, 0.0
    %vm4731 = vcmp.ge.f32.partialorder %v4661, 0.0
    %vm4732 = vcmp.ge.f32.partialorder %v4662, 0.0
    %vm4733 = vcmp.ge.f32.partialorder %v4663, 0.0
    %vm4734 = vcmp.ge.f32.partialorder %v4664, 0.0
    %vm4735 = vcmp.ge.f32.partialorder %v4665, 0.0
    %vm4736 = vcmp.ge.f32.partialorder %v4666, 0.0
    %vm4737 = vcmp.ge.f32.partialorder %v4667, 0.0
    %vm4738 = vcmp.ge.f32.partialorder %v4668, 0.0
    %vm4739 = vcmp.ge.f32.partialorder %v4669, 0.0
    %v4740 = vmul.f32 %v4600, 0.01
    %v4741 = vmul.f32 %v4601, 0.01
    %v4742 = vmul.f32 %v4602, 0.01
    %v4743 = vmul.f32 %v4603, 0.01
    %v4744 = vmul.f32 %v4604, 0.01
    %v4745 = vmul.f32 %v4605, 0.01
    %v4746 = vmul.f32 %v4606, 0.01
    %v4747 = vmul.f32 %v4607, 0.01
    %v4748 = vmul.f32 %v4608, 0.01
    %v4749 = vmul.f32 %v4609, 0.01
    %v4750 = vmul.f32 %v4610, 0.01
    %v4751 = vmul.f32 %v4611, 0.01
    %v4752 = vmul.f32 %v4612, 0.01
    %v4753 = vmul.f32 %v4613, 0.01
    %v4754 = vmul.f32 %v4614, 0.01
    %v4755 = vmul.f32 %v4615, 0.01
    %v4756 = vmul.f32 %v4616, 0.01
    %v4757 = vmul.f32 %v4617, 0.01
    %v4758 = vmul.f32 %v4618, 0.01
    %v4759 = vmul.f32 %v4619, 0.01
    %v4760 = vmul.f32 %v4620, 0.01
    %v4761 = vmul.f32 %v4621, 0.01
    %v4762 = vmul.f32 %v4622, 0.01
    %v4763 = vmul.f32 %v4623, 0.01
    %v4764 = vmul.f32 %v4624, 0.01
    %v4765 = vmul.f32 %v4625, 0.01
    %v4766 = vmul.f32 %v4626, 0.01
    %v4767 = vmul.f32 %v4627, 0.01
    %v4768 = vmul.f32 %v4628, 0.01
    %v4769 = vmul.f32 %v4629, 0.01
    %v4770 = vmul.f32 %v4630, 0.01
    %v4771 = vmul.f32 %v4631, 0.01
    %v4772 = vmul.f32 %v4632, 0.01
    %v4773 = vmul.f32 %v4633, 0.01
    %v4774 = vmul.f32 %v4634, 0.01
    %v4775 = vmul.f32 %v4635, 0.01
    %v4776 = vmul.f32 %v4636, 0.01
    %v4777 = vmul.f32 %v4637, 0.01
    %v4778 = vmul.f32 %v4638, 0.01
    %v4779 = vmul.f32 %v4639, 0.01
    %v4780 = vmul.f32 %v4640, 0.01
    %v4781 = vmul.f32 %v4641, 0.01
    %v4782 = vmul.f32 %v4642, 0.01
    %v4783 = vmul.f32 %v4643, 0.01
    %v4784 = vmul.f32 %v4644, 0.01
    %v4785 = vmul.f32 %v4645, 0.01
    %v4786 = vmul.f32 %v4646, 0.01
    %v4787 = vmul.f32 %v4647, 0.01
    %v4788 = vmul.f32 %v4648, 0.01
    %v4789 = vmul.f32 %v4649, 0.01
    %v4790 = vmul.f32 %v4650, 0.01
    %v4791 = vmul.f32 %v4651, 0.01
    %v4792 = vmul.f32 %v4652, 0.01
    %v4793 = vmul.f32 %v4653, 0.01
    %v4794 = vmul.f32 %v4654, 0.01
    %v4795 = vmul.f32 %v4655, 0.01
    %v4796 = vmul.f32 %v4656, 0.01
    %v4797 = vmul.f32 %v4657, 0.01
    %v4798 = vmul.f32 %v4658, 0.01
    %v4799 = vmul.f32 %v4659, 0.01
    %v4800 = vmul.f32 %v4660, 0.01
    %v4801 = vmul.f32 %v4661, 0.01
    %v4802 = vmul.f32 %v4662, 0.01
    %v4803 = vmul.f32 %v4663, 0.01
    %v4804 = vmul.f32 %v4664, 0.01
    %v4805 = vmul.f32 %v4665, 0.01
    %v4806 = vmul.f32 %v4666, 0.01
    %v4807 = vmul.f32 %v4667, 0.01
    %v4808 = vmul.f32 %v4668, 0.01
    %v4809 = vmul.f32 %v4669, 0.01
    %v4810 = vsel %vm4670, %v4600, %v4740
    %v4811 = vsel %vm4671, %v4601, %v4741
    %v4812 = vsel %vm4672, %v4602, %v4742
    %v4813 = vsel %vm4673, %v4603, %v4743
    %v4814 = vsel %vm4674, %v4604, %v4744
    %v4815 = vsel %vm4675, %v4605, %v4745
    %v4816 = vsel %vm4676, %v4606, %v4746
    %v4817 = vsel %vm4677, %v4607, %v4747
    %v4818 = vsel %vm4678, %v4608, %v4748
    %v4819 = vsel %vm4679, %v4609, %v4749
    %v4820 = vsel %vm4680, %v4610, %v4750
    %v4821 = vsel %vm4681, %v4611, %v4751
    %v4822 = vsel %vm4682, %v4612, %v4752
    %v4823 = vsel %vm4683, %v4613, %v4753
    %v4824 = vsel %vm4684, %v4614, %v4754
    %v4825 = vsel %vm4685, %v4615, %v4755
    %v4826 = vsel %vm4686, %v4616, %v4756
    %v4827 = vsel %vm4687, %v4617, %v4757
    %v4828 = vsel %vm4688, %v4618, %v4758
    %v4829 = vsel %vm4689, %v4619, %v4759
    %v4830 = vsel %vm4690, %v4620, %v4760
    %v4831 = vsel %vm4691, %v4621, %v4761
    %v4832 = vsel %vm4692, %v4622, %v4762
    %v4833 = vsel %vm4693, %v4623, %v4763
    %v4834 = vsel %vm4694, %v4624, %v4764
    %v4835 = vsel %vm4695, %v4625, %v4765
    %v4836 = vsel %vm4696, %v4626, %v4766
    %v4837 = vsel %vm4697, %v4627, %v4767
    %v4838 = vsel %vm4698, %v4628, %v4768
    %v4839 = vsel %vm4699, %v4629, %v4769
    %v4840 = vsel %vm4700, %v4630, %v4770
    %v4841 = vsel %vm4701, %v4631, %v4771
    %v4842 = vsel %vm4702, %v4632, %v4772
    %v4843 = vsel %vm4703, %v4633, %v4773
    %v4844 = vsel %vm4704, %v4634, %v4774
    %v4845 = vsel %vm4705, %v4635, %v4775
    %v4846 = vsel %vm4706, %v4636, %v4776
    %v4847 = vsel %vm4707, %v4637, %v4777
    %v4848 = vsel %vm4708, %v4638, %v4778
    %v4849 = vsel %vm4709, %v4639, %v4779
    %v4850 = vsel %vm4710, %v4640, %v4780
    %v4851 = vsel %vm4711, %v4641, %v4781
    %v4852 = vsel %vm4712, %v4642, %v4782
    %v4853 = vsel %vm4713, %v4643, %v4783
    %v4854 = vsel %vm4714, %v4644, %v4784
    %v4855 = vsel %vm4715, %v4645, %v4785
    %v4856 = vsel %vm4716, %v4646, %v4786
    %v4857 = vsel %vm4717, %v4647, %v4787
    %v4858 = vsel %vm4718, %v4648, %v4788
    %v4859 = vsel %vm4719, %v4649, %v4789
    %v4860 = vsel %vm4720, %v4650, %v4790
    %v4861 = vsel %vm4721, %v4651, %v4791
    %v4862 = vsel %vm4722, %v4652, %v4792
    %v4863 = vsel %vm4723, %v4653, %v4793
    %v4864 = vsel %vm4724, %v4654, %v4794
    %v4865 = vsel %vm4725, %v4655, %v4795
    %v4866 = vsel %vm4726, %v4656, %v4796
    %v4867 = vsel %vm4727, %v4657, %v4797
    %v4868 = vsel %vm4728, %v4658, %v4798
    %v4869 = vsel %vm4729, %v4659, %v4799
    %v4870 = vsel %vm4730, %v4660, %v4800
    %v4871 = vsel %vm4731, %v4661, %v4801
    %v4872 = vsel %vm4732, %v4662, %v4802
    %v4873 = vsel %vm4733, %v4663, %v4803
    %v4874 = vsel %vm4734, %v4664, %v4804
    %v4875 = vsel %vm4735, %v4665, %v4805
    %v4876 = vsel %vm4736, %v4666, %v4806
    %v4877 = vsel %vm4737, %v4667, %v4807
    %v4878 = vsel %vm4738, %v4668, %v4808
    %v4879 = vsel %vm4739, %v4669, %v4809
    %4880 = vst.msk [vmem:[#allocation3] sm:$0xff] %vm4008, %v4810
    %4881 = vst.msk [vmem:[#allocation3 + $0x8] sm:$0xff] %vm4008, %v4811
    %4882 = vst.msk [vmem:[#allocation3 + $0x10] sm:$0xff] %vm4008, %v4812
    %4883 = vst.msk [vmem:[#allocation3 + $0x18] sm:$0xff] %vm4008, %v4813
    %4884 = vst.msk [vmem:[#allocation3 + $0x20] sm:$0xff] %vm4008, %v4814
    %4885 = vst.msk [vmem:[#allocation3 + $0x28] sm:$0xff] %vm4008, %v4815
    %4886 = vst.msk [vmem:[#allocation3 + $0x30] sm:$0xff] %vm4008, %v4816
    %4887 = vst.msk [vmem:[#allocation3 + $0x38] sm:$0xff] %vm4008, %v4817
    %4888 = vst.msk [vmem:[#allocation3 + $0x40] sm:$0xff] %vm4008, %v4818
    %4889 = vst.msk [vmem:[#allocation3 + $0x48] sm:$0xff] %vm4008, %v4819
    %4890 = vst.msk [vmem:[#allocation3 + $0x50] sm:$0xff] %vm4008, %v4820
    %4891 = vst.msk [vmem:[#allocation3 + $0x58] sm:$0xff] %vm4008, %v4821
    %4892 = vst.msk [vmem:[#allocation3 + $0x60] sm:$0xff] %vm4008, %v4822
    %4893 = vst.msk [vmem:[#allocation3 + $0x68] sm:$0xff] %vm4008, %v4823
    %4894 = vst.msk [vmem:[#allocation3 + $0x70] sm:$0xff] %vm4008, %v4824
    %4895 = vst.msk [vmem:[#allocation3 + $0x78] sm:$0xff] %vm4008, %v4825
    %4896 = vst.msk [vmem:[#allocation3 + $0x80] sm:$0xff] %vm4008, %v4826
    %4897 = vst.msk [vmem:[#allocation3 + $0x88] sm:$0xff] %vm4008, %v4827
    %4898 = vst.msk [vmem:[#allocation3 + $0x90] sm:$0xff] %vm4008, %v4828
    %4899 = vst.msk [vmem:[#allocation3 + $0x98] sm:$0xff] %vm4008, %v4829
    %4900 = vst.msk [vmem:[#allocation3 + $0xa0] sm:$0xff] %vm4008, %v4830
    %4901 = vst.msk [vmem:[#allocation3 + $0xa8] sm:$0xff] %vm4008, %v4831
    %4902 = vst.msk [vmem:[#allocation3 + $0xb0] sm:$0xff] %vm4008, %v4832
    %4903 = vst.msk [vmem:[#allocation3 + $0xb8] sm:$0xff] %vm4008, %v4833
    %4904 = vst.msk [vmem:[#allocation3 + $0xc0] sm:$0xff] %vm4008, %v4834
    %4905 = vst.msk [vmem:[#allocation3 + $0xc8] sm:$0xff] %vm4008, %v4835
    %4906 = vst.msk [vmem:[#allocation3 + $0xd0] sm:$0xff] %vm4008, %v4836
    %4907 = vst.msk [vmem:[#allocation3 + $0xd8] sm:$0xff] %vm4008, %v4837
    %4908 = vst.msk [vmem:[#allocation3 + $0xe0] sm:$0xff] %vm4008, %v4838
    %4909 = vst.msk [vmem:[#allocation3 + $0xe8] sm:$0xff] %vm4008, %v4839
    %4910 = vst.msk [vmem:[#allocation3 + $0xf0] sm:$0xff] %vm4008, %v4840
    %4911 = vst.msk [vmem:[#allocation3 + $0xf8] sm:$0xff] %vm4008, %v4841
    %4912 = vst.msk [vmem:[#allocation3 + $0x100] sm:$0xff] %vm4008, %v4842
    %4913 = vst.msk [vmem:[#allocation3 + $0x108] sm:$0xff] %vm4008, %v4843
    %4914 = vst.msk [vmem:[#allocation3 + $0x110] sm:$0xff] %vm4008, %v4844
    %4915 = vst.msk [vmem:[#allocation3 + $0x118] sm:$0xff] %vm4008, %v4845
    %4916 = vst.msk [vmem:[#allocation3 + $0x120] sm:$0xff] %vm4008, %v4846
    %4917 = vst.msk [vmem:[#allocation3 + $0x128] sm:$0xff] %vm4008, %v4847
    %4918 = vst.msk [vmem:[#allocation3 + $0x130] sm:$0xff] %vm4008, %v4848
    %4919 = vst.msk [vmem:[#allocation3 + $0x138] sm:$0xff] %vm4008, %v4849
    %4920 = vst.msk [vmem:[#allocation3 + $0x140] sm:$0xff] %vm4008, %v4850
    %4921 = vst.msk [vmem:[#allocation3 + $0x148] sm:$0xff] %vm4008, %v4851
    %4922 = vst.msk [vmem:[#allocation3 + $0x150] sm:$0xff] %vm4008, %v4852
    %4923 = vst.msk [vmem:[#allocation3 + $0x158] sm:$0xff] %vm4008, %v4853
    %4924 = vst.msk [vmem:[#allocation3 + $0x160] sm:$0xff] %vm4008, %v4854
    %4925 = vst.msk [vmem:[#allocation3 + $0x168] sm:$0xff] %vm4008, %v4855
    %4926 = vst.msk [vmem:[#allocation3 + $0x170] sm:$0xff] %vm4008, %v4856
    %4927 = vst.msk [vmem:[#allocation3 + $0x178] sm:$0xff] %vm4008, %v4857
    %4928 = vst.msk [vmem:[#allocation3 + $0x180] sm:$0xff] %vm4008, %v4858
    %4929 = vst.msk [vmem:[#allocation3 + $0x188] sm:$0xff] %vm4008, %v4859
    %4930 = vst.msk [vmem:[#allocation3 + $0x190] sm:$0xff] %vm4008, %v4860
    %4931 = vst.msk [vmem:[#allocation3 + $0x198] sm:$0xff] %vm4008, %v4861
    %4932 = vst.msk [vmem:[#allocation3 + $0x1a0] sm:$0xff] %vm4008, %v4862
    %4933 = vst.msk [vmem:[#allocation3 + $0x1a8] sm:$0xff] %vm4008, %v4863
    %4934 = vst.msk [vmem:[#allocation3 + $0x1b0] sm:$0xff] %vm4008, %v4864
    %4935 = vst.msk [vmem:[#allocation3 + $0x1b8] sm:$0xff] %vm4008, %v4865
    %4936 = vst.msk [vmem:[#allocation3 + $0x1c0] sm:$0xff] %vm4008, %v4866
    %4937 = vst.msk [vmem:[#allocation3 + $0x1c8] sm:$0xff] %vm4008, %v4867
    %4938 = vst.msk [vmem:[#allocation3 + $0x1d0] sm:$0xff] %vm4008, %v4868
    %4939 = vst.msk [vmem:[#allocation3 + $0x1d8] sm:$0xff] %vm4008, %v4869
    %4940 = vst.msk [vmem:[#allocation3 + $0x1e0] sm:$0xff] %vm4008, %v4870
    %4941 = vst.msk [vmem:[#allocation3 + $0x1e8] sm:$0xff] %vm4008, %v4871
    %4942 = vst.msk [vmem:[#allocation3 + $0x1f0] sm:$0xff] %vm4008, %v4872
    %4943 = vst.msk [vmem:[#allocation3 + $0x1f8] sm:$0xff] %vm4008, %v4873
    %4944 = vst.msk [vmem:[#allocation3 + $0x200] sm:$0xff] %vm4008, %v4874
    %4945 = vst.msk [vmem:[#allocation3 + $0x208] sm:$0xff] %vm4008, %v4875
    %4946 = vst.msk [vmem:[#allocation3 + $0x210] sm:$0xff] %vm4008, %v4876
    %4947 = vst.msk [vmem:[#allocation3 + $0x218] sm:$0xff] %vm4008, %v4877
    %4948 = vst.msk [vmem:[#allocation3 + $0x220] sm:$0xff] %vm4008, %v4878
    %4949 = vst.msk [vmem:[#allocation3 + $0x228] sm:$0xff] %vm4008, %v4879
    %4950 = vst.msk [vmem:[#allocation3 + $0x230] sm:$0xff] %vm4008, 0.0
    %v4951 = vld [vmem:[%s8] sm:$0x1]
    %v4952 = vld [vmem:[#allocation3] sm:$0xff]
    %v4953 = vld [vmem:[#allocation3 + $0x8] sm:$0xff]
    %v4954 = vld [vmem:[#allocation3 + $0x10] sm:$0xff]
    %v4955 = vld [vmem:[#allocation3 + $0x18] sm:$0xff]
    %v4956 = vld [vmem:[#allocation3 + $0x20] sm:$0xff]
    %v4957 = vld [vmem:[#allocation3 + $0x28] sm:$0xff]
    %v4958 = vld [vmem:[#allocation3 + $0x30] sm:$0xff]
    %v4959 = vld [vmem:[#allocation3 + $0x38] sm:$0xff]
    %v4960 = vld [vmem:[#allocation3 + $0x40] sm:$0xff]
    %v4961 = vld [vmem:[#allocation3 + $0x48] sm:$0xff]
    %v4962 = vld [vmem:[#allocation3 + $0x50] sm:$0xff]
    %v4963 = vld [vmem:[#allocation3 + $0x58] sm:$0xff]
    %v4964 = vld [vmem:[#allocation3 + $0x60] sm:$0xff]
    %v4965 = vld [vmem:[#allocation3 + $0x68] sm:$0xff]
    %v4966 = vld [vmem:[#allocation3 + $0x70] sm:$0xff]
    %v4967 = vld [vmem:[#allocation3 + $0x78] sm:$0xff]
    %v4968 = vld [vmem:[#allocation3 + $0x80] sm:$0xff]
    %v4969 = vld [vmem:[#allocation3 + $0x88] sm:$0xff]
    %v4970 = vld [vmem:[#allocation3 + $0x90] sm:$0xff]
    %v4971 = vld [vmem:[#allocation3 + $0x98] sm:$0xff]
    %v4972 = vld [vmem:[#allocation3 + $0xa0] sm:$0xff]
    %v4973 = vld [vmem:[#allocation3 + $0xa8] sm:$0xff]
    %v4974 = vld [vmem:[#allocation3 + $0xb0] sm:$0xff]
    %v4975 = vld [vmem:[#allocation3 + $0xb8] sm:$0xff]
    %v4976 = vld [vmem:[#allocation3 + $0xc0] sm:$0xff]
    %v4977 = vld [vmem:[#allocation3 + $0xc8] sm:$0xff]
    %v4978 = vld [vmem:[#allocation3 + $0xd0] sm:$0xff]
    %v4979 = vld [vmem:[#allocation3 + $0xd8] sm:$0xff]
    %v4980 = vld [vmem:[#allocation3 + $0xe0] sm:$0xff]
    %v4981 = vld [vmem:[#allocation3 + $0xe8] sm:$0xff]
    %v4982 = vld [vmem:[#allocation3 + $0xf0] sm:$0xff]
    %v4983 = vld [vmem:[#allocation3 + $0xf8] sm:$0xff]
    %v4984 = vld [vmem:[#allocation3 + $0x100] sm:$0xff]
    %v4985 = vld [vmem:[#allocation3 + $0x108] sm:$0xff]
    %v4986 = vld [vmem:[#allocation3 + $0x110] sm:$0xff]
    %v4987 = vld [vmem:[#allocation3 + $0x118] sm:$0xff]
    %v4988 = vld [vmem:[#allocation3 + $0x120] sm:$0xff]
    %v4989 = vld [vmem:[#allocation3 + $0x128] sm:$0xff]
    %v4990 = vld [vmem:[#allocation3 + $0x130] sm:$0xff]
    %v4991 = vld [vmem:[#allocation3 + $0x138] sm:$0xff]
    %v4992 = vld [vmem:[#allocation3 + $0x140] sm:$0xff]
    %v4993 = vld [vmem:[#allocation3 + $0x148] sm:$0xff]
    %v4994 = vld [vmem:[#allocation3 + $0x150] sm:$0xff]
    %v4995 = vld [vmem:[#allocation3 + $0x158] sm:$0xff]
    %v4996 = vld [vmem:[#allocation3 + $0x160] sm:$0xff]
    %v4997 = vld [vmem:[#allocation3 + $0x168] sm:$0xff]
    %v4998 = vld [vmem:[#allocation3 + $0x170] sm:$0xff]
    %v4999 = vld [vmem:[#allocation3 + $0x178] sm:$0xff]
    %v5000 = vld [vmem:[#allocation3 + $0x180] sm:$0xff]
    %v5001 = vld [vmem:[#allocation3 + $0x188] sm:$0xff]
    %v5002 = vld [vmem:[#allocation3 + $0x190] sm:$0xff]
    %v5003 = vld [vmem:[#allocation3 + $0x198] sm:$0xff]
    %v5004 = vld [vmem:[#allocation3 + $0x1a0] sm:$0xff]
    %v5005 = vld [vmem:[#allocation3 + $0x1a8] sm:$0xff]
    %v5006 = vld [vmem:[#allocation3 + $0x1b0] sm:$0xff]
    %v5007 = vld [vmem:[#allocation3 + $0x1b8] sm:$0xff]
    %v5008 = vld [vmem:[#allocation3 + $0x1c0] sm:$0xff]
    %v5009 = vld [vmem:[#allocation3 + $0x1c8] sm:$0xff]
    %v5010 = vld [vmem:[#allocation3 + $0x1d0] sm:$0xff]
    %v5011 = vld [vmem:[#allocation3 + $0x1d8] sm:$0xff]
    %v5012 = vld [vmem:[#allocation3 + $0x1e0] sm:$0xff]
    %v5013 = vld [vmem:[#allocation3 + $0x1e8] sm:$0xff]
    %v5014 = vld [vmem:[#allocation3 + $0x1f0] sm:$0xff]
    %v5015 = vld [vmem:[#allocation3 + $0x1f8] sm:$0xff]
    %v5016 = vld [vmem:[#allocation3 + $0x200] sm:$0xff]
    %v5017 = vld [vmem:[#allocation3 + $0x208] sm:$0xff]
    %v5018 = vld [vmem:[#allocation3 + $0x210] sm:$0xff]
    %v5019 = vld [vmem:[#allocation3 + $0x218] sm:$0xff]
    %v5020 = vld [vmem:[#allocation3 + $0x220] sm:$0xff]
    %v5021 = vld [vmem:[#allocation3 + $0x228] sm:$0xff]
    %v5022 = vld [vmem:[%s7] sm:$0xff]
    %v5023 = vld [vmem:[%s7 + $0x8] sm:$0xff]
    %v5024 = vld [vmem:[%s7 + $0x10] sm:$0xff]
    %v5025 = vld [vmem:[%s7 + $0x18] sm:$0xff]
    %v5026 = vld [vmem:[%s7 + $0x20] sm:$0xff]
    %v5027 = vld [vmem:[%s7 + $0x28] sm:$0xff]
    %v5028 = vld [vmem:[%s7 + $0x30] sm:$0xff]
    %v5029 = vld [vmem:[%s7 + $0x38] sm:$0xff]
    %v5031 = vsel %vm4008, %v4952, 0
    %v5034 = vsel %vm4008, %v4953, 0
    %v5037 = vsel %vm4008, %v4954, 0
    %v5040 = vsel %vm4008, %v4955, 0
    %v5043 = vsel %vm4008, %v4956, 0
    %v5046 = vsel %vm4008, %v4957, 0
    %v5049 = vsel %vm4008, %v4958, 0
    %v5052 = vsel %vm4008, %v4959, 0
    %v5055 = vsel %vm4008, %v4960, 0
    %v5058 = vsel %vm4008, %v4961, 0
    %v5061 = vsel %vm4008, %v4962, 0
    %v5064 = vsel %vm4008, %v4963, 0
    %v5067 = vsel %vm4008, %v4964, 0
    %v5070 = vsel %vm4008, %v4965, 0
    %v5073 = vsel %vm4008, %v4966, 0
    %v5076 = vsel %vm4008, %v4967, 0
    %v5079 = vsel %vm4008, %v4968, 0
    %v5082 = vsel %vm4008, %v4969, 0
    %v5085 = vsel %vm4008, %v4970, 0
    %v5088 = vsel %vm4008, %v4971, 0
    %v5091 = vsel %vm4008, %v4972, 0
    %v5094 = vsel %vm4008, %v4973, 0
    %v5097 = vsel %vm4008, %v4974, 0
    %v5100 = vsel %vm4008, %v4975, 0
    %v5103 = vsel %vm4008, %v4976, 0
    %v5106 = vsel %vm4008, %v4977, 0
    %v5109 = vsel %vm4008, %v4978, 0
    %v5112 = vsel %vm4008, %v4979, 0
    %v5115 = vsel %vm4008, %v4980, 0
    %v5118 = vsel %vm4008, %v4981, 0
    %v5121 = vsel %vm4008, %v4982, 0
    %v5124 = vsel %vm4008, %v4983, 0
    %v5127 = vsel %vm4008, %v4984, 0
    %v5130 = vsel %vm4008, %v4985, 0
    %v5133 = vsel %vm4008, %v4986, 0
    %v5136 = vsel %vm4008, %v4987, 0
    %v5139 = vsel %vm4008, %v4988, 0
    %v5142 = vsel %vm4008, %v4989, 0
    %v5145 = vsel %vm4008, %v4990, 0
    %v5148 = vsel %vm4008, %v4991, 0
    %v5151 = vsel %vm4008, %v4992, 0
    %v5154 = vsel %vm4008, %v4993, 0
    %v5157 = vsel %vm4008, %v4994, 0
    %v5160 = vsel %vm4008, %v4995, 0
    %v5163 = vsel %vm4008, %v4996, 0
    %v5166 = vsel %vm4008, %v4997, 0
    %v5169 = vsel %vm4008, %v4998, 0
    %v5172 = vsel %vm4008, %v4999, 0
    %v5175 = vsel %vm4008, %v5000, 0
    %v5178 = vsel %vm4008, %v5001, 0
    %v5181 = vsel %vm4008, %v5002, 0
    %v5184 = vsel %vm4008, %v5003, 0
    %v5187 = vsel %vm4008, %v5004, 0
    %v5190 = vsel %vm4008, %v5005, 0
    %v5193 = vsel %vm4008, %v5006, 0
    %v5196 = vsel %vm4008, %v5007, 0
    %v5199 = vsel %vm4008, %v5008, 0
    %v5202 = vsel %vm4008, %v5009, 0
    %v5205 = vsel %vm4008, %v5010, 0
    %v5208 = vsel %vm4008, %v5011, 0
    %v5211 = vsel %vm4008, %v5012, 0
    %v5214 = vsel %vm4008, %v5013, 0
    %v5217 = vsel %vm4008, %v5014, 0
    %v5220 = vsel %vm4008, %v5015, 0
    %v5223 = vsel %vm4008, %v5016, 0
    %v5226 = vsel %vm4008, %v5017, 0
    %v5229 = vsel %vm4008, %v5018, 0
    %v5232 = vsel %vm4008, %v5019, 0
    %v5235 = vsel %vm4008, %v5020, 0
    %v5238 = vsel %vm4008, %v5021, 0
    %5240 = vmatprep.subr.mxu0 0.0
    %5241 = vmatpush1.msra.mxu0 %v5022
    %5242 = vmatprep.subr.mxu0 0.0
    %5243 = vmatpush1.msra.mxu0 %v5023
    %5244 = vmatprep.subr.mxu0 0.0
    %5245 = vmatpush1.msra.mxu0 %v5024
    %5246 = vmatprep.subr.mxu0 0.0
    %5247 = vmatpush1.msra.mxu0 %v5025
    %5248 = vmatprep.subr.mxu0 0.0
    %5249 = vmatpush1.msra.mxu0 %v5026
    %5250 = vmatprep.subr.mxu0 0.0
    %5251 = vmatpush1.msra.mxu0 %v5027
    %5252 = vmatprep.subr.mxu0 0.0
    %5253 = vmatpush1.msra.mxu0 %v5028
    %5254 = vmatprep.subr.mxu0 0.0
    %5255 = vmatpush1.msra.mxu0 %v5029
    %5256 = vmatprep.subr.mxu0 0.0
    %5257 = vmatpush1.msra.mxu0 0.0
    %5258 = vmatprep.subr.mxu0 0.0
    %5259 = vmatpush1.msra.mxu0 0.0
    %5260 = vmatprep.subr.mxu0 0.0
    %5261 = vmatpush1.msra.mxu0 0.0
    %5262 = vmatprep.subr.mxu0 0.0
    %5263 = vmatpush1.msra.mxu0 0.0
    %5264 = vmatprep.subr.mxu0 0.0
    %5265 = vmatpush1.msra.mxu0 0.0
    %5266 = vmatprep.subr.mxu0 0.0
    %5267 = vmatpush1.msra.mxu0 0.0
    %5268 = vmatprep.subr.mxu0 0.0
    %5269 = vmatpush1.msra.mxu0 0.0
    %5270 = vmatprep.subr.mxu0 0.0
    %5271 = vmatpush1.msra.mxu0 0.0
    %5272 = vmatprep.subr.mxu0 0.0
    %5273 = vmatpush1.msra.mxu0 0.0
    %5274 = vmatprep.subr.mxu0 0.0
    %5275 = vmatpush1.msra.mxu0 0.0
    %5276 = vmatprep.subr.mxu0 0.0
    %5277 = vmatpush1.msra.mxu0 0.0
    %5278 = vmatprep.subr.mxu0 0.0
    %5279 = vmatpush1.msra.mxu0 0.0
    %5280 = vmatprep.subr.mxu0 0.0
    %5281 = vmatpush1.msra.mxu0 0.0
    %5282 = vmatprep.subr.mxu0 0.0
    %5283 = vmatpush1.msra.mxu0 0.0
    %5284 = vmatprep.subr.mxu0 0.0
    %5285 = vmatpush1.msra.mxu0 0.0
    %5286 = vmatprep.subr.mxu0 0.0
    %5287 = vmatpush1.msra.mxu0 0.0
    %5288 = vmatprep.subr.mxu0 0.0
    %5289 = vmatpush1.msra.mxu0 0.0
    %5290 = vmatprep.subr.mxu0 0.0
    %5291 = vmatpush1.msra.mxu0 0.0
    %5292 = vmatprep.subr.mxu0 0.0
    %5293 = vmatpush1.msra.mxu0 0.0
    %5294 = vmatprep.subr.mxu0 0.0
    %5295 = vmatpush1.msra.mxu0 0.0
    %5296 = vmatprep.subr.mxu0 0.0
    %5297 = vmatpush1.msra.mxu0 0.0
    %5298 = vmatprep.subr.mxu0 0.0
    %5299 = vmatpush1.msra.mxu0 0.0
    %5300 = vmatprep.subr.mxu0 0.0
    %5301 = vmatpush1.msra.mxu0 0.0
    %5302 = vmatprep.subr.mxu0 0.0
    %5303 = vmatpush1.msra.mxu0 0.0
    %5304 = vmatprep.mubr.f32.mxu0 0.0
    %5305 = vmatmul.mubr.f32.gmra.mrb[0].mxu0 %v5031
    %v5306 = vpop.f32.mrb[0].mxu0
    %v5307 = vadd.f32 0.0, %v5306
    %v5308 = vpop.f32.mrb[0].mxu0
    %5309 = vmatprep.mubr.f32.mxu0 0.0
    %5310 = vmatmul.mubr.f32.gmra.mrb[0].mxu0 %v5034
    %v5311 = vpop.f32.mrb[0].mxu0
    %v5312 = vadd.f32 0.0, %v5311
    %v5313 = vpop.f32.mrb[0].mxu0
    %5314 = vmatprep.mubr.f32.mxu0 0.0
    %5315 = vmatmul.mubr.f32.gmra.mrb[0].mxu0 %v5037
    %v5316 = vpop.f32.mrb[0].mxu0
    %v5317 = vadd.f32 0.0, %v5316
    %v5318 = vpop.f32.mrb[0].mxu0
    %5319 = vmatprep.mubr.f32.mxu0 0.0
    %5320 = vmatmul.mubr.f32.gmra.mrb[0].mxu0 %v5040
    %v5321 = vpop.f32.mrb[0].mxu0
    %v5322 = vadd.f32 0.0, %v5321
    %v5323 = vpop.f32.mrb[0].mxu0
    %5324 = vmatprep.mubr.f32.mxu0 0.0
    %5325 = vmatmul.mubr.f32.gmra.mrb[0].mxu0 %v5043
    %v5326 = vpop.f32.mrb[0].mxu0
    %v5327 = vadd.f32 0.0, %v5326
    %v5328 = vpop.f32.mrb[0].mxu0
    %5329 = vmatprep.mubr.f32.mxu0 0.0
    %5330 = vmatmul.mubr.f32.gmra.mrb[0].mxu0 %v5046
    %v5331 = vpop.f32.mrb[0].mxu0
    %v5332 = vadd.f32 0.0, %v5331
    %v5333 = vpop.f32.mrb[0].mxu0
    %5334 = vmatprep.mubr.f32.mxu0 0.0
    %5335 = vmatmul.mubr.f32.gmra.mrb[0].mxu0 %v5049
    %v5336 = vpop.f32.mrb[0].mxu0
    %v5337 = vadd.f32 0.0, %v5336
    %v5338 = vpop.f32.mrb[0].mxu0
    %5339 = vmatprep.mubr.f32.mxu0 0.0
    %5340 = vmatmul.mubr.f32.gmra.mrb[0].mxu0 %v5052
    %v5341 = vpop.f32.mrb[0].mxu0
    %v5342 = vadd.f32 0.0, %v5341
    %v5343 = vpop.f32.mrb[0].mxu0
    %5344 = vmatprep.mubr.f32.mxu0 0.0
    %5345 = vmatmul.mubr.f32.gmra.mrb[0].mxu0 %v5055
    %v5346 = vpop.f32.mrb[0].mxu0
    %v5347 = vadd.f32 0.0, %v5346
    %v5348 = vpop.f32.mrb[0].mxu0
    %5349 = vmatprep.mubr.f32.mxu0 0.0
    %5350 = vmatmul.mubr.f32.gmra.mrb[0].mxu0 %v5058
    %v5351 = vpop.f32.mrb[0].mxu0
    %v5352 = vadd.f32 0.0, %v5351
    %v5353 = vpop.f32.mrb[0].mxu0
    %5354 = vmatprep.mubr.f32.mxu0 0.0
    %5355 = vmatmul.mubr.f32.gmra.mrb[0].mxu0 %v5061
    %v5356 = vpop.f32.mrb[0].mxu0
    %v5357 = vadd.f32 0.0, %v5356
    %v5358 = vpop.f32.mrb[0].mxu0
    %5359 = vmatprep.mubr.f32.mxu0 0.0
    %5360 = vmatmul.mubr.f32.gmra.mrb[0].mxu0 %v5064
    %v5361 = vpop.f32.mrb[0].mxu0
    %v5362 = vadd.f32 0.0, %v5361
    %v5363 = vpop.f32.mrb[0].mxu0
    %5364 = vmatprep.mubr.f32.mxu0 0.0
    %5365 = vmatmul.mubr.f32.gmra.mrb[0].mxu0 %v5067
    %v5366 = vpop.f32.mrb[0].mxu0
    %v5367 = vadd.f32 0.0, %v5366
    %v5368 = vpop.f32.mrb[0].mxu0
    %5369 = vmatprep.mubr.f32.mxu0 0.0
    %5370 = vmatmul.mubr.f32.gmra.mrb[0].mxu0 %v5070
    %v5371 = vpop.f32.mrb[0].mxu0
    %v5372 = vadd.f32 0.0, %v5371
    %v5373 = vpop.f32.mrb[0].mxu0
    %5374 = vmatprep.mubr.f32.mxu0 0.0
    %5375 = vmatmul.mubr.f32.gmra.mrb[0].mxu0 %v5073
    %v5376 = vpop.f32.mrb[0].mxu0
    %v5377 = vadd.f32 0.0, %v5376
    %v5378 = vpop.f32.mrb[0].mxu0
    %5379 = vmatprep.mubr.f32.mxu0 0.0
    %5380 = vmatmul.mubr.f32.gmra.mrb[0].mxu0 %v5076
    %v5381 = vpop.f32.mrb[0].mxu0
    %v5382 = vadd.f32 0.0, %v5381
    %v5383 = vpop.f32.mrb[0].mxu0
    %5384 = vmatprep.mubr.f32.mxu0 0.0
    %5385 = vmatmul.mubr.f32.gmra.mrb[0].mxu0 %v5079
    %v5386 = vpop.f32.mrb[0].mxu0
    %v5387 = vadd.f32 0.0, %v5386
    %v5388 = vpop.f32.mrb[0].mxu0
    %5389 = vmatprep.mubr.f32.mxu0 0.0
    %5390 = vmatmul.mubr.f32.gmra.mrb[0].mxu0 %v5082
    %v5391 = vpop.f32.mrb[0].mxu0
    %v5392 = vadd.f32 0.0, %v5391
    %v5393 = vpop.f32.mrb[0].mxu0
    %5394 = vmatprep.mubr.f32.mxu0 0.0
    %5395 = vmatmul.mubr.f32.gmra.mrb[0].mxu0 %v5085
    %v5396 = vpop.f32.mrb[0].mxu0
    %v5397 = vadd.f32 0.0, %v5396
    %v5398 = vpop.f32.mrb[0].mxu0
    %5399 = vmatprep.mubr.f32.mxu0 0.0
    %5400 = vmatmul.mubr.f32.gmra.mrb[0].mxu0 %v5088
    %v5401 = vpop.f32.mrb[0].mxu0
    %v5402 = vadd.f32 0.0, %v5401
    %v5403 = vpop.f32.mrb[0].mxu0
    %5404 = vmatprep.mubr.f32.mxu0 0.0
    %5405 = vmatmul.mubr.f32.gmra.mrb[0].mxu0 %v5091
    %v5406 = vpop.f32.mrb[0].mxu0
    %v5407 = vadd.f32 0.0, %v5406
    %v5408 = vpop.f32.mrb[0].mxu0
    %5409 = vmatprep.mubr.f32.mxu0 0.0
    %5410 = vmatmul.mubr.f32.gmra.mrb[0].mxu0 %v5094
    %v5411 = vpop.f32.mrb[0].mxu0
    %v5412 = vadd.f32 0.0, %v5411
    %v5413 = vpop.f32.mrb[0].mxu0
    %5414 = vmatprep.mubr.f32.mxu0 0.0
    %5415 = vmatmul.mubr.f32.gmra.mrb[0].mxu0 %v5097
    %v5416 = vpop.f32.mrb[0].mxu0
    %v5417 = vadd.f32 0.0, %v5416
    %v5418 = vpop.f32.mrb[0].mxu0
    %5419 = vmatprep.mubr.f32.mxu0 0.0
    %5420 = vmatmul.mubr.f32.gmra.mrb[0].mxu0 %v5100
    %v5421 = vpop.f32.mrb[0].mxu0
    %v5422 = vadd.f32 0.0, %v5421
    %v5423 = vpop.f32.mrb[0].mxu0
    %5424 = vmatprep.mubr.f32.mxu0 0.0
    %5425 = vmatmul.mubr.f32.gmra.mrb[0].mxu0 %v5103
    %v5426 = vpop.f32.mrb[0].mxu0
    %v5427 = vadd.f32 0.0, %v5426
    %v5428 = vpop.f32.mrb[0].mxu0
    %5429 = vmatprep.mubr.f32.mxu0 0.0
    %5430 = vmatmul.mubr.f32.gmra.mrb[0].mxu0 %v5106
    %v5431 = vpop.f32.mrb[0].mxu0
    %v5432 = vadd.f32 0.0, %v5431
    %v5433 = vpop.f32.mrb[0].mxu0
    %5434 = vmatprep.mubr.f32.mxu0 0.0
    %5435 = vmatmul.mubr.f32.gmra.mrb[0].mxu0 %v5109
    %v5436 = vpop.f32.mrb[0].mxu0
    %v5437 = vadd.f32 0.0, %v5436
    %v5438 = vpop.f32.mrb[0].mxu0
    %5439 = vmatprep.mubr.f32.mxu0 0.0
    %5440 = vmatmul.mubr.f32.gmra.mrb[0].mxu0 %v5112
    %v5441 = vpop.f32.mrb[0].mxu0
    %v5442 = vadd.f32 0.0, %v5441
    %v5443 = vpop.f32.mrb[0].mxu0
    %5444 = vmatprep.mubr.f32.mxu0 0.0
    %5445 = vmatmul.mubr.f32.gmra.mrb[0].mxu0 %v5115
    %v5446 = vpop.f32.mrb[0].mxu0
    %v5447 = vadd.f32 0.0, %v5446
    %v5448 = vpop.f32.mrb[0].mxu0
    %5449 = vmatprep.mubr.f32.mxu0 0.0
    %5450 = vmatmul.mubr.f32.gmra.mrb[0].mxu0 %v5118
    %v5451 = vpop.f32.mrb[0].mxu0
    %v5452 = vadd.f32 0.0, %v5451
    %v5453 = vpop.f32.mrb[0].mxu0
    %5454 = vmatprep.mubr.f32.mxu0 0.0
    %5455 = vmatmul.mubr.f32.gmra.mrb[0].mxu0 %v5121
    %v5456 = vpop.f32.mrb[0].mxu0
    %v5457 = vadd.f32 0.0, %v5456
    %v5458 = vpop.f32.mrb[0].mxu0
    %5459 = vmatprep.mubr.f32.mxu0 0.0
    %5460 = vmatmul.mubr.f32.gmra.mrb[0].mxu0 %v5124
    %v5461 = vpop.f32.mrb[0].mxu0
    %v5462 = vadd.f32 0.0, %v5461
    %v5463 = vpop.f32.mrb[0].mxu0
    %5464 = vmatprep.mubr.f32.mxu0 0.0
    %5465 = vmatmul.mubr.f32.gmra.mrb[0].mxu0 %v5127
    %v5466 = vpop.f32.mrb[0].mxu0
    %v5467 = vadd.f32 0.0, %v5466
    %v5468 = vpop.f32.mrb[0].mxu0
    %5469 = vmatprep.mubr.f32.mxu0 0.0
    %5470 = vmatmul.mubr.f32.gmra.mrb[0].mxu0 %v5130
    %v5471 = vpop.f32.mrb[0].mxu0
    %v5472 = vadd.f32 0.0, %v5471
    %v5473 = vpop.f32.mrb[0].mxu0
    %5474 = vmatprep.mubr.f32.mxu0 0.0
    %5475 = vmatmul.mubr.f32.gmra.mrb[0].mxu0 %v5133
    %v5476 = vpop.f32.mrb[0].mxu0
    %v5477 = vadd.f32 0.0, %v5476
    %v5478 = vpop.f32.mrb[0].mxu0
    %5479 = vmatprep.mubr.f32.mxu0 0.0
    %5480 = vmatmul.mubr.f32.gmra.mrb[0].mxu0 %v5136
    %v5481 = vpop.f32.mrb[0].mxu0
    %v5482 = vadd.f32 0.0, %v5481
    %v5483 = vpop.f32.mrb[0].mxu0
    %5484 = vmatprep.mubr.f32.mxu0 0.0
    %5485 = vmatmul.mubr.f32.gmra.mrb[0].mxu0 %v5139
    %v5486 = vpop.f32.mrb[0].mxu0
    %v5487 = vadd.f32 0.0, %v5486
    %v5488 = vpop.f32.mrb[0].mxu0
    %5489 = vmatprep.mubr.f32.mxu0 0.0
    %5490 = vmatmul.mubr.f32.gmra.mrb[0].mxu0 %v5142
    %v5491 = vpop.f32.mrb[0].mxu0
    %v5492 = vadd.f32 0.0, %v5491
    %v5493 = vpop.f32.mrb[0].mxu0
    %5494 = vmatprep.mubr.f32.mxu0 0.0
    %5495 = vmatmul.mubr.f32.gmra.mrb[0].mxu0 %v5145
    %v5496 = vpop.f32.mrb[0].mxu0
    %v5497 = vadd.f32 0.0, %v5496
    %v5498 = vpop.f32.mrb[0].mxu0
    %5499 = vmatprep.mubr.f32.mxu0 0.0
    %5500 = vmatmul.mubr.f32.gmra.mrb[0].mxu0 %v5148
    %v5501 = vpop.f32.mrb[0].mxu0
    %v5502 = vadd.f32 0.0, %v5501
    %v5503 = vpop.f32.mrb[0].mxu0
    %5504 = vmatprep.mubr.f32.mxu0 0.0
    %5505 = vmatmul.mubr.f32.gmra.mrb[0].mxu0 %v5151
    %v5506 = vpop.f32.mrb[0].mxu0
    %v5507 = vadd.f32 0.0, %v5506
    %v5508 = vpop.f32.mrb[0].mxu0
    %5509 = vmatprep.mubr.f32.mxu0 0.0
    %5510 = vmatmul.mubr.f32.gmra.mrb[0].mxu0 %v5154
    %v5511 = vpop.f32.mrb[0].mxu0
    %v5512 = vadd.f32 0.0, %v5511
    %v5513 = vpop.f32.mrb[0].mxu0
    %5514 = vmatprep.mubr.f32.mxu0 0.0
    %5515 = vmatmul.mubr.f32.gmra.mrb[0].mxu0 %v5157
    %v5516 = vpop.f32.mrb[0].mxu0
    %v5517 = vadd.f32 0.0, %v5516
    %v5518 = vpop.f32.mrb[0].mxu0
    %5519 = vmatprep.mubr.f32.mxu0 0.0
    %5520 = vmatmul.mubr.f32.gmra.mrb[0].mxu0 %v5160
    %v5521 = vpop.f32.mrb[0].mxu0
    %v5522 = vadd.f32 0.0, %v5521
    %v5523 = vpop.f32.mrb[0].mxu0
    %5524 = vmatprep.mubr.f32.mxu0 0.0
    %5525 = vmatmul.mubr.f32.gmra.mrb[0].mxu0 %v5163
    %v5526 = vpop.f32.mrb[0].mxu0
    %v5527 = vadd.f32 0.0, %v5526
    %v5528 = vpop.f32.mrb[0].mxu0
    %5529 = vmatprep.mubr.f32.mxu0 0.0
    %5530 = vmatmul.mubr.f32.gmra.mrb[0].mxu0 %v5166
    %v5531 = vpop.f32.mrb[0].mxu0
    %v5532 = vadd.f32 0.0, %v5531
    %v5533 = vpop.f32.mrb[0].mxu0
    %5534 = vmatprep.mubr.f32.mxu0 0.0
    %5535 = vmatmul.mubr.f32.gmra.mrb[0].mxu0 %v5169
    %v5536 = vpop.f32.mrb[0].mxu0
    %v5537 = vadd.f32 0.0, %v5536
    %v5538 = vpop.f32.mrb[0].mxu0
    %5539 = vmatprep.mubr.f32.mxu0 0.0
    %5540 = vmatmul.mubr.f32.gmra.mrb[0].mxu0 %v5172
    %v5541 = vpop.f32.mrb[0].mxu0
    %v5542 = vadd.f32 0.0, %v5541
    %v5543 = vpop.f32.mrb[0].mxu0
    %5544 = vmatprep.mubr.f32.mxu0 0.0
    %5545 = vmatmul.mubr.f32.gmra.mrb[0].mxu0 %v5175
    %v5546 = vpop.f32.mrb[0].mxu0
    %v5547 = vadd.f32 0.0, %v5546
    %v5548 = vpop.f32.mrb[0].mxu0
    %5549 = vmatprep.mubr.f32.mxu0 0.0
    %5550 = vmatmul.mubr.f32.gmra.mrb[0].mxu0 %v5178
    %v5551 = vpop.f32.mrb[0].mxu0
    %v5552 = vadd.f32 0.0, %v5551
    %v5553 = vpop.f32.mrb[0].mxu0
    %5554 = vmatprep.mubr.f32.mxu0 0.0
    %5555 = vmatmul.mubr.f32.gmra.mrb[0].mxu0 %v5181
    %v5556 = vpop.f32.mrb[0].mxu0
    %v5557 = vadd.f32 0.0, %v5556
    %v5558 = vpop.f32.mrb[0].mxu0
    %5559 = vmatprep.mubr.f32.mxu0 0.0
    %5560 = vmatmul.mubr.f32.gmra.mrb[0].mxu0 %v5184
    %v5561 = vpop.f32.mrb[0].mxu0
    %v5562 = vadd.f32 0.0, %v5561
    %v5563 = vpop.f32.mrb[0].mxu0
    %5564 = vmatprep.mubr.f32.mxu0 0.0
    %5565 = vmatmul.mubr.f32.gmra.mrb[0].mxu0 %v5187
    %v5566 = vpop.f32.mrb[0].mxu0
    %v5567 = vadd.f32 0.0, %v5566
    %v5568 = vpop.f32.mrb[0].mxu0
    %5569 = vmatprep.mubr.f32.mxu0 0.0
    %5570 = vmatmul.mubr.f32.gmra.mrb[0].mxu0 %v5190
    %v5571 = vpop.f32.mrb[0].mxu0
    %v5572 = vadd.f32 0.0, %v5571
    %v5573 = vpop.f32.mrb[0].mxu0
    %5574 = vmatprep.mubr.f32.mxu0 0.0
    %5575 = vmatmul.mubr.f32.gmra.mrb[0].mxu0 %v5193
    %v5576 = vpop.f32.mrb[0].mxu0
    %v5577 = vadd.f32 0.0, %v5576
    %v5578 = vpop.f32.mrb[0].mxu0
    %5579 = vmatprep.mubr.f32.mxu0 0.0
    %5580 = vmatmul.mubr.f32.gmra.mrb[0].mxu0 %v5196
    %v5581 = vpop.f32.mrb[0].mxu0
    %v5582 = vadd.f32 0.0, %v5581
    %v5583 = vpop.f32.mrb[0].mxu0
    %5584 = vmatprep.mubr.f32.mxu0 0.0
    %5585 = vmatmul.mubr.f32.gmra.mrb[0].mxu0 %v5199
    %v5586 = vpop.f32.mrb[0].mxu0
    %v5587 = vadd.f32 0.0, %v5586
    %v5588 = vpop.f32.mrb[0].mxu0
    %5589 = vmatprep.mubr.f32.mxu0 0.0
    %5590 = vmatmul.mubr.f32.gmra.mrb[0].mxu0 %v5202
    %v5591 = vpop.f32.mrb[0].mxu0
    %v5592 = vadd.f32 0.0, %v5591
    %v5593 = vpop.f32.mrb[0].mxu0
    %5594 = vmatprep.mubr.f32.mxu0 0.0
    %5595 = vmatmul.mubr.f32.gmra.mrb[0].mxu0 %v5205
    %v5596 = vpop.f32.mrb[0].mxu0
    %v5597 = vadd.f32 0.0, %v5596
    %v5598 = vpop.f32.mrb[0].mxu0
    %5599 = vmatprep.mubr.f32.mxu0 0.0
    %5600 = vmatmul.mubr.f32.gmra.mrb[0].mxu0 %v5208
    %v5601 = vpop.f32.mrb[0].mxu0
    %v5602 = vadd.f32 0.0, %v5601
    %v5603 = vpop.f32.mrb[0].mxu0
    %5604 = vmatprep.mubr.f32.mxu0 0.0
    %5605 = vmatmul.mubr.f32.gmra.mrb[0].mxu0 %v5211
    %v5606 = vpop.f32.mrb[0].mxu0
    %v5607 = vadd.f32 0.0, %v5606
    %v5608 = vpop.f32.mrb[0].mxu0
    %5609 = vmatprep.mubr.f32.mxu0 0.0
    %5610 = vmatmul.mubr.f32.gmra.mrb[0].mxu0 %v5214
    %v5611 = vpop.f32.mrb[0].mxu0
    %v5612 = vadd.f32 0.0, %v5611
    %v5613 = vpop.f32.mrb[0].mxu0
    %5614 = vmatprep.mubr.f32.mxu0 0.0
    %5615 = vmatmul.mubr.f32.gmra.mrb[0].mxu0 %v5217
    %v5616 = vpop.f32.mrb[0].mxu0
    %v5617 = vadd.f32 0.0, %v5616
    %v5618 = vpop.f32.mrb[0].mxu0
    %5619 = vmatprep.mubr.f32.mxu0 0.0
    %5620 = vmatmul.mubr.f32.gmra.mrb[0].mxu0 %v5220
    %v5621 = vpop.f32.mrb[0].mxu0
    %v5622 = vadd.f32 0.0, %v5621
    %v5623 = vpop.f32.mrb[0].mxu0
    %5624 = vmatprep.mubr.f32.mxu0 0.0
    %5625 = vmatmul.mubr.f32.gmra.mrb[0].mxu0 %v5223
    %v5626 = vpop.f32.mrb[0].mxu0
    %v5627 = vadd.f32 0.0, %v5626
    %v5628 = vpop.f32.mrb[0].mxu0
    %5629 = vmatprep.mubr.f32.mxu0 0.0
    %5630 = vmatmul.mubr.f32.gmra.mrb[0].mxu0 %v5226
    %v5631 = vpop.f32.mrb[0].mxu0
    %v5632 = vadd.f32 0.0, %v5631
    %v5633 = vpop.f32.mrb[0].mxu0
    %5634 = vmatprep.mubr.f32.mxu0 0.0
    %5635 = vmatmul.mubr.f32.gmra.mrb[0].mxu0 %v5229
    %v5636 = vpop.f32.mrb[0].mxu0
    %v5637 = vadd.f32 0.0, %v5636
    %v5638 = vpop.f32.mrb[0].mxu0
    %5639 = vmatprep.mubr.f32.mxu0 0.0
    %5640 = vmatmul.mubr.f32.gmra.mrb[0].mxu0 %v5232
    %v5641 = vpop.f32.mrb[0].mxu0
    %v5642 = vadd.f32 0.0, %v5641
    %v5643 = vpop.f32.mrb[0].mxu0
    %5644 = vmatprep.mubr.f32.mxu0 0.0
    %5645 = vmatmul.mubr.f32.gmra.mrb[0].mxu0 %v5235
    %v5646 = vpop.f32.mrb[0].mxu0
    %v5647 = vadd.f32 0.0, %v5646
    %v5648 = vpop.f32.mrb[0].mxu0
    %5649 = vmatprep.mubr.f32.mxu0 0.0
    %5650 = vmatmul.mubr.f32.gmra.mrb[0].mxu0 %v5238
    %v5651 = vpop.f32.mrb[0].mxu0
    %v5652 = vadd.f32 0.0, %v5651
    %v5653 = vpop.f32.mrb[0].mxu0
    %5654 = vdwg.mxu0
    %v5656 = vlaneseq
    %v5657 = vshrl.u32 %v5656, 7
    %v5658 = vsub.s32 0, %v5657
    %v5659 = vrot.slane %v4951, %v5658
    %v5661 = vadd.f32 %v5659, %v5307
    %v5662 = vadd.f32 %v5659, %v5312
    %v5663 = vadd.f32 %v5659, %v5317
    %v5664 = vadd.f32 %v5659, %v5322
    %v5665 = vadd.f32 %v5659, %v5327
    %v5666 = vadd.f32 %v5659, %v5332
    %v5667 = vadd.f32 %v5659, %v5337
    %v5668 = vadd.f32 %v5659, %v5342
    %v5669 = vadd.f32 %v5659, %v5347
    %v5670 = vadd.f32 %v5659, %v5352
    %v5671 = vadd.f32 %v5659, %v5357
    %v5672 = vadd.f32 %v5659, %v5362
    %v5673 = vadd.f32 %v5659, %v5367
    %v5674 = vadd.f32 %v5659, %v5372
    %v5675 = vadd.f32 %v5659, %v5377
    %v5676 = vadd.f32 %v5659, %v5382
    %v5677 = vadd.f32 %v5659, %v5387
    %v5678 = vadd.f32 %v5659, %v5392
    %v5679 = vadd.f32 %v5659, %v5397
    %v5680 = vadd.f32 %v5659, %v5402
    %v5681 = vadd.f32 %v5659, %v5407
    %v5682 = vadd.f32 %v5659, %v5412
    %v5683 = vadd.f32 %v5659, %v5417
    %v5684 = vadd.f32 %v5659, %v5422
    %v5685 = vadd.f32 %v5659, %v5427
    %v5686 = vadd.f32 %v5659, %v5432
    %v5687 = vadd.f32 %v5659, %v5437
    %v5688 = vadd.f32 %v5659, %v5442
    %v5689 = vadd.f32 %v5659, %v5447
    %v5690 = vadd.f32 %v5659, %v5452
    %v5691 = vadd.f32 %v5659, %v5457
    %v5692 = vadd.f32 %v5659, %v5462
    %v5693 = vadd.f32 %v5659, %v5467
    %v5694 = vadd.f32 %v5659, %v5472
    %v5695 = vadd.f32 %v5659, %v5477
    %v5696 = vadd.f32 %v5659, %v5482
    %v5697 = vadd.f32 %v5659, %v5487
    %v5698 = vadd.f32 %v5659, %v5492
    %v5699 = vadd.f32 %v5659, %v5497
    %v5700 = vadd.f32 %v5659, %v5502
    %v5701 = vadd.f32 %v5659, %v5507
    %v5702 = vadd.f32 %v5659, %v5512
    %v5703 = vadd.f32 %v5659, %v5517
    %v5704 = vadd.f32 %v5659, %v5522
    %v5705 = vadd.f32 %v5659, %v5527
    %v5706 = vadd.f32 %v5659, %v5532
    %v5707 = vadd.f32 %v5659, %v5537
    %v5708 = vadd.f32 %v5659, %v5542
    %v5709 = vadd.f32 %v5659, %v5547
    %v5710 = vadd.f32 %v5659, %v5552
    %v5711 = vadd.f32 %v5659, %v5557
    %v5712 = vadd.f32 %v5659, %v5562
    %v5713 = vadd.f32 %v5659, %v5567
    %v5714 = vadd.f32 %v5659, %v5572
    %v5715 = vadd.f32 %v5659, %v5577
    %v5716 = vadd.f32 %v5659, %v5582
    %v5717 = vadd.f32 %v5659, %v5587
    %v5718 = vadd.f32 %v5659, %v5592
    %v5719 = vadd.f32 %v5659, %v5597
    %v5720 = vadd.f32 %v5659, %v5602
    %v5721 = vadd.f32 %v5659, %v5607
    %v5722 = vadd.f32 %v5659, %v5612
    %v5723 = vadd.f32 %v5659, %v5617
    %v5724 = vadd.f32 %v5659, %v5622
    %v5725 = vadd.f32 %v5659, %v5627
    %v5726 = vadd.f32 %v5659, %v5632
    %v5727 = vadd.f32 %v5659, %v5637
    %v5728 = vadd.f32 %v5659, %v5642
    %v5729 = vadd.f32 %v5659, %v5647
    %v5730 = vadd.f32 %v5659, %v5652
    %v5731 = vld [vmem:[#allocation3 + $0x1] sm:$0xff]
    %v5732 = vld [vmem:[#allocation3 + $0x9] sm:$0xff]
    %v5733 = vld [vmem:[#allocation3 + $0x11] sm:$0xff]
    %v5734 = vld [vmem:[#allocation3 + $0x19] sm:$0xff]
    %v5735 = vld [vmem:[#allocation3 + $0x21] sm:$0xff]
    %v5736 = vld [vmem:[#allocation3 + $0x29] sm:$0xff]
    %v5737 = vld [vmem:[#allocation3 + $0x31] sm:$0xff]
    %v5738 = vld [vmem:[#allocation3 + $0x39] sm:$0xff]
    %v5739 = vld [vmem:[#allocation3 + $0x41] sm:$0xff]
    %v5740 = vld [vmem:[#allocation3 + $0x49] sm:$0xff]
    %v5741 = vld [vmem:[#allocation3 + $0x51] sm:$0xff]
    %v5742 = vld [vmem:[#allocation3 + $0x59] sm:$0xff]
    %v5743 = vld [vmem:[#allocation3 + $0x61] sm:$0xff]
    %v5744 = vld [vmem:[#allocation3 + $0x69] sm:$0xff]
    %v5745 = vld [vmem:[#allocation3 + $0x71] sm:$0xff]
    %v5746 = vld [vmem:[#allocation3 + $0x79] sm:$0xff]
    %v5747 = vld [vmem:[#allocation3 + $0x81] sm:$0xff]
    %v5748 = vld [vmem:[#allocation3 + $0x89] sm:$0xff]
    %v5749 = vld [vmem:[#allocation3 + $0x91] sm:$0xff]
    %v5750 = vld [vmem:[#allocation3 + $0x99] sm:$0xff]
    %v5751 = vld [vmem:[#allocation3 + $0xa1] sm:$0xff]
    %v5752 = vld [vmem:[#allocation3 + $0xa9] sm:$0xff]
    %v5753 = vld [vmem:[#allocation3 + $0xb1] sm:$0xff]
    %v5754 = vld [vmem:[#allocation3 + $0xb9] sm:$0xff]
    %v5755 = vld [vmem:[#allocation3 + $0xc1] sm:$0xff]
    %v5756 = vld [vmem:[#allocation3 + $0xc9] sm:$0xff]
    %v5757 = vld [vmem:[#allocation3 + $0xd1] sm:$0xff]
    %v5758 = vld [vmem:[#allocation3 + $0xd9] sm:$0xff]
    %v5759 = vld [vmem:[#allocation3 + $0xe1] sm:$0xff]
    %v5760 = vld [vmem:[#allocation3 + $0xe9] sm:$0xff]
    %v5761 = vld [vmem:[#allocation3 + $0xf1] sm:$0xff]
    %v5762 = vld [vmem:[#allocation3 + $0xf9] sm:$0xff]
    %v5763 = vld [vmem:[#allocation3 + $0x101] sm:$0xff]
    %v5764 = vld [vmem:[#allocation3 + $0x109] sm:$0xff]
    %v5765 = vld [vmem:[#allocation3 + $0x111] sm:$0xff]
    %v5766 = vld [vmem:[#allocation3 + $0x119] sm:$0xff]
    %v5767 = vld [vmem:[#allocation3 + $0x121] sm:$0xff]
    %v5768 = vld [vmem:[#allocation3 + $0x129] sm:$0xff]
    %v5769 = vld [vmem:[#allocation3 + $0x131] sm:$0xff]
    %v5770 = vld [vmem:[#allocation3 + $0x139] sm:$0xff]
    %v5771 = vld [vmem:[#allocation3 + $0x141] sm:$0xff]
    %v5772 = vld [vmem:[#allocation3 + $0x149] sm:$0xff]
    %v5773 = vld [vmem:[#allocation3 + $0x151] sm:$0xff]
    %v5774 = vld [vmem:[#allocation3 + $0x159] sm:$0xff]
    %v5775 = vld [vmem:[#allocation3 + $0x161] sm:$0xff]
    %v5776 = vld [vmem:[#allocation3 + $0x169] sm:$0xff]
    %v5777 = vld [vmem:[#allocation3 + $0x171] sm:$0xff]
    %v5778 = vld [vmem:[#allocation3 + $0x179] sm:$0xff]
    %v5779 = vld [vmem:[#allocation3 + $0x181] sm:$0xff]
    %v5780 = vld [vmem:[#allocation3 + $0x189] sm:$0xff]
    %v5781 = vld [vmem:[#allocation3 + $0x191] sm:$0xff]
    %v5782 = vld [vmem:[#allocation3 + $0x199] sm:$0xff]
    %v5783 = vld [vmem:[#allocation3 + $0x1a1] sm:$0xff]
    %v5784 = vld [vmem:[#allocation3 + $0x1a9] sm:$0xff]
    %v5785 = vld [vmem:[#allocation3 + $0x1b1] sm:$0xff]
    %v5786 = vld [vmem:[#allocation3 + $0x1b9] sm:$0xff]
    %v5787 = vld [vmem:[#allocation3 + $0x1c1] sm:$0xff]
    %v5788 = vld [vmem:[#allocation3 + $0x1c9] sm:$0xff]
    %v5789 = vld [vmem:[#allocation3 + $0x1d1] sm:$0xff]
    %v5790 = vld [vmem:[#allocation3 + $0x1d9] sm:$0xff]
    %v5791 = vld [vmem:[#allocation3 + $0x1e1] sm:$0xff]
    %v5792 = vld [vmem:[#allocation3 + $0x1e9] sm:$0xff]
    %v5793 = vld [vmem:[#allocation3 + $0x1f1] sm:$0xff]
    %v5794 = vld [vmem:[#allocation3 + $0x1f9] sm:$0xff]
    %v5795 = vld [vmem:[#allocation3 + $0x201] sm:$0xff]
    %v5796 = vld [vmem:[#allocation3 + $0x209] sm:$0xff]
    %v5797 = vld [vmem:[#allocation3 + $0x211] sm:$0xff]
    %v5798 = vld [vmem:[#allocation3 + $0x219] sm:$0xff]
    %v5799 = vld [vmem:[#allocation3 + $0x221] sm:$0xff]
    %v5800 = vld [vmem:[#allocation3 + $0x229] sm:$0xff]
    %s5801 = scalar_lea.vmem %s7, 64
    %v5802 = vld [vmem:[%s5801] sm:$0xff]
    %v5803 = vld [vmem:[%s5801 + $0x8] sm:$0xff]
    %v5804 = vld [vmem:[%s5801 + $0x10] sm:$0xff]
    %v5805 = vld [vmem:[%s5801 + $0x18] sm:$0xff]
    %v5806 = vld [vmem:[%s5801 + $0x20] sm:$0xff]
    %v5807 = vld [vmem:[%s5801 + $0x28] sm:$0xff]
    %v5808 = vld [vmem:[%s5801 + $0x30] sm:$0xff]
    %v5809 = vld [vmem:[%s5801 + $0x38] sm:$0xff]
    %v5811 = vsel %vm4008, %v5731, 0
    %v5814 = vsel %vm4008, %v5732, 0
    %v5817 = vsel %vm4008, %v5733, 0
    %v5820 = vsel %vm4008, %v5734, 0
    %v5823 = vsel %vm4008, %v5735, 0
    %v5826 = vsel %vm4008, %v5736, 0
    %v5829 = vsel %vm4008, %v5737, 0
    %v5832 = vsel %vm4008, %v5738, 0
    %v5835 = vsel %vm4008, %v5739, 0
    %v5838 = vsel %vm4008, %v5740, 0
    %v5841 = vsel %vm4008, %v5741, 0
    %v5844 = vsel %vm4008, %v5742, 0
    %v5847 = vsel %vm4008, %v5743, 0
    %v5850 = vsel %vm4008, %v5744, 0
    %v5853 = vsel %vm4008, %v5745, 0
    %v5856 = vsel %vm4008, %v5746, 0
    %v5859 = vsel %vm4008, %v5747, 0
    %v5862 = vsel %vm4008, %v5748, 0
    %v5865 = vsel %vm4008, %v5749, 0
    %v5868 = vsel %vm4008, %v5750, 0
    %v5871 = vsel %vm4008, %v5751, 0
    %v5874 = vsel %vm4008, %v5752, 0
    %v5877 = vsel %vm4008, %v5753, 0
    %v5880 = vsel %vm4008, %v5754, 0
    %v5883 = vsel %vm4008, %v5755, 0
    %v5886 = vsel %vm4008, %v5756, 0
    %v5889 = vsel %vm4008, %v5757, 0
    %v5892 = vsel %vm4008, %v5758, 0
    %v5895 = vsel %vm4008, %v5759, 0
    %v5898 = vsel %vm4008, %v5760, 0
    %v5901 = vsel %vm4008, %v5761, 0
    %v5904 = vsel %vm4008, %v5762, 0
    %v5907 = vsel %vm4008, %v5763, 0
    %v5910 = vsel %vm4008, %v5764, 0
    %v5913 = vsel %vm4008, %v5765, 0
    %v5916 = vsel %vm4008, %v5766, 0
    %v5919 = vsel %vm4008, %v5767, 0
    %v5922 = vsel %vm4008, %v5768, 0
    %v5925 = vsel %vm4008, %v5769, 0
    %v5928 = vsel %vm4008, %v5770, 0
    %v5931 = vsel %vm4008, %v5771, 0
    %v5934 = vsel %vm4008, %v5772, 0
    %v5937 = vsel %vm4008, %v5773, 0
    %v5940 = vsel %vm4008, %v5774, 0
    %v5943 = vsel %vm4008, %v5775, 0
    %v5946 = vsel %vm4008, %v5776, 0
    %v5949 = vsel %vm4008, %v5777, 0
    %v5952 = vsel %vm4008, %v5778, 0
    %v5955 = vsel %vm4008, %v5779, 0
    %v5958 = vsel %vm4008, %v5780, 0
    %v5961 = vsel %vm4008, %v5781, 0
    %v5964 = vsel %vm4008, %v5782, 0
    %v5967 = vsel %vm4008, %v5783, 0
    %v5970 = vsel %vm4008, %v5784, 0
    %v5973 = vsel %vm4008, %v5785, 0
    %v5976 = vsel %vm4008, %v5786, 0
    %v5979 = vsel %vm4008, %v5787, 0
    %v5982 = vsel %vm4008, %v5788, 0
    %v5985 = vsel %vm4008, %v5789, 0
    %v5988 = vsel %vm4008, %v5790, 0
    %v5991 = vsel %vm4008, %v5791, 0
    %v5994 = vsel %vm4008, %v5792, 0
    %v5997 = vsel %vm4008, %v5793, 0
    %v6000 = vsel %vm4008, %v5794, 0
    %v6003 = vsel %vm4008, %v5795, 0
    %v6006 = vsel %vm4008, %v5796, 0
    %v6009 = vsel %vm4008, %v5797, 0
    %v6012 = vsel %vm4008, %v5798, 0
    %v6015 = vsel %vm4008, %v5799, 0
    %v6018 = vsel %vm4008, %v5800, 0
    %6020 = vmatprep.subr.mxu0 0.0
    %6021 = vmatpush1.msra.mxu0 %v5802
    %6022 = vmatprep.subr.mxu0 0.0
    %6023 = vmatpush1.msra.mxu0 %v5803
    %6024 = vmatprep.subr.mxu0 0.0
    %6025 = vmatpush1.msra.mxu0 %v5804
    %6026 = vmatprep.subr.mxu0 0.0
    %6027 = vmatpush1.msra.mxu0 %v5805
    %6028 = vmatprep.subr.mxu0 0.0
    %6029 = vmatpush1.msra.mxu0 %v5806
    %6030 = vmatprep.subr.mxu0 0.0
    %6031 = vmatpush1.msra.mxu0 %v5807
    %6032 = vmatprep.subr.mxu0 0.0
    %6033 = vmatpush1.msra.mxu0 %v5808
    %6034 = vmatprep.subr.mxu0 0.0
    %6035 = vmatpush1.msra.mxu0 %v5809
    %6036 = vmatprep.subr.mxu0 0.0
    %6037 = vmatpush1.msra.mxu0 0.0
    %6038 = vmatprep.subr.mxu0 0.0
    %6039 = vmatpush1.msra.mxu0 0.0
    %6040 = vmatprep.subr.mxu0 0.0
    %6041 = vmatpush1.msra.mxu0 0.0
    %6042 = vmatprep.subr.mxu0 0.0
    %6043 = vmatpush1.msra.mxu0 0.0
    %6044 = vmatprep.subr.mxu0 0.0
    %6045 = vmatpush1.msra.mxu0 0.0
    %6046 = vmatprep.subr.mxu0 0.0
    %6047 = vmatpush1.msra.mxu0 0.0
    %6048 = vmatprep.subr.mxu0 0.0
    %6049 = vmatpush1.msra.mxu0 0.0
    %6050 = vmatprep.subr.mxu0 0.0
    %6051 = vmatpush1.msra.mxu0 0.0
    %6052 = vmatprep.subr.mxu0 0.0
    %6053 = vmatpush1.msra.mxu0 0.0
    %6054 = vmatprep.subr.mxu0 0.0
    %6055 = vmatpush1.msra.mxu0 0.0
    %6056 = vmatprep.subr.mxu0 0.0
    %6057 = vmatpush1.msra.mxu0 0.0
    %6058 = vmatprep.subr.mxu0 0.0
    %6059 = vmatpush1.msra.mxu0 0.0
    %6060 = vmatprep.subr.mxu0 0.0
    %6061 = vmatpush1.msra.mxu0 0.0
    %6062 = vmatprep.subr.mxu0 0.0
    %6063 = vmatpush1.msra.mxu0 0.0
    %6064 = vmatprep.subr.mxu0 0.0
    %6065 = vmatpush1.msra.mxu0 0.0
    %6066 = vmatprep.subr.mxu0 0.0
    %6067 = vmatpush1.msra.mxu0 0.0
    %6068 = vmatprep.subr.mxu0 0.0
    %6069 = vmatpush1.msra.mxu0 0.0
    %6070 = vmatprep.subr.mxu0 0.0
    %6071 = vmatpush1.msra.mxu0 0.0
    %6072 = vmatprep.subr.mxu0 0.0
    %6073 = vmatpush1.msra.mxu0 0.0
    %6074 = vmatprep.subr.mxu0 0.0
    %6075 = vmatpush1.msra.mxu0 0.0
    %6076 = vmatprep.subr.mxu0 0.0
    %6077 = vmatpush1.msra.mxu0 0.0
    %6078 = vmatprep.subr.mxu0 0.0
    %6079 = vmatpush1.msra.mxu0 0.0
    %6080 = vmatprep.subr.mxu0 0.0
    %6081 = vmatpush1.msra.mxu0 0.0
    %6082 = vmatprep.subr.mxu0 0.0
    %6083 = vmatpush1.msra.mxu0 0.0
    %6084 = vmatprep.mubr.f32.mxu0 0.0
    %6085 = vmatmul.mubr.f32.gmra.mrb[0].mxu0 %v5811
    %v6086 = vpop.f32.mrb[0].mxu0
    %v6087 = vadd.f32 0.0, %v6086
    %v6088 = vpop.f32.mrb[0].mxu0
    %6089 = vmatprep.mubr.f32.mxu0 0.0
    %6090 = vmatmul.mubr.f32.gmra.mrb[0].mxu0 %v5814
    %v6091 = vpop.f32.mrb[0].mxu0
    %v6092 = vadd.f32 0.0, %v6091
    %v6093 = vpop.f32.mrb[0].mxu0
    %6094 = vmatprep.mubr.f32.mxu0 0.0
    %6095 = vmatmul.mubr.f32.gmra.mrb[0].mxu0 %v5817
    %v6096 = vpop.f32.mrb[0].mxu0
    %v6097 = vadd.f32 0.0, %v6096
    %v6098 = vpop.f32.mrb[0].mxu0
    %6099 = vmatprep.mubr.f32.mxu0 0.0
    %6100 = vmatmul.mubr.f32.gmra.mrb[0].mxu0 %v5820
    %v6101 = vpop.f32.mrb[0].mxu0
    %v6102 = vadd.f32 0.0, %v6101
    %v6103 = vpop.f32.mrb[0].mxu0
    %6104 = vmatprep.mubr.f32.mxu0 0.0
    %6105 = vmatmul.mubr.f32.gmra.mrb[0].mxu0 %v5823
    %v6106 = vpop.f32.mrb[0].mxu0
    %v6107 = vadd.f32 0.0, %v6106
    %v6108 = vpop.f32.mrb[0].mxu0
    %6109 = vmatprep.mubr.f32.mxu0 0.0
    %6110 = vmatmul.mubr.f32.gmra.mrb[0].mxu0 %v5826
    %v6111 = vpop.f32.mrb[0].mxu0
    %v6112 = vadd.f32 0.0, %v6111
    %v6113 = vpop.f32.mrb[0].mxu0
    %6114 = vmatprep.mubr.f32.mxu0 0.0
    %6115 = vmatmul.mubr.f32.gmra.mrb[0].mxu0 %v5829
    %v6116 = vpop.f32.mrb[0].mxu0
    %v6117 = vadd.f32 0.0, %v6116
    %v6118 = vpop.f32.mrb[0].mxu0
    %6119 = vmatprep.mubr.f32.mxu0 0.0
    %6120 = vmatmul.mubr.f32.gmra.mrb[0].mxu0 %v5832
    %v6121 = vpop.f32.mrb[0].mxu0
    %v6122 = vadd.f32 0.0, %v6121
    %v6123 = vpop.f32.mrb[0].mxu0
    %6124 = vmatprep.mubr.f32.mxu0 0.0
    %6125 = vmatmul.mubr.f32.gmra.mrb[0].mxu0 %v5835
    %v6126 = vpop.f32.mrb[0].mxu0
    %v6127 = vadd.f32 0.0, %v6126
    %v6128 = vpop.f32.mrb[0].mxu0
    %6129 = vmatprep.mubr.f32.mxu0 0.0
    %6130 = vmatmul.mubr.f32.gmra.mrb[0].mxu0 %v5838
    %v6131 = vpop.f32.mrb[0].mxu0
    %v6132 = vadd.f32 0.0, %v6131
    %v6133 = vpop.f32.mrb[0].mxu0
    %6134 = vmatprep.mubr.f32.mxu0 0.0
    %6135 = vmatmul.mubr.f32.gmra.mrb[0].mxu0 %v5841
    %v6136 = vpop.f32.mrb[0].mxu0
    %v6137 = vadd.f32 0.0, %v6136
    %v6138 = vpop.f32.mrb[0].mxu0
    %6139 = vmatprep.mubr.f32.mxu0 0.0
    %6140 = vmatmul.mubr.f32.gmra.mrb[0].mxu0 %v5844
    %v6141 = vpop.f32.mrb[0].mxu0
    %v6142 = vadd.f32 0.0, %v6141
    %v6143 = vpop.f32.mrb[0].mxu0
    %6144 = vmatprep.mubr.f32.mxu0 0.0
    %6145 = vmatmul.mubr.f32.gmra.mrb[0].mxu0 %v5847
    %v6146 = vpop.f32.mrb[0].mxu0
    %v6147 = vadd.f32 0.0, %v6146
    %v6148 = vpop.f32.mrb[0].mxu0
    %6149 = vmatprep.mubr.f32.mxu0 0.0
    %6150 = vmatmul.mubr.f32.gmra.mrb[0].mxu0 %v5850
    %v6151 = vpop.f32.mrb[0].mxu0
    %v6152 = vadd.f32 0.0, %v6151
    %v6153 = vpop.f32.mrb[0].mxu0
    %6154 = vmatprep.mubr.f32.mxu0 0.0
    %6155 = vmatmul.mubr.f32.gmra.mrb[0].mxu0 %v5853
    %v6156 = vpop.f32.mrb[0].mxu0
    %v6157 = vadd.f32 0.0, %v6156
    %v6158 = vpop.f32.mrb[0].mxu0
    %6159 = vmatprep.mubr.f32.mxu0 0.0
    %6160 = vmatmul.mubr.f32.gmra.mrb[0].mxu0 %v5856
    %v6161 = vpop.f32.mrb[0].mxu0
    %v6162 = vadd.f32 0.0, %v6161
    %v6163 = vpop.f32.mrb[0].mxu0
    %6164 = vmatprep.mubr.f32.mxu0 0.0
    %6165 = vmatmul.mubr.f32.gmra.mrb[0].mxu0 %v5859
    %v6166 = vpop.f32.mrb[0].mxu0
    %v6167 = vadd.f32 0.0, %v6166
    %v6168 = vpop.f32.mrb[0].mxu0
    %6169 = vmatprep.mubr.f32.mxu0 0.0
    %6170 = vmatmul.mubr.f32.gmra.mrb[0].mxu0 %v5862
    %v6171 = vpop.f32.mrb[0].mxu0
    %v6172 = vadd.f32 0.0, %v6171
    %v6173 = vpop.f32.mrb[0].mxu0
    %6174 = vmatprep.mubr.f32.mxu0 0.0
    %6175 = vmatmul.mubr.f32.gmra.mrb[0].mxu0 %v5865
    %v6176 = vpop.f32.mrb[0].mxu0
    %v6177 = vadd.f32 0.0, %v6176
    %v6178 = vpop.f32.mrb[0].mxu0
    %6179 = vmatprep.mubr.f32.mxu0 0.0
    %6180 = vmatmul.mubr.f32.gmra.mrb[0].mxu0 %v5868
    %v6181 = vpop.f32.mrb[0].mxu0
    %v6182 = vadd.f32 0.0, %v6181
    %v6183 = vpop.f32.mrb[0].mxu0
    %6184 = vmatprep.mubr.f32.mxu0 0.0
    %6185 = vmatmul.mubr.f32.gmra.mrb[0].mxu0 %v5871
    %v6186 = vpop.f32.mrb[0].mxu0
    %v6187 = vadd.f32 0.0, %v6186
    %v6188 = vpop.f32.mrb[0].mxu0
    %6189 = vmatprep.mubr.f32.mxu0 0.0
    %6190 = vmatmul.mubr.f32.gmra.mrb[0].mxu0 %v5874
    %v6191 = vpop.f32.mrb[0].mxu0
    %v6192 = vadd.f32 0.0, %v6191
    %v6193 = vpop.f32.mrb[0].mxu0
    %6194 = vmatprep.mubr.f32.mxu0 0.0
    %6195 = vmatmul.mubr.f32.gmra.mrb[0].mxu0 %v5877
    %v6196 = vpop.f32.mrb[0].mxu0
    %v6197 = vadd.f32 0.0, %v6196
    %v6198 = vpop.f32.mrb[0].mxu0
    %6199 = vmatprep.mubr.f32.mxu0 0.0
    %6200 = vmatmul.mubr.f32.gmra.mrb[0].mxu0 %v5880
    %v6201 = vpop.f32.mrb[0].mxu0
    %v6202 = vadd.f32 0.0, %v6201
    %v6203 = vpop.f32.mrb[0].mxu0
    %6204 = vmatprep.mubr.f32.mxu0 0.0
    %6205 = vmatmul.mubr.f32.gmra.mrb[0].mxu0 %v5883
    %v6206 = vpop.f32.mrb[0].mxu0
    %v6207 = vadd.f32 0.0, %v6206
    %v6208 = vpop.f32.mrb[0].mxu0
    %6209 = vmatprep.mubr.f32.mxu0 0.0
    %6210 = vmatmul.mubr.f32.gmra.mrb[0].mxu0 %v5886
    %v6211 = vpop.f32.mrb[0].mxu0
    %v6212 = vadd.f32 0.0, %v6211
    %v6213 = vpop.f32.mrb[0].mxu0
    %6214 = vmatprep.mubr.f32.mxu0 0.0
    %6215 = vmatmul.mubr.f32.gmra.mrb[0].mxu0 %v5889
    %v6216 = vpop.f32.mrb[0].mxu0
    %v6217 = vadd.f32 0.0, %v6216
    %v6218 = vpop.f32.mrb[0].mxu0
    %6219 = vmatprep.mubr.f32.mxu0 0.0
    %6220 = vmatmul.mubr.f32.gmra.mrb[0].mxu0 %v5892
    %v6221 = vpop.f32.mrb[0].mxu0
    %v6222 = vadd.f32 0.0, %v6221
    %v6223 = vpop.f32.mrb[0].mxu0
    %6224 = vmatprep.mubr.f32.mxu0 0.0
    %6225 = vmatmul.mubr.f32.gmra.mrb[0].mxu0 %v5895
    %v6226 = vpop.f32.mrb[0].mxu0
    %v6227 = vadd.f32 0.0, %v6226
    %v6228 = vpop.f32.mrb[0].mxu0
    %6229 = vmatprep.mubr.f32.mxu0 0.0
    %6230 = vmatmul.mubr.f32.gmra.mrb[0].mxu0 %v5898
    %v6231 = vpop.f32.mrb[0].mxu0
    %v6232 = vadd.f32 0.0, %v6231
    %v6233 = vpop.f32.mrb[0].mxu0
    %6234 = vmatprep.mubr.f32.mxu0 0.0
    %6235 = vmatmul.mubr.f32.gmra.mrb[0].mxu0 %v5901
    %v6236 = vpop.f32.mrb[0].mxu0
    %v6237 = vadd.f32 0.0, %v6236
    %v6238 = vpop.f32.mrb[0].mxu0
    %6239 = vmatprep.mubr.f32.mxu0 0.0
    %6240 = vmatmul.mubr.f32.gmra.mrb[0].mxu0 %v5904
    %v6241 = vpop.f32.mrb[0].mxu0
    %v6242 = vadd.f32 0.0, %v6241
    %v6243 = vpop.f32.mrb[0].mxu0
    %6244 = vmatprep.mubr.f32.mxu0 0.0
    %6245 = vmatmul.mubr.f32.gmra.mrb[0].mxu0 %v5907
    %v6246 = vpop.f32.mrb[0].mxu0
    %v6247 = vadd.f32 0.0, %v6246
    %v6248 = vpop.f32.mrb[0].mxu0
    %6249 = vmatprep.mubr.f32.mxu0 0.0
    %6250 = vmatmul.mubr.f32.gmra.mrb[0].mxu0 %v5910
    %v6251 = vpop.f32.mrb[0].mxu0
    %v6252 = vadd.f32 0.0, %v6251
    %v6253 = vpop.f32.mrb[0].mxu0
    %6254 = vmatprep.mubr.f32.mxu0 0.0
    %6255 = vmatmul.mubr.f32.gmra.mrb[0].mxu0 %v5913
    %v6256 = vpop.f32.mrb[0].mxu0
    %v6257 = vadd.f32 0.0, %v6256
    %v6258 = vpop.f32.mrb[0].mxu0
    %6259 = vmatprep.mubr.f32.mxu0 0.0
    %6260 = vmatmul.mubr.f32.gmra.mrb[0].mxu0 %v5916
    %v6261 = vpop.f32.mrb[0].mxu0
    %v6262 = vadd.f32 0.0, %v6261
    %v6263 = vpop.f32.mrb[0].mxu0
    %6264 = vmatprep.mubr.f32.mxu0 0.0
    %6265 = vmatmul.mubr.f32.gmra.mrb[0].mxu0 %v5919
    %v6266 = vpop.f32.mrb[0].mxu0
    %v6267 = vadd.f32 0.0, %v6266
    %v6268 = vpop.f32.mrb[0].mxu0
    %6269 = vmatprep.mubr.f32.mxu0 0.0
    %6270 = vmatmul.mubr.f32.gmra.mrb[0].mxu0 %v5922
    %v6271 = vpop.f32.mrb[0].mxu0
    %v6272 = vadd.f32 0.0, %v6271
    %v6273 = vpop.f32.mrb[0].mxu0
    %6274 = vmatprep.mubr.f32.mxu0 0.0
    %6275 = vmatmul.mubr.f32.gmra.mrb[0].mxu0 %v5925
    %v6276 = vpop.f32.mrb[0].mxu0
    %v6277 = vadd.f32 0.0, %v6276
    %v6278 = vpop.f32.mrb[0].mxu0
    %6279 = vmatprep.mubr.f32.mxu0 0.0
    %6280 = vmatmul.mubr.f32.gmra.mrb[0].mxu0 %v5928
    %v6281 = vpop.f32.mrb[0].mxu0
    %v6282 = vadd.f32 0.0, %v6281
    %v6283 = vpop.f32.mrb[0].mxu0
    %6284 = vmatprep.mubr.f32.mxu0 0.0
    %6285 = vmatmul.mubr.f32.gmra.mrb[0].mxu0 %v5931
    %v6286 = vpop.f32.mrb[0].mxu0
    %v6287 = vadd.f32 0.0, %v6286
    %v6288 = vpop.f32.mrb[0].mxu0
    %6289 = vmatprep.mubr.f32.mxu0 0.0
    %6290 = vmatmul.mubr.f32.gmra.mrb[0].mxu0 %v5934
    %v6291 = vpop.f32.mrb[0].mxu0
    %v6292 = vadd.f32 0.0, %v6291
    %v6293 = vpop.f32.mrb[0].mxu0
    %6294 = vmatprep.mubr.f32.mxu0 0.0
    %6295 = vmatmul.mubr.f32.gmra.mrb[0].mxu0 %v5937
    %v6296 = vpop.f32.mrb[0].mxu0
    %v6297 = vadd.f32 0.0, %v6296
    %v6298 = vpop.f32.mrb[0].mxu0
    %6299 = vmatprep.mubr.f32.mxu0 0.0
    %6300 = vmatmul.mubr.f32.gmra.mrb[0].mxu0 %v5940
    %v6301 = vpop.f32.mrb[0].mxu0
    %v6302 = vadd.f32 0.0, %v6301
    %v6303 = vpop.f32.mrb[0].mxu0
    %6304 = vmatprep.mubr.f32.mxu0 0.0
    %6305 = vmatmul.mubr.f32.gmra.mrb[0].mxu0 %v5943
    %v6306 = vpop.f32.mrb[0].mxu0
    %v6307 = vadd.f32 0.0, %v6306
    %v6308 = vpop.f32.mrb[0].mxu0
    %6309 = vmatprep.mubr.f32.mxu0 0.0
    %6310 = vmatmul.mubr.f32.gmra.mrb[0].mxu0 %v5946
    %v6311 = vpop.f32.mrb[0].mxu0
    %v6312 = vadd.f32 0.0, %v6311
    %v6313 = vpop.f32.mrb[0].mxu0
    %6314 = vmatprep.mubr.f32.mxu0 0.0
    %6315 = vmatmul.mubr.f32.gmra.mrb[0].mxu0 %v5949
    %v6316 = vpop.f32.mrb[0].mxu0
    %v6317 = vadd.f32 0.0, %v6316
    %v6318 = vpop.f32.mrb[0].mxu0
    %6319 = vmatprep.mubr.f32.mxu0 0.0
    %6320 = vmatmul.mubr.f32.gmra.mrb[0].mxu0 %v5952
    %v6321 = vpop.f32.mrb[0].mxu0
    %v6322 = vadd.f32 0.0, %v6321
    %v6323 = vpop.f32.mrb[0].mxu0
    %6324 = vmatprep.mubr.f32.mxu0 0.0
    %6325 = vmatmul.mubr.f32.gmra.mrb[0].mxu0 %v5955
    %v6326 = vpop.f32.mrb[0].mxu0
    %v6327 = vadd.f32 0.0, %v6326
    %v6328 = vpop.f32.mrb[0].mxu0
    %6329 = vmatprep.mubr.f32.mxu0 0.0
    %6330 = vmatmul.mubr.f32.gmra.mrb[0].mxu0 %v5958
    %v6331 = vpop.f32.mrb[0].mxu0
    %v6332 = vadd.f32 0.0, %v6331
    %v6333 = vpop.f32.mrb[0].mxu0
    %6334 = vmatprep.mubr.f32.mxu0 0.0
    %6335 = vmatmul.mubr.f32.gmra.mrb[0].mxu0 %v5961
    %v6336 = vpop.f32.mrb[0].mxu0
    %v6337 = vadd.f32 0.0, %v6336
    %v6338 = vpop.f32.mrb[0].mxu0
    %6339 = vmatprep.mubr.f32.mxu0 0.0
    %6340 = vmatmul.mubr.f32.gmra.mrb[0].mxu0 %v5964
    %v6341 = vpop.f32.mrb[0].mxu0
    %v6342 = vadd.f32 0.0, %v6341
    %v6343 = vpop.f32.mrb[0].mxu0
    %6344 = vmatprep.mubr.f32.mxu0 0.0
    %6345 = vmatmul.mubr.f32.gmra.mrb[0].mxu0 %v5967
    %v6346 = vpop.f32.mrb[0].mxu0
    %v6347 = vadd.f32 0.0, %v6346
    %v6348 = vpop.f32.mrb[0].mxu0
    %6349 = vmatprep.mubr.f32.mxu0 0.0
    %6350 = vmatmul.mubr.f32.gmra.mrb[0].mxu0 %v5970
    %v6351 = vpop.f32.mrb[0].mxu0
    %v6352 = vadd.f32 0.0, %v6351
    %v6353 = vpop.f32.mrb[0].mxu0
    %6354 = vmatprep.mubr.f32.mxu0 0.0
    %6355 = vmatmul.mubr.f32.gmra.mrb[0].mxu0 %v5973
    %v6356 = vpop.f32.mrb[0].mxu0
    %v6357 = vadd.f32 0.0, %v6356
    %v6358 = vpop.f32.mrb[0].mxu0
    %6359 = vmatprep.mubr.f32.mxu0 0.0
    %6360 = vmatmul.mubr.f32.gmra.mrb[0].mxu0 %v5976
    %v6361 = vpop.f32.mrb[0].mxu0
    %v6362 = vadd.f32 0.0, %v6361
    %v6363 = vpop.f32.mrb[0].mxu0
    %6364 = vmatprep.mubr.f32.mxu0 0.0
    %6365 = vmatmul.mubr.f32.gmra.mrb[0].mxu0 %v5979
    %v6366 = vpop.f32.mrb[0].mxu0
    %v6367 = vadd.f32 0.0, %v6366
    %v6368 = vpop.f32.mrb[0].mxu0
    %6369 = vmatprep.mubr.f32.mxu0 0.0
    %6370 = vmatmul.mubr.f32.gmra.mrb[0].mxu0 %v5982
    %v6371 = vpop.f32.mrb[0].mxu0
    %v6372 = vadd.f32 0.0, %v6371
    %v6373 = vpop.f32.mrb[0].mxu0
    %6374 = vmatprep.mubr.f32.mxu0 0.0
    %6375 = vmatmul.mubr.f32.gmra.mrb[0].mxu0 %v5985
    %v6376 = vpop.f32.mrb[0].mxu0
    %v6377 = vadd.f32 0.0, %v6376
    %v6378 = vpop.f32.mrb[0].mxu0
    %6379 = vmatprep.mubr.f32.mxu0 0.0
    %6380 = vmatmul.mubr.f32.gmra.mrb[0].mxu0 %v5988
    %v6381 = vpop.f32.mrb[0].mxu0
    %v6382 = vadd.f32 0.0, %v6381
    %v6383 = vpop.f32.mrb[0].mxu0
    %6384 = vmatprep.mubr.f32.mxu0 0.0
    %6385 = vmatmul.mubr.f32.gmra.mrb[0].mxu0 %v5991
    %v6386 = vpop.f32.mrb[0].mxu0
    %v6387 = vadd.f32 0.0, %v6386
    %v6388 = vpop.f32.mrb[0].mxu0
    %6389 = vmatprep.mubr.f32.mxu0 0.0
    %6390 = vmatmul.mubr.f32.gmra.mrb[0].mxu0 %v5994
    %v6391 = vpop.f32.mrb[0].mxu0
    %v6392 = vadd.f32 0.0, %v6391
    %v6393 = vpop.f32.mrb[0].mxu0
    %6394 = vmatprep.mubr.f32.mxu0 0.0
    %6395 = vmatmul.mubr.f32.gmra.mrb[0].mxu0 %v5997
    %v6396 = vpop.f32.mrb[0].mxu0
    %v6397 = vadd.f32 0.0, %v6396
    %v6398 = vpop.f32.mrb[0].mxu0
    %6399 = vmatprep.mubr.f32.mxu0 0.0
    %6400 = vmatmul.mubr.f32.gmra.mrb[0].mxu0 %v6000
    %v6401 = vpop.f32.mrb[0].mxu0
    %v6402 = vadd.f32 0.0, %v6401
    %v6403 = vpop.f32.mrb[0].mxu0
    %6404 = vmatprep.mubr.f32.mxu0 0.0
    %6405 = vmatmul.mubr.f32.gmra.mrb[0].mxu0 %v6003
    %v6406 = vpop.f32.mrb[0].mxu0
    %v6407 = vadd.f32 0.0, %v6406
    %v6408 = vpop.f32.mrb[0].mxu0
    %6409 = vmatprep.mubr.f32.mxu0 0.0
    %6410 = vmatmul.mubr.f32.gmra.mrb[0].mxu0 %v6006
    %v6411 = vpop.f32.mrb[0].mxu0
    %v6412 = vadd.f32 0.0, %v6411
    %v6413 = vpop.f32.mrb[0].mxu0
    %6414 = vmatprep.mubr.f32.mxu0 0.0
    %6415 = vmatmul.mubr.f32.gmra.mrb[0].mxu0 %v6009
    %v6416 = vpop.f32.mrb[0].mxu0
    %v6417 = vadd.f32 0.0, %v6416
    %v6418 = vpop.f32.mrb[0].mxu0
    %6419 = vmatprep.mubr.f32.mxu0 0.0
    %6420 = vmatmul.mubr.f32.gmra.mrb[0].mxu0 %v6012
    %v6421 = vpop.f32.mrb[0].mxu0
    %v6422 = vadd.f32 0.0, %v6421
    %v6423 = vpop.f32.mrb[0].mxu0
    %6424 = vmatprep.mubr.f32.mxu0 0.0
    %6425 = vmatmul.mubr.f32.gmra.mrb[0].mxu0 %v6015
    %v6426 = vpop.f32.mrb[0].mxu0
    %v6427 = vadd.f32 0.0, %v6426
    %v6428 = vpop.f32.mrb[0].mxu0
    %6429 = vmatprep.mubr.f32.mxu0 0.0
    %6430 = vmatmul.mubr.f32.gmra.mrb[0].mxu0 %v6018
    %v6431 = vpop.f32.mrb[0].mxu0
    %v6432 = vadd.f32 0.0, %v6431
    %v6433 = vpop.f32.mrb[0].mxu0
    %6434 = vdwg.mxu0
    %v6435 = vadd.f32 %v5661, %v6087
    %v6436 = vadd.f32 %v5662, %v6092
    %v6437 = vadd.f32 %v5663, %v6097
    %v6438 = vadd.f32 %v5664, %v6102
    %v6439 = vadd.f32 %v5665, %v6107
    %v6440 = vadd.f32 %v5666, %v6112
    %v6441 = vadd.f32 %v5667, %v6117
    %v6442 = vadd.f32 %v5668, %v6122
    %v6443 = vadd.f32 %v5669, %v6127
    %v6444 = vadd.f32 %v5670, %v6132
    %v6445 = vadd.f32 %v5671, %v6137
    %v6446 = vadd.f32 %v5672, %v6142
    %v6447 = vadd.f32 %v5673, %v6147
    %v6448 = vadd.f32 %v5674, %v6152
    %v6449 = vadd.f32 %v5675, %v6157
    %v6450 = vadd.f32 %v5676, %v6162
    %v6451 = vadd.f32 %v5677, %v6167
    %v6452 = vadd.f32 %v5678, %v6172
    %v6453 = vadd.f32 %v5679, %v6177
    %v6454 = vadd.f32 %v5680, %v6182
    %v6455 = vadd.f32 %v5681, %v6187
    %v6456 = vadd.f32 %v5682, %v6192
    %v6457 = vadd.f32 %v5683, %v6197
    %v6458 = vadd.f32 %v5684, %v6202
    %v6459 = vadd.f32 %v5685, %v6207
    %v6460 = vadd.f32 %v5686, %v6212
    %v6461 = vadd.f32 %v5687, %v6217
    %v6462 = vadd.f32 %v5688, %v6222
    %v6463 = vadd.f32 %v5689, %v6227
    %v6464 = vadd.f32 %v5690, %v6232
    %v6465 = vadd.f32 %v5691, %v6237
    %v6466 = vadd.f32 %v5692, %v6242
    %v6467 = vadd.f32 %v5693, %v6247
    %v6468 = vadd.f32 %v5694, %v6252
    %v6469 = vadd.f32 %v5695, %v6257
    %v6470 = vadd.f32 %v5696, %v6262
    %v6471 = vadd.f32 %v5697, %v6267
    %v6472 = vadd.f32 %v5698, %v6272
    %v6473 = vadd.f32 %v5699, %v6277
    %v6474 = vadd.f32 %v5700, %v6282
    %v6475 = vadd.f32 %v5701, %v6287
    %v6476 = vadd.f32 %v5702, %v6292
    %v6477 = vadd.f32 %v5703, %v6297
    %v6478 = vadd.f32 %v5704, %v6302
    %v6479 = vadd.f32 %v5705, %v6307
    %v6480 = vadd.f32 %v5706, %v6312
    %v6481 = vadd.f32 %v5707, %v6317
    %v6482 = vadd.f32 %v5708, %v6322
    %v6483 = vadd.f32 %v5709, %v6327
    %v6484 = vadd.f32 %v5710, %v6332
    %v6485 = vadd.f32 %v5711, %v6337
    %v6486 = vadd.f32 %v5712, %v6342
    %v6487 = vadd.f32 %v5713, %v6347
    %v6488 = vadd.f32 %v5714, %v6352
    %v6489 = vadd.f32 %v5715, %v6357
    %v6490 = vadd.f32 %v5716, %v6362
    %v6491 = vadd.f32 %v5717, %v6367
    %v6492 = vadd.f32 %v5718, %v6372
    %v6493 = vadd.f32 %v5719, %v6377
    %v6494 = vadd.f32 %v5720, %v6382
    %v6495 = vadd.f32 %v5721, %v6387
    %v6496 = vadd.f32 %v5722, %v6392
    %v6497 = vadd.f32 %v5723, %v6397
    %v6498 = vadd.f32 %v5724, %v6402
    %v6499 = vadd.f32 %v5725, %v6407
    %v6500 = vadd.f32 %v5726, %v6412
    %v6501 = vadd.f32 %v5727, %v6417
    %v6502 = vadd.f32 %v5728, %v6422
    %v6503 = vadd.f32 %v5729, %v6427
    %v6504 = vadd.f32 %v5730, %v6432
    %v6505 = vld [vmem:[#allocation3 + $0x2] sm:$0xff]
    %v6506 = vld [vmem:[#allocation3 + $0xa] sm:$0xff]
    %v6507 = vld [vmem:[#allocation3 + $0x12] sm:$0xff]
    %v6508 = vld [vmem:[#allocation3 + $0x1a] sm:$0xff]
    %v6509 = vld [vmem:[#allocation3 + $0x22] sm:$0xff]
    %v6510 = vld [vmem:[#allocation3 + $0x2a] sm:$0xff]
    %v6511 = vld [vmem:[#allocation3 + $0x32] sm:$0xff]
    %v6512 = vld [vmem:[#allocation3 + $0x3a] sm:$0xff]
    %v6513 = vld [vmem:[#allocation3 + $0x42] sm:$0xff]
    %v6514 = vld [vmem:[#allocation3 + $0x4a] sm:$0xff]
    %v6515 = vld [vmem:[#allocation3 + $0x52] sm:$0xff]
    %v6516 = vld [vmem:[#allocation3 + $0x5a] sm:$0xff]
    %v6517 = vld [vmem:[#allocation3 + $0x62] sm:$0xff]
    %v6518 = vld [vmem:[#allocation3 + $0x6a] sm:$0xff]
    %v6519 = vld [vmem:[#allocation3 + $0x72] sm:$0xff]
    %v6520 = vld [vmem:[#allocation3 + $0x7a] sm:$0xff]
    %v6521 = vld [vmem:[#allocation3 + $0x82] sm:$0xff]
    %v6522 = vld [vmem:[#allocation3 + $0x8a] sm:$0xff]
    %v6523 = vld [vmem:[#allocation3 + $0x92] sm:$0xff]
    %v6524 = vld [vmem:[#allocation3 + $0x9a] sm:$0xff]
    %v6525 = vld [vmem:[#allocation3 + $0xa2] sm:$0xff]
    %v6526 = vld [vmem:[#allocation3 + $0xaa] sm:$0xff]
    %v6527 = vld [vmem:[#allocation3 + $0xb2] sm:$0xff]
    %v6528 = vld [vmem:[#allocation3 + $0xba] sm:$0xff]
    %v6529 = vld [vmem:[#allocation3 + $0xc2] sm:$0xff]
    %v6530 = vld [vmem:[#allocation3 + $0xca] sm:$0xff]
    %v6531 = vld [vmem:[#allocation3 + $0xd2] sm:$0xff]
    %v6532 = vld [vmem:[#allocation3 + $0xda] sm:$0xff]
    %v6533 = vld [vmem:[#allocation3 + $0xe2] sm:$0xff]
    %v6534 = vld [vmem:[#allocation3 + $0xea] sm:$0xff]
    %v6535 = vld [vmem:[#allocation3 + $0xf2] sm:$0xff]
    %v6536 = vld [vmem:[#allocation3 + $0xfa] sm:$0xff]
    %v6537 = vld [vmem:[#allocation3 + $0x102] sm:$0xff]
    %v6538 = vld [vmem:[#allocation3 + $0x10a] sm:$0xff]
    %v6539 = vld [vmem:[#allocation3 + $0x112] sm:$0xff]
    %v6540 = vld [vmem:[#allocation3 + $0x11a] sm:$0xff]
    %v6541 = vld [vmem:[#allocation3 + $0x122] sm:$0xff]
    %v6542 = vld [vmem:[#allocation3 + $0x12a] sm:$0xff]
    %v6543 = vld [vmem:[#allocation3 + $0x132] sm:$0xff]
    %v6544 = vld [vmem:[#allocation3 + $0x13a] sm:$0xff]
    %v6545 = vld [vmem:[#allocation3 + $0x142] sm:$0xff]
    %v6546 = vld [vmem:[#allocation3 + $0x14a] sm:$0xff]
    %v6547 = vld [vmem:[#allocation3 + $0x152] sm:$0xff]
    %v6548 = vld [vmem:[#allocation3 + $0x15a] sm:$0xff]
    %v6549 = vld [vmem:[#allocation3 + $0x162] sm:$0xff]
    %v6550 = vld [vmem:[#allocation3 + $0x16a] sm:$0xff]
    %v6551 = vld [vmem:[#allocation3 + $0x172] sm:$0xff]
    %v6552 = vld [vmem:[#allocation3 + $0x17a] sm:$0xff]
    %v6553 = vld [vmem:[#allocation3 + $0x182] sm:$0xff]
    %v6554 = vld [vmem:[#allocation3 + $0x18a] sm:$0xff]
    %v6555 = vld [vmem:[#allocation3 + $0x192] sm:$0xff]
    %v6556 = vld [vmem:[#allocation3 + $0x19a] sm:$0xff]
    %v6557 = vld [vmem:[#allocation3 + $0x1a2] sm:$0xff]
    %v6558 = vld [vmem:[#allocation3 + $0x1aa] sm:$0xff]
    %v6559 = vld [vmem:[#allocation3 + $0x1b2] sm:$0xff]
    %v6560 = vld [vmem:[#allocation3 + $0x1ba] sm:$0xff]
    %v6561 = vld [vmem:[#allocation3 + $0x1c2] sm:$0xff]
    %v6562 = vld [vmem:[#allocation3 + $0x1ca] sm:$0xff]
    %v6563 = vld [vmem:[#allocation3 + $0x1d2] sm:$0xff]
    %v6564 = vld [vmem:[#allocation3 + $0x1da] sm:$0xff]
    %v6565 = vld [vmem:[#allocation3 + $0x1e2] sm:$0xff]
    %v6566 = vld [vmem:[#allocation3 + $0x1ea] sm:$0xff]
    %v6567 = vld [vmem:[#allocation3 + $0x1f2] sm:$0xff]
    %v6568 = vld [vmem:[#allocation3 + $0x1fa] sm:$0xff]
    %v6569 = vld [vmem:[#allocation3 + $0x202] sm:$0xff]
    %v6570 = vld [vmem:[#allocation3 + $0x20a] sm:$0xff]
    %v6571 = vld [vmem:[#allocation3 + $0x212] sm:$0xff]
    %v6572 = vld [vmem:[#allocation3 + $0x21a] sm:$0xff]
    %v6573 = vld [vmem:[#allocation3 + $0x222] sm:$0xff]
    %v6574 = vld [vmem:[#allocation3 + $0x22a] sm:$0xff]
    %s6575 = scalar_lea.vmem %s7, 128
    %v6576 = vld [vmem:[%s6575] sm:$0xff]
    %v6577 = vld [vmem:[%s6575 + $0x8] sm:$0xff]
    %v6578 = vld [vmem:[%s6575 + $0x10] sm:$0xff]
    %v6579 = vld [vmem:[%s6575 + $0x18] sm:$0xff]
    %v6580 = vld [vmem:[%s6575 + $0x20] sm:$0xff]
    %v6581 = vld [vmem:[%s6575 + $0x28] sm:$0xff]
    %v6582 = vld [vmem:[%s6575 + $0x30] sm:$0xff]
    %v6583 = vld [vmem:[%s6575 + $0x38] sm:$0xff]
    %v6585 = vsel %vm4008, %v6505, 0
    %v6588 = vsel %vm4008, %v6506, 0
    %v6591 = vsel %vm4008, %v6507, 0
    %v6594 = vsel %vm4008, %v6508, 0
    %v6597 = vsel %vm4008, %v6509, 0
    %v6600 = vsel %vm4008, %v6510, 0
    %v6603 = vsel %vm4008, %v6511, 0
    %v6606 = vsel %vm4008, %v6512, 0
    %v6609 = vsel %vm4008, %v6513, 0
    %v6612 = vsel %vm4008, %v6514, 0
    %v6615 = vsel %vm4008, %v6515, 0
    %v6618 = vsel %vm4008, %v6516, 0
    %v6621 = vsel %vm4008, %v6517, 0
    %v6624 = vsel %vm4008, %v6518, 0
    %v6627 = vsel %vm4008, %v6519, 0
    %v6630 = vsel %vm4008, %v6520, 0
    %v6633 = vsel %vm4008, %v6521, 0
    %v6636 = vsel %vm4008, %v6522, 0
    %v6639 = vsel %vm4008, %v6523, 0
    %v6642 = vsel %vm4008, %v6524, 0
    %v6645 = vsel %vm4008, %v6525, 0
    %v6648 = vsel %vm4008, %v6526, 0
    %v6651 = vsel %vm4008, %v6527, 0
    %v6654 = vsel %vm4008, %v6528, 0
    %v6657 = vsel %vm4008, %v6529, 0
    %v6660 = vsel %vm4008, %v6530, 0
    %v6663 = vsel %vm4008, %v6531, 0
    %v6666 = vsel %vm4008, %v6532, 0
    %v6669 = vsel %vm4008, %v6533, 0
    %v6672 = vsel %vm4008, %v6534, 0
    %v6675 = vsel %vm4008, %v6535, 0
    %v6678 = vsel %vm4008, %v6536, 0
    %v6681 = vsel %vm4008, %v6537, 0
    %v6684 = vsel %vm4008, %v6538, 0
    %v6687 = vsel %vm4008, %v6539, 0
    %v6690 = vsel %vm4008, %v6540, 0
    %v6693 = vsel %vm4008, %v6541, 0
    %v6696 = vsel %vm4008, %v6542, 0
    %v6699 = vsel %vm4008, %v6543, 0
    %v6702 = vsel %vm4008, %v6544, 0
    %v6705 = vsel %vm4008, %v6545, 0
    %v6708 = vsel %vm4008, %v6546, 0
    %v6711 = vsel %vm4008, %v6547, 0
    %v6714 = vsel %vm4008, %v6548, 0
    %v6717 = vsel %vm4008, %v6549, 0
    %v6720 = vsel %vm4008, %v6550, 0
    %v6723 = vsel %vm4008, %v6551, 0
    %v6726 = vsel %vm4008, %v6552, 0
    %v6729 = vsel %vm4008, %v6553, 0
    %v6732 = vsel %vm4008, %v6554, 0
    %v6735 = vsel %vm4008, %v6555, 0
    %v6738 = vsel %vm4008, %v6556, 0
    %v6741 = vsel %vm4008, %v6557, 0
    %v6744 = vsel %vm4008, %v6558, 0
    %v6747 = vsel %vm4008, %v6559, 0
    %v6750 = vsel %vm4008, %v6560, 0
    %v6753 = vsel %vm4008, %v6561, 0
    %v6756 = vsel %vm4008, %v6562, 0
    %v6759 = vsel %vm4008, %v6563, 0
    %v6762 = vsel %vm4008, %v6564, 0
    %v6765 = vsel %vm4008, %v6565, 0
    %v6768 = vsel %vm4008, %v6566, 0
    %v6771 = vsel %vm4008, %v6567, 0
    %v6774 = vsel %vm4008, %v6568, 0
    %v6777 = vsel %vm4008, %v6569, 0
    %v6780 = vsel %vm4008, %v6570, 0
    %v6783 = vsel %vm4008, %v6571, 0
    %v6786 = vsel %vm4008, %v6572, 0
    %v6789 = vsel %vm4008, %v6573, 0
    %v6792 = vsel %vm4008, %v6574, 0
    %6794 = vmatprep.subr.mxu0 0.0
    %6795 = vmatpush1.msra.mxu0 %v6576
    %6796 = vmatprep.subr.mxu0 0.0
    %6797 = vmatpush1.msra.mxu0 %v6577
    %6798 = vmatprep.subr.mxu0 0.0
    %6799 = vmatpush1.msra.mxu0 %v6578
    %6800 = vmatprep.subr.mxu0 0.0
    %6801 = vmatpush1.msra.mxu0 %v6579
    %6802 = vmatprep.subr.mxu0 0.0
    %6803 = vmatpush1.msra.mxu0 %v6580
    %6804 = vmatprep.subr.mxu0 0.0
    %6805 = vmatpush1.msra.mxu0 %v6581
    %6806 = vmatprep.subr.mxu0 0.0
    %6807 = vmatpush1.msra.mxu0 %v6582
    %6808 = vmatprep.subr.mxu0 0.0
    %6809 = vmatpush1.msra.mxu0 %v6583
    %6810 = vmatprep.subr.mxu0 0.0
    %6811 = vmatpush1.msra.mxu0 0.0
    %6812 = vmatprep.subr.mxu0 0.0
    %6813 = vmatpush1.msra.mxu0 0.0
    %6814 = vmatprep.subr.mxu0 0.0
    %6815 = vmatpush1.msra.mxu0 0.0
    %6816 = vmatprep.subr.mxu0 0.0
    %6817 = vmatpush1.msra.mxu0 0.0
    %6818 = vmatprep.subr.mxu0 0.0
    %6819 = vmatpush1.msra.mxu0 0.0
    %6820 = vmatprep.subr.mxu0 0.0
    %6821 = vmatpush1.msra.mxu0 0.0
    %6822 = vmatprep.subr.mxu0 0.0
    %6823 = vmatpush1.msra.mxu0 0.0
    %6824 = vmatprep.subr.mxu0 0.0
    %6825 = vmatpush1.msra.mxu0 0.0
    %6826 = vmatprep.subr.mxu0 0.0
    %6827 = vmatpush1.msra.mxu0 0.0
    %6828 = vmatprep.subr.mxu0 0.0
    %6829 = vmatpush1.msra.mxu0 0.0
    %6830 = vmatprep.subr.mxu0 0.0
    %6831 = vmatpush1.msra.mxu0 0.0
    %6832 = vmatprep.subr.mxu0 0.0
    %6833 = vmatpush1.msra.mxu0 0.0
    %6834 = vmatprep.subr.mxu0 0.0
    %6835 = vmatpush1.msra.mxu0 0.0
    %6836 = vmatprep.subr.mxu0 0.0
    %6837 = vmatpush1.msra.mxu0 0.0
    %6838 = vmatprep.subr.mxu0 0.0
    %6839 = vmatpush1.msra.mxu0 0.0
    %6840 = vmatprep.subr.mxu0 0.0
    %6841 = vmatpush1.msra.mxu0 0.0
    %6842 = vmatprep.subr.mxu0 0.0
    %6843 = vmatpush1.msra.mxu0 0.0
    %6844 = vmatprep.subr.mxu0 0.0
    %6845 = vmatpush1.msra.mxu0 0.0
    %6846 = vmatprep.subr.mxu0 0.0
    %6847 = vmatpush1.msra.mxu0 0.0
    %6848 = vmatprep.subr.mxu0 0.0
    %6849 = vmatpush1.msra.mxu0 0.0
    %6850 = vmatprep.subr.mxu0 0.0
    %6851 = vmatpush1.msra.mxu0 0.0
    %6852 = vmatprep.subr.mxu0 0.0
    %6853 = vmatpush1.msra.mxu0 0.0
    %6854 = vmatprep.subr.mxu0 0.0
    %6855 = vmatpush1.msra.mxu0 0.0
    %6856 = vmatprep.subr.mxu0 0.0
    %6857 = vmatpush1.msra.mxu0 0.0
    %6858 = vmatprep.mubr.f32.mxu0 0.0
    %6859 = vmatmul.mubr.f32.gmra.mrb[0].mxu0 %v6585
    %v6860 = vpop.f32.mrb[0].mxu0
    %v6861 = vadd.f32 0.0, %v6860
    %v6862 = vpop.f32.mrb[0].mxu0
    %6863 = vmatprep.mubr.f32.mxu0 0.0
    %6864 = vmatmul.mubr.f32.gmra.mrb[0].mxu0 %v6588
    %v6865 = vpop.f32.mrb[0].mxu0
    %v6866 = vadd.f32 0.0, %v6865
    %v6867 = vpop.f32.mrb[0].mxu0
    %6868 = vmatprep.mubr.f32.mxu0 0.0
    %6869 = vmatmul.mubr.f32.gmra.mrb[0].mxu0 %v6591
    %v6870 = vpop.f32.mrb[0].mxu0
    %v6871 = vadd.f32 0.0, %v6870
    %v6872 = vpop.f32.mrb[0].mxu0
    %6873 = vmatprep.mubr.f32.mxu0 0.0
    %6874 = vmatmul.mubr.f32.gmra.mrb[0].mxu0 %v6594
    %v6875 = vpop.f32.mrb[0].mxu0
    %v6876 = vadd.f32 0.0, %v6875
    %v6877 = vpop.f32.mrb[0].mxu0
    %6878 = vmatprep.mubr.f32.mxu0 0.0
    %6879 = vmatmul.mubr.f32.gmra.mrb[0].mxu0 %v6597
    %v6880 = vpop.f32.mrb[0].mxu0
    %v6881 = vadd.f32 0.0, %v6880
    %v6882 = vpop.f32.mrb[0].mxu0
    %6883 = vmatprep.mubr.f32.mxu0 0.0
    %6884 = vmatmul.mubr.f32.gmra.mrb[0].mxu0 %v6600
    %v6885 = vpop.f32.mrb[0].mxu0
    %v6886 = vadd.f32 0.0, %v6885
    %v6887 = vpop.f32.mrb[0].mxu0
    %6888 = vmatprep.mubr.f32.mxu0 0.0
    %6889 = vmatmul.mubr.f32.gmra.mrb[0].mxu0 %v6603
    %v6890 = vpop.f32.mrb[0].mxu0
    %v6891 = vadd.f32 0.0, %v6890
    %v6892 = vpop.f32.mrb[0].mxu0
    %6893 = vmatprep.mubr.f32.mxu0 0.0
    %6894 = vmatmul.mubr.f32.gmra.mrb[0].mxu0 %v6606
    %v6895 = vpop.f32.mrb[0].mxu0
    %v6896 = vadd.f32 0.0, %v6895
    %v6897 = vpop.f32.mrb[0].mxu0
    %6898 = vmatprep.mubr.f32.mxu0 0.0
    %6899 = vmatmul.mubr.f32.gmra.mrb[0].mxu0 %v6609
    %v6900 = vpop.f32.mrb[0].mxu0
    %v6901 = vadd.f32 0.0, %v6900
    %v6902 = vpop.f32.mrb[0].mxu0
    %6903 = vmatprep.mubr.f32.mxu0 0.0
    %6904 = vmatmul.mubr.f32.gmra.mrb[0].mxu0 %v6612
    %v6905 = vpop.f32.mrb[0].mxu0
    %v6906 = vadd.f32 0.0, %v6905
    %v6907 = vpop.f32.mrb[0].mxu0
    %6908 = vmatprep.mubr.f32.mxu0 0.0
    %6909 = vmatmul.mubr.f32.gmra.mrb[0].mxu0 %v6615
    %v6910 = vpop.f32.mrb[0].mxu0
    %v6911 = vadd.f32 0.0, %v6910
    %v6912 = vpop.f32.mrb[0].mxu0
    %6913 = vmatprep.mubr.f32.mxu0 0.0
    %6914 = vmatmul.mubr.f32.gmra.mrb[0].mxu0 %v6618
    %v6915 = vpop.f32.mrb[0].mxu0
    %v6916 = vadd.f32 0.0, %v6915
    %v6917 = vpop.f32.mrb[0].mxu0
    %6918 = vmatprep.mubr.f32.mxu0 0.0
    %6919 = vmatmul.mubr.f32.gmra.mrb[0].mxu0 %v6621
    %v6920 = vpop.f32.mrb[0].mxu0
    %v6921 = vadd.f32 0.0, %v6920
    %v6922 = vpop.f32.mrb[0].mxu0
    %6923 = vmatprep.mubr.f32.mxu0 0.0
    %6924 = vmatmul.mubr.f32.gmra.mrb[0].mxu0 %v6624
    %v6925 = vpop.f32.mrb[0].mxu0
    %v6926 = vadd.f32 0.0, %v6925
    %v6927 = vpop.f32.mrb[0].mxu0
    %6928 = vmatprep.mubr.f32.mxu0 0.0
    %6929 = vmatmul.mubr.f32.gmra.mrb[0].mxu0 %v6627
    %v6930 = vpop.f32.mrb[0].mxu0
    %v6931 = vadd.f32 0.0, %v6930
    %v6932 = vpop.f32.mrb[0].mxu0
    %6933 = vmatprep.mubr.f32.mxu0 0.0
    %6934 = vmatmul.mubr.f32.gmra.mrb[0].mxu0 %v6630
    %v6935 = vpop.f32.mrb[0].mxu0
    %v6936 = vadd.f32 0.0, %v6935
    %v6937 = vpop.f32.mrb[0].mxu0
    %6938 = vmatprep.mubr.f32.mxu0 0.0
    %6939 = vmatmul.mubr.f32.gmra.mrb[0].mxu0 %v6633
    %v6940 = vpop.f32.mrb[0].mxu0
    %v6941 = vadd.f32 0.0, %v6940
    %v6942 = vpop.f32.mrb[0].mxu0
    %6943 = vmatprep.mubr.f32.mxu0 0.0
    %6944 = vmatmul.mubr.f32.gmra.mrb[0].mxu0 %v6636
    %v6945 = vpop.f32.mrb[0].mxu0
    %v6946 = vadd.f32 0.0, %v6945
    %v6947 = vpop.f32.mrb[0].mxu0
    %6948 = vmatprep.mubr.f32.mxu0 0.0
    %6949 = vmatmul.mubr.f32.gmra.mrb[0].mxu0 %v6639
    %v6950 = vpop.f32.mrb[0].mxu0
    %v6951 = vadd.f32 0.0, %v6950
    %v6952 = vpop.f32.mrb[0].mxu0
    %6953 = vmatprep.mubr.f32.mxu0 0.0
    %6954 = vmatmul.mubr.f32.gmra.mrb[0].mxu0 %v6642
    %v6955 = vpop.f32.mrb[0].mxu0
    %v6956 = vadd.f32 0.0, %v6955
    %v6957 = vpop.f32.mrb[0].mxu0
    %6958 = vmatprep.mubr.f32.mxu0 0.0
    %6959 = vmatmul.mubr.f32.gmra.mrb[0].mxu0 %v6645
    %v6960 = vpop.f32.mrb[0].mxu0
    %v6961 = vadd.f32 0.0, %v6960
    %v6962 = vpop.f32.mrb[0].mxu0
    %6963 = vmatprep.mubr.f32.mxu0 0.0
    %6964 = vmatmul.mubr.f32.gmra.mrb[0].mxu0 %v6648
    %v6965 = vpop.f32.mrb[0].mxu0
    %v6966 = vadd.f32 0.0, %v6965
    %v6967 = vpop.f32.mrb[0].mxu0
    %6968 = vmatprep.mubr.f32.mxu0 0.0
    %6969 = vmatmul.mubr.f32.gmra.mrb[0].mxu0 %v6651
    %v6970 = vpop.f32.mrb[0].mxu0
    %v6971 = vadd.f32 0.0, %v6970
    %v6972 = vpop.f32.mrb[0].mxu0
    %6973 = vmatprep.mubr.f32.mxu0 0.0
    %6974 = vmatmul.mubr.f32.gmra.mrb[0].mxu0 %v6654
    %v6975 = vpop.f32.mrb[0].mxu0
    %v6976 = vadd.f32 0.0, %v6975
    %v6977 = vpop.f32.mrb[0].mxu0
    %6978 = vmatprep.mubr.f32.mxu0 0.0
    %6979 = vmatmul.mubr.f32.gmra.mrb[0].mxu0 %v6657
    %v6980 = vpop.f32.mrb[0].mxu0
    %v6981 = vadd.f32 0.0, %v6980
    %v6982 = vpop.f32.mrb[0].mxu0
    %6983 = vmatprep.mubr.f32.mxu0 0.0
    %6984 = vmatmul.mubr.f32.gmra.mrb[0].mxu0 %v6660
    %v6985 = vpop.f32.mrb[0].mxu0
    %v6986 = vadd.f32 0.0, %v6985
    %v6987 = vpop.f32.mrb[0].mxu0
    %6988 = vmatprep.mubr.f32.mxu0 0.0
    %6989 = vmatmul.mubr.f32.gmra.mrb[0].mxu0 %v6663
    %v6990 = vpop.f32.mrb[0].mxu0
    %v6991 = vadd.f32 0.0, %v6990
    %v6992 = vpop.f32.mrb[0].mxu0
    %6993 = vmatprep.mubr.f32.mxu0 0.0
    %6994 = vmatmul.mubr.f32.gmra.mrb[0].mxu0 %v6666
    %v6995 = vpop.f32.mrb[0].mxu0
    %v6996 = vadd.f32 0.0, %v6995
    %v6997 = vpop.f32.mrb[0].mxu0
    %6998 = vmatprep.mubr.f32.mxu0 0.0
    %6999 = vmatmul.mubr.f32.gmra.mrb[0].mxu0 %v6669
    %v7000 = vpop.f32.mrb[0].mxu0
    %v7001 = vadd.f32 0.0, %v7000
    %v7002 = vpop.f32.mrb[0].mxu0
    %7003 = vmatprep.mubr.f32.mxu0 0.0
    %7004 = vmatmul.mubr.f32.gmra.mrb[0].mxu0 %v6672
    %v7005 = vpop.f32.mrb[0].mxu0
    %v7006 = vadd.f32 0.0, %v7005
    %v7007 = vpop.f32.mrb[0].mxu0
    %7008 = vmatprep.mubr.f32.mxu0 0.0
    %7009 = vmatmul.mubr.f32.gmra.mrb[0].mxu0 %v6675
    %v7010 = vpop.f32.mrb[0].mxu0
    %v7011 = vadd.f32 0.0, %v7010
    %v7012 = vpop.f32.mrb[0].mxu0
    %7013 = vmatprep.mubr.f32.mxu0 0.0
    %7014 = vmatmul.mubr.f32.gmra.mrb[0].mxu0 %v6678
    %v7015 = vpop.f32.mrb[0].mxu0
    %v7016 = vadd.f32 0.0, %v7015
    %v7017 = vpop.f32.mrb[0].mxu0
    %7018 = vmatprep.mubr.f32.mxu0 0.0
    %7019 = vmatmul.mubr.f32.gmra.mrb[0].mxu0 %v6681
    %v7020 = vpop.f32.mrb[0].mxu0
    %v7021 = vadd.f32 0.0, %v7020
    %v7022 = vpop.f32.mrb[0].mxu0
    %7023 = vmatprep.mubr.f32.mxu0 0.0
    %7024 = vmatmul.mubr.f32.gmra.mrb[0].mxu0 %v6684
    %v7025 = vpop.f32.mrb[0].mxu0
    %v7026 = vadd.f32 0.0, %v7025
    %v7027 = vpop.f32.mrb[0].mxu0
    %7028 = vmatprep.mubr.f32.mxu0 0.0
    %7029 = vmatmul.mubr.f32.gmra.mrb[0].mxu0 %v6687
    %v7030 = vpop.f32.mrb[0].mxu0
    %v7031 = vadd.f32 0.0, %v7030
    %v7032 = vpop.f32.mrb[0].mxu0
    %7033 = vmatprep.mubr.f32.mxu0 0.0
    %7034 = vmatmul.mubr.f32.gmra.mrb[0].mxu0 %v6690
    %v7035 = vpop.f32.mrb[0].mxu0
    %v7036 = vadd.f32 0.0, %v7035
    %v7037 = vpop.f32.mrb[0].mxu0
    %7038 = vmatprep.mubr.f32.mxu0 0.0
    %7039 = vmatmul.mubr.f32.gmra.mrb[0].mxu0 %v6693
    %v7040 = vpop.f32.mrb[0].mxu0
    %v7041 = vadd.f32 0.0, %v7040
    %v7042 = vpop.f32.mrb[0].mxu0
    %7043 = vmatprep.mubr.f32.mxu0 0.0
    %7044 = vmatmul.mubr.f32.gmra.mrb[0].mxu0 %v6696
    %v7045 = vpop.f32.mrb[0].mxu0
    %v7046 = vadd.f32 0.0, %v7045
    %v7047 = vpop.f32.mrb[0].mxu0
    %7048 = vmatprep.mubr.f32.mxu0 0.0
    %7049 = vmatmul.mubr.f32.gmra.mrb[0].mxu0 %v6699
    %v7050 = vpop.f32.mrb[0].mxu0
    %v7051 = vadd.f32 0.0, %v7050
    %v7052 = vpop.f32.mrb[0].mxu0
    %7053 = vmatprep.mubr.f32.mxu0 0.0
    %7054 = vmatmul.mubr.f32.gmra.mrb[0].mxu0 %v6702
    %v7055 = vpop.f32.mrb[0].mxu0
    %v7056 = vadd.f32 0.0, %v7055
    %v7057 = vpop.f32.mrb[0].mxu0
    %7058 = vmatprep.mubr.f32.mxu0 0.0
    %7059 = vmatmul.mubr.f32.gmra.mrb[0].mxu0 %v6705
    %v7060 = vpop.f32.mrb[0].mxu0
    %v7061 = vadd.f32 0.0, %v7060
    %v7062 = vpop.f32.mrb[0].mxu0
    %7063 = vmatprep.mubr.f32.mxu0 0.0
    %7064 = vmatmul.mubr.f32.gmra.mrb[0].mxu0 %v6708
    %v7065 = vpop.f32.mrb[0].mxu0
    %v7066 = vadd.f32 0.0, %v7065
    %v7067 = vpop.f32.mrb[0].mxu0
    %7068 = vmatprep.mubr.f32.mxu0 0.0
    %7069 = vmatmul.mubr.f32.gmra.mrb[0].mxu0 %v6711
    %v7070 = vpop.f32.mrb[0].mxu0
    %v7071 = vadd.f32 0.0, %v7070
    %v7072 = vpop.f32.mrb[0].mxu0
    %7073 = vmatprep.mubr.f32.mxu0 0.0
    %7074 = vmatmul.mubr.f32.gmra.mrb[0].mxu0 %v6714
    %v7075 = vpop.f32.mrb[0].mxu0
    %v7076 = vadd.f32 0.0, %v7075
    %v7077 = vpop.f32.mrb[0].mxu0
    %7078 = vmatprep.mubr.f32.mxu0 0.0
    %7079 = vmatmul.mubr.f32.gmra.mrb[0].mxu0 %v6717
    %v7080 = vpop.f32.mrb[0].mxu0
    %v7081 = vadd.f32 0.0, %v7080
    %v7082 = vpop.f32.mrb[0].mxu0
    %7083 = vmatprep.mubr.f32.mxu0 0.0
    %7084 = vmatmul.mubr.f32.gmra.mrb[0].mxu0 %v6720
    %v7085 = vpop.f32.mrb[0].mxu0
    %v7086 = vadd.f32 0.0, %v7085
    %v7087 = vpop.f32.mrb[0].mxu0
    %7088 = vmatprep.mubr.f32.mxu0 0.0
    %7089 = vmatmul.mubr.f32.gmra.mrb[0].mxu0 %v6723
    %v7090 = vpop.f32.mrb[0].mxu0
    %v7091 = vadd.f32 0.0, %v7090
    %v7092 = vpop.f32.mrb[0].mxu0
    %7093 = vmatprep.mubr.f32.mxu0 0.0
    %7094 = vmatmul.mubr.f32.gmra.mrb[0].mxu0 %v6726
    %v7095 = vpop.f32.mrb[0].mxu0
    %v7096 = vadd.f32 0.0, %v7095
    %v7097 = vpop.f32.mrb[0].mxu0
    %7098 = vmatprep.mubr.f32.mxu0 0.0
    %7099 = vmatmul.mubr.f32.gmra.mrb[0].mxu0 %v6729
    %v7100 = vpop.f32.mrb[0].mxu0
    %v7101 = vadd.f32 0.0, %v7100
    %v7102 = vpop.f32.mrb[0].mxu0
    %7103 = vmatprep.mubr.f32.mxu0 0.0
    %7104 = vmatmul.mubr.f32.gmra.mrb[0].mxu0 %v6732
    %v7105 = vpop.f32.mrb[0].mxu0
    %v7106 = vadd.f32 0.0, %v7105
    %v7107 = vpop.f32.mrb[0].mxu0
    %7108 = vmatprep.mubr.f32.mxu0 0.0
    %7109 = vmatmul.mubr.f32.gmra.mrb[0].mxu0 %v6735
    %v7110 = vpop.f32.mrb[0].mxu0
    %v7111 = vadd.f32 0.0, %v7110
    %v7112 = vpop.f32.mrb[0].mxu0
    %7113 = vmatprep.mubr.f32.mxu0 0.0
    %7114 = vmatmul.mubr.f32.gmra.mrb[0].mxu0 %v6738
    %v7115 = vpop.f32.mrb[0].mxu0
    %v7116 = vadd.f32 0.0, %v7115
    %v7117 = vpop.f32.mrb[0].mxu0
    %7118 = vmatprep.mubr.f32.mxu0 0.0
    %7119 = vmatmul.mubr.f32.gmra.mrb[0].mxu0 %v6741
    %v7120 = vpop.f32.mrb[0].mxu0
    %v7121 = vadd.f32 0.0, %v7120
    %v7122 = vpop.f32.mrb[0].mxu0
    %7123 = vmatprep.mubr.f32.mxu0 0.0
    %7124 = vmatmul.mubr.f32.gmra.mrb[0].mxu0 %v6744
    %v7125 = vpop.f32.mrb[0].mxu0
    %v7126 = vadd.f32 0.0, %v7125
    %v7127 = vpop.f32.mrb[0].mxu0
    %7128 = vmatprep.mubr.f32.mxu0 0.0
    %7129 = vmatmul.mubr.f32.gmra.mrb[0].mxu0 %v6747
    %v7130 = vpop.f32.mrb[0].mxu0
    %v7131 = vadd.f32 0.0, %v7130
    %v7132 = vpop.f32.mrb[0].mxu0
    %7133 = vmatprep.mubr.f32.mxu0 0.0
    %7134 = vmatmul.mubr.f32.gmra.mrb[0].mxu0 %v6750
    %v7135 = vpop.f32.mrb[0].mxu0
    %v7136 = vadd.f32 0.0, %v7135
    %v7137 = vpop.f32.mrb[0].mxu0
    %7138 = vmatprep.mubr.f32.mxu0 0.0
    %7139 = vmatmul.mubr.f32.gmra.mrb[0].mxu0 %v6753
    %v7140 = vpop.f32.mrb[0].mxu0
    %v7141 = vadd.f32 0.0, %v7140
    %v7142 = vpop.f32.mrb[0].mxu0
    %7143 = vmatprep.mubr.f32.mxu0 0.0
    %7144 = vmatmul.mubr.f32.gmra.mrb[0].mxu0 %v6756
    %v7145 = vpop.f32.mrb[0].mxu0
    %v7146 = vadd.f32 0.0, %v7145
    %v7147 = vpop.f32.mrb[0].mxu0
    %7148 = vmatprep.mubr.f32.mxu0 0.0
    %7149 = vmatmul.mubr.f32.gmra.mrb[0].mxu0 %v6759
    %v7150 = vpop.f32.mrb[0].mxu0
    %v7151 = vadd.f32 0.0, %v7150
    %v7152 = vpop.f32.mrb[0].mxu0
    %7153 = vmatprep.mubr.f32.mxu0 0.0
    %7154 = vmatmul.mubr.f32.gmra.mrb[0].mxu0 %v6762
    %v7155 = vpop.f32.mrb[0].mxu0
    %v7156 = vadd.f32 0.0, %v7155
    %v7157 = vpop.f32.mrb[0].mxu0
    %7158 = vmatprep.mubr.f32.mxu0 0.0
    %7159 = vmatmul.mubr.f32.gmra.mrb[0].mxu0 %v6765
    %v7160 = vpop.f32.mrb[0].mxu0
    %v7161 = vadd.f32 0.0, %v7160
    %v7162 = vpop.f32.mrb[0].mxu0
    %7163 = vmatprep.mubr.f32.mxu0 0.0
    %7164 = vmatmul.mubr.f32.gmra.mrb[0].mxu0 %v6768
    %v7165 = vpop.f32.mrb[0].mxu0
    %v7166 = vadd.f32 0.0, %v7165
    %v7167 = vpop.f32.mrb[0].mxu0
    %7168 = vmatprep.mubr.f32.mxu0 0.0
    %7169 = vmatmul.mubr.f32.gmra.mrb[0].mxu0 %v6771
    %v7170 = vpop.f32.mrb[0].mxu0
    %v7171 = vadd.f32 0.0, %v7170
    %v7172 = vpop.f32.mrb[0].mxu0
    %7173 = vmatprep.mubr.f32.mxu0 0.0
    %7174 = vmatmul.mubr.f32.gmra.mrb[0].mxu0 %v6774
    %v7175 = vpop.f32.mrb[0].mxu0
    %v7176 = vadd.f32 0.0, %v7175
    %v7177 = vpop.f32.mrb[0].mxu0
    %7178 = vmatprep.mubr.f32.mxu0 0.0
    %7179 = vmatmul.mubr.f32.gmra.mrb[0].mxu0 %v6777
    %v7180 = vpop.f32.mrb[0].mxu0
    %v7181 = vadd.f32 0.0, %v7180
    %v7182 = vpop.f32.mrb[0].mxu0
    %7183 = vmatprep.mubr.f32.mxu0 0.0
    %7184 = vmatmul.mubr.f32.gmra.mrb[0].mxu0 %v6780
    %v7185 = vpop.f32.mrb[0].mxu0
    %v7186 = vadd.f32 0.0, %v7185
    %v7187 = vpop.f32.mrb[0].mxu0
    %7188 = vmatprep.mubr.f32.mxu0 0.0
    %7189 = vmatmul.mubr.f32.gmra.mrb[0].mxu0 %v6783
    %v7190 = vpop.f32.mrb[0].mxu0
    %v7191 = vadd.f32 0.0, %v7190
    %v7192 = vpop.f32.mrb[0].mxu0
    %7193 = vmatprep.mubr.f32.mxu0 0.0
    %7194 = vmatmul.mubr.f32.gmra.mrb[0].mxu0 %v6786
    %v7195 = vpop.f32.mrb[0].mxu0
    %v7196 = vadd.f32 0.0, %v7195
    %v7197 = vpop.f32.mrb[0].mxu0
    %7198 = vmatprep.mubr.f32.mxu0 0.0
    %7199 = vmatmul.mubr.f32.gmra.mrb[0].mxu0 %v6789
    %v7200 = vpop.f32.mrb[0].mxu0
    %v7201 = vadd.f32 0.0, %v7200
    %v7202 = vpop.f32.mrb[0].mxu0
    %7203 = vmatprep.mubr.f32.mxu0 0.0
    %7204 = vmatmul.mubr.f32.gmra.mrb[0].mxu0 %v6792
    %v7205 = vpop.f32.mrb[0].mxu0
    %v7206 = vadd.f32 0.0, %v7205
    %v7207 = vpop.f32.mrb[0].mxu0
    %7208 = vdwg.mxu0
    %v7209 = vadd.f32 %v6435, %v6861
    %v7210 = vadd.f32 %v6436, %v6866
    %v7211 = vadd.f32 %v6437, %v6871
    %v7212 = vadd.f32 %v6438, %v6876
    %v7213 = vadd.f32 %v6439, %v6881
    %v7214 = vadd.f32 %v6440, %v6886
    %v7215 = vadd.f32 %v6441, %v6891
    %v7216 = vadd.f32 %v6442, %v6896
    %v7217 = vadd.f32 %v6443, %v6901
    %v7218 = vadd.f32 %v6444, %v6906
    %v7219 = vadd.f32 %v6445, %v6911
    %v7220 = vadd.f32 %v6446, %v6916
    %v7221 = vadd.f32 %v6447, %v6921
    %v7222 = vadd.f32 %v6448, %v6926
    %v7223 = vadd.f32 %v6449, %v6931
    %v7224 = vadd.f32 %v6450, %v6936
    %v7225 = vadd.f32 %v6451, %v6941
    %v7226 = vadd.f32 %v6452, %v6946
    %v7227 = vadd.f32 %v6453, %v6951
    %v7228 = vadd.f32 %v6454, %v6956
    %v7229 = vadd.f32 %v6455, %v6961
    %v7230 = vadd.f32 %v6456, %v6966
    %v7231 = vadd.f32 %v6457, %v6971
    %v7232 = vadd.f32 %v6458, %v6976
    %v7233 = vadd.f32 %v6459, %v6981
    %v7234 = vadd.f32 %v6460, %v6986
    %v7235 = vadd.f32 %v6461, %v6991
    %v7236 = vadd.f32 %v6462, %v6996
    %v7237 = vadd.f32 %v6463, %v7001
    %v7238 = vadd.f32 %v6464, %v7006
    %v7239 = vadd.f32 %v6465, %v7011
    %v7240 = vadd.f32 %v6466, %v7016
    %v7241 = vadd.f32 %v6467, %v7021
    %v7242 = vadd.f32 %v6468, %v7026
    %v7243 = vadd.f32 %v6469, %v7031
    %v7244 = vadd.f32 %v6470, %v7036
    %v7245 = vadd.f32 %v6471, %v7041
    %v7246 = vadd.f32 %v6472, %v7046
    %v7247 = vadd.f32 %v6473, %v7051
    %v7248 = vadd.f32 %v6474, %v7056
    %v7249 = vadd.f32 %v6475, %v7061
    %v7250 = vadd.f32 %v6476, %v7066
    %v7251 = vadd.f32 %v6477, %v7071
    %v7252 = vadd.f32 %v6478, %v7076
    %v7253 = vadd.f32 %v6479, %v7081
    %v7254 = vadd.f32 %v6480, %v7086
    %v7255 = vadd.f32 %v6481, %v7091
    %v7256 = vadd.f32 %v6482, %v7096
    %v7257 = vadd.f32 %v6483, %v7101
    %v7258 = vadd.f32 %v6484, %v7106
    %v7259 = vadd.f32 %v6485, %v7111
    %v7260 = vadd.f32 %v6486, %v7116
    %v7261 = vadd.f32 %v6487, %v7121
    %v7262 = vadd.f32 %v6488, %v7126
    %v7263 = vadd.f32 %v6489, %v7131
    %v7264 = vadd.f32 %v6490, %v7136
    %v7265 = vadd.f32 %v6491, %v7141
    %v7266 = vadd.f32 %v6492, %v7146
    %v7267 = vadd.f32 %v6493, %v7151
    %v7268 = vadd.f32 %v6494, %v7156
    %v7269 = vadd.f32 %v6495, %v7161
    %v7270 = vadd.f32 %v6496, %v7166
    %v7271 = vadd.f32 %v6497, %v7171
    %v7272 = vadd.f32 %v6498, %v7176
    %v7273 = vadd.f32 %v6499, %v7181
    %v7274 = vadd.f32 %v6500, %v7186
    %v7275 = vadd.f32 %v6501, %v7191
    %v7276 = vadd.f32 %v6502, %v7196
    %v7277 = vadd.f32 %v6503, %v7201
    %v7278 = vadd.f32 %v6504, %v7206
    %v7279 = vmul.f32 %v7209, %v1551
    %v7280 = vmul.f32 %v7210, %v1552
    %v7281 = vmul.f32 %v7211, %v1553
    %v7282 = vmul.f32 %v7212, %v1554
    %v7283 = vmul.f32 %v7213, %v1555
    %v7284 = vmul.f32 %v7214, %v1556
    %v7285 = vmul.f32 %v7215, %v1557
    %v7286 = vmul.f32 %v7216, %v1558
    %v7287 = vmul.f32 %v7217, %v1559
    %v7288 = vmul.f32 %v7218, %v1560
    %v7289 = vmul.f32 %v7219, %v1561
    %v7290 = vmul.f32 %v7220, %v1562
    %v7291 = vmul.f32 %v7221, %v1563
    %v7292 = vmul.f32 %v7222, %v1564
    %v7293 = vmul.f32 %v7223, %v1565
    %v7294 = vmul.f32 %v7224, %v1566
    %v7295 = vmul.f32 %v7225, %v1567
    %v7296 = vmul.f32 %v7226, %v1568
    %v7297 = vmul.f32 %v7227, %v1569
    %v7298 = vmul.f32 %v7228, %v1570
    %v7299 = vmul.f32 %v7229, %v1571
    %v7300 = vmul.f32 %v7230, %v1572
    %v7301 = vmul.f32 %v7231, %v1573
    %v7302 = vmul.f32 %v7232, %v1574
    %v7303 = vmul.f32 %v7233, %v1575
    %v7304 = vmul.f32 %v7234, %v1576
    %v7305 = vmul.f32 %v7235, %v1577
    %v7306 = vmul.f32 %v7236, %v1578
    %v7307 = vmul.f32 %v7237, %v1579
    %v7308 = vmul.f32 %v7238, %v1580
    %v7309 = vmul.f32 %v7239, %v1581
    %v7310 = vmul.f32 %v7240, %v1582
    %v7311 = vmul.f32 %v7241, %v1583
    %v7312 = vmul.f32 %v7242, %v1584
    %v7313 = vmul.f32 %v7243, %v1585
    %v7314 = vmul.f32 %v7244, %v1586
    %v7315 = vmul.f32 %v7245, %v1587
    %v7316 = vmul.f32 %v7246, %v1588
    %v7317 = vmul.f32 %v7247, %v1589
    %v7318 = vmul.f32 %v7248, %v1590
    %v7319 = vmul.f32 %v7249, %v1591
    %v7320 = vmul.f32 %v7250, %v1592
    %v7321 = vmul.f32 %v7251, %v1593
    %v7322 = vmul.f32 %v7252, %v1594
    %v7323 = vmul.f32 %v7253, %v1595
    %v7324 = vmul.f32 %v7254, %v1596
    %v7325 = vmul.f32 %v7255, %v1597
    %v7326 = vmul.f32 %v7256, %v1598
    %v7327 = vmul.f32 %v7257, %v1599
    %v7328 = vmul.f32 %v7258, %v1600
    %v7329 = vmul.f32 %v7259, %v1601
    %v7330 = vmul.f32 %v7260, %v1602
    %v7331 = vmul.f32 %v7261, %v1603
    %v7332 = vmul.f32 %v7262, %v1604
    %v7333 = vmul.f32 %v7263, %v1605
    %v7334 = vmul.f32 %v7264, %v1606
    %v7335 = vmul.f32 %v7265, %v1607
    %v7336 = vmul.f32 %v7266, %v1608
    %v7337 = vmul.f32 %v7267, %v1609
    %v7338 = vmul.f32 %v7268, %v1610
    %v7339 = vmul.f32 %v7269, %v1611
    %v7340 = vmul.f32 %v7270, %v1612
    %v7341 = vmul.f32 %v7271, %v1613
    %v7342 = vmul.f32 %v7272, %v1614
    %v7343 = vmul.f32 %v7273, %v1615
    %v7344 = vmul.f32 %v7274, %v1616
    %v7345 = vmul.f32 %v7275, %v1617
    %v7346 = vmul.f32 %v7276, %v1618
    %v7347 = vmul.f32 %v7277, %v1619
    %v7348 = vmul.f32 %v7278, %v1620
    %v7349 = vadd.f32 %v7279, %v7280
    %v7350 = vadd.f32 %v7349, %v7281
    %v7351 = vadd.f32 %v7350, %v7282
    %v7352 = vadd.f32 %v7351, %v7283
    %v7353 = vadd.f32 %v7352, %v7284
    %v7354 = vadd.f32 %v7353, %v7285
    %v7355 = vadd.f32 %v7354, %v7286
    %v7356 = vadd.f32 %v7355, %v7287
    %v7357 = vadd.f32 %v7356, %v7288
    %v7358 = vadd.f32 %v7357, %v7289
    %v7359 = vadd.f32 %v7358, %v7290
    %v7360 = vadd.f32 %v7359, %v7291
    %v7361 = vadd.f32 %v7360, %v7292
    %v7362 = vadd.f32 %v7361, %v7293
    %v7363 = vadd.f32 %v7362, %v7294
    %v7364 = vadd.f32 %v7363, %v7295
    %v7365 = vadd.f32 %v7364, %v7296
    %v7366 = vadd.f32 %v7365, %v7297
    %v7367 = vadd.f32 %v7366, %v7298
    %v7368 = vadd.f32 %v7367, %v7299
    %v7369 = vadd.f32 %v7368, %v7300
    %v7370 = vadd.f32 %v7369, %v7301
    %v7371 = vadd.f32 %v7370, %v7302
    %v7372 = vadd.f32 %v7371, %v7303
    %v7373 = vadd.f32 %v7372, %v7304
    %v7374 = vadd.f32 %v7373, %v7305
    %v7375 = vadd.f32 %v7374, %v7306
    %v7376 = vadd.f32 %v7375, %v7307
    %v7377 = vadd.f32 %v7376, %v7308
    %v7378 = vadd.f32 %v7377, %v7309
    %v7379 = vadd.f32 %v7378, %v7310
    %v7380 = vadd.f32 %v7379, %v7311
    %v7381 = vadd.f32 %v7380, %v7312
    %v7382 = vadd.f32 %v7381, %v7313
    %v7383 = vadd.f32 %v7382, %v7314
    %v7384 = vadd.f32 %v7383, %v7315
    %v7385 = vadd.f32 %v7384, %v7316
    %v7386 = vadd.f32 %v7385, %v7317
    %v7387 = vadd.f32 %v7386, %v7318
    %v7388 = vadd.f32 %v7387, %v7319
    %v7389 = vadd.f32 %v7388, %v7320
    %v7390 = vadd.f32 %v7389, %v7321
    %v7391 = vadd.f32 %v7390, %v7322
    %v7392 = vadd.f32 %v7391, %v7323
    %v7393 = vadd.f32 %v7392, %v7324
    %v7394 = vadd.f32 %v7393, %v7325
    %v7395 = vadd.f32 %v7394, %v7326
    %v7396 = vadd.f32 %v7395, %v7327
    %v7397 = vadd.f32 %v7396, %v7328
    %v7398 = vadd.f32 %v7397, %v7329
    %v7399 = vadd.f32 %v7398, %v7330
    %v7400 = vadd.f32 %v7399, %v7331
    %v7401 = vadd.f32 %v7400, %v7332
    %v7402 = vadd.f32 %v7401, %v7333
    %v7403 = vadd.f32 %v7402, %v7334
    %v7404 = vadd.f32 %v7403, %v7335
    %v7405 = vadd.f32 %v7404, %v7336
    %v7406 = vadd.f32 %v7405, %v7337
    %v7407 = vadd.f32 %v7406, %v7338
    %v7408 = vadd.f32 %v7407, %v7339
    %v7409 = vadd.f32 %v7408, %v7340
    %v7410 = vadd.f32 %v7409, %v7341
    %v7411 = vadd.f32 %v7410, %v7342
    %v7412 = vadd.f32 %v7411, %v7343
    %v7413 = vadd.f32 %v7412, %v7344
    %v7414 = vadd.f32 %v7413, %v7345
    %v7415 = vadd.f32 %v7414, %v7346
    %v7416 = vadd.f32 %v7415, %v7347
    %v7417 = vadd.f32 %v7416, %v7348
    %v7418 = vrot.slane %v7417, 4
    %v7419 = vadd.f32 %v7417, %v7418
    %v7420 = vrot.slane %v7419, 2
    %v7421 = vadd.f32 %v7419, %v7420
    %v7422 = vrot.slane %v7421, 1
    %v7423 = vadd.f32 %v7421, %v7422
    %v7424 = vmul.f32 %v7423, 0.0023809525
    %v7425 = vmul.f32 %v7279, %v7209
    %v7426 = vmul.f32 %v7280, %v7210
    %v7427 = vmul.f32 %v7281, %v7211
    %v7428 = vmul.f32 %v7282, %v7212
    %v7429 = vmul.f32 %v7283, %v7213
    %v7430 = vmul.f32 %v7284, %v7214
    %v7431 = vmul.f32 %v7285, %v7215
    %v7432 = vmul.f32 %v7286, %v7216
    %v7433 = vmul.f32 %v7287, %v7217
    %v7434 = vmul.f32 %v7288, %v7218
    %v7435 = vmul.f32 %v7289, %v7219
    %v7436 = vmul.f32 %v7290, %v7220
    %v7437 = vmul.f32 %v7291, %v7221
    %v7438 = vmul.f32 %v7292, %v7222
    %v7439 = vmul.f32 %v7293, %v7223
    %v7440 = vmul.f32 %v7294, %v7224
    %v7441 = vmul.f32 %v7295, %v7225
    %v7442 = vmul.f32 %v7296, %v7226
    %v7443 = vmul.f32 %v7297, %v7227
    %v7444 = vmul.f32 %v7298, %v7228
    %v7445 = vmul.f32 %v7299, %v7229
    %v7446 = vmul.f32 %v7300, %v7230
    %v7447 = vmul.f32 %v7301, %v7231
    %v7448 = vmul.f32 %v7302, %v7232
    %v7449 = vmul.f32 %v7303, %v7233
    %v7450 = vmul.f32 %v7304, %v7234
    %v7451 = vmul.f32 %v7305, %v7235
    %v7452 = vmul.f32 %v7306, %v7236
    %v7453 = vmul.f32 %v7307, %v7237
    %v7454 = vmul.f32 %v7308, %v7238
    %v7455 = vmul.f32 %v7309, %v7239
    %v7456 = vmul.f32 %v7310, %v7240
    %v7457 = vmul.f32 %v7311, %v7241
    %v7458 = vmul.f32 %v7312, %v7242
    %v7459 = vmul.f32 %v7313, %v7243
    %v7460 = vmul.f32 %v7314, %v7244
    %v7461 = vmul.f32 %v7315, %v7245
    %v7462 = vmul.f32 %v7316, %v7246
    %v7463 = vmul.f32 %v7317, %v7247
    %v7464 = vmul.f32 %v7318, %v7248
    %v7465 = vmul.f32 %v7319, %v7249
    %v7466 = vmul.f32 %v7320, %v7250
    %v7467 = vmul.f32 %v7321, %v7251
    %v7468 = vmul.f32 %v7322, %v7252
    %v7469 = vmul.f32 %v7323, %v7253
    %v7470 = vmul.f32 %v7324, %v7254
    %v7471 = vmul.f32 %v7325, %v7255
    %v7472 = vmul.f32 %v7326, %v7256
    %v7473 = vmul.f32 %v7327, %v7257
    %v7474 = vmul.f32 %v7328, %v7258
    %v7475 = vmul.f32 %v7329, %v7259
    %v7476 = vmul.f32 %v7330, %v7260
    %v7477 = vmul.f32 %v7331, %v7261
    %v7478 = vmul.f32 %v7332, %v7262
    %v7479 = vmul.f32 %v7333, %v7263
    %v7480 = vmul.f32 %v7334, %v7264
    %v7481 = vmul.f32 %v7335, %v7265
    %v7482 = vmul.f32 %v7336, %v7266
    %v7483 = vmul.f32 %v7337, %v7267
    %v7484 = vmul.f32 %v7338, %v7268
    %v7485 = vmul.f32 %v7339, %v7269
    %v7486 = vmul.f32 %v7340, %v7270
    %v7487 = vmul.f32 %v7341, %v7271
    %v7488 = vmul.f32 %v7342, %v7272
    %v7489 = vmul.f32 %v7343, %v7273
    %v7490 = vmul.f32 %v7344, %v7274
    %v7491 = vmul.f32 %v7345, %v7275
    %v7492 = vmul.f32 %v7346, %v7276
    %v7493 = vmul.f32 %v7347, %v7277
    %v7494 = vmul.f32 %v7348, %v7278
    %v7495 = vadd.f32 %v7425, %v7426
    %v7496 = vadd.f32 %v7495, %v7427
    %v7497 = vadd.f32 %v7496, %v7428
    %v7498 = vadd.f32 %v7497, %v7429
    %v7499 = vadd.f32 %v7498, %v7430
    %v7500 = vadd.f32 %v7499, %v7431
    %v7501 = vadd.f32 %v7500, %v7432
    %v7502 = vadd.f32 %v7501, %v7433
    %v7503 = vadd.f32 %v7502, %v7434
    %v7504 = vadd.f32 %v7503, %v7435
    %v7505 = vadd.f32 %v7504, %v7436
    %v7506 = vadd.f32 %v7505, %v7437
    %v7507 = vadd.f32 %v7506, %v7438
    %v7508 = vadd.f32 %v7507, %v7439
    %v7509 = vadd.f32 %v7508, %v7440
    %v7510 = vadd.f32 %v7509, %v7441
    %v7511 = vadd.f32 %v7510, %v7442
    %v7512 = vadd.f32 %v7511, %v7443
    %v7513 = vadd.f32 %v7512, %v7444
    %v7514 = vadd.f32 %v7513, %v7445
    %v7515 = vadd.f32 %v7514, %v7446
    %v7516 = vadd.f32 %v7515, %v7447
    %v7517 = vadd.f32 %v7516, %v7448
    %v7518 = vadd.f32 %v7517, %v7449
    %v7519 = vadd.f32 %v7518, %v7450
    %v7520 = vadd.f32 %v7519, %v7451
    %v7521 = vadd.f32 %v7520, %v7452
    %v7522 = vadd.f32 %v7521, %v7453
    %v7523 = vadd.f32 %v7522, %v7454
    %v7524 = vadd.f32 %v7523, %v7455
    %v7525 = vadd.f32 %v7524, %v7456
    %v7526 = vadd.f32 %v7525, %v7457
    %v7527 = vadd.f32 %v7526, %v7458
    %v7528 = vadd.f32 %v7527, %v7459
    %v7529 = vadd.f32 %v7528, %v7460
    %v7530 = vadd.f32 %v7529, %v7461
    %v7531 = vadd.f32 %v7530, %v7462
    %v7532 = vadd.f32 %v7531, %v7463
    %v7533 = vadd.f32 %v7532, %v7464
    %v7534 = vadd.f32 %v7533, %v7465
    %v7535 = vadd.f32 %v7534, %v7466
    %v7536 = vadd.f32 %v7535, %v7467
    %v7537 = vadd.f32 %v7536, %v7468
    %v7538 = vadd.f32 %v7537, %v7469
    %v7539 = vadd.f32 %v7538, %v7470
    %v7540 = vadd.f32 %v7539, %v7471
    %v7541 = vadd.f32 %v7540, %v7472
    %v7542 = vadd.f32 %v7541, %v7473
    %v7543 = vadd.f32 %v7542, %v7474
    %v7544 = vadd.f32 %v7543, %v7475
    %v7545 = vadd.f32 %v7544, %v7476
    %v7546 = vadd.f32 %v7545, %v7477
    %v7547 = vadd.f32 %v7546, %v7478
    %v7548 = vadd.f32 %v7547, %v7479
    %v7549 = vadd.f32 %v7548, %v7480
    %v7550 = vadd.f32 %v7549, %v7481
    %v7551 = vadd.f32 %v7550, %v7482
    %v7552 = vadd.f32 %v7551, %v7483
    %v7553 = vadd.f32 %v7552, %v7484
    %v7554 = vadd.f32 %v7553, %v7485
    %v7555 = vadd.f32 %v7554, %v7486
    %v7556 = vadd.f32 %v7555, %v7487
    %v7557 = vadd.f32 %v7556, %v7488
    %v7558 = vadd.f32 %v7557, %v7489
    %v7559 = vadd.f32 %v7558, %v7490
    %v7560 = vadd.f32 %v7559, %v7491
    %v7561 = vadd.f32 %v7560, %v7492
    %v7562 = vadd.f32 %v7561, %v7493
    %v7563 = vadd.f32 %v7562, %v7494
    %v7564 = vrot.slane %v7563, 4
    %v7565 = vadd.f32 %v7563, %v7564
    %v7566 = vrot.slane %v7565, 2
    %v7567 = vadd.f32 %v7565, %v7566
    %v7568 = vrot.slane %v7567, 1
    %v7569 = vadd.f32 %v7567, %v7568
    %v7570 = vmul.f32 %v7569, 0.0023809525
    %v7571 = vmul.f32 %v7424, %v7424
    %v7572 = vsub.f32 %v7570, %v7571
    %v7573 = vmax.f32 %v7572, 0.0
    %v7574 = vld [vmem:[%s9] sm:$0x1]
    %v7575 = vsub.f32 %v7209, %v7424
    %v7576 = vsub.f32 %v7210, %v7424
    %v7577 = vsub.f32 %v7211, %v7424
    %v7578 = vsub.f32 %v7212, %v7424
    %v7579 = vsub.f32 %v7213, %v7424
    %v7580 = vsub.f32 %v7214, %v7424
    %v7581 = vsub.f32 %v7215, %v7424
    %v7582 = vsub.f32 %v7216, %v7424
    %v7583 = vsub.f32 %v7217, %v7424
    %v7584 = vsub.f32 %v7218, %v7424
    %v7585 = vsub.f32 %v7219, %v7424
    %v7586 = vsub.f32 %v7220, %v7424
    %v7587 = vsub.f32 %v7221, %v7424
    %v7588 = vsub.f32 %v7222, %v7424
    %v7589 = vsub.f32 %v7223, %v7424
    %v7590 = vsub.f32 %v7224, %v7424
    %v7591 = vsub.f32 %v7225, %v7424
    %v7592 = vsub.f32 %v7226, %v7424
    %v7593 = vsub.f32 %v7227, %v7424
    %v7594 = vsub.f32 %v7228, %v7424
    %v7595 = vsub.f32 %v7229, %v7424
    %v7596 = vsub.f32 %v7230, %v7424
    %v7597 = vsub.f32 %v7231, %v7424
    %v7598 = vsub.f32 %v7232, %v7424
    %v7599 = vsub.f32 %v7233, %v7424
    %v7600 = vsub.f32 %v7234, %v7424
    %v7601 = vsub.f32 %v7235, %v7424
    %v7602 = vsub.f32 %v7236, %v7424
    %v7603 = vsub.f32 %v7237, %v7424
    %v7604 = vsub.f32 %v7238, %v7424
    %v7605 = vsub.f32 %v7239, %v7424
    %v7606 = vsub.f32 %v7240, %v7424
    %v7607 = vsub.f32 %v7241, %v7424
    %v7608 = vsub.f32 %v7242, %v7424
    %v7609 = vsub.f32 %v7243, %v7424
    %v7610 = vsub.f32 %v7244, %v7424
    %v7611 = vsub.f32 %v7245, %v7424
    %v7612 = vsub.f32 %v7246, %v7424
    %v7613 = vsub.f32 %v7247, %v7424
    %v7614 = vsub.f32 %v7248, %v7424
    %v7615 = vsub.f32 %v7249, %v7424
    %v7616 = vsub.f32 %v7250, %v7424
    %v7617 = vsub.f32 %v7251, %v7424
    %v7618 = vsub.f32 %v7252, %v7424
    %v7619 = vsub.f32 %v7253, %v7424
    %v7620 = vsub.f32 %v7254, %v7424
    %v7621 = vsub.f32 %v7255, %v7424
    %v7622 = vsub.f32 %v7256, %v7424
    %v7623 = vsub.f32 %v7257, %v7424
    %v7624 = vsub.f32 %v7258, %v7424
    %v7625 = vsub.f32 %v7259, %v7424
    %v7626 = vsub.f32 %v7260, %v7424
    %v7627 = vsub.f32 %v7261, %v7424
    %v7628 = vsub.f32 %v7262, %v7424
    %v7629 = vsub.f32 %v7263, %v7424
    %v7630 = vsub.f32 %v7264, %v7424
    %v7631 = vsub.f32 %v7265, %v7424
    %v7632 = vsub.f32 %v7266, %v7424
    %v7633 = vsub.f32 %v7267, %v7424
    %v7634 = vsub.f32 %v7268, %v7424
    %v7635 = vsub.f32 %v7269, %v7424
    %v7636 = vsub.f32 %v7270, %v7424
    %v7637 = vsub.f32 %v7271, %v7424
    %v7638 = vsub.f32 %v7272, %v7424
    %v7639 = vsub.f32 %v7273, %v7424
    %v7640 = vsub.f32 %v7274, %v7424
    %v7641 = vsub.f32 %v7275, %v7424
    %v7642 = vsub.f32 %v7276, %v7424
    %v7643 = vsub.f32 %v7277, %v7424
    %v7644 = vsub.f32 %v7278, %v7424
    %v7646 = vlaneseq
    %v7647 = vshrl.u32 %v7646, 7
    %v7648 = vsub.s32 0, %v7647
    %v7649 = vrot.slane %v7574, %v7648
    %v7651 = vmul.f32 %v7649, %v7575
    %v7652 = vmul.f32 %v7649, %v7576
    %v7653 = vmul.f32 %v7649, %v7577
    %v7654 = vmul.f32 %v7649, %v7578
    %v7655 = vmul.f32 %v7649, %v7579
    %v7656 = vmul.f32 %v7649, %v7580
    %v7657 = vmul.f32 %v7649, %v7581
    %v7658 = vmul.f32 %v7649, %v7582
    %v7659 = vmul.f32 %v7649, %v7583
    %v7660 = vmul.f32 %v7649, %v7584
    %v7661 = vmul.f32 %v7649, %v7585
    %v7662 = vmul.f32 %v7649, %v7586
    %v7663 = vmul.f32 %v7649, %v7587
    %v7664 = vmul.f32 %v7649, %v7588
    %v7665 = vmul.f32 %v7649, %v7589
    %v7666 = vmul.f32 %v7649, %v7590
    %v7667 = vmul.f32 %v7649, %v7591
    %v7668 = vmul.f32 %v7649, %v7592
    %v7669 = vmul.f32 %v7649, %v7593
    %v7670 = vmul.f32 %v7649, %v7594
    %v7671 = vmul.f32 %v7649, %v7595
    %v7672 = vmul.f32 %v7649, %v7596
    %v7673 = vmul.f32 %v7649, %v7597
    %v7674 = vmul.f32 %v7649, %v7598
    %v7675 = vmul.f32 %v7649, %v7599
    %v7676 = vmul.f32 %v7649, %v7600
    %v7677 = vmul.f32 %v7649, %v7601
    %v7678 = vmul.f32 %v7649, %v7602
    %v7679 = vmul.f32 %v7649, %v7603
    %v7680 = vmul.f32 %v7649, %v7604
    %v7681 = vmul.f32 %v7649, %v7605
    %v7682 = vmul.f32 %v7649, %v7606
    %v7683 = vmul.f32 %v7649, %v7607
    %v7684 = vmul.f32 %v7649, %v7608
    %v7685 = vmul.f32 %v7649, %v7609
    %v7686 = vmul.f32 %v7649, %v7610
    %v7687 = vmul.f32 %v7649, %v7611
    %v7688 = vmul.f32 %v7649, %v7612
    %v7689 = vmul.f32 %v7649, %v7613
    %v7690 = vmul.f32 %v7649, %v7614
    %v7691 = vmul.f32 %v7649, %v7615
    %v7692 = vmul.f32 %v7649, %v7616
    %v7693 = vmul.f32 %v7649, %v7617
    %v7694 = vmul.f32 %v7649, %v7618
    %v7695 = vmul.f32 %v7649, %v7619
    %v7696 = vmul.f32 %v7649, %v7620
    %v7697 = vmul.f32 %v7649, %v7621
    %v7698 = vmul.f32 %v7649, %v7622
    %v7699 = vmul.f32 %v7649, %v7623
    %v7700 = vmul.f32 %v7649, %v7624
    %v7701 = vmul.f32 %v7649, %v7625
    %v7702 = vmul.f32 %v7649, %v7626
    %v7703 = vmul.f32 %v7649, %v7627
    %v7704 = vmul.f32 %v7649, %v7628
    %v7705 = vmul.f32 %v7649, %v7629
    %v7706 = vmul.f32 %v7649, %v7630
    %v7707 = vmul.f32 %v7649, %v7631
    %v7708 = vmul.f32 %v7649, %v7632
    %v7709 = vmul.f32 %v7649, %v7633
    %v7710 = vmul.f32 %v7649, %v7634
    %v7711 = vmul.f32 %v7649, %v7635
    %v7712 = vmul.f32 %v7649, %v7636
    %v7713 = vmul.f32 %v7649, %v7637
    %v7714 = vmul.f32 %v7649, %v7638
    %v7715 = vmul.f32 %v7649, %v7639
    %v7716 = vmul.f32 %v7649, %v7640
    %v7717 = vmul.f32 %v7649, %v7641
    %v7718 = vmul.f32 %v7649, %v7642
    %v7719 = vmul.f32 %v7649, %v7643
    %v7720 = vmul.f32 %v7649, %v7644
    %v7721 = vadd.f32 %v7573, 1e-05
    %v7722 = vrsqrt.pop %v7721
    %v7723 = vmul.f32 %v7651, %v7722
    %v7724 = vmul.f32 %v7652, %v7722
    %v7725 = vmul.f32 %v7653, %v7722
    %v7726 = vmul.f32 %v7654, %v7722
    %v7727 = vmul.f32 %v7655, %v7722
    %v7728 = vmul.f32 %v7656, %v7722
    %v7729 = vmul.f32 %v7657, %v7722
    %v7730 = vmul.f32 %v7658, %v7722
    %v7731 = vmul.f32 %v7659, %v7722
    %v7732 = vmul.f32 %v7660, %v7722
    %v7733 = vmul.f32 %v7661, %v7722
    %v7734 = vmul.f32 %v7662, %v7722
    %v7735 = vmul.f32 %v7663, %v7722
    %v7736 = vmul.f32 %v7664, %v7722
    %v7737 = vmul.f32 %v7665, %v7722
    %v7738 = vmul.f32 %v7666, %v7722
    %v7739 = vmul.f32 %v7667, %v7722
    %v7740 = vmul.f32 %v7668, %v7722
    %v7741 = vmul.f32 %v7669, %v7722
    %v7742 = vmul.f32 %v7670, %v7722
    %v7743 = vmul.f32 %v7671, %v7722
    %v7744 = vmul.f32 %v7672, %v7722
    %v7745 = vmul.f32 %v7673, %v7722
    %v7746 = vmul.f32 %v7674, %v7722
    %v7747 = vmul.f32 %v7675, %v7722
    %v7748 = vmul.f32 %v7676, %v7722
    %v7749 = vmul.f32 %v7677, %v7722
    %v7750 = vmul.f32 %v7678, %v7722
    %v7751 = vmul.f32 %v7679, %v7722
    %v7752 = vmul.f32 %v7680, %v7722
    %v7753 = vmul.f32 %v7681, %v7722
    %v7754 = vmul.f32 %v7682, %v7722
    %v7755 = vmul.f32 %v7683, %v7722
    %v7756 = vmul.f32 %v7684, %v7722
    %v7757 = vmul.f32 %v7685, %v7722
    %v7758 = vmul.f32 %v7686, %v7722
    %v7759 = vmul.f32 %v7687, %v7722
    %v7760 = vmul.f32 %v7688, %v7722
    %v7761 = vmul.f32 %v7689, %v7722
    %v7762 = vmul.f32 %v7690, %v7722
    %v7763 = vmul.f32 %v7691, %v7722
    %v7764 = vmul.f32 %v7692, %v7722
    %v7765 = vmul.f32 %v7693, %v7722
    %v7766 = vmul.f32 %v7694, %v7722
    %v7767 = vmul.f32 %v7695, %v7722
    %v7768 = vmul.f32 %v7696, %v7722
    %v7769 = vmul.f32 %v7697, %v7722
    %v7770 = vmul.f32 %v7698, %v7722
    %v7771 = vmul.f32 %v7699, %v7722
    %v7772 = vmul.f32 %v7700, %v7722
    %v7773 = vmul.f32 %v7701, %v7722
    %v7774 = vmul.f32 %v7702, %v7722
    %v7775 = vmul.f32 %v7703, %v7722
    %v7776 = vmul.f32 %v7704, %v7722
    %v7777 = vmul.f32 %v7705, %v7722
    %v7778 = vmul.f32 %v7706, %v7722
    %v7779 = vmul.f32 %v7707, %v7722
    %v7780 = vmul.f32 %v7708, %v7722
    %v7781 = vmul.f32 %v7709, %v7722
    %v7782 = vmul.f32 %v7710, %v7722
    %v7783 = vmul.f32 %v7711, %v7722
    %v7784 = vmul.f32 %v7712, %v7722
    %v7785 = vmul.f32 %v7713, %v7722
    %v7786 = vmul.f32 %v7714, %v7722
    %v7787 = vmul.f32 %v7715, %v7722
    %v7788 = vmul.f32 %v7716, %v7722
    %v7789 = vmul.f32 %v7717, %v7722
    %v7790 = vmul.f32 %v7718, %v7722
    %v7791 = vmul.f32 %v7719, %v7722
    %v7792 = vmul.f32 %v7720, %v7722
    %v7793 = vld [vmem:[%s10] sm:$0x1]
    %v7795 = vlaneseq
    %v7796 = vshrl.u32 %v7795, 7
    %v7797 = vsub.s32 0, %v7796
    %v7798 = vrot.slane %v7793, %v7797
    %v7800 = vadd.f32 %v7723, %v7798
    %v7801 = vadd.f32 %v7724, %v7798
    %v7802 = vadd.f32 %v7725, %v7798
    %v7803 = vadd.f32 %v7726, %v7798
    %v7804 = vadd.f32 %v7727, %v7798
    %v7805 = vadd.f32 %v7728, %v7798
    %v7806 = vadd.f32 %v7729, %v7798
    %v7807 = vadd.f32 %v7730, %v7798
    %v7808 = vadd.f32 %v7731, %v7798
    %v7809 = vadd.f32 %v7732, %v7798
    %v7810 = vadd.f32 %v7733, %v7798
    %v7811 = vadd.f32 %v7734, %v7798
    %v7812 = vadd.f32 %v7735, %v7798
    %v7813 = vadd.f32 %v7736, %v7798
    %v7814 = vadd.f32 %v7737, %v7798
    %v7815 = vadd.f32 %v7738, %v7798
    %v7816 = vadd.f32 %v7739, %v7798
    %v7817 = vadd.f32 %v7740, %v7798
    %v7818 = vadd.f32 %v7741, %v7798
    %v7819 = vadd.f32 %v7742, %v7798
    %v7820 = vadd.f32 %v7743, %v7798
    %v7821 = vadd.f32 %v7744, %v7798
    %v7822 = vadd.f32 %v7745, %v7798
    %v7823 = vadd.f32 %v7746, %v7798
    %v7824 = vadd.f32 %v7747, %v7798
    %v7825 = vadd.f32 %v7748, %v7798
    %v7826 = vadd.f32 %v7749, %v7798
    %v7827 = vadd.f32 %v7750, %v7798
    %v7828 = vadd.f32 %v7751, %v7798
    %v7829 = vadd.f32 %v7752, %v7798
    %v7830 = vadd.f32 %v7753, %v7798
    %v7831 = vadd.f32 %v7754, %v7798
    %v7832 = vadd.f32 %v7755, %v7798
    %v7833 = vadd.f32 %v7756, %v7798
    %v7834 = vadd.f32 %v7757, %v7798
    %v7835 = vadd.f32 %v7758, %v7798
    %v7836 = vadd.f32 %v7759, %v7798
    %v7837 = vadd.f32 %v7760, %v7798
    %v7838 = vadd.f32 %v7761, %v7798
    %v7839 = vadd.f32 %v7762, %v7798
    %v7840 = vadd.f32 %v7763, %v7798
    %v7841 = vadd.f32 %v7764, %v7798
    %v7842 = vadd.f32 %v7765, %v7798
    %v7843 = vadd.f32 %v7766, %v7798
    %v7844 = vadd.f32 %v7767, %v7798
    %v7845 = vadd.f32 %v7768, %v7798
    %v7846 = vadd.f32 %v7769, %v7798
    %v7847 = vadd.f32 %v7770, %v7798
    %v7848 = vadd.f32 %v7771, %v7798
    %v7849 = vadd.f32 %v7772, %v7798
    %v7850 = vadd.f32 %v7773, %v7798
    %v7851 = vadd.f32 %v7774, %v7798
    %v7852 = vadd.f32 %v7775, %v7798
    %v7853 = vadd.f32 %v7776, %v7798
    %v7854 = vadd.f32 %v7777, %v7798
    %v7855 = vadd.f32 %v7778, %v7798
    %v7856 = vadd.f32 %v7779, %v7798
    %v7857 = vadd.f32 %v7780, %v7798
    %v7858 = vadd.f32 %v7781, %v7798
    %v7859 = vadd.f32 %v7782, %v7798
    %v7860 = vadd.f32 %v7783, %v7798
    %v7861 = vadd.f32 %v7784, %v7798
    %v7862 = vadd.f32 %v7785, %v7798
    %v7863 = vadd.f32 %v7786, %v7798
    %v7864 = vadd.f32 %v7787, %v7798
    %v7865 = vadd.f32 %v7788, %v7798
    %v7866 = vadd.f32 %v7789, %v7798
    %v7867 = vadd.f32 %v7790, %v7798
    %v7868 = vadd.f32 %v7791, %v7798
    %v7869 = vadd.f32 %v7792, %v7798
    %v7870 = vld [vmem:[%s11] sm:$0xff]
    %v7871 = vld [vmem:[%s11 + $0x8] sm:$0xff]
    %v7872 = vld [vmem:[%s11 + $0x10] sm:$0xff]
    %v7873 = vld [vmem:[%s11 + $0x18] sm:$0xff]
    %v7874 = vld [vmem:[%s11 + $0x20] sm:$0xff]
    %v7875 = vld [vmem:[%s11 + $0x28] sm:$0xff]
    %v7876 = vld [vmem:[%s11 + $0x30] sm:$0xff]
    %v7877 = vld [vmem:[%s11 + $0x38] sm:$0xff]
    %v7878 = vld [vmem:[%s11 + $0x40] sm:$0xff]
    %v7879 = vld [vmem:[%s11 + $0x48] sm:$0xff]
    %v7880 = vld [vmem:[%s11 + $0x50] sm:$0xff]
    %v7881 = vld [vmem:[%s11 + $0x58] sm:$0xff]
    %v7882 = vld [vmem:[%s11 + $0x60] sm:$0xff]
    %v7883 = vld [vmem:[%s11 + $0x68] sm:$0xff]
    %v7884 = vld [vmem:[%s11 + $0x70] sm:$0xff]
    %v7885 = vld [vmem:[%s11 + $0x78] sm:$0xff]
    %v7886 = vld [vmem:[%s11 + $0x80] sm:$0xff]
    %v7887 = vld [vmem:[%s11 + $0x88] sm:$0xff]
    %v7888 = vld [vmem:[%s11 + $0x90] sm:$0xff]
    %v7889 = vld [vmem:[%s11 + $0x98] sm:$0xff]
    %v7890 = vld [vmem:[%s11 + $0xa0] sm:$0xff]
    %v7891 = vld [vmem:[%s11 + $0xa8] sm:$0xff]
    %v7892 = vld [vmem:[%s11 + $0xb0] sm:$0xff]
    %v7893 = vld [vmem:[%s11 + $0xb8] sm:$0xff]
    %v7894 = vld [vmem:[%s11 + $0xc0] sm:$0xff]
    %v7895 = vld [vmem:[%s11 + $0xc8] sm:$0xff]
    %v7896 = vld [vmem:[%s11 + $0xd0] sm:$0xff]
    %v7897 = vld [vmem:[%s11 + $0xd8] sm:$0xff]
    %v7898 = vld [vmem:[%s11 + $0xe0] sm:$0xff]
    %v7899 = vld [vmem:[%s11 + $0xe8] sm:$0xff]
    %v7900 = vld [vmem:[%s11 + $0xf0] sm:$0xff]
    %v7901 = vld [vmem:[%s11 + $0xf8] sm:$0xff]
    %v7902 = vld [vmem:[%s11 + $0x100] sm:$0xff]
    %v7903 = vld [vmem:[%s11 + $0x108] sm:$0xff]
    %v7904 = vld [vmem:[%s11 + $0x110] sm:$0xff]
    %v7905 = vld [vmem:[%s11 + $0x118] sm:$0xff]
    %v7906 = vld [vmem:[%s11 + $0x120] sm:$0xff]
    %v7907 = vld [vmem:[%s11 + $0x128] sm:$0xff]
    %v7908 = vld [vmem:[%s11 + $0x130] sm:$0xff]
    %v7909 = vld [vmem:[%s11 + $0x138] sm:$0xff]
    %v7910 = vld [vmem:[%s11 + $0x140] sm:$0xff]
    %v7911 = vld [vmem:[%s11 + $0x148] sm:$0xff]
    %v7912 = vld [vmem:[%s11 + $0x150] sm:$0xff]
    %v7913 = vld [vmem:[%s11 + $0x158] sm:$0xff]
    %v7914 = vld [vmem:[%s11 + $0x160] sm:$0xff]
    %v7915 = vld [vmem:[%s11 + $0x168] sm:$0xff]
    %v7916 = vld [vmem:[%s11 + $0x170] sm:$0xff]
    %v7917 = vld [vmem:[%s11 + $0x178] sm:$0xff]
    %v7918 = vld [vmem:[%s11 + $0x180] sm:$0xff]
    %v7919 = vld [vmem:[%s11 + $0x188] sm:$0xff]
    %v7920 = vld [vmem:[%s11 + $0x190] sm:$0xff]
    %v7921 = vld [vmem:[%s11 + $0x198] sm:$0xff]
    %v7922 = vld [vmem:[%s11 + $0x1a0] sm:$0xff]
    %v7923 = vld [vmem:[%s11 + $0x1a8] sm:$0xff]
    %v7924 = vld [vmem:[%s11 + $0x1b0] sm:$0xff]
    %v7925 = vld [vmem:[%s11 + $0x1b8] sm:$0xff]
    %v7926 = vld [vmem:[%s11 + $0x1c0] sm:$0xff]
    %v7927 = vld [vmem:[%s11 + $0x1c8] sm:$0xff]
    %v7928 = vld [vmem:[%s11 + $0x1d0] sm:$0xff]
    %v7929 = vld [vmem:[%s11 + $0x1d8] sm:$0xff]
    %v7930 = vld [vmem:[%s11 + $0x1e0] sm:$0xff]
    %v7931 = vld [vmem:[%s11 + $0x1e8] sm:$0xff]
    %v7932 = vld [vmem:[%s11 + $0x1f0] sm:$0xff]
    %v7933 = vld [vmem:[%s11 + $0x1f8] sm:$0xff]
    %v7934 = vld [vmem:[%s11 + $0x200] sm:$0xff]
    %v7935 = vld [vmem:[%s11 + $0x208] sm:$0xff]
    %v7936 = vld [vmem:[%s11 + $0x210] sm:$0xff]
    %v7937 = vld [vmem:[%s11 + $0x218] sm:$0xff]
    %v7938 = vld [vmem:[%s11 + $0x220] sm:$0xff]
    %v7939 = vld [vmem:[%s11 + $0x228] sm:$0xff]
    %v7940 = vmul.f32 %v7800, %v7870
    %v7941 = vmul.f32 %v7801, %v7871
    %v7942 = vmul.f32 %v7802, %v7872
    %v7943 = vmul.f32 %v7803, %v7873
    %v7944 = vmul.f32 %v7804, %v7874
    %v7945 = vmul.f32 %v7805, %v7875
    %v7946 = vmul.f32 %v7806, %v7876
    %v7947 = vmul.f32 %v7807, %v7877
    %v7948 = vmul.f32 %v7808, %v7878
    %v7949 = vmul.f32 %v7809, %v7879
    %v7950 = vmul.f32 %v7810, %v7880
    %v7951 = vmul.f32 %v7811, %v7881
    %v7952 = vmul.f32 %v7812, %v7882
    %v7953 = vmul.f32 %v7813, %v7883
    %v7954 = vmul.f32 %v7814, %v7884
    %v7955 = vmul.f32 %v7815, %v7885
    %v7956 = vmul.f32 %v7816, %v7886
    %v7957 = vmul.f32 %v7817, %v7887
    %v7958 = vmul.f32 %v7818, %v7888
    %v7959 = vmul.f32 %v7819, %v7889
    %v7960 = vmul.f32 %v7820, %v7890
    %v7961 = vmul.f32 %v7821, %v7891
    %v7962 = vmul.f32 %v7822, %v7892
    %v7963 = vmul.f32 %v7823, %v7893
    %v7964 = vmul.f32 %v7824, %v7894
    %v7965 = vmul.f32 %v7825, %v7895
    %v7966 = vmul.f32 %v7826, %v7896
    %v7967 = vmul.f32 %v7827, %v7897
    %v7968 = vmul.f32 %v7828, %v7898
    %v7969 = vmul.f32 %v7829, %v7899
    %v7970 = vmul.f32 %v7830, %v7900
    %v7971 = vmul.f32 %v7831, %v7901
    %v7972 = vmul.f32 %v7832, %v7902
    %v7973 = vmul.f32 %v7833, %v7903
    %v7974 = vmul.f32 %v7834, %v7904
    %v7975 = vmul.f32 %v7835, %v7905
    %v7976 = vmul.f32 %v7836, %v7906
    %v7977 = vmul.f32 %v7837, %v7907
    %v7978 = vmul.f32 %v7838, %v7908
    %v7979 = vmul.f32 %v7839, %v7909
    %v7980 = vmul.f32 %v7840, %v7910
    %v7981 = vmul.f32 %v7841, %v7911
    %v7982 = vmul.f32 %v7842, %v7912
    %v7983 = vmul.f32 %v7843, %v7913
    %v7984 = vmul.f32 %v7844, %v7914
    %v7985 = vmul.f32 %v7845, %v7915
    %v7986 = vmul.f32 %v7846, %v7916
    %v7987 = vmul.f32 %v7847, %v7917
    %v7988 = vmul.f32 %v7848, %v7918
    %v7989 = vmul.f32 %v7849, %v7919
    %v7990 = vmul.f32 %v7850, %v7920
    %v7991 = vmul.f32 %v7851, %v7921
    %v7992 = vmul.f32 %v7852, %v7922
    %v7993 = vmul.f32 %v7853, %v7923
    %v7994 = vmul.f32 %v7854, %v7924
    %v7995 = vmul.f32 %v7855, %v7925
    %v7996 = vmul.f32 %v7856, %v7926
    %v7997 = vmul.f32 %v7857, %v7927
    %v7998 = vmul.f32 %v7858, %v7928
    %v7999 = vmul.f32 %v7859, %v7929
    %v8000 = vmul.f32 %v7860, %v7930
    %v8001 = vmul.f32 %v7861, %v7931
    %v8002 = vmul.f32 %v7862, %v7932
    %v8003 = vmul.f32 %v7863, %v7933
    %v8004 = vmul.f32 %v7864, %v7934
    %v8005 = vmul.f32 %v7865, %v7935
    %v8006 = vmul.f32 %v7866, %v7936
    %v8007 = vmul.f32 %v7867, %v7937
    %v8008 = vmul.f32 %v7868, %v7938
    %v8009 = vmul.f32 %v7869, %v7939
    %8010 = vadd.xlane.f32.xlu0 %v7940
    %v8011 = vpop.xlane.xlu0 %8010
    %8012 = vadd.xlane.f32.xlu0 %v7941
    %v8013 = vpop.xlane.xlu0 %8012
    %8014 = vadd.xlane.f32.xlu0 %v7942
    %v8015 = vpop.xlane.xlu0 %8014
    %8016 = vadd.xlane.f32.xlu0 %v7943
    %v8017 = vpop.xlane.xlu0 %8016
    %8018 = vadd.xlane.f32.xlu0 %v7944
    %v8019 = vpop.xlane.xlu0 %8018
    %8020 = vadd.xlane.f32.xlu0 %v7945
    %v8021 = vpop.xlane.xlu0 %8020
    %8022 = vadd.xlane.f32.xlu0 %v7946
    %v8023 = vpop.xlane.xlu0 %8022
    %8024 = vadd.xlane.f32.xlu0 %v7947
    %v8025 = vpop.xlane.xlu0 %8024
    %8026 = vadd.xlane.f32.xlu0 %v7948
    %v8027 = vpop.xlane.xlu0 %8026
    %8028 = vadd.xlane.f32.xlu0 %v7949
    %v8029 = vpop.xlane.xlu0 %8028
    %8030 = vadd.xlane.f32.xlu0 %v7950
    %v8031 = vpop.xlane.xlu0 %8030
    %8032 = vadd.xlane.f32.xlu0 %v7951
    %v8033 = vpop.xlane.xlu0 %8032
    %8034 = vadd.xlane.f32.xlu0 %v7952
    %v8035 = vpop.xlane.xlu0 %8034
    %8036 = vadd.xlane.f32.xlu0 %v7953
    %v8037 = vpop.xlane.xlu0 %8036
    %8038 = vadd.xlane.f32.xlu0 %v7954
    %v8039 = vpop.xlane.xlu0 %8038
    %8040 = vadd.xlane.f32.xlu0 %v7955
    %v8041 = vpop.xlane.xlu0 %8040
    %8042 = vadd.xlane.f32.xlu0 %v7956
    %v8043 = vpop.xlane.xlu0 %8042
    %8044 = vadd.xlane.f32.xlu0 %v7957
    %v8045 = vpop.xlane.xlu0 %8044
    %8046 = vadd.xlane.f32.xlu0 %v7958
    %v8047 = vpop.xlane.xlu0 %8046
    %8048 = vadd.xlane.f32.xlu0 %v7959
    %v8049 = vpop.xlane.xlu0 %8048
    %8050 = vadd.xlane.f32.xlu0 %v7960
    %v8051 = vpop.xlane.xlu0 %8050
    %8052 = vadd.xlane.f32.xlu0 %v7961
    %v8053 = vpop.xlane.xlu0 %8052
    %8054 = vadd.xlane.f32.xlu0 %v7962
    %v8055 = vpop.xlane.xlu0 %8054
    %8056 = vadd.xlane.f32.xlu0 %v7963
    %v8057 = vpop.xlane.xlu0 %8056
    %8058 = vadd.xlane.f32.xlu0 %v7964
    %v8059 = vpop.xlane.xlu0 %8058
    %8060 = vadd.xlane.f32.xlu0 %v7965
    %v8061 = vpop.xlane.xlu0 %8060
    %8062 = vadd.xlane.f32.xlu0 %v7966
    %v8063 = vpop.xlane.xlu0 %8062
    %8064 = vadd.xlane.f32.xlu0 %v7967
    %v8065 = vpop.xlane.xlu0 %8064
    %8066 = vadd.xlane.f32.xlu0 %v7968
    %v8067 = vpop.xlane.xlu0 %8066
    %8068 = vadd.xlane.f32.xlu0 %v7969
    %v8069 = vpop.xlane.xlu0 %8068
    %8070 = vadd.xlane.f32.xlu0 %v7970
    %v8071 = vpop.xlane.xlu0 %8070
    %8072 = vadd.xlane.f32.xlu0 %v7971
    %v8073 = vpop.xlane.xlu0 %8072
    %8074 = vadd.xlane.f32.xlu0 %v7972
    %v8075 = vpop.xlane.xlu0 %8074
    %8076 = vadd.xlane.f32.xlu0 %v7973
    %v8077 = vpop.xlane.xlu0 %8076
    %8078 = vadd.xlane.f32.xlu0 %v7974
    %v8079 = vpop.xlane.xlu0 %8078
    %8080 = vadd.xlane.f32.xlu0 %v7975
    %v8081 = vpop.xlane.xlu0 %8080
    %8082 = vadd.xlane.f32.xlu0 %v7976
    %v8083 = vpop.xlane.xlu0 %8082
    %8084 = vadd.xlane.f32.xlu0 %v7977
    %v8085 = vpop.xlane.xlu0 %8084
    %8086 = vadd.xlane.f32.xlu0 %v7978
    %v8087 = vpop.xlane.xlu0 %8086
    %8088 = vadd.xlane.f32.xlu0 %v7979
    %v8089 = vpop.xlane.xlu0 %8088
    %8090 = vadd.xlane.f32.xlu0 %v7980
    %v8091 = vpop.xlane.xlu0 %8090
    %8092 = vadd.xlane.f32.xlu0 %v7981
    %v8093 = vpop.xlane.xlu0 %8092
    %8094 = vadd.xlane.f32.xlu0 %v7982
    %v8095 = vpop.xlane.xlu0 %8094
    %8096 = vadd.xlane.f32.xlu0 %v7983
    %v8097 = vpop.xlane.xlu0 %8096
    %8098 = vadd.xlane.f32.xlu0 %v7984
    %v8099 = vpop.xlane.xlu0 %8098
    %8100 = vadd.xlane.f32.xlu0 %v7985
    %v8101 = vpop.xlane.xlu0 %8100
    %8102 = vadd.xlane.f32.xlu0 %v7986
    %v8103 = vpop.xlane.xlu0 %8102
    %8104 = vadd.xlane.f32.xlu0 %v7987
    %v8105 = vpop.xlane.xlu0 %8104
    %8106 = vadd.xlane.f32.xlu0 %v7988
    %v8107 = vpop.xlane.xlu0 %8106
    %8108 = vadd.xlane.f32.xlu0 %v7989
    %v8109 = vpop.xlane.xlu0 %8108
    %8110 = vadd.xlane.f32.xlu0 %v7990
    %v8111 = vpop.xlane.xlu0 %8110
    %8112 = vadd.xlane.f32.xlu0 %v7991
    %v8113 = vpop.xlane.xlu0 %8112
    %8114 = vadd.xlane.f32.xlu0 %v7992
    %v8115 = vpop.xlane.xlu0 %8114
    %8116 = vadd.xlane.f32.xlu0 %v7993
    %v8117 = vpop.xlane.xlu0 %8116
    %8118 = vadd.xlane.f32.xlu0 %v7994
    %v8119 = vpop.xlane.xlu0 %8118
    %8120 = vadd.xlane.f32.xlu0 %v7995
    %v8121 = vpop.xlane.xlu0 %8120
    %8122 = vadd.xlane.f32.xlu0 %v7996
    %v8123 = vpop.xlane.xlu0 %8122
    %8124 = vadd.xlane.f32.xlu0 %v7997
    %v8125 = vpop.xlane.xlu0 %8124
    %8126 = vadd.xlane.f32.xlu0 %v7998
    %v8127 = vpop.xlane.xlu0 %8126
    %8128 = vadd.xlane.f32.xlu0 %v7999
    %v8129 = vpop.xlane.xlu0 %8128
    %8130 = vadd.xlane.f32.xlu0 %v8000
    %v8131 = vpop.xlane.xlu0 %8130
    %8132 = vadd.xlane.f32.xlu0 %v8001
    %v8133 = vpop.xlane.xlu0 %8132
    %8134 = vadd.xlane.f32.xlu0 %v8002
    %v8135 = vpop.xlane.xlu0 %8134
    %8136 = vadd.xlane.f32.xlu0 %v8003
    %v8137 = vpop.xlane.xlu0 %8136
    %8138 = vadd.xlane.f32.xlu0 %v8004
    %v8139 = vpop.xlane.xlu0 %8138
    %8140 = vadd.xlane.f32.xlu0 %v8005
    %v8141 = vpop.xlane.xlu0 %8140
    %8142 = vadd.xlane.f32.xlu0 %v8006
    %v8143 = vpop.xlane.xlu0 %8142
    %8144 = vadd.xlane.f32.xlu0 %v8007
    %v8145 = vpop.xlane.xlu0 %8144
    %8146 = vadd.xlane.f32.xlu0 %v8008
    %v8147 = vpop.xlane.xlu0 %8146
    %8148 = vadd.xlane.f32.xlu0 %v8009
    %v8149 = vpop.xlane.xlu0 %8148
    %v8150 = vadd.f32 %v8011, %v8013
    %v8151 = vadd.f32 %v8150, %v8015
    %v8152 = vadd.f32 %v8151, %v8017
    %v8153 = vadd.f32 %v8152, %v8019
    %v8154 = vadd.f32 %v8153, %v8021
    %v8155 = vadd.f32 %v8154, %v8023
    %v8156 = vadd.f32 %v8155, %v8025
    %v8157 = vadd.f32 %v8156, %v8027
    %v8158 = vadd.f32 %v8157, %v8029
    %v8159 = vadd.f32 %v8158, %v8031
    %v8160 = vadd.f32 %v8159, %v8033
    %v8161 = vadd.f32 %v8160, %v8035
    %v8162 = vadd.f32 %v8161, %v8037
    %v8163 = vadd.f32 %v8162, %v8039
    %v8164 = vadd.f32 %v8163, %v8041
    %v8165 = vadd.f32 %v8164, %v8043
    %v8166 = vadd.f32 %v8165, %v8045
    %v8167 = vadd.f32 %v8166, %v8047
    %v8168 = vadd.f32 %v8167, %v8049
    %v8169 = vadd.f32 %v8168, %v8051
    %v8170 = vadd.f32 %v8169, %v8053
    %v8171 = vadd.f32 %v8170, %v8055
    %v8172 = vadd.f32 %v8171, %v8057
    %v8173 = vadd.f32 %v8172, %v8059
    %v8174 = vadd.f32 %v8173, %v8061
    %v8175 = vadd.f32 %v8174, %v8063
    %v8176 = vadd.f32 %v8175, %v8065
    %v8177 = vadd.f32 %v8176, %v8067
    %v8178 = vadd.f32 %v8177, %v8069
    %v8179 = vadd.f32 %v8178, %v8071
    %v8180 = vadd.f32 %v8179, %v8073
    %v8181 = vadd.f32 %v8180, %v8075
    %v8182 = vadd.f32 %v8181, %v8077
    %v8183 = vadd.f32 %v8182, %v8079
    %v8184 = vadd.f32 %v8183, %v8081
    %v8185 = vadd.f32 %v8184, %v8083
    %v8186 = vadd.f32 %v8185, %v8085
    %v8187 = vadd.f32 %v8186, %v8087
    %v8188 = vadd.f32 %v8187, %v8089
    %v8189 = vadd.f32 %v8188, %v8091
    %v8190 = vadd.f32 %v8189, %v8093
    %v8191 = vadd.f32 %v8190, %v8095
    %v8192 = vadd.f32 %v8191, %v8097
    %v8193 = vadd.f32 %v8192, %v8099
    %v8194 = vadd.f32 %v8193, %v8101
    %v8195 = vadd.f32 %v8194, %v8103
    %v8196 = vadd.f32 %v8195, %v8105
    %v8197 = vadd.f32 %v8196, %v8107
    %v8198 = vadd.f32 %v8197, %v8109
    %v8199 = vadd.f32 %v8198, %v8111
    %v8200 = vadd.f32 %v8199, %v8113
    %v8201 = vadd.f32 %v8200, %v8115
    %v8202 = vadd.f32 %v8201, %v8117
    %v8203 = vadd.f32 %v8202, %v8119
    %v8204 = vadd.f32 %v8203, %v8121
    %v8205 = vadd.f32 %v8204, %v8123
    %v8206 = vadd.f32 %v8205, %v8125
    %v8207 = vadd.f32 %v8206, %v8127
    %v8208 = vadd.f32 %v8207, %v8129
    %v8209 = vadd.f32 %v8208, %v8131
    %v8210 = vadd.f32 %v8209, %v8133
    %v8211 = vadd.f32 %v8210, %v8135
    %v8212 = vadd.f32 %v8211, %v8137
    %v8213 = vadd.f32 %v8212, %v8139
    %v8214 = vadd.f32 %v8213, %v8141
    %v8215 = vadd.f32 %v8214, %v8143
    %v8216 = vadd.f32 %v8215, %v8145
    %v8217 = vadd.f32 %v8216, %v8147
    %v8218 = vadd.f32 %v8217, %v8149
    %v8219 = vrot.slane %v8218, 4
    %v8220 = vadd.f32 %v8218, %v8219
    %v8221 = vrot.slane %v8220, 2
    %v8222 = vadd.f32 %v8220, %v8221
    %v8223 = vrot.slane %v8222, 1
    %v8224 = vadd.f32 %v8222, %v8223
    %v8225 = vld [vmem:[#allocation4] sm:$0x1]
    %v8226 = vadd.f32 %v8224, %v8225
    %v8227 = vsub.f32 0.0, %v8226
    %v8228 = vmul.f32 %v8227, 1.442695
    %v8229 = vpow.pop %v8228
    %v8230 = vadd.f32 %v8229, 1.0
    %v8231 = vrcp.pop %v8230
    %v8232 = vmul.f32 1.0, %v8231
    %vm8233 = vcmask 0
    %8234 = vst.msk [vmem:[#allocation5] sm:$0x1] %vm8233, %v8232
    // Predicated region
    $region54: #{discriminator_forward.3} parent=1 // pred_check
      _
    $region55: #{discriminator_forward.3} parent=1 // pred_check_branch
      %8236 = sbr.rel (0) target = $region57
    $region56: #{discriminator_forward.3} parent=1 // pred_region
      %s8238 = ssub.s32 16, 16
      %8239 = vsyncadd [#allocation6], %s8238
      %s8241 = sshll.u32 [#allocation5], 4
      %s8242 = int_to_ptr.vmem [resolvable:$true] %s8241
      %8244 = dma.vmem_to_hbm [thread:$0]  %s8242, 16, %s13, [#allocation6]
    $region57: #{discriminator_forward.3} parent=1 // pred_fallthru
      _
    // Predicated region
    $region58: #{discriminator_forward.3} parent=1 // pred_check
      _
    $region59: #{discriminator_forward.3} parent=1 // pred_check_branch
      %8246 = sbr.rel (0) target = $region61
    $region60: #{discriminator_forward.3} parent=1 // pred_region
      %8247 = dma.done [#allocation6], 16
    $region61: #{discriminator_forward.3} parent=1 // pred_fallthru
      _
    %8248 = vsyncpa [#allocation6], 1

</llo_original>
